<compile_context>
chip_gen: v7x
topology: tpu7x:2x2x1
jax: 0.10.0
libtpu: 0.0.40
codegen_flags: <defaults>
</compile_context>

<pallas_src>
import functools

import jax
import jax.numpy as jnp
from jax.experimental import pallas as pl
from jax.experimental.pallas import tpu as pltpu


# ---------------------------------------------------------------------------
# Fused RRDB kernel (one batch element per grid step)
# ---------------------------------------------------------------------------
def _rrdb_kernel(x_ref,
                 w1_ref, w2_ref, w3_ref, w4_ref, w5_ref,
                 b1_ref, b2_ref, b3_ref, b4_ref, b5_ref,
                 m_ref, o_ref, act_ref, cur_ref, *, nc, gc, H, W):
    # x_ref  : (1, nc, HW)            f32   input feature map (channel-major)
    # wN_ref : (3, 9*cout_N, cin_N)   bf16  conv_N weights for RDB1..3, tap-major rows
    # bN_ref : (3, cout_N, 1)         f32   conv_N biases for RDB1..3
    # m_ref  : (9, 1, HW)             f32   border masks per tap (1.0 inside image)
    # o_ref  : (1, nc, HW)            f32   output feature map
    # act_ref: (nc + 4*gc, HW)        bf16  dense-concat buffer [x | x1 | x2 | x3 | x4]
    # cur_ref: (nc, HW)               f32   carried RDB value (residual math in f32)
    w_refs = (w1_ref, w2_ref, w3_ref, w4_ref, w5_ref)
    b_refs = (b1_ref, b2_ref, b3_ref, b4_ref, b5_ref)

    cur_ref[...] = x_ref[0]                       # RRDB input, kept in f32

    for r in range(3):                            # RDB1..RDB3 (fully unrolled)
        # Current RDB input -> prefix rows of the concat buffer (single bf16 cast).
        act_ref[0:nc, :] = cur_ref[...].astype(jnp.bfloat16)

        for i in range(5):                        # conv1..conv5 (unrolled)
            cin = nc + i * gc                     # exact contraction size
            cout = gc if i < 4 else nc            # exact output rows
            w = w_refs[i][r]                      # (9*cout, cin) bf16, static index
            xs = act_ref[0:cin, :]                # (cin, HW) bf16 dense-concat prefix
            # One fused MXU dot for all 9 taps of this conv.
            y = jnp.dot(w, xs, preferred_element_type=jnp.float32)   # (9*cout, HW) f32

            acc = None
            for t in range(9):                    # combine the 9 tap slabs
                dy, dx = t // 3 - 1, t % 3 - 1
                off = dy * W + dx
                slab = y[t * cout:(t + 1) * cout, :]
                if off != 0:
                    # Shift the tap's contribution to its output pixels; the mask
                    # zeroes terms that crossed the image border (= zero 'same' pad)
                    # and the circularly wrapped lanes of the roll.
                    slab = jnp.roll(slab, -off, axis=-1) * m_ref[t]
                acc = slab if acc is None else acc + slab
            acc = acc + b_refs[i][r]              # bias (cout, 1) f32

            if i < 4:
                acc = jnp.where(acc > 0, acc, 0.2 * acc)              # LeakyReLU(0.2)
                act_ref[nc + i * gc: nc + (i + 1) * gc, :] = acc.astype(jnp.bfloat16)
            else:
                cur_ref[...] = 0.2 * acc + cur_ref[...]               # RDB residual

    o_ref[0] = (0.2 * cur_ref[...] + x_ref[0]).astype(o_ref.dtype)    # RRDB residual


# ---------------------------------------------------------------------------
# Host-side wrapper
# ---------------------------------------------------------------------------
def rrdb_forward(x_nchw, w_list, b_list, tap_masks, *, nc, gc):
    """RRDB forward. Input/output in NCHW (PyTorch convention), float32."""
    N, C, H, W = x_nchw.shape
    assert C == nc
    # bf16 scratch prefix slices stay sublane-tile aligned (real ESRGAN: 64/32).
    assert nc % 16 == 0 and gc % 16 == 0
    HW = H * W
    assert HW % 128 == 0                      # lane-dense stores / unmasked vst
    ctot = nc + 4 * gc
    x_flat = x_nchw.reshape(N, C, HW)         # NCHW is already channel-major

    kern = functools.partial(_rrdb_kernel, nc=nc, gc=gc, H=H, W=W)

    def _const_spec(arr):
        nd = arr.ndim
        # Constant operands: same block every grid step (DMA'd once, stay resident).
        return pl.BlockSpec(arr.shape, lambda n: (0,) * nd)

    in_specs = ([pl.BlockSpec((1, nc, HW), lambda n: (n, 0, 0))]
                + [_const_spec(w) for w in w_list]
                + [_const_spec(b) for b in b_list]
                + [_const_spec(tap_masks)])

    out = pl.pallas_call(
        kern,
        out_shape=jax.ShapeDtypeStruct((N, nc, HW), x_nchw.dtype),
        grid=(N,),
        in_specs=in_specs,
        out_specs=pl.BlockSpec((1, nc, HW), lambda n: (n, 0, 0)),
        scratch_shapes=[pltpu.VMEM((ctot, HW), jnp.bfloat16),   # dense concat (bf16)
                        pltpu.VMEM((nc, HW), jnp.float32)],     # carried RDB value
        compiler_params=pltpu.CompilerParams(
            dimension_semantics=("parallel",),
            vmem_limit_bytes=32 * 1024 * 1024),
    )(x_flat, *w_list, *b_list, tap_masks)
    return out.reshape(N, nc, H, W)


# ---------------------------------------------------------------------------
# Parameter construction / packing (deterministic, synthetic)
# ---------------------------------------------------------------------------
def make_rrdb_params(key, nc, gc):
    """15 convs in PyTorch layout/order: [(w (Cout,Cin,3,3), b (Cout,)), ...]."""
    raw = []
    cins = [nc, nc + gc, nc + 2 * gc, nc + 3 * gc, nc + 4 * gc]
    couts = [gc, gc, gc, gc, nc]
    for _ in range(3):                        # RDB1, RDB2, RDB3
        for cin, cout in zip(cins, couts):
            key, kw, kb = jax.random.split(key, 3)
            w = 0.05 * jax.random.normal(kw, (cout, cin, 3, 3), jnp.float32)
            b = 0.05 * jax.random.normal(kb, (cout,), jnp.float32)
            raw.append((w, b))
    return raw


def pack_rrdb_params(raw, nc, gc):
    """Group by conv position: 5 weight arrays (3, 9*cout_i, cin_i) bf16 (tap-major
    rows, exact Cin/Cout, no zero padding) and 5 bias arrays (3, cout_i, 1) f32."""
    w_list, b_list = [], []
    for i in range(5):
        ws, bs = [], []
        for r in range(3):
            w, b = raw[r * 5 + i]
            cout, cin = w.shape[0], w.shape[1]
            # (Cout,Cin,3,3) -> (ky,kx,Cout,Cin) -> rows = tap-major blocks of Cout
            wt = jnp.transpose(w, (2, 3, 0, 1)).reshape(9 * cout, cin)
            ws.append(wt)
            bs.append(b.reshape(cout, 1))
        w_list.append(jnp.stack(ws, axis=0).astype(jnp.bfloat16))
        b_list.append(jnp.stack(bs, axis=0))
    return w_list, b_list


def make_tap_masks(H, W):
    """(9, 1, H*W) float masks: 1.0 where tap (ky,kx) reads inside the image."""
    hh, ww = jnp.meshgrid(jnp.arange(H), jnp.arange(W), indexing="ij")
    hh = hh.reshape(1, H * W)
    ww = ww.reshape(1, H * W)
    masks = []
    for t in range(9):
        dy, dx = t // 3 - 1, t % 3 - 1
        m = (hh + dy >= 0) & (hh + dy < H) & (ww + dx >= 0) & (ww + dx < W)
        masks.append(m.astype(jnp.float32))
    return jnp.stack(masks, axis=0)


# ---------------------------------------------------------------------------
# Pure-JAX reference (for correctness checking only)
# ---------------------------------------------------------------------------
def _conv3x3_ref(x, w, b):
    y = jax.lax.conv_general_dilated(
        x, w, window_strides=(1, 1), padding=((1, 1), (1, 1)),
        dimension_numbers=("NCHW", "OIHW", "NCHW"),
        precision=jax.lax.Precision.HIGHEST)
    return y + b.reshape(1, -1, 1, 1)


def _rrdb_ref(x, raw_params):
    lrelu = lambda v: jnp.where(v > 0, v, 0.2 * v)
    cur = x
    for r in range(3):
        xin = cur
        feats = [xin]
        for i in range(5):
            w, b = raw_params[r * 5 + i]
            y = _conv3x3_ref(jnp.concatenate(feats, axis=1), w, b)
            if i < 4:
                feats.append(lrelu(y))
            else:
                cur = 0.2 * y + xin
    return 0.2 * cur + x


# ---------------------------------------------------------------------------
if __name__ == "__main__":
    N, NC, H, W = 2, 16, 16, 16     # small test shapes (real ESRGAN: nc=64, gc=32)
    GC = 16

    key = jax.random.PRNGKey(0)
    kx, kp = jax.random.split(key)
    x = jax.random.normal(kx, (N, NC, H, W), jnp.float32)   # NCHW, like PyTorch
    raw = make_rrdb_params(kp, NC, GC)
    w_list, b_list = pack_rrdb_params(raw, NC, GC)
    tap_masks = make_tap_masks(H, W)

    fwd = jax.jit(functools.partial(rrdb_forward, nc=NC, gc=GC))
    out = fwd(x, w_list, b_list, tap_masks)
    jax.block_until_ready(out)
    assert out.shape == (N, NC, H, W)

    # Correctness check vs. pure-JAX reference using the same bf16-rounded weights
    # (the kernel keeps all non-MXU math in f32, so 5e-2 is a very loose bound).
    raw_bf = [(w.astype(jnp.bfloat16).astype(jnp.float32), b) for w, b in raw]
    ref = jax.jit(lambda xx: _rrdb_ref(xx, raw_bf))(x)
    err = float(jnp.max(jnp.abs(out - ref)))
    assert err < 5e-2, f"max abs error vs reference: {err}"

    print("KERNEL_OK")
</pallas_src>

<mosaic_0001>
module attributes {stable_mosaic.version = 11 : i64} {
  func.func @_rrdb_kernel(%arg0: i32, %arg1: memref<1x16x256xf32, #tpu.memory_space<vmem>>, %arg2: memref<3x144x16xbf16, #tpu.memory_space<vmem>>, %arg3: memref<3x144x32xbf16, #tpu.memory_space<vmem>>, %arg4: memref<3x144x48xbf16, #tpu.memory_space<vmem>>, %arg5: memref<3x144x64xbf16, #tpu.memory_space<vmem>>, %arg6: memref<3x144x80xbf16, #tpu.memory_space<vmem>>, %arg7: memref<3x16x1xf32, #tpu.memory_space<vmem>>, %arg8: memref<3x16x1xf32, #tpu.memory_space<vmem>>, %arg9: memref<3x16x1xf32, #tpu.memory_space<vmem>>, %arg10: memref<3x16x1xf32, #tpu.memory_space<vmem>>, %arg11: memref<3x16x1xf32, #tpu.memory_space<vmem>>, %arg12: memref<9x1x256xf32, #tpu.memory_space<vmem>>, %arg13: memref<1x16x256xf32, #tpu.memory_space<vmem>>, %arg14: memref<80x256xbf16, #tpu.memory_space<vmem>>, %arg15: memref<16x256xf32, #tpu.memory_space<vmem>>) attributes {dimension_semantics = [#tpu.dimension_semantics<parallel>], iteration_bounds = array<i64: 2>, scalar_prefetch = 0 : i64, scratch_operands = 2 : i64, tpu.core_type = #tpu.core_type<tc>, window_params = [{transform_indices = @transform_0, window_bounds = array<i64: 1, 16, 256>}, {pipeline_mode = #tpu.pipeline_mode<synchronous>, transform_indices = @transform_1, window_bounds = array<i64: 3, 144, 16>}, {pipeline_mode = #tpu.pipeline_mode<synchronous>, transform_indices = @transform_2, window_bounds = array<i64: 3, 144, 32>}, {pipeline_mode = #tpu.pipeline_mode<synchronous>, transform_indices = @transform_3, window_bounds = array<i64: 3, 144, 48>}, {pipeline_mode = #tpu.pipeline_mode<synchronous>, transform_indices = @transform_4, window_bounds = array<i64: 3, 144, 64>}, {pipeline_mode = #tpu.pipeline_mode<synchronous>, transform_indices = @transform_5, window_bounds = array<i64: 3, 144, 80>}, {pipeline_mode = #tpu.pipeline_mode<synchronous>, transform_indices = @transform_6, window_bounds = array<i64: 3, 16, 1>}, {pipeline_mode = #tpu.pipeline_mode<synchronous>, transform_indices = @transform_7, window_bounds = array<i64: 3, 16, 1>}, {pipeline_mode = #tpu.pipeline_mode<synchronous>, transform_indices = @transform_8, window_bounds = array<i64: 3, 16, 1>}, {pipeline_mode = #tpu.pipeline_mode<synchronous>, transform_indices = @transform_9, window_bounds = array<i64: 3, 16, 1>}, {pipeline_mode = #tpu.pipeline_mode<synchronous>, transform_indices = @transform_10, window_bounds = array<i64: 3, 16, 1>}, {pipeline_mode = #tpu.pipeline_mode<synchronous>, transform_indices = @transform_11, window_bounds = array<i64: 9, 1, 256>}, {transform_indices = @transform_12, window_bounds = array<i64: 1, 16, 256>}]} {
    %c0 = arith.constant 0 : index
    %c0_0 = arith.constant 0 : index
    %c0_1 = arith.constant 0 : index
    %0 = vector.load %arg1[%c0, %c0_0, %c0_1] : memref<1x16x256xf32, #tpu.memory_space<vmem>>, vector<1x16x256xf32>
    %1 = vector.shape_cast %0 : vector<1x16x256xf32> to vector<16x256xf32>
    %c0_2 = arith.constant 0 : index
    %c0_3 = arith.constant 0 : index
    %2 = vector.load %arg15[%c0_2, %c0_3] : memref<16x256xf32, #tpu.memory_space<vmem>>, vector<16x256xf32>
    tpu.vector_store %arg15[%c0_2, %c0_3], %1 {strides = array<i32>} : memref<16x256xf32, #tpu.memory_space<vmem>>, vector<16x256xf32>,
    %c0_4 = arith.constant 0 : index
    %c0_5 = arith.constant 0 : index
    %3 = vector.load %arg15[%c0_4, %c0_5] : memref<16x256xf32, #tpu.memory_space<vmem>>, vector<16x256xf32>
    %4 = arith.truncf %3 : vector<16x256xf32> to vector<16x256xbf16>
    %c0_6 = arith.constant 0 : index
    %c0_7 = arith.constant 0 : index
    %5 = vector.load %arg14[%c0_6, %c0_7] : memref<80x256xbf16, #tpu.memory_space<vmem>>, vector<16x256xbf16>
    tpu.vector_store %arg14[%c0_6, %c0_7], %4 {strides = array<i32>} : memref<80x256xbf16, #tpu.memory_space<vmem>>, vector<16x256xbf16>,
    %c0_8 = arith.constant 0 : index
    %c0_9 = arith.constant 0 : index
    %c0_10 = arith.constant 0 : index
    %6 = vector.load %arg2[%c0_8, %c0_9, %c0_10] : memref<3x144x16xbf16, #tpu.memory_space<vmem>>, vector<1x144x16xbf16>
    %7 = vector.shape_cast %6 : vector<1x144x16xbf16> to vector<144x16xbf16>
    %c0_11 = arith.constant 0 : index
    %c0_12 = arith.constant 0 : index
    %8 = vector.load %arg14[%c0_11, %c0_12] : memref<80x256xbf16, #tpu.memory_space<vmem>>, vector<16x256xbf16>
    %cst = arith.constant dense<0.000000e+00> : vector<144x256xf32>
    %9 = tpu.matmul %7, %8, %cst {dimension_numbers = #tpu.dot_dimension_numbers<[1], [0], [0], [1], [0, 0, 1, 1], [], []>} : vector<144x16xbf16>, vector<16x256xbf16>, vector<144x256xf32> -> vector<144x256xf32>
    %10 = vector.extract_strided_slice %9 {offsets = [0, 0], sizes = [16, 256], strides = [1, 1]} : vector<144x256xf32> to vector<16x256xf32>
    %11 = vector.extract_strided_slice %10 {offsets = [0, 239], sizes = [16, 17], strides = [1, 1]} : vector<16x256xf32> to vector<16x17xf32>
    %12 = vector.extract_strided_slice %10 {offsets = [0, 0], sizes = [16, 239], strides = [1, 1]} : vector<16x256xf32> to vector<16x239xf32>
    %13 = tpu.concatenate %11, %12 in 1 : vector<16x17xf32>, vector<16x239xf32> -> vector<16x256xf32>
    %c0_13 = arith.constant 0 : index
    %c0_14 = arith.constant 0 : index
    %c0_15 = arith.constant 0 : index
    %14 = vector.load %arg12[%c0_13, %c0_14, %c0_15] : memref<9x1x256xf32, #tpu.memory_space<vmem>>, vector<1x1x256xf32>
    %15 = vector.shape_cast %14 : vector<1x1x256xf32> to vector<1x256xf32>
    %16 = vector.broadcast %15 : vector<1x256xf32> to vector<16x256xf32>
    %17 = arith.mulf %13, %16 : vector<16x256xf32>
    %18 = vector.extract_strided_slice %9 {offsets = [16, 0], sizes = [16, 256], strides = [1, 1]} : vector<144x256xf32> to vector<16x256xf32>
    %19 = vector.extract_strided_slice %18 {offsets = [0, 240], sizes = [16, 16], strides = [1, 1]} : vector<16x256xf32> to vector<16x16xf32>
    %20 = vector.extract_strided_slice %18 {offsets = [0, 0], sizes = [16, 240], strides = [1, 1]} : vector<16x256xf32> to vector<16x240xf32>
    %21 = tpu.concatenate %19, %20 in 1 : vector<16x16xf32>, vector<16x240xf32> -> vector<16x256xf32>
    %c1 = arith.constant 1 : index
    %c0_16 = arith.constant 0 : index
    %c0_17 = arith.constant 0 : index
    %22 = vector.load %arg12[%c1, %c0_16, %c0_17] : memref<9x1x256xf32, #tpu.memory_space<vmem>>, vector<1x1x256xf32>
    %23 = vector.shape_cast %22 : vector<1x1x256xf32> to vector<1x256xf32>
    %24 = vector.broadcast %23 : vector<1x256xf32> to vector<16x256xf32>
    %25 = arith.mulf %21, %24 : vector<16x256xf32>
    %26 = arith.addf %17, %25 : vector<16x256xf32>
    %27 = vector.extract_strided_slice %9 {offsets = [32, 0], sizes = [16, 256], strides = [1, 1]} : vector<144x256xf32> to vector<16x256xf32>
    %28 = vector.extract_strided_slice %27 {offsets = [0, 241], sizes = [16, 15], strides = [1, 1]} : vector<16x256xf32> to vector<16x15xf32>
    %29 = vector.extract_strided_slice %27 {offsets = [0, 0], sizes = [16, 241], strides = [1, 1]} : vector<16x256xf32> to vector<16x241xf32>
    %30 = tpu.concatenate %28, %29 in 1 : vector<16x15xf32>, vector<16x241xf32> -> vector<16x256xf32>
    %c2 = arith.constant 2 : index
    %c0_18 = arith.constant 0 : index
    %c0_19 = arith.constant 0 : index
    %31 = vector.load %arg12[%c2, %c0_18, %c0_19] : memref<9x1x256xf32, #tpu.memory_space<vmem>>, vector<1x1x256xf32>
    %32 = vector.shape_cast %31 : vector<1x1x256xf32> to vector<1x256xf32>
    %33 = vector.broadcast %32 : vector<1x256xf32> to vector<16x256xf32>
    %34 = arith.mulf %30, %33 : vector<16x256xf32>
    %35 = arith.addf %26, %34 : vector<16x256xf32>
    %36 = vector.extract_strided_slice %9 {offsets = [48, 0], sizes = [16, 256], strides = [1, 1]} : vector<144x256xf32> to vector<16x256xf32>
    %37 = vector.extract_strided_slice %36 {offsets = [0, 255], sizes = [16, 1], strides = [1, 1]} : vector<16x256xf32> to vector<16x1xf32>
    %38 = vector.extract_strided_slice %36 {offsets = [0, 0], sizes = [16, 255], strides = [1, 1]} : vector<16x256xf32> to vector<16x255xf32>
    %39 = tpu.concatenate %37, %38 in 1 : vector<16x1xf32>, vector<16x255xf32> -> vector<16x256xf32>
    %c3 = arith.constant 3 : index
    %c0_20 = arith.constant 0 : index
    %c0_21 = arith.constant 0 : index
    %40 = vector.load %arg12[%c3, %c0_20, %c0_21] : memref<9x1x256xf32, #tpu.memory_space<vmem>>, vector<1x1x256xf32>
    %41 = vector.shape_cast %40 : vector<1x1x256xf32> to vector<1x256xf32>
    %42 = vector.broadcast %41 : vector<1x256xf32> to vector<16x256xf32>
    %43 = arith.mulf %39, %42 : vector<16x256xf32>
    %44 = arith.addf %35, %43 : vector<16x256xf32>
    %45 = vector.extract_strided_slice %9 {offsets = [64, 0], sizes = [16, 256], strides = [1, 1]} : vector<144x256xf32> to vector<16x256xf32>
    %46 = arith.addf %44, %45 : vector<16x256xf32>
    %47 = vector.extract_strided_slice %9 {offsets = [80, 0], sizes = [16, 256], strides = [1, 1]} : vector<144x256xf32> to vector<16x256xf32>
    %48 = vector.extract_strided_slice %47 {offsets = [0, 1], sizes = [16, 255], strides = [1, 1]} : vector<16x256xf32> to vector<16x255xf32>
    %49 = vector.extract_strided_slice %47 {offsets = [0, 0], sizes = [16, 1], strides = [1, 1]} : vector<16x256xf32> to vector<16x1xf32>
    %50 = tpu.concatenate %48, %49 in 1 : vector<16x255xf32>, vector<16x1xf32> -> vector<16x256xf32>
    %c5 = arith.constant 5 : index
    %c0_22 = arith.constant 0 : index
    %c0_23 = arith.constant 0 : index
    %51 = vector.load %arg12[%c5, %c0_22, %c0_23] : memref<9x1x256xf32, #tpu.memory_space<vmem>>, vector<1x1x256xf32>
    %52 = vector.shape_cast %51 : vector<1x1x256xf32> to vector<1x256xf32>
    %53 = vector.broadcast %52 : vector<1x256xf32> to vector<16x256xf32>
    %54 = arith.mulf %50, %53 : vector<16x256xf32>
    %55 = arith.addf %46, %54 : vector<16x256xf32>
    %56 = vector.extract_strided_slice %9 {offsets = [96, 0], sizes = [16, 256], strides = [1, 1]} : vector<144x256xf32> to vector<16x256xf32>
    %57 = vector.extract_strided_slice %56 {offsets = [0, 15], sizes = [16, 241], strides = [1, 1]} : vector<16x256xf32> to vector<16x241xf32>
    %58 = vector.extract_strided_slice %56 {offsets = [0, 0], sizes = [16, 15], strides = [1, 1]} : vector<16x256xf32> to vector<16x15xf32>
    %59 = tpu.concatenate %57, %58 in 1 : vector<16x241xf32>, vector<16x15xf32> -> vector<16x256xf32>
    %c6 = arith.constant 6 : index
    %c0_24 = arith.constant 0 : index
    %c0_25 = arith.constant 0 : index
    %60 = vector.load %arg12[%c6, %c0_24, %c0_25] : memref<9x1x256xf32, #tpu.memory_space<vmem>>, vector<1x1x256xf32>
    %61 = vector.shape_cast %60 : vector<1x1x256xf32> to vector<1x256xf32>
    %62 = vector.broadcast %61 : vector<1x256xf32> to vector<16x256xf32>
    %63 = arith.mulf %59, %62 : vector<16x256xf32>
    %64 = arith.addf %55, %63 : vector<16x256xf32>
    %65 = vector.extract_strided_slice %9 {offsets = [112, 0], sizes = [16, 256], strides = [1, 1]} : vector<144x256xf32> to vector<16x256xf32>
    %66 = vector.extract_strided_slice %65 {offsets = [0, 16], sizes = [16, 240], strides = [1, 1]} : vector<16x256xf32> to vector<16x240xf32>
    %67 = vector.extract_strided_slice %65 {offsets = [0, 0], sizes = [16, 16], strides = [1, 1]} : vector<16x256xf32> to vector<16x16xf32>
    %68 = tpu.concatenate %66, %67 in 1 : vector<16x240xf32>, vector<16x16xf32> -> vector<16x256xf32>
    %c7 = arith.constant 7 : index
    %c0_26 = arith.constant 0 : index
    %c0_27 = arith.constant 0 : index
    %69 = vector.load %arg12[%c7, %c0_26, %c0_27] : memref<9x1x256xf32, #tpu.memory_space<vmem>>, vector<1x1x256xf32>
    %70 = vector.shape_cast %69 : vector<1x1x256xf32> to vector<1x256xf32>
    %71 = vector.broadcast %70 : vector<1x256xf32> to vector<16x256xf32>
    %72 = arith.mulf %68, %71 : vector<16x256xf32>
    %73 = arith.addf %64, %72 : vector<16x256xf32>
    %74 = vector.extract_strided_slice %9 {offsets = [128, 0], sizes = [16, 256], strides = [1, 1]} : vector<144x256xf32> to vector<16x256xf32>
    %75 = vector.extract_strided_slice %74 {offsets = [0, 17], sizes = [16, 239], strides = [1, 1]} : vector<16x256xf32> to vector<16x239xf32>
    %76 = vector.extract_strided_slice %74 {offsets = [0, 0], sizes = [16, 17], strides = [1, 1]} : vector<16x256xf32> to vector<16x17xf32>
    %77 = tpu.concatenate %75, %76 in 1 : vector<16x239xf32>, vector<16x17xf32> -> vector<16x256xf32>
    %c8 = arith.constant 8 : index
    %c0_28 = arith.constant 0 : index
    %c0_29 = arith.constant 0 : index
    %78 = vector.load %arg12[%c8, %c0_28, %c0_29] : memref<9x1x256xf32, #tpu.memory_space<vmem>>, vector<1x1x256xf32>
    %79 = vector.shape_cast %78 : vector<1x1x256xf32> to vector<1x256xf32>
    %80 = vector.broadcast %79 : vector<1x256xf32> to vector<16x256xf32>
    %81 = arith.mulf %77, %80 : vector<16x256xf32>
    %82 = arith.addf %73, %81 : vector<16x256xf32>
    %c0_30 = arith.constant 0 : index
    %c0_31 = arith.constant 0 : index
    %c0_32 = arith.constant 0 : index
    %83 = vector.load %arg7[%c0_30, %c0_31, %c0_32] : memref<3x16x1xf32, #tpu.memory_space<vmem>>, vector<1x16x1xf32>
    %84 = vector.shape_cast %83 : vector<1x16x1xf32> to vector<16x1xf32>
    %85 = vector.broadcast %84 : vector<16x1xf32> to vector<16x256xf32>
    %86 = arith.addf %82, %85 : vector<16x256xf32>
    %cst_33 = arith.constant 0.000000e+00 : f32
    %87 = vector.broadcast %cst_33 : f32 to vector<16x256xf32>
    %88 = arith.cmpf ogt, %86, %87 : vector<16x256xf32>
    %cst_34 = arith.constant 2.000000e-01 : f32
    %89 = vector.broadcast %cst_34 : f32 to vector<16x256xf32>
    %90 = arith.mulf %89, %86 : vector<16x256xf32>
    %91 = arith.select %88, %86, %90 : vector<16x256xi1>, vector<16x256xf32>
    %92 = arith.truncf %91 : vector<16x256xf32> to vector<16x256xbf16>
    %c16 = arith.constant 16 : index
    %c0_35 = arith.constant 0 : index
    %93 = vector.load %arg14[%c16, %c0_35] : memref<80x256xbf16, #tpu.memory_space<vmem>>, vector<16x256xbf16>
    tpu.vector_store %arg14[%c16, %c0_35], %92 {strides = array<i32>} : memref<80x256xbf16, #tpu.memory_space<vmem>>, vector<16x256xbf16>,
    %c0_36 = arith.constant 0 : index
    %c0_37 = arith.constant 0 : index
    %c0_38 = arith.constant 0 : index
    %94 = vector.load %arg3[%c0_36, %c0_37, %c0_38] : memref<3x144x32xbf16, #tpu.memory_space<vmem>>, vector<1x144x32xbf16>
    %95 = vector.shape_cast %94 : vector<1x144x32xbf16> to vector<144x32xbf16>
    %c0_39 = arith.constant 0 : index
    %c0_40 = arith.constant 0 : index
    %96 = vector.load %arg14[%c0_39, %c0_40] : memref<80x256xbf16, #tpu.memory_space<vmem>>, vector<32x256xbf16>
    %cst_41 = arith.constant dense<0.000000e+00> : vector<144x256xf32>
    %97 = tpu.matmul %95, %96, %cst_41 {dimension_numbers = #tpu.dot_dimension_numbers<[1], [0], [0], [1], [0, 0, 1, 1], [], []>} : vector<144x32xbf16>, vector<32x256xbf16>, vector<144x256xf32> -> vector<144x256xf32>
    %98 = vector.extract_strided_slice %97 {offsets = [0, 0], sizes = [16, 256], strides = [1, 1]} : vector<144x256xf32> to vector<16x256xf32>
    %99 = vector.extract_strided_slice %98 {offsets = [0, 239], sizes = [16, 17], strides = [1, 1]} : vector<16x256xf32> to vector<16x17xf32>
    %100 = vector.extract_strided_slice %98 {offsets = [0, 0], sizes = [16, 239], strides = [1, 1]} : vector<16x256xf32> to vector<16x239xf32>
    %101 = tpu.concatenate %99, %100 in 1 : vector<16x17xf32>, vector<16x239xf32> -> vector<16x256xf32>
    %c0_42 = arith.constant 0 : index
    %c0_43 = arith.constant 0 : index
    %c0_44 = arith.constant 0 : index
    %102 = vector.load %arg12[%c0_42, %c0_43, %c0_44] : memref<9x1x256xf32, #tpu.memory_space<vmem>>, vector<1x1x256xf32>
    %103 = vector.shape_cast %102 : vector<1x1x256xf32> to vector<1x256xf32>
    %104 = vector.broadcast %103 : vector<1x256xf32> to vector<16x256xf32>
    %105 = arith.mulf %101, %104 : vector<16x256xf32>
    %106 = vector.extract_strided_slice %97 {offsets = [16, 0], sizes = [16, 256], strides = [1, 1]} : vector<144x256xf32> to vector<16x256xf32>
    %107 = vector.extract_strided_slice %106 {offsets = [0, 240], sizes = [16, 16], strides = [1, 1]} : vector<16x256xf32> to vector<16x16xf32>
    %108 = vector.extract_strided_slice %106 {offsets = [0, 0], sizes = [16, 240], strides = [1, 1]} : vector<16x256xf32> to vector<16x240xf32>
    %109 = tpu.concatenate %107, %108 in 1 : vector<16x16xf32>, vector<16x240xf32> -> vector<16x256xf32>
    %c1_45 = arith.constant 1 : index
    %c0_46 = arith.constant 0 : index
    %c0_47 = arith.constant 0 : index
    %110 = vector.load %arg12[%c1_45, %c0_46, %c0_47] : memref<9x1x256xf32, #tpu.memory_space<vmem>>, vector<1x1x256xf32>
    %111 = vector.shape_cast %110 : vector<1x1x256xf32> to vector<1x256xf32>
    %112 = vector.broadcast %111 : vector<1x256xf32> to vector<16x256xf32>
    %113 = arith.mulf %109, %112 : vector<16x256xf32>
    %114 = arith.addf %105, %113 : vector<16x256xf32>
    %115 = vector.extract_strided_slice %97 {offsets = [32, 0], sizes = [16, 256], strides = [1, 1]} : vector<144x256xf32> to vector<16x256xf32>
    %116 = vector.extract_strided_slice %115 {offsets = [0, 241], sizes = [16, 15], strides = [1, 1]} : vector<16x256xf32> to vector<16x15xf32>
    %117 = vector.extract_strided_slice %115 {offsets = [0, 0], sizes = [16, 241], strides = [1, 1]} : vector<16x256xf32> to vector<16x241xf32>
    %118 = tpu.concatenate %116, %117 in 1 : vector<16x15xf32>, vector<16x241xf32> -> vector<16x256xf32>
    %c2_48 = arith.constant 2 : index
    %c0_49 = arith.constant 0 : index
    %c0_50 = arith.constant 0 : index
    %119 = vector.load %arg12[%c2_48, %c0_49, %c0_50] : memref<9x1x256xf32, #tpu.memory_space<vmem>>, vector<1x1x256xf32>
    %120 = vector.shape_cast %119 : vector<1x1x256xf32> to vector<1x256xf32>
    %121 = vector.broadcast %120 : vector<1x256xf32> to vector<16x256xf32>
    %122 = arith.mulf %118, %121 : vector<16x256xf32>
    %123 = arith.addf %114, %122 : vector<16x256xf32>
    %124 = vector.extract_strided_slice %97 {offsets = [48, 0], sizes = [16, 256], strides = [1, 1]} : vector<144x256xf32> to vector<16x256xf32>
    %125 = vector.extract_strided_slice %124 {offsets = [0, 255], sizes = [16, 1], strides = [1, 1]} : vector<16x256xf32> to vector<16x1xf32>
    %126 = vector.extract_strided_slice %124 {offsets = [0, 0], sizes = [16, 255], strides = [1, 1]} : vector<16x256xf32> to vector<16x255xf32>
    %127 = tpu.concatenate %125, %126 in 1 : vector<16x1xf32>, vector<16x255xf32> -> vector<16x256xf32>
    %c3_51 = arith.constant 3 : index
    %c0_52 = arith.constant 0 : index
    %c0_53 = arith.constant 0 : index
    %128 = vector.load %arg12[%c3_51, %c0_52, %c0_53] : memref<9x1x256xf32, #tpu.memory_space<vmem>>, vector<1x1x256xf32>
    %129 = vector.shape_cast %128 : vector<1x1x256xf32> to vector<1x256xf32>
    %130 = vector.broadcast %129 : vector<1x256xf32> to vector<16x256xf32>
    %131 = arith.mulf %127, %130 : vector<16x256xf32>
    %132 = arith.addf %123, %131 : vector<16x256xf32>
    %133 = vector.extract_strided_slice %97 {offsets = [64, 0], sizes = [16, 256], strides = [1, 1]} : vector<144x256xf32> to vector<16x256xf32>
    %134 = arith.addf %132, %133 : vector<16x256xf32>
    %135 = vector.extract_strided_slice %97 {offsets = [80, 0], sizes = [16, 256], strides = [1, 1]} : vector<144x256xf32> to vector<16x256xf32>
    %136 = vector.extract_strided_slice %135 {offsets = [0, 1], sizes = [16, 255], strides = [1, 1]} : vector<16x256xf32> to vector<16x255xf32>
    %137 = vector.extract_strided_slice %135 {offsets = [0, 0], sizes = [16, 1], strides = [1, 1]} : vector<16x256xf32> to vector<16x1xf32>
    %138 = tpu.concatenate %136, %137 in 1 : vector<16x255xf32>, vector<16x1xf32> -> vector<16x256xf32>
    %c5_54 = arith.constant 5 : index
    %c0_55 = arith.constant 0 : index
    %c0_56 = arith.constant 0 : index
    %139 = vector.load %arg12[%c5_54, %c0_55, %c0_56] : memref<9x1x256xf32, #tpu.memory_space<vmem>>, vector<1x1x256xf32>
    %140 = vector.shape_cast %139 : vector<1x1x256xf32> to vector<1x256xf32>
    %141 = vector.broadcast %140 : vector<1x256xf32> to vector<16x256xf32>
    %142 = arith.mulf %138, %141 : vector<16x256xf32>
    %143 = arith.addf %134, %142 : vector<16x256xf32>
    %144 = vector.extract_strided_slice %97 {offsets = [96, 0], sizes = [16, 256], strides = [1, 1]} : vector<144x256xf32> to vector<16x256xf32>
    %145 = vector.extract_strided_slice %144 {offsets = [0, 15], sizes = [16, 241], strides = [1, 1]} : vector<16x256xf32> to vector<16x241xf32>
    %146 = vector.extract_strided_slice %144 {offsets = [0, 0], sizes = [16, 15], strides = [1, 1]} : vector<16x256xf32> to vector<16x15xf32>
    %147 = tpu.concatenate %145, %146 in 1 : vector<16x241xf32>, vector<16x15xf32> -> vector<16x256xf32>
    %c6_57 = arith.constant 6 : index
    %c0_58 = arith.constant 0 : index
    %c0_59 = arith.constant 0 : index
    %148 = vector.load %arg12[%c6_57, %c0_58, %c0_59] : memref<9x1x256xf32, #tpu.memory_space<vmem>>, vector<1x1x256xf32>
    %149 = vector.shape_cast %148 : vector<1x1x256xf32> to vector<1x256xf32>
    %150 = vector.broadcast %149 : vector<1x256xf32> to vector<16x256xf32>
    %151 = arith.mulf %147, %150 : vector<16x256xf32>
    %152 = arith.addf %143, %151 : vector<16x256xf32>
    %153 = vector.extract_strided_slice %97 {offsets = [112, 0], sizes = [16, 256], strides = [1, 1]} : vector<144x256xf32> to vector<16x256xf32>
    %154 = vector.extract_strided_slice %153 {offsets = [0, 16], sizes = [16, 240], strides = [1, 1]} : vector<16x256xf32> to vector<16x240xf32>
    %155 = vector.extract_strided_slice %153 {offsets = [0, 0], sizes = [16, 16], strides = [1, 1]} : vector<16x256xf32> to vector<16x16xf32>
    %156 = tpu.concatenate %154, %155 in 1 : vector<16x240xf32>, vector<16x16xf32> -> vector<16x256xf32>
    %c7_60 = arith.constant 7 : index
    %c0_61 = arith.constant 0 : index
    %c0_62 = arith.constant 0 : index
    %157 = vector.load %arg12[%c7_60, %c0_61, %c0_62] : memref<9x1x256xf32, #tpu.memory_space<vmem>>, vector<1x1x256xf32>
    %158 = vector.shape_cast %157 : vector<1x1x256xf32> to vector<1x256xf32>
    %159 = vector.broadcast %158 : vector<1x256xf32> to vector<16x256xf32>
    %160 = arith.mulf %156, %159 : vector<16x256xf32>
    %161 = arith.addf %152, %160 : vector<16x256xf32>
    %162 = vector.extract_strided_slice %97 {offsets = [128, 0], sizes = [16, 256], strides = [1, 1]} : vector<144x256xf32> to vector<16x256xf32>
    %163 = vector.extract_strided_slice %162 {offsets = [0, 17], sizes = [16, 239], strides = [1, 1]} : vector<16x256xf32> to vector<16x239xf32>
    %164 = vector.extract_strided_slice %162 {offsets = [0, 0], sizes = [16, 17], strides = [1, 1]} : vector<16x256xf32> to vector<16x17xf32>
    %165 = tpu.concatenate %163, %164 in 1 : vector<16x239xf32>, vector<16x17xf32> -> vector<16x256xf32>
    %c8_63 = arith.constant 8 : index
    %c0_64 = arith.constant 0 : index
    %c0_65 = arith.constant 0 : index
    %166 = vector.load %arg12[%c8_63, %c0_64, %c0_65] : memref<9x1x256xf32, #tpu.memory_space<vmem>>, vector<1x1x256xf32>
    %167 = vector.shape_cast %166 : vector<1x1x256xf32> to vector<1x256xf32>
    %168 = vector.broadcast %167 : vector<1x256xf32> to vector<16x256xf32>
    %169 = arith.mulf %165, %168 : vector<16x256xf32>
    %170 = arith.addf %161, %169 : vector<16x256xf32>
    %c0_66 = arith.constant 0 : index
    %c0_67 = arith.constant 0 : index
    %c0_68 = arith.constant 0 : index
    %171 = vector.load %arg8[%c0_66, %c0_67, %c0_68] : memref<3x16x1xf32, #tpu.memory_space<vmem>>, vector<1x16x1xf32>
    %172 = vector.shape_cast %171 : vector<1x16x1xf32> to vector<16x1xf32>
    %173 = vector.broadcast %172 : vector<16x1xf32> to vector<16x256xf32>
    %174 = arith.addf %170, %173 : vector<16x256xf32>
    %cst_69 = arith.constant 0.000000e+00 : f32
    %175 = vector.broadcast %cst_69 : f32 to vector<16x256xf32>
    %176 = arith.cmpf ogt, %174, %175 : vector<16x256xf32>
    %cst_70 = arith.constant 2.000000e-01 : f32
    %177 = vector.broadcast %cst_70 : f32 to vector<16x256xf32>
    %178 = arith.mulf %177, %174 : vector<16x256xf32>
    %179 = arith.select %176, %174, %178 : vector<16x256xi1>, vector<16x256xf32>
    %180 = arith.truncf %179 : vector<16x256xf32> to vector<16x256xbf16>
    %c32 = arith.constant 32 : index
    %c0_71 = arith.constant 0 : index
    %181 = vector.load %arg14[%c32, %c0_71] : memref<80x256xbf16, #tpu.memory_space<vmem>>, vector<16x256xbf16>
    tpu.vector_store %arg14[%c32, %c0_71], %180 {strides = array<i32>} : memref<80x256xbf16, #tpu.memory_space<vmem>>, vector<16x256xbf16>,
    %c0_72 = arith.constant 0 : index
    %c0_73 = arith.constant 0 : index
    %c0_74 = arith.constant 0 : index
    %182 = vector.load %arg4[%c0_72, %c0_73, %c0_74] : memref<3x144x48xbf16, #tpu.memory_space<vmem>>, vector<1x144x48xbf16>
    %183 = vector.shape_cast %182 : vector<1x144x48xbf16> to vector<144x48xbf16>
    %c0_75 = arith.constant 0 : index
    %c0_76 = arith.constant 0 : index
    %184 = vector.load %arg14[%c0_75, %c0_76] : memref<80x256xbf16, #tpu.memory_space<vmem>>, vector<48x256xbf16>
    %cst_77 = arith.constant dense<0.000000e+00> : vector<144x256xf32>
    %185 = tpu.matmul %183, %184, %cst_77 {dimension_numbers = #tpu.dot_dimension_numbers<[1], [0], [0], [1], [0, 0, 1, 1], [], []>} : vector<144x48xbf16>, vector<48x256xbf16>, vector<144x256xf32> -> vector<144x256xf32>
    %186 = vector.extract_strided_slice %185 {offsets = [0, 0], sizes = [16, 256], strides = [1, 1]} : vector<144x256xf32> to vector<16x256xf32>
    %187 = vector.extract_strided_slice %186 {offsets = [0, 239], sizes = [16, 17], strides = [1, 1]} : vector<16x256xf32> to vector<16x17xf32>
    %188 = vector.extract_strided_slice %186 {offsets = [0, 0], sizes = [16, 239], strides = [1, 1]} : vector<16x256xf32> to vector<16x239xf32>
    %189 = tpu.concatenate %187, %188 in 1 : vector<16x17xf32>, vector<16x239xf32> -> vector<16x256xf32>
    %c0_78 = arith.constant 0 : index
    %c0_79 = arith.constant 0 : index
    %c0_80 = arith.constant 0 : index
    %190 = vector.load %arg12[%c0_78, %c0_79, %c0_80] : memref<9x1x256xf32, #tpu.memory_space<vmem>>, vector<1x1x256xf32>
    %191 = vector.shape_cast %190 : vector<1x1x256xf32> to vector<1x256xf32>
    %192 = vector.broadcast %191 : vector<1x256xf32> to vector<16x256xf32>
    %193 = arith.mulf %189, %192 : vector<16x256xf32>
    %194 = vector.extract_strided_slice %185 {offsets = [16, 0], sizes = [16, 256], strides = [1, 1]} : vector<144x256xf32> to vector<16x256xf32>
    %195 = vector.extract_strided_slice %194 {offsets = [0, 240], sizes = [16, 16], strides = [1, 1]} : vector<16x256xf32> to vector<16x16xf32>
    %196 = vector.extract_strided_slice %194 {offsets = [0, 0], sizes = [16, 240], strides = [1, 1]} : vector<16x256xf32> to vector<16x240xf32>
    %197 = tpu.concatenate %195, %196 in 1 : vector<16x16xf32>, vector<16x240xf32> -> vector<16x256xf32>
    %c1_81 = arith.constant 1 : index
    %c0_82 = arith.constant 0 : index
    %c0_83 = arith.constant 0 : index
    %198 = vector.load %arg12[%c1_81, %c0_82, %c0_83] : memref<9x1x256xf32, #tpu.memory_space<vmem>>, vector<1x1x256xf32>
    %199 = vector.shape_cast %198 : vector<1x1x256xf32> to vector<1x256xf32>
    %200 = vector.broadcast %199 : vector<1x256xf32> to vector<16x256xf32>
    %201 = arith.mulf %197, %200 : vector<16x256xf32>
    %202 = arith.addf %193, %201 : vector<16x256xf32>
    %203 = vector.extract_strided_slice %185 {offsets = [32, 0], sizes = [16, 256], strides = [1, 1]} : vector<144x256xf32> to vector<16x256xf32>
    %204 = vector.extract_strided_slice %203 {offsets = [0, 241], sizes = [16, 15], strides = [1, 1]} : vector<16x256xf32> to vector<16x15xf32>
    %205 = vector.extract_strided_slice %203 {offsets = [0, 0], sizes = [16, 241], strides = [1, 1]} : vector<16x256xf32> to vector<16x241xf32>
    %206 = tpu.concatenate %204, %205 in 1 : vector<16x15xf32>, vector<16x241xf32> -> vector<16x256xf32>
    %c2_84 = arith.constant 2 : index
    %c0_85 = arith.constant 0 : index
    %c0_86 = arith.constant 0 : index
    %207 = vector.load %arg12[%c2_84, %c0_85, %c0_86] : memref<9x1x256xf32, #tpu.memory_space<vmem>>, vector<1x1x256xf32>
    %208 = vector.shape_cast %207 : vector<1x1x256xf32> to vector<1x256xf32>
    %209 = vector.broadcast %208 : vector<1x256xf32> to vector<16x256xf32>
    %210 = arith.mulf %206, %209 : vector<16x256xf32>
    %211 = arith.addf %202, %210 : vector<16x256xf32>
    %212 = vector.extract_strided_slice %185 {offsets = [48, 0], sizes = [16, 256], strides = [1, 1]} : vector<144x256xf32> to vector<16x256xf32>
    %213 = vector.extract_strided_slice %212 {offsets = [0, 255], sizes = [16, 1], strides = [1, 1]} : vector<16x256xf32> to vector<16x1xf32>
    %214 = vector.extract_strided_slice %212 {offsets = [0, 0], sizes = [16, 255], strides = [1, 1]} : vector<16x256xf32> to vector<16x255xf32>
    %215 = tpu.concatenate %213, %214 in 1 : vector<16x1xf32>, vector<16x255xf32> -> vector<16x256xf32>
    %c3_87 = arith.constant 3 : index
    %c0_88 = arith.constant 0 : index
    %c0_89 = arith.constant 0 : index
    %216 = vector.load %arg12[%c3_87, %c0_88, %c0_89] : memref<9x1x256xf32, #tpu.memory_space<vmem>>, vector<1x1x256xf32>
    %217 = vector.shape_cast %216 : vector<1x1x256xf32> to vector<1x256xf32>
    %218 = vector.broadcast %217 : vector<1x256xf32> to vector<16x256xf32>
    %219 = arith.mulf %215, %218 : vector<16x256xf32>
    %220 = arith.addf %211, %219 : vector<16x256xf32>
    %221 = vector.extract_strided_slice %185 {offsets = [64, 0], sizes = [16, 256], strides = [1, 1]} : vector<144x256xf32> to vector<16x256xf32>
    %222 = arith.addf %220, %221 : vector<16x256xf32>
    %223 = vector.extract_strided_slice %185 {offsets = [80, 0], sizes = [16, 256], strides = [1, 1]} : vector<144x256xf32> to vector<16x256xf32>
    %224 = vector.extract_strided_slice %223 {offsets = [0, 1], sizes = [16, 255], strides = [1, 1]} : vector<16x256xf32> to vector<16x255xf32>
    %225 = vector.extract_strided_slice %223 {offsets = [0, 0], sizes = [16, 1], strides = [1, 1]} : vector<16x256xf32> to vector<16x1xf32>
    %226 = tpu.concatenate %224, %225 in 1 : vector<16x255xf32>, vector<16x1xf32> -> vector<16x256xf32>
    %c5_90 = arith.constant 5 : index
    %c0_91 = arith.constant 0 : index
    %c0_92 = arith.constant 0 : index
    %227 = vector.load %arg12[%c5_90, %c0_91, %c0_92] : memref<9x1x256xf32, #tpu.memory_space<vmem>>, vector<1x1x256xf32>
    %228 = vector.shape_cast %227 : vector<1x1x256xf32> to vector<1x256xf32>
    %229 = vector.broadcast %228 : vector<1x256xf32> to vector<16x256xf32>
    %230 = arith.mulf %226, %229 : vector<16x256xf32>
    %231 = arith.addf %222, %230 : vector<16x256xf32>
    %232 = vector.extract_strided_slice %185 {offsets = [96, 0], sizes = [16, 256], strides = [1, 1]} : vector<144x256xf32> to vector<16x256xf32>
    %233 = vector.extract_strided_slice %232 {offsets = [0, 15], sizes = [16, 241], strides = [1, 1]} : vector<16x256xf32> to vector<16x241xf32>
    %234 = vector.extract_strided_slice %232 {offsets = [0, 0], sizes = [16, 15], strides = [1, 1]} : vector<16x256xf32> to vector<16x15xf32>
    %235 = tpu.concatenate %233, %234 in 1 : vector<16x241xf32>, vector<16x15xf32> -> vector<16x256xf32>
    %c6_93 = arith.constant 6 : index
    %c0_94 = arith.constant 0 : index
    %c0_95 = arith.constant 0 : index
    %236 = vector.load %arg12[%c6_93, %c0_94, %c0_95] : memref<9x1x256xf32, #tpu.memory_space<vmem>>, vector<1x1x256xf32>
    %237 = vector.shape_cast %236 : vector<1x1x256xf32> to vector<1x256xf32>
    %238 = vector.broadcast %237 : vector<1x256xf32> to vector<16x256xf32>
    %239 = arith.mulf %235, %238 : vector<16x256xf32>
    %240 = arith.addf %231, %239 : vector<16x256xf32>
    %241 = vector.extract_strided_slice %185 {offsets = [112, 0], sizes = [16, 256], strides = [1, 1]} : vector<144x256xf32> to vector<16x256xf32>
    %242 = vector.extract_strided_slice %241 {offsets = [0, 16], sizes = [16, 240], strides = [1, 1]} : vector<16x256xf32> to vector<16x240xf32>
    %243 = vector.extract_strided_slice %241 {offsets = [0, 0], sizes = [16, 16], strides = [1, 1]} : vector<16x256xf32> to vector<16x16xf32>
    %244 = tpu.concatenate %242, %243 in 1 : vector<16x240xf32>, vector<16x16xf32> -> vector<16x256xf32>
    %c7_96 = arith.constant 7 : index
    %c0_97 = arith.constant 0 : index
    %c0_98 = arith.constant 0 : index
    %245 = vector.load %arg12[%c7_96, %c0_97, %c0_98] : memref<9x1x256xf32, #tpu.memory_space<vmem>>, vector<1x1x256xf32>
    %246 = vector.shape_cast %245 : vector<1x1x256xf32> to vector<1x256xf32>
    %247 = vector.broadcast %246 : vector<1x256xf32> to vector<16x256xf32>
    %248 = arith.mulf %244, %247 : vector<16x256xf32>
    %249 = arith.addf %240, %248 : vector<16x256xf32>
    %250 = vector.extract_strided_slice %185 {offsets = [128, 0], sizes = [16, 256], strides = [1, 1]} : vector<144x256xf32> to vector<16x256xf32>
    %251 = vector.extract_strided_slice %250 {offsets = [0, 17], sizes = [16, 239], strides = [1, 1]} : vector<16x256xf32> to vector<16x239xf32>
    %252 = vector.extract_strided_slice %250 {offsets = [0, 0], sizes = [16, 17], strides = [1, 1]} : vector<16x256xf32> to vector<16x17xf32>
    %253 = tpu.concatenate %251, %252 in 1 : vector<16x239xf32>, vector<16x17xf32> -> vector<16x256xf32>
    %c8_99 = arith.constant 8 : index
    %c0_100 = arith.constant 0 : index
    %c0_101 = arith.constant 0 : index
    %254 = vector.load %arg12[%c8_99, %c0_100, %c0_101] : memref<9x1x256xf32, #tpu.memory_space<vmem>>, vector<1x1x256xf32>
    %255 = vector.shape_cast %254 : vector<1x1x256xf32> to vector<1x256xf32>
    %256 = vector.broadcast %255 : vector<1x256xf32> to vector<16x256xf32>
    %257 = arith.mulf %253, %256 : vector<16x256xf32>
    %258 = arith.addf %249, %257 : vector<16x256xf32>
    %c0_102 = arith.constant 0 : index
    %c0_103 = arith.constant 0 : index
    %c0_104 = arith.constant 0 : index
    %259 = vector.load %arg9[%c0_102, %c0_103, %c0_104] : memref<3x16x1xf32, #tpu.memory_space<vmem>>, vector<1x16x1xf32>
    %260 = vector.shape_cast %259 : vector<1x16x1xf32> to vector<16x1xf32>
    %261 = vector.broadcast %260 : vector<16x1xf32> to vector<16x256xf32>
    %262 = arith.addf %258, %261 : vector<16x256xf32>
    %cst_105 = arith.constant 0.000000e+00 : f32
    %263 = vector.broadcast %cst_105 : f32 to vector<16x256xf32>
    %264 = arith.cmpf ogt, %262, %263 : vector<16x256xf32>
    %cst_106 = arith.constant 2.000000e-01 : f32
    %265 = vector.broadcast %cst_106 : f32 to vector<16x256xf32>
    %266 = arith.mulf %265, %262 : vector<16x256xf32>
    %267 = arith.select %264, %262, %266 : vector<16x256xi1>, vector<16x256xf32>
    %268 = arith.truncf %267 : vector<16x256xf32> to vector<16x256xbf16>
    %c48 = arith.constant 48 : index
    %c0_107 = arith.constant 0 : index
    %269 = vector.load %arg14[%c48, %c0_107] : memref<80x256xbf16, #tpu.memory_space<vmem>>, vector<16x256xbf16>
    tpu.vector_store %arg14[%c48, %c0_107], %268 {strides = array<i32>} : memref<80x256xbf16, #tpu.memory_space<vmem>>, vector<16x256xbf16>,
    %c0_108 = arith.constant 0 : index
    %c0_109 = arith.constant 0 : index
    %c0_110 = arith.constant 0 : index
    %270 = vector.load %arg5[%c0_108, %c0_109, %c0_110] : memref<3x144x64xbf16, #tpu.memory_space<vmem>>, vector<1x144x64xbf16>
    %271 = vector.shape_cast %270 : vector<1x144x64xbf16> to vector<144x64xbf16>
    %c0_111 = arith.constant 0 : index
    %c0_112 = arith.constant 0 : index
    %272 = vector.load %arg14[%c0_111, %c0_112] : memref<80x256xbf16, #tpu.memory_space<vmem>>, vector<64x256xbf16>
    %cst_113 = arith.constant dense<0.000000e+00> : vector<144x256xf32>
    %273 = tpu.matmul %271, %272, %cst_113 {dimension_numbers = #tpu.dot_dimension_numbers<[1], [0], [0], [1], [0, 0, 1, 1], [], []>} : vector<144x64xbf16>, vector<64x256xbf16>, vector<144x256xf32> -> vector<144x256xf32>
    %274 = vector.extract_strided_slice %273 {offsets = [0, 0], sizes = [16, 256], strides = [1, 1]} : vector<144x256xf32> to vector<16x256xf32>
    %275 = vector.extract_strided_slice %274 {offsets = [0, 239], sizes = [16, 17], strides = [1, 1]} : vector<16x256xf32> to vector<16x17xf32>
    %276 = vector.extract_strided_slice %274 {offsets = [0, 0], sizes = [16, 239], strides = [1, 1]} : vector<16x256xf32> to vector<16x239xf32>
    %277 = tpu.concatenate %275, %276 in 1 : vector<16x17xf32>, vector<16x239xf32> -> vector<16x256xf32>
    %c0_114 = arith.constant 0 : index
    %c0_115 = arith.constant 0 : index
    %c0_116 = arith.constant 0 : index
    %278 = vector.load %arg12[%c0_114, %c0_115, %c0_116] : memref<9x1x256xf32, #tpu.memory_space<vmem>>, vector<1x1x256xf32>
    %279 = vector.shape_cast %278 : vector<1x1x256xf32> to vector<1x256xf32>
    %280 = vector.broadcast %279 : vector<1x256xf32> to vector<16x256xf32>
    %281 = arith.mulf %277, %280 : vector<16x256xf32>
    %282 = vector.extract_strided_slice %273 {offsets = [16, 0], sizes = [16, 256], strides = [1, 1]} : vector<144x256xf32> to vector<16x256xf32>
    %283 = vector.extract_strided_slice %282 {offsets = [0, 240], sizes = [16, 16], strides = [1, 1]} : vector<16x256xf32> to vector<16x16xf32>
    %284 = vector.extract_strided_slice %282 {offsets = [0, 0], sizes = [16, 240], strides = [1, 1]} : vector<16x256xf32> to vector<16x240xf32>
    %285 = tpu.concatenate %283, %284 in 1 : vector<16x16xf32>, vector<16x240xf32> -> vector<16x256xf32>
    %c1_117 = arith.constant 1 : index
    %c0_118 = arith.constant 0 : index
    %c0_119 = arith.constant 0 : index
    %286 = vector.load %arg12[%c1_117, %c0_118, %c0_119] : memref<9x1x256xf32, #tpu.memory_space<vmem>>, vector<1x1x256xf32>
    %287 = vector.shape_cast %286 : vector<1x1x256xf32> to vector<1x256xf32>
    %288 = vector.broadcast %287 : vector<1x256xf32> to vector<16x256xf32>
    %289 = arith.mulf %285, %288 : vector<16x256xf32>
    %290 = arith.addf %281, %289 : vector<16x256xf32>
    %291 = vector.extract_strided_slice %273 {offsets = [32, 0], sizes = [16, 256], strides = [1, 1]} : vector<144x256xf32> to vector<16x256xf32>
    %292 = vector.extract_strided_slice %291 {offsets = [0, 241], sizes = [16, 15], strides = [1, 1]} : vector<16x256xf32> to vector<16x15xf32>
    %293 = vector.extract_strided_slice %291 {offsets = [0, 0], sizes = [16, 241], strides = [1, 1]} : vector<16x256xf32> to vector<16x241xf32>
    %294 = tpu.concatenate %292, %293 in 1 : vector<16x15xf32>, vector<16x241xf32> -> vector<16x256xf32>
    %c2_120 = arith.constant 2 : index
    %c0_121 = arith.constant 0 : index
    %c0_122 = arith.constant 0 : index
    %295 = vector.load %arg12[%c2_120, %c0_121, %c0_122] : memref<9x1x256xf32, #tpu.memory_space<vmem>>, vector<1x1x256xf32>
    %296 = vector.shape_cast %295 : vector<1x1x256xf32> to vector<1x256xf32>
    %297 = vector.broadcast %296 : vector<1x256xf32> to vector<16x256xf32>
    %298 = arith.mulf %294, %297 : vector<16x256xf32>
    %299 = arith.addf %290, %298 : vector<16x256xf32>
    %300 = vector.extract_strided_slice %273 {offsets = [48, 0], sizes = [16, 256], strides = [1, 1]} : vector<144x256xf32> to vector<16x256xf32>
    %301 = vector.extract_strided_slice %300 {offsets = [0, 255], sizes = [16, 1], strides = [1, 1]} : vector<16x256xf32> to vector<16x1xf32>
    %302 = vector.extract_strided_slice %300 {offsets = [0, 0], sizes = [16, 255], strides = [1, 1]} : vector<16x256xf32> to vector<16x255xf32>
    %303 = tpu.concatenate %301, %302 in 1 : vector<16x1xf32>, vector<16x255xf32> -> vector<16x256xf32>
    %c3_123 = arith.constant 3 : index
    %c0_124 = arith.constant 0 : index
    %c0_125 = arith.constant 0 : index
    %304 = vector.load %arg12[%c3_123, %c0_124, %c0_125] : memref<9x1x256xf32, #tpu.memory_space<vmem>>, vector<1x1x256xf32>
    %305 = vector.shape_cast %304 : vector<1x1x256xf32> to vector<1x256xf32>
    %306 = vector.broadcast %305 : vector<1x256xf32> to vector<16x256xf32>
    %307 = arith.mulf %303, %306 : vector<16x256xf32>
    %308 = arith.addf %299, %307 : vector<16x256xf32>
    %309 = vector.extract_strided_slice %273 {offsets = [64, 0], sizes = [16, 256], strides = [1, 1]} : vector<144x256xf32> to vector<16x256xf32>
    %310 = arith.addf %308, %309 : vector<16x256xf32>
    %311 = vector.extract_strided_slice %273 {offsets = [80, 0], sizes = [16, 256], strides = [1, 1]} : vector<144x256xf32> to vector<16x256xf32>
    %312 = vector.extract_strided_slice %311 {offsets = [0, 1], sizes = [16, 255], strides = [1, 1]} : vector<16x256xf32> to vector<16x255xf32>
    %313 = vector.extract_strided_slice %311 {offsets = [0, 0], sizes = [16, 1], strides = [1, 1]} : vector<16x256xf32> to vector<16x1xf32>
    %314 = tpu.concatenate %312, %313 in 1 : vector<16x255xf32>, vector<16x1xf32> -> vector<16x256xf32>
    %c5_126 = arith.constant 5 : index
    %c0_127 = arith.constant 0 : index
    %c0_128 = arith.constant 0 : index
    %315 = vector.load %arg12[%c5_126, %c0_127, %c0_128] : memref<9x1x256xf32, #tpu.memory_space<vmem>>, vector<1x1x256xf32>
    %316 = vector.shape_cast %315 : vector<1x1x256xf32> to vector<1x256xf32>
    %317 = vector.broadcast %316 : vector<1x256xf32> to vector<16x256xf32>
    %318 = arith.mulf %314, %317 : vector<16x256xf32>
    %319 = arith.addf %310, %318 : vector<16x256xf32>
    %320 = vector.extract_strided_slice %273 {offsets = [96, 0], sizes = [16, 256], strides = [1, 1]} : vector<144x256xf32> to vector<16x256xf32>
    %321 = vector.extract_strided_slice %320 {offsets = [0, 15], sizes = [16, 241], strides = [1, 1]} : vector<16x256xf32> to vector<16x241xf32>
    %322 = vector.extract_strided_slice %320 {offsets = [0, 0], sizes = [16, 15], strides = [1, 1]} : vector<16x256xf32> to vector<16x15xf32>
    %323 = tpu.concatenate %321, %322 in 1 : vector<16x241xf32>, vector<16x15xf32> -> vector<16x256xf32>
    %c6_129 = arith.constant 6 : index
    %c0_130 = arith.constant 0 : index
    %c0_131 = arith.constant 0 : index
    %324 = vector.load %arg12[%c6_129, %c0_130, %c0_131] : memref<9x1x256xf32, #tpu.memory_space<vmem>>, vector<1x1x256xf32>
    %325 = vector.shape_cast %324 : vector<1x1x256xf32> to vector<1x256xf32>
    %326 = vector.broadcast %325 : vector<1x256xf32> to vector<16x256xf32>
    %327 = arith.mulf %323, %326 : vector<16x256xf32>
    %328 = arith.addf %319, %327 : vector<16x256xf32>
    %329 = vector.extract_strided_slice %273 {offsets = [112, 0], sizes = [16, 256], strides = [1, 1]} : vector<144x256xf32> to vector<16x256xf32>
    %330 = vector.extract_strided_slice %329 {offsets = [0, 16], sizes = [16, 240], strides = [1, 1]} : vector<16x256xf32> to vector<16x240xf32>
    %331 = vector.extract_strided_slice %329 {offsets = [0, 0], sizes = [16, 16], strides = [1, 1]} : vector<16x256xf32> to vector<16x16xf32>
    %332 = tpu.concatenate %330, %331 in 1 : vector<16x240xf32>, vector<16x16xf32> -> vector<16x256xf32>
    %c7_132 = arith.constant 7 : index
    %c0_133 = arith.constant 0 : index
    %c0_134 = arith.constant 0 : index
    %333 = vector.load %arg12[%c7_132, %c0_133, %c0_134] : memref<9x1x256xf32, #tpu.memory_space<vmem>>, vector<1x1x256xf32>
    %334 = vector.shape_cast %333 : vector<1x1x256xf32> to vector<1x256xf32>
    %335 = vector.broadcast %334 : vector<1x256xf32> to vector<16x256xf32>
    %336 = arith.mulf %332, %335 : vector<16x256xf32>
    %337 = arith.addf %328, %336 : vector<16x256xf32>
    %338 = vector.extract_strided_slice %273 {offsets = [128, 0], sizes = [16, 256], strides = [1, 1]} : vector<144x256xf32> to vector<16x256xf32>
    %339 = vector.extract_strided_slice %338 {offsets = [0, 17], sizes = [16, 239], strides = [1, 1]} : vector<16x256xf32> to vector<16x239xf32>
    %340 = vector.extract_strided_slice %338 {offsets = [0, 0], sizes = [16, 17], strides = [1, 1]} : vector<16x256xf32> to vector<16x17xf32>
    %341 = tpu.concatenate %339, %340 in 1 : vector<16x239xf32>, vector<16x17xf32> -> vector<16x256xf32>
    %c8_135 = arith.constant 8 : index
    %c0_136 = arith.constant 0 : index
    %c0_137 = arith.constant 0 : index
    %342 = vector.load %arg12[%c8_135, %c0_136, %c0_137] : memref<9x1x256xf32, #tpu.memory_space<vmem>>, vector<1x1x256xf32>
    %343 = vector.shape_cast %342 : vector<1x1x256xf32> to vector<1x256xf32>
    %344 = vector.broadcast %343 : vector<1x256xf32> to vector<16x256xf32>
    %345 = arith.mulf %341, %344 : vector<16x256xf32>
    %346 = arith.addf %337, %345 : vector<16x256xf32>
    %c0_138 = arith.constant 0 : index
    %c0_139 = arith.constant 0 : index
    %c0_140 = arith.constant 0 : index
    %347 = vector.load %arg10[%c0_138, %c0_139, %c0_140] : memref<3x16x1xf32, #tpu.memory_space<vmem>>, vector<1x16x1xf32>
    %348 = vector.shape_cast %347 : vector<1x16x1xf32> to vector<16x1xf32>
    %349 = vector.broadcast %348 : vector<16x1xf32> to vector<16x256xf32>
    %350 = arith.addf %346, %349 : vector<16x256xf32>
    %cst_141 = arith.constant 0.000000e+00 : f32
    %351 = vector.broadcast %cst_141 : f32 to vector<16x256xf32>
    %352 = arith.cmpf ogt, %350, %351 : vector<16x256xf32>
    %cst_142 = arith.constant 2.000000e-01 : f32
    %353 = vector.broadcast %cst_142 : f32 to vector<16x256xf32>
    %354 = arith.mulf %353, %350 : vector<16x256xf32>
    %355 = arith.select %352, %350, %354 : vector<16x256xi1>, vector<16x256xf32>
    %356 = arith.truncf %355 : vector<16x256xf32> to vector<16x256xbf16>
    %c64 = arith.constant 64 : index
    %c0_143 = arith.constant 0 : index
    %357 = vector.load %arg14[%c64, %c0_143] : memref<80x256xbf16, #tpu.memory_space<vmem>>, vector<16x256xbf16>
    tpu.vector_store %arg14[%c64, %c0_143], %356 {strides = array<i32>} : memref<80x256xbf16, #tpu.memory_space<vmem>>, vector<16x256xbf16>,
    %c0_144 = arith.constant 0 : index
    %c0_145 = arith.constant 0 : index
    %c0_146 = arith.constant 0 : index
    %358 = vector.load %arg6[%c0_144, %c0_145, %c0_146] : memref<3x144x80xbf16, #tpu.memory_space<vmem>>, vector<1x144x80xbf16>
    %359 = vector.shape_cast %358 : vector<1x144x80xbf16> to vector<144x80xbf16>
    %c0_147 = arith.constant 0 : index
    %c0_148 = arith.constant 0 : index
    %360 = vector.load %arg14[%c0_147, %c0_148] : memref<80x256xbf16, #tpu.memory_space<vmem>>, vector<80x256xbf16>
    %cst_149 = arith.constant dense<0.000000e+00> : vector<144x256xf32>
    %361 = tpu.matmul %359, %360, %cst_149 {dimension_numbers = #tpu.dot_dimension_numbers<[1], [0], [0], [1], [0, 0, 1, 1], [], []>} : vector<144x80xbf16>, vector<80x256xbf16>, vector<144x256xf32> -> vector<144x256xf32>
    %362 = vector.extract_strided_slice %361 {offsets = [0, 0], sizes = [16, 256], strides = [1, 1]} : vector<144x256xf32> to vector<16x256xf32>
    %363 = vector.extract_strided_slice %362 {offsets = [0, 239], sizes = [16, 17], strides = [1, 1]} : vector<16x256xf32> to vector<16x17xf32>
    %364 = vector.extract_strided_slice %362 {offsets = [0, 0], sizes = [16, 239], strides = [1, 1]} : vector<16x256xf32> to vector<16x239xf32>
    %365 = tpu.concatenate %363, %364 in 1 : vector<16x17xf32>, vector<16x239xf32> -> vector<16x256xf32>
    %c0_150 = arith.constant 0 : index
    %c0_151 = arith.constant 0 : index
    %c0_152 = arith.constant 0 : index
    %366 = vector.load %arg12[%c0_150, %c0_151, %c0_152] : memref<9x1x256xf32, #tpu.memory_space<vmem>>, vector<1x1x256xf32>
    %367 = vector.shape_cast %366 : vector<1x1x256xf32> to vector<1x256xf32>
    %368 = vector.broadcast %367 : vector<1x256xf32> to vector<16x256xf32>
    %369 = arith.mulf %365, %368 : vector<16x256xf32>
    %370 = vector.extract_strided_slice %361 {offsets = [16, 0], sizes = [16, 256], strides = [1, 1]} : vector<144x256xf32> to vector<16x256xf32>
    %371 = vector.extract_strided_slice %370 {offsets = [0, 240], sizes = [16, 16], strides = [1, 1]} : vector<16x256xf32> to vector<16x16xf32>
    %372 = vector.extract_strided_slice %370 {offsets = [0, 0], sizes = [16, 240], strides = [1, 1]} : vector<16x256xf32> to vector<16x240xf32>
    %373 = tpu.concatenate %371, %372 in 1 : vector<16x16xf32>, vector<16x240xf32> -> vector<16x256xf32>
    %c1_153 = arith.constant 1 : index
    %c0_154 = arith.constant 0 : index
    %c0_155 = arith.constant 0 : index
    %374 = vector.load %arg12[%c1_153, %c0_154, %c0_155] : memref<9x1x256xf32, #tpu.memory_space<vmem>>, vector<1x1x256xf32>
    %375 = vector.shape_cast %374 : vector<1x1x256xf32> to vector<1x256xf32>
    %376 = vector.broadcast %375 : vector<1x256xf32> to vector<16x256xf32>
    %377 = arith.mulf %373, %376 : vector<16x256xf32>
    %378 = arith.addf %369, %377 : vector<16x256xf32>
    %379 = vector.extract_strided_slice %361 {offsets = [32, 0], sizes = [16, 256], strides = [1, 1]} : vector<144x256xf32> to vector<16x256xf32>
    %380 = vector.extract_strided_slice %379 {offsets = [0, 241], sizes = [16, 15], strides = [1, 1]} : vector<16x256xf32> to vector<16x15xf32>
    %381 = vector.extract_strided_slice %379 {offsets = [0, 0], sizes = [16, 241], strides = [1, 1]} : vector<16x256xf32> to vector<16x241xf32>
    %382 = tpu.concatenate %380, %381 in 1 : vector<16x15xf32>, vector<16x241xf32> -> vector<16x256xf32>
    %c2_156 = arith.constant 2 : index
    %c0_157 = arith.constant 0 : index
    %c0_158 = arith.constant 0 : index
    %383 = vector.load %arg12[%c2_156, %c0_157, %c0_158] : memref<9x1x256xf32, #tpu.memory_space<vmem>>, vector<1x1x256xf32>
    %384 = vector.shape_cast %383 : vector<1x1x256xf32> to vector<1x256xf32>
    %385 = vector.broadcast %384 : vector<1x256xf32> to vector<16x256xf32>
    %386 = arith.mulf %382, %385 : vector<16x256xf32>
    %387 = arith.addf %378, %386 : vector<16x256xf32>
    %388 = vector.extract_strided_slice %361 {offsets = [48, 0], sizes = [16, 256], strides = [1, 1]} : vector<144x256xf32> to vector<16x256xf32>
    %389 = vector.extract_strided_slice %388 {offsets = [0, 255], sizes = [16, 1], strides = [1, 1]} : vector<16x256xf32> to vector<16x1xf32>
    %390 = vector.extract_strided_slice %388 {offsets = [0, 0], sizes = [16, 255], strides = [1, 1]} : vector<16x256xf32> to vector<16x255xf32>
    %391 = tpu.concatenate %389, %390 in 1 : vector<16x1xf32>, vector<16x255xf32> -> vector<16x256xf32>
    %c3_159 = arith.constant 3 : index
    %c0_160 = arith.constant 0 : index
    %c0_161 = arith.constant 0 : index
    %392 = vector.load %arg12[%c3_159, %c0_160, %c0_161] : memref<9x1x256xf32, #tpu.memory_space<vmem>>, vector<1x1x256xf32>
    %393 = vector.shape_cast %392 : vector<1x1x256xf32> to vector<1x256xf32>
    %394 = vector.broadcast %393 : vector<1x256xf32> to vector<16x256xf32>
    %395 = arith.mulf %391, %394 : vector<16x256xf32>
    %396 = arith.addf %387, %395 : vector<16x256xf32>
    %397 = vector.extract_strided_slice %361 {offsets = [64, 0], sizes = [16, 256], strides = [1, 1]} : vector<144x256xf32> to vector<16x256xf32>
    %398 = arith.addf %396, %397 : vector<16x256xf32>
    %399 = vector.extract_strided_slice %361 {offsets = [80, 0], sizes = [16, 256], strides = [1, 1]} : vector<144x256xf32> to vector<16x256xf32>
    %400 = vector.extract_strided_slice %399 {offsets = [0, 1], sizes = [16, 255], strides = [1, 1]} : vector<16x256xf32> to vector<16x255xf32>
    %401 = vector.extract_strided_slice %399 {offsets = [0, 0], sizes = [16, 1], strides = [1, 1]} : vector<16x256xf32> to vector<16x1xf32>
    %402 = tpu.concatenate %400, %401 in 1 : vector<16x255xf32>, vector<16x1xf32> -> vector<16x256xf32>
    %c5_162 = arith.constant 5 : index
    %c0_163 = arith.constant 0 : index
    %c0_164 = arith.constant 0 : index
    %403 = vector.load %arg12[%c5_162, %c0_163, %c0_164] : memref<9x1x256xf32, #tpu.memory_space<vmem>>, vector<1x1x256xf32>
    %404 = vector.shape_cast %403 : vector<1x1x256xf32> to vector<1x256xf32>
    %405 = vector.broadcast %404 : vector<1x256xf32> to vector<16x256xf32>
    %406 = arith.mulf %402, %405 : vector<16x256xf32>
    %407 = arith.addf %398, %406 : vector<16x256xf32>
    %408 = vector.extract_strided_slice %361 {offsets = [96, 0], sizes = [16, 256], strides = [1, 1]} : vector<144x256xf32> to vector<16x256xf32>
    %409 = vector.extract_strided_slice %408 {offsets = [0, 15], sizes = [16, 241], strides = [1, 1]} : vector<16x256xf32> to vector<16x241xf32>
    %410 = vector.extract_strided_slice %408 {offsets = [0, 0], sizes = [16, 15], strides = [1, 1]} : vector<16x256xf32> to vector<16x15xf32>
    %411 = tpu.concatenate %409, %410 in 1 : vector<16x241xf32>, vector<16x15xf32> -> vector<16x256xf32>
    %c6_165 = arith.constant 6 : index
    %c0_166 = arith.constant 0 : index
    %c0_167 = arith.constant 0 : index
    %412 = vector.load %arg12[%c6_165, %c0_166, %c0_167] : memref<9x1x256xf32, #tpu.memory_space<vmem>>, vector<1x1x256xf32>
    %413 = vector.shape_cast %412 : vector<1x1x256xf32> to vector<1x256xf32>
    %414 = vector.broadcast %413 : vector<1x256xf32> to vector<16x256xf32>
    %415 = arith.mulf %411, %414 : vector<16x256xf32>
    %416 = arith.addf %407, %415 : vector<16x256xf32>
    %417 = vector.extract_strided_slice %361 {offsets = [112, 0], sizes = [16, 256], strides = [1, 1]} : vector<144x256xf32> to vector<16x256xf32>
    %418 = vector.extract_strided_slice %417 {offsets = [0, 16], sizes = [16, 240], strides = [1, 1]} : vector<16x256xf32> to vector<16x240xf32>
    %419 = vector.extract_strided_slice %417 {offsets = [0, 0], sizes = [16, 16], strides = [1, 1]} : vector<16x256xf32> to vector<16x16xf32>
    %420 = tpu.concatenate %418, %419 in 1 : vector<16x240xf32>, vector<16x16xf32> -> vector<16x256xf32>
    %c7_168 = arith.constant 7 : index
    %c0_169 = arith.constant 0 : index
    %c0_170 = arith.constant 0 : index
    %421 = vector.load %arg12[%c7_168, %c0_169, %c0_170] : memref<9x1x256xf32, #tpu.memory_space<vmem>>, vector<1x1x256xf32>
    %422 = vector.shape_cast %421 : vector<1x1x256xf32> to vector<1x256xf32>
    %423 = vector.broadcast %422 : vector<1x256xf32> to vector<16x256xf32>
    %424 = arith.mulf %420, %423 : vector<16x256xf32>
    %425 = arith.addf %416, %424 : vector<16x256xf32>
    %426 = vector.extract_strided_slice %361 {offsets = [128, 0], sizes = [16, 256], strides = [1, 1]} : vector<144x256xf32> to vector<16x256xf32>
    %427 = vector.extract_strided_slice %426 {offsets = [0, 17], sizes = [16, 239], strides = [1, 1]} : vector<16x256xf32> to vector<16x239xf32>
    %428 = vector.extract_strided_slice %426 {offsets = [0, 0], sizes = [16, 17], strides = [1, 1]} : vector<16x256xf32> to vector<16x17xf32>
    %429 = tpu.concatenate %427, %428 in 1 : vector<16x239xf32>, vector<16x17xf32> -> vector<16x256xf32>
    %c8_171 = arith.constant 8 : index
    %c0_172 = arith.constant 0 : index
    %c0_173 = arith.constant 0 : index
    %430 = vector.load %arg12[%c8_171, %c0_172, %c0_173] : memref<9x1x256xf32, #tpu.memory_space<vmem>>, vector<1x1x256xf32>
    %431 = vector.shape_cast %430 : vector<1x1x256xf32> to vector<1x256xf32>
    %432 = vector.broadcast %431 : vector<1x256xf32> to vector<16x256xf32>
    %433 = arith.mulf %429, %432 : vector<16x256xf32>
    %434 = arith.addf %425, %433 : vector<16x256xf32>
    %c0_174 = arith.constant 0 : index
    %c0_175 = arith.constant 0 : index
    %c0_176 = arith.constant 0 : index
    %435 = vector.load %arg11[%c0_174, %c0_175, %c0_176] : memref<3x16x1xf32, #tpu.memory_space<vmem>>, vector<1x16x1xf32>
    %436 = vector.shape_cast %435 : vector<1x16x1xf32> to vector<16x1xf32>
    %437 = vector.broadcast %436 : vector<16x1xf32> to vector<16x256xf32>
    %438 = arith.addf %434, %437 : vector<16x256xf32>
    %cst_177 = arith.constant 2.000000e-01 : f32
    %439 = vector.broadcast %cst_177 : f32 to vector<16x256xf32>
    %440 = arith.mulf %439, %438 : vector<16x256xf32>
    %c0_178 = arith.constant 0 : index
    %c0_179 = arith.constant 0 : index
    %441 = vector.load %arg15[%c0_178, %c0_179] : memref<16x256xf32, #tpu.memory_space<vmem>>, vector<16x256xf32>
    %442 = arith.addf %440, %441 : vector<16x256xf32>
    %c0_180 = arith.constant 0 : index
    %c0_181 = arith.constant 0 : index
    %443 = vector.load %arg15[%c0_180, %c0_181] : memref<16x256xf32, #tpu.memory_space<vmem>>, vector<16x256xf32>
    tpu.vector_store %arg15[%c0_180, %c0_181], %442 {strides = array<i32>} : memref<16x256xf32, #tpu.memory_space<vmem>>, vector<16x256xf32>,
    %c0_182 = arith.constant 0 : index
    %c0_183 = arith.constant 0 : index
    %444 = vector.load %arg15[%c0_182, %c0_183] : memref<16x256xf32, #tpu.memory_space<vmem>>, vector<16x256xf32>
    %445 = arith.truncf %444 : vector<16x256xf32> to vector<16x256xbf16>
    %c0_184 = arith.constant 0 : index
    %c0_185 = arith.constant 0 : index
    %446 = vector.load %arg14[%c0_184, %c0_185] : memref<80x256xbf16, #tpu.memory_space<vmem>>, vector<16x256xbf16>
    tpu.vector_store %arg14[%c0_184, %c0_185], %445 {strides = array<i32>} : memref<80x256xbf16, #tpu.memory_space<vmem>>, vector<16x256xbf16>,
    %c1_186 = arith.constant 1 : index
    %c0_187 = arith.constant 0 : index
    %c0_188 = arith.constant 0 : index
    %447 = vector.load %arg2[%c1_186, %c0_187, %c0_188] : memref<3x144x16xbf16, #tpu.memory_space<vmem>>, vector<1x144x16xbf16>
    %448 = vector.shape_cast %447 : vector<1x144x16xbf16> to vector<144x16xbf16>
    %c0_189 = arith.constant 0 : index
    %c0_190 = arith.constant 0 : index
    %449 = vector.load %arg14[%c0_189, %c0_190] : memref<80x256xbf16, #tpu.memory_space<vmem>>, vector<16x256xbf16>
    %cst_191 = arith.constant dense<0.000000e+00> : vector<144x256xf32>
    %450 = tpu.matmul %448, %449, %cst_191 {dimension_numbers = #tpu.dot_dimension_numbers<[1], [0], [0], [1], [0, 0, 1, 1], [], []>} : vector<144x16xbf16>, vector<16x256xbf16>, vector<144x256xf32> -> vector<144x256xf32>
    %451 = vector.extract_strided_slice %450 {offsets = [0, 0], sizes = [16, 256], strides = [1, 1]} : vector<144x256xf32> to vector<16x256xf32>
    %452 = vector.extract_strided_slice %451 {offsets = [0, 239], sizes = [16, 17], strides = [1, 1]} : vector<16x256xf32> to vector<16x17xf32>
    %453 = vector.extract_strided_slice %451 {offsets = [0, 0], sizes = [16, 239], strides = [1, 1]} : vector<16x256xf32> to vector<16x239xf32>
    %454 = tpu.concatenate %452, %453 in 1 : vector<16x17xf32>, vector<16x239xf32> -> vector<16x256xf32>
    %c0_192 = arith.constant 0 : index
    %c0_193 = arith.constant 0 : index
    %c0_194 = arith.constant 0 : index
    %455 = vector.load %arg12[%c0_192, %c0_193, %c0_194] : memref<9x1x256xf32, #tpu.memory_space<vmem>>, vector<1x1x256xf32>
    %456 = vector.shape_cast %455 : vector<1x1x256xf32> to vector<1x256xf32>
    %457 = vector.broadcast %456 : vector<1x256xf32> to vector<16x256xf32>
    %458 = arith.mulf %454, %457 : vector<16x256xf32>
    %459 = vector.extract_strided_slice %450 {offsets = [16, 0], sizes = [16, 256], strides = [1, 1]} : vector<144x256xf32> to vector<16x256xf32>
    %460 = vector.extract_strided_slice %459 {offsets = [0, 240], sizes = [16, 16], strides = [1, 1]} : vector<16x256xf32> to vector<16x16xf32>
    %461 = vector.extract_strided_slice %459 {offsets = [0, 0], sizes = [16, 240], strides = [1, 1]} : vector<16x256xf32> to vector<16x240xf32>
    %462 = tpu.concatenate %460, %461 in 1 : vector<16x16xf32>, vector<16x240xf32> -> vector<16x256xf32>
    %c1_195 = arith.constant 1 : index
    %c0_196 = arith.constant 0 : index
    %c0_197 = arith.constant 0 : index
    %463 = vector.load %arg12[%c1_195, %c0_196, %c0_197] : memref<9x1x256xf32, #tpu.memory_space<vmem>>, vector<1x1x256xf32>
    %464 = vector.shape_cast %463 : vector<1x1x256xf32> to vector<1x256xf32>
    %465 = vector.broadcast %464 : vector<1x256xf32> to vector<16x256xf32>
    %466 = arith.mulf %462, %465 : vector<16x256xf32>
    %467 = arith.addf %458, %466 : vector<16x256xf32>
    %468 = vector.extract_strided_slice %450 {offsets = [32, 0], sizes = [16, 256], strides = [1, 1]} : vector<144x256xf32> to vector<16x256xf32>
    %469 = vector.extract_strided_slice %468 {offsets = [0, 241], sizes = [16, 15], strides = [1, 1]} : vector<16x256xf32> to vector<16x15xf32>
    %470 = vector.extract_strided_slice %468 {offsets = [0, 0], sizes = [16, 241], strides = [1, 1]} : vector<16x256xf32> to vector<16x241xf32>
    %471 = tpu.concatenate %469, %470 in 1 : vector<16x15xf32>, vector<16x241xf32> -> vector<16x256xf32>
    %c2_198 = arith.constant 2 : index
    %c0_199 = arith.constant 0 : index
    %c0_200 = arith.constant 0 : index
    %472 = vector.load %arg12[%c2_198, %c0_199, %c0_200] : memref<9x1x256xf32, #tpu.memory_space<vmem>>, vector<1x1x256xf32>
    %473 = vector.shape_cast %472 : vector<1x1x256xf32> to vector<1x256xf32>
    %474 = vector.broadcast %473 : vector<1x256xf32> to vector<16x256xf32>
    %475 = arith.mulf %471, %474 : vector<16x256xf32>
    %476 = arith.addf %467, %475 : vector<16x256xf32>
    %477 = vector.extract_strided_slice %450 {offsets = [48, 0], sizes = [16, 256], strides = [1, 1]} : vector<144x256xf32> to vector<16x256xf32>
    %478 = vector.extract_strided_slice %477 {offsets = [0, 255], sizes = [16, 1], strides = [1, 1]} : vector<16x256xf32> to vector<16x1xf32>
    %479 = vector.extract_strided_slice %477 {offsets = [0, 0], sizes = [16, 255], strides = [1, 1]} : vector<16x256xf32> to vector<16x255xf32>
    %480 = tpu.concatenate %478, %479 in 1 : vector<16x1xf32>, vector<16x255xf32> -> vector<16x256xf32>
    %c3_201 = arith.constant 3 : index
    %c0_202 = arith.constant 0 : index
    %c0_203 = arith.constant 0 : index
    %481 = vector.load %arg12[%c3_201, %c0_202, %c0_203] : memref<9x1x256xf32, #tpu.memory_space<vmem>>, vector<1x1x256xf32>
    %482 = vector.shape_cast %481 : vector<1x1x256xf32> to vector<1x256xf32>
    %483 = vector.broadcast %482 : vector<1x256xf32> to vector<16x256xf32>
    %484 = arith.mulf %480, %483 : vector<16x256xf32>
    %485 = arith.addf %476, %484 : vector<16x256xf32>
    %486 = vector.extract_strided_slice %450 {offsets = [64, 0], sizes = [16, 256], strides = [1, 1]} : vector<144x256xf32> to vector<16x256xf32>
    %487 = arith.addf %485, %486 : vector<16x256xf32>
    %488 = vector.extract_strided_slice %450 {offsets = [80, 0], sizes = [16, 256], strides = [1, 1]} : vector<144x256xf32> to vector<16x256xf32>
    %489 = vector.extract_strided_slice %488 {offsets = [0, 1], sizes = [16, 255], strides = [1, 1]} : vector<16x256xf32> to vector<16x255xf32>
    %490 = vector.extract_strided_slice %488 {offsets = [0, 0], sizes = [16, 1], strides = [1, 1]} : vector<16x256xf32> to vector<16x1xf32>
    %491 = tpu.concatenate %489, %490 in 1 : vector<16x255xf32>, vector<16x1xf32> -> vector<16x256xf32>
    %c5_204 = arith.constant 5 : index
    %c0_205 = arith.constant 0 : index
    %c0_206 = arith.constant 0 : index
    %492 = vector.load %arg12[%c5_204, %c0_205, %c0_206] : memref<9x1x256xf32, #tpu.memory_space<vmem>>, vector<1x1x256xf32>
    %493 = vector.shape_cast %492 : vector<1x1x256xf32> to vector<1x256xf32>
    %494 = vector.broadcast %493 : vector<1x256xf32> to vector<16x256xf32>
    %495 = arith.mulf %491, %494 : vector<16x256xf32>
    %496 = arith.addf %487, %495 : vector<16x256xf32>
    %497 = vector.extract_strided_slice %450 {offsets = [96, 0], sizes = [16, 256], strides = [1, 1]} : vector<144x256xf32> to vector<16x256xf32>
    %498 = vector.extract_strided_slice %497 {offsets = [0, 15], sizes = [16, 241], strides = [1, 1]} : vector<16x256xf32> to vector<16x241xf32>
    %499 = vector.extract_strided_slice %497 {offsets = [0, 0], sizes = [16, 15], strides = [1, 1]} : vector<16x256xf32> to vector<16x15xf32>
    %500 = tpu.concatenate %498, %499 in 1 : vector<16x241xf32>, vector<16x15xf32> -> vector<16x256xf32>
    %c6_207 = arith.constant 6 : index
    %c0_208 = arith.constant 0 : index
    %c0_209 = arith.constant 0 : index
    %501 = vector.load %arg12[%c6_207, %c0_208, %c0_209] : memref<9x1x256xf32, #tpu.memory_space<vmem>>, vector<1x1x256xf32>
    %502 = vector.shape_cast %501 : vector<1x1x256xf32> to vector<1x256xf32>
    %503 = vector.broadcast %502 : vector<1x256xf32> to vector<16x256xf32>
    %504 = arith.mulf %500, %503 : vector<16x256xf32>
    %505 = arith.addf %496, %504 : vector<16x256xf32>
    %506 = vector.extract_strided_slice %450 {offsets = [112, 0], sizes = [16, 256], strides = [1, 1]} : vector<144x256xf32> to vector<16x256xf32>
    %507 = vector.extract_strided_slice %506 {offsets = [0, 16], sizes = [16, 240], strides = [1, 1]} : vector<16x256xf32> to vector<16x240xf32>
    %508 = vector.extract_strided_slice %506 {offsets = [0, 0], sizes = [16, 16], strides = [1, 1]} : vector<16x256xf32> to vector<16x16xf32>
    %509 = tpu.concatenate %507, %508 in 1 : vector<16x240xf32>, vector<16x16xf32> -> vector<16x256xf32>
    %c7_210 = arith.constant 7 : index
    %c0_211 = arith.constant 0 : index
    %c0_212 = arith.constant 0 : index
    %510 = vector.load %arg12[%c7_210, %c0_211, %c0_212] : memref<9x1x256xf32, #tpu.memory_space<vmem>>, vector<1x1x256xf32>
    %511 = vector.shape_cast %510 : vector<1x1x256xf32> to vector<1x256xf32>
    %512 = vector.broadcast %511 : vector<1x256xf32> to vector<16x256xf32>
    %513 = arith.mulf %509, %512 : vector<16x256xf32>
    %514 = arith.addf %505, %513 : vector<16x256xf32>
    %515 = vector.extract_strided_slice %450 {offsets = [128, 0], sizes = [16, 256], strides = [1, 1]} : vector<144x256xf32> to vector<16x256xf32>
    %516 = vector.extract_strided_slice %515 {offsets = [0, 17], sizes = [16, 239], strides = [1, 1]} : vector<16x256xf32> to vector<16x239xf32>
    %517 = vector.extract_strided_slice %515 {offsets = [0, 0], sizes = [16, 17], strides = [1, 1]} : vector<16x256xf32> to vector<16x17xf32>
    %518 = tpu.concatenate %516, %517 in 1 : vector<16x239xf32>, vector<16x17xf32> -> vector<16x256xf32>
    %c8_213 = arith.constant 8 : index
    %c0_214 = arith.constant 0 : index
    %c0_215 = arith.constant 0 : index
    %519 = vector.load %arg12[%c8_213, %c0_214, %c0_215] : memref<9x1x256xf32, #tpu.memory_space<vmem>>, vector<1x1x256xf32>
    %520 = vector.shape_cast %519 : vector<1x1x256xf32> to vector<1x256xf32>
    %521 = vector.broadcast %520 : vector<1x256xf32> to vector<16x256xf32>
    %522 = arith.mulf %518, %521 : vector<16x256xf32>
    %523 = arith.addf %514, %522 : vector<16x256xf32>
    %c1_216 = arith.constant 1 : index
    %c0_217 = arith.constant 0 : index
    %c0_218 = arith.constant 0 : index
    %524 = vector.load %arg7[%c1_216, %c0_217, %c0_218] : memref<3x16x1xf32, #tpu.memory_space<vmem>>, vector<1x16x1xf32>
    %525 = vector.shape_cast %524 : vector<1x16x1xf32> to vector<16x1xf32>
    %526 = vector.broadcast %525 : vector<16x1xf32> to vector<16x256xf32>
    %527 = arith.addf %523, %526 : vector<16x256xf32>
    %cst_219 = arith.constant 0.000000e+00 : f32
    %528 = vector.broadcast %cst_219 : f32 to vector<16x256xf32>
    %529 = arith.cmpf ogt, %527, %528 : vector<16x256xf32>
    %cst_220 = arith.constant 2.000000e-01 : f32
    %530 = vector.broadcast %cst_220 : f32 to vector<16x256xf32>
    %531 = arith.mulf %530, %527 : vector<16x256xf32>
    %532 = arith.select %529, %527, %531 : vector<16x256xi1>, vector<16x256xf32>
    %533 = arith.truncf %532 : vector<16x256xf32> to vector<16x256xbf16>
    %c16_221 = arith.constant 16 : index
    %c0_222 = arith.constant 0 : index
    %534 = vector.load %arg14[%c16_221, %c0_222] : memref<80x256xbf16, #tpu.memory_space<vmem>>, vector<16x256xbf16>
    tpu.vector_store %arg14[%c16_221, %c0_222], %533 {strides = array<i32>} : memref<80x256xbf16, #tpu.memory_space<vmem>>, vector<16x256xbf16>,
    %c1_223 = arith.constant 1 : index
    %c0_224 = arith.constant 0 : index
    %c0_225 = arith.constant 0 : index
    %535 = vector.load %arg3[%c1_223, %c0_224, %c0_225] : memref<3x144x32xbf16, #tpu.memory_space<vmem>>, vector<1x144x32xbf16>
    %536 = vector.shape_cast %535 : vector<1x144x32xbf16> to vector<144x32xbf16>
    %c0_226 = arith.constant 0 : index
    %c0_227 = arith.constant 0 : index
    %537 = vector.load %arg14[%c0_226, %c0_227] : memref<80x256xbf16, #tpu.memory_space<vmem>>, vector<32x256xbf16>
    %cst_228 = arith.constant dense<0.000000e+00> : vector<144x256xf32>
    %538 = tpu.matmul %536, %537, %cst_228 {dimension_numbers = #tpu.dot_dimension_numbers<[1], [0], [0], [1], [0, 0, 1, 1], [], []>} : vector<144x32xbf16>, vector<32x256xbf16>, vector<144x256xf32> -> vector<144x256xf32>
    %539 = vector.extract_strided_slice %538 {offsets = [0, 0], sizes = [16, 256], strides = [1, 1]} : vector<144x256xf32> to vector<16x256xf32>
    %540 = vector.extract_strided_slice %539 {offsets = [0, 239], sizes = [16, 17], strides = [1, 1]} : vector<16x256xf32> to vector<16x17xf32>
    %541 = vector.extract_strided_slice %539 {offsets = [0, 0], sizes = [16, 239], strides = [1, 1]} : vector<16x256xf32> to vector<16x239xf32>
    %542 = tpu.concatenate %540, %541 in 1 : vector<16x17xf32>, vector<16x239xf32> -> vector<16x256xf32>
    %c0_229 = arith.constant 0 : index
    %c0_230 = arith.constant 0 : index
    %c0_231 = arith.constant 0 : index
    %543 = vector.load %arg12[%c0_229, %c0_230, %c0_231] : memref<9x1x256xf32, #tpu.memory_space<vmem>>, vector<1x1x256xf32>
    %544 = vector.shape_cast %543 : vector<1x1x256xf32> to vector<1x256xf32>
    %545 = vector.broadcast %544 : vector<1x256xf32> to vector<16x256xf32>
    %546 = arith.mulf %542, %545 : vector<16x256xf32>
    %547 = vector.extract_strided_slice %538 {offsets = [16, 0], sizes = [16, 256], strides = [1, 1]} : vector<144x256xf32> to vector<16x256xf32>
    %548 = vector.extract_strided_slice %547 {offsets = [0, 240], sizes = [16, 16], strides = [1, 1]} : vector<16x256xf32> to vector<16x16xf32>
    %549 = vector.extract_strided_slice %547 {offsets = [0, 0], sizes = [16, 240], strides = [1, 1]} : vector<16x256xf32> to vector<16x240xf32>
    %550 = tpu.concatenate %548, %549 in 1 : vector<16x16xf32>, vector<16x240xf32> -> vector<16x256xf32>
    %c1_232 = arith.constant 1 : index
    %c0_233 = arith.constant 0 : index
    %c0_234 = arith.constant 0 : index
    %551 = vector.load %arg12[%c1_232, %c0_233, %c0_234] : memref<9x1x256xf32, #tpu.memory_space<vmem>>, vector<1x1x256xf32>
    %552 = vector.shape_cast %551 : vector<1x1x256xf32> to vector<1x256xf32>
    %553 = vector.broadcast %552 : vector<1x256xf32> to vector<16x256xf32>
    %554 = arith.mulf %550, %553 : vector<16x256xf32>
    %555 = arith.addf %546, %554 : vector<16x256xf32>
    %556 = vector.extract_strided_slice %538 {offsets = [32, 0], sizes = [16, 256], strides = [1, 1]} : vector<144x256xf32> to vector<16x256xf32>
    %557 = vector.extract_strided_slice %556 {offsets = [0, 241], sizes = [16, 15], strides = [1, 1]} : vector<16x256xf32> to vector<16x15xf32>
    %558 = vector.extract_strided_slice %556 {offsets = [0, 0], sizes = [16, 241], strides = [1, 1]} : vector<16x256xf32> to vector<16x241xf32>
    %559 = tpu.concatenate %557, %558 in 1 : vector<16x15xf32>, vector<16x241xf32> -> vector<16x256xf32>
    %c2_235 = arith.constant 2 : index
    %c0_236 = arith.constant 0 : index
    %c0_237 = arith.constant 0 : index
    %560 = vector.load %arg12[%c2_235, %c0_236, %c0_237] : memref<9x1x256xf32, #tpu.memory_space<vmem>>, vector<1x1x256xf32>
    %561 = vector.shape_cast %560 : vector<1x1x256xf32> to vector<1x256xf32>
    %562 = vector.broadcast %561 : vector<1x256xf32> to vector<16x256xf32>
    %563 = arith.mulf %559, %562 : vector<16x256xf32>
    %564 = arith.addf %555, %563 : vector<16x256xf32>
    %565 = vector.extract_strided_slice %538 {offsets = [48, 0], sizes = [16, 256], strides = [1, 1]} : vector<144x256xf32> to vector<16x256xf32>
    %566 = vector.extract_strided_slice %565 {offsets = [0, 255], sizes = [16, 1], strides = [1, 1]} : vector<16x256xf32> to vector<16x1xf32>
    %567 = vector.extract_strided_slice %565 {offsets = [0, 0], sizes = [16, 255], strides = [1, 1]} : vector<16x256xf32> to vector<16x255xf32>
    %568 = tpu.concatenate %566, %567 in 1 : vector<16x1xf32>, vector<16x255xf32> -> vector<16x256xf32>
    %c3_238 = arith.constant 3 : index
    %c0_239 = arith.constant 0 : index
    %c0_240 = arith.constant 0 : index
    %569 = vector.load %arg12[%c3_238, %c0_239, %c0_240] : memref<9x1x256xf32, #tpu.memory_space<vmem>>, vector<1x1x256xf32>
    %570 = vector.shape_cast %569 : vector<1x1x256xf32> to vector<1x256xf32>
    %571 = vector.broadcast %570 : vector<1x256xf32> to vector<16x256xf32>
    %572 = arith.mulf %568, %571 : vector<16x256xf32>
    %573 = arith.addf %564, %572 : vector<16x256xf32>
    %574 = vector.extract_strided_slice %538 {offsets = [64, 0], sizes = [16, 256], strides = [1, 1]} : vector<144x256xf32> to vector<16x256xf32>
    %575 = arith.addf %573, %574 : vector<16x256xf32>
    %576 = vector.extract_strided_slice %538 {offsets = [80, 0], sizes = [16, 256], strides = [1, 1]} : vector<144x256xf32> to vector<16x256xf32>
    %577 = vector.extract_strided_slice %576 {offsets = [0, 1], sizes = [16, 255], strides = [1, 1]} : vector<16x256xf32> to vector<16x255xf32>
    %578 = vector.extract_strided_slice %576 {offsets = [0, 0], sizes = [16, 1], strides = [1, 1]} : vector<16x256xf32> to vector<16x1xf32>
    %579 = tpu.concatenate %577, %578 in 1 : vector<16x255xf32>, vector<16x1xf32> -> vector<16x256xf32>
    %c5_241 = arith.constant 5 : index
    %c0_242 = arith.constant 0 : index
    %c0_243 = arith.constant 0 : index
    %580 = vector.load %arg12[%c5_241, %c0_242, %c0_243] : memref<9x1x256xf32, #tpu.memory_space<vmem>>, vector<1x1x256xf32>
    %581 = vector.shape_cast %580 : vector<1x1x256xf32> to vector<1x256xf32>
    %582 = vector.broadcast %581 : vector<1x256xf32> to vector<16x256xf32>
    %583 = arith.mulf %579, %582 : vector<16x256xf32>
    %584 = arith.addf %575, %583 : vector<16x256xf32>
    %585 = vector.extract_strided_slice %538 {offsets = [96, 0], sizes = [16, 256], strides = [1, 1]} : vector<144x256xf32> to vector<16x256xf32>
    %586 = vector.extract_strided_slice %585 {offsets = [0, 15], sizes = [16, 241], strides = [1, 1]} : vector<16x256xf32> to vector<16x241xf32>
    %587 = vector.extract_strided_slice %585 {offsets = [0, 0], sizes = [16, 15], strides = [1, 1]} : vector<16x256xf32> to vector<16x15xf32>
    %588 = tpu.concatenate %586, %587 in 1 : vector<16x241xf32>, vector<16x15xf32> -> vector<16x256xf32>
    %c6_244 = arith.constant 6 : index
    %c0_245 = arith.constant 0 : index
    %c0_246 = arith.constant 0 : index
    %589 = vector.load %arg12[%c6_244, %c0_245, %c0_246] : memref<9x1x256xf32, #tpu.memory_space<vmem>>, vector<1x1x256xf32>
    %590 = vector.shape_cast %589 : vector<1x1x256xf32> to vector<1x256xf32>
    %591 = vector.broadcast %590 : vector<1x256xf32> to vector<16x256xf32>
    %592 = arith.mulf %588, %591 : vector<16x256xf32>
    %593 = arith.addf %584, %592 : vector<16x256xf32>
    %594 = vector.extract_strided_slice %538 {offsets = [112, 0], sizes = [16, 256], strides = [1, 1]} : vector<144x256xf32> to vector<16x256xf32>
    %595 = vector.extract_strided_slice %594 {offsets = [0, 16], sizes = [16, 240], strides = [1, 1]} : vector<16x256xf32> to vector<16x240xf32>
    %596 = vector.extract_strided_slice %594 {offsets = [0, 0], sizes = [16, 16], strides = [1, 1]} : vector<16x256xf32> to vector<16x16xf32>
    %597 = tpu.concatenate %595, %596 in 1 : vector<16x240xf32>, vector<16x16xf32> -> vector<16x256xf32>
    %c7_247 = arith.constant 7 : index
    %c0_248 = arith.constant 0 : index
    %c0_249 = arith.constant 0 : index
    %598 = vector.load %arg12[%c7_247, %c0_248, %c0_249] : memref<9x1x256xf32, #tpu.memory_space<vmem>>, vector<1x1x256xf32>
    %599 = vector.shape_cast %598 : vector<1x1x256xf32> to vector<1x256xf32>
    %600 = vector.broadcast %599 : vector<1x256xf32> to vector<16x256xf32>
    %601 = arith.mulf %597, %600 : vector<16x256xf32>
    %602 = arith.addf %593, %601 : vector<16x256xf32>
    %603 = vector.extract_strided_slice %538 {offsets = [128, 0], sizes = [16, 256], strides = [1, 1]} : vector<144x256xf32> to vector<16x256xf32>
    %604 = vector.extract_strided_slice %603 {offsets = [0, 17], sizes = [16, 239], strides = [1, 1]} : vector<16x256xf32> to vector<16x239xf32>
    %605 = vector.extract_strided_slice %603 {offsets = [0, 0], sizes = [16, 17], strides = [1, 1]} : vector<16x256xf32> to vector<16x17xf32>
    %606 = tpu.concatenate %604, %605 in 1 : vector<16x239xf32>, vector<16x17xf32> -> vector<16x256xf32>
    %c8_250 = arith.constant 8 : index
    %c0_251 = arith.constant 0 : index
    %c0_252 = arith.constant 0 : index
    %607 = vector.load %arg12[%c8_250, %c0_251, %c0_252] : memref<9x1x256xf32, #tpu.memory_space<vmem>>, vector<1x1x256xf32>
    %608 = vector.shape_cast %607 : vector<1x1x256xf32> to vector<1x256xf32>
    %609 = vector.broadcast %608 : vector<1x256xf32> to vector<16x256xf32>
    %610 = arith.mulf %606, %609 : vector<16x256xf32>
    %611 = arith.addf %602, %610 : vector<16x256xf32>
    %c1_253 = arith.constant 1 : index
    %c0_254 = arith.constant 0 : index
    %c0_255 = arith.constant 0 : index
    %612 = vector.load %arg8[%c1_253, %c0_254, %c0_255] : memref<3x16x1xf32, #tpu.memory_space<vmem>>, vector<1x16x1xf32>
    %613 = vector.shape_cast %612 : vector<1x16x1xf32> to vector<16x1xf32>
    %614 = vector.broadcast %613 : vector<16x1xf32> to vector<16x256xf32>
    %615 = arith.addf %611, %614 : vector<16x256xf32>
    %cst_256 = arith.constant 0.000000e+00 : f32
    %616 = vector.broadcast %cst_256 : f32 to vector<16x256xf32>
    %617 = arith.cmpf ogt, %615, %616 : vector<16x256xf32>
    %cst_257 = arith.constant 2.000000e-01 : f32
    %618 = vector.broadcast %cst_257 : f32 to vector<16x256xf32>
    %619 = arith.mulf %618, %615 : vector<16x256xf32>
    %620 = arith.select %617, %615, %619 : vector<16x256xi1>, vector<16x256xf32>
    %621 = arith.truncf %620 : vector<16x256xf32> to vector<16x256xbf16>
    %c32_258 = arith.constant 32 : index
    %c0_259 = arith.constant 0 : index
    %622 = vector.load %arg14[%c32_258, %c0_259] : memref<80x256xbf16, #tpu.memory_space<vmem>>, vector<16x256xbf16>
    tpu.vector_store %arg14[%c32_258, %c0_259], %621 {strides = array<i32>} : memref<80x256xbf16, #tpu.memory_space<vmem>>, vector<16x256xbf16>,
    %c1_260 = arith.constant 1 : index
    %c0_261 = arith.constant 0 : index
    %c0_262 = arith.constant 0 : index
    %623 = vector.load %arg4[%c1_260, %c0_261, %c0_262] : memref<3x144x48xbf16, #tpu.memory_space<vmem>>, vector<1x144x48xbf16>
    %624 = vector.shape_cast %623 : vector<1x144x48xbf16> to vector<144x48xbf16>
    %c0_263 = arith.constant 0 : index
    %c0_264 = arith.constant 0 : index
    %625 = vector.load %arg14[%c0_263, %c0_264] : memref<80x256xbf16, #tpu.memory_space<vmem>>, vector<48x256xbf16>
    %cst_265 = arith.constant dense<0.000000e+00> : vector<144x256xf32>
    %626 = tpu.matmul %624, %625, %cst_265 {dimension_numbers = #tpu.dot_dimension_numbers<[1], [0], [0], [1], [0, 0, 1, 1], [], []>} : vector<144x48xbf16>, vector<48x256xbf16>, vector<144x256xf32> -> vector<144x256xf32>
    %627 = vector.extract_strided_slice %626 {offsets = [0, 0], sizes = [16, 256], strides = [1, 1]} : vector<144x256xf32> to vector<16x256xf32>
    %628 = vector.extract_strided_slice %627 {offsets = [0, 239], sizes = [16, 17], strides = [1, 1]} : vector<16x256xf32> to vector<16x17xf32>
    %629 = vector.extract_strided_slice %627 {offsets = [0, 0], sizes = [16, 239], strides = [1, 1]} : vector<16x256xf32> to vector<16x239xf32>
    %630 = tpu.concatenate %628, %629 in 1 : vector<16x17xf32>, vector<16x239xf32> -> vector<16x256xf32>
    %c0_266 = arith.constant 0 : index
    %c0_267 = arith.constant 0 : index
    %c0_268 = arith.constant 0 : index
    %631 = vector.load %arg12[%c0_266, %c0_267, %c0_268] : memref<9x1x256xf32, #tpu.memory_space<vmem>>, vector<1x1x256xf32>
    %632 = vector.shape_cast %631 : vector<1x1x256xf32> to vector<1x256xf32>
    %633 = vector.broadcast %632 : vector<1x256xf32> to vector<16x256xf32>
    %634 = arith.mulf %630, %633 : vector<16x256xf32>
    %635 = vector.extract_strided_slice %626 {offsets = [16, 0], sizes = [16, 256], strides = [1, 1]} : vector<144x256xf32> to vector<16x256xf32>
    %636 = vector.extract_strided_slice %635 {offsets = [0, 240], sizes = [16, 16], strides = [1, 1]} : vector<16x256xf32> to vector<16x16xf32>
    %637 = vector.extract_strided_slice %635 {offsets = [0, 0], sizes = [16, 240], strides = [1, 1]} : vector<16x256xf32> to vector<16x240xf32>
    %638 = tpu.concatenate %636, %637 in 1 : vector<16x16xf32>, vector<16x240xf32> -> vector<16x256xf32>
    %c1_269 = arith.constant 1 : index
    %c0_270 = arith.constant 0 : index
    %c0_271 = arith.constant 0 : index
    %639 = vector.load %arg12[%c1_269, %c0_270, %c0_271] : memref<9x1x256xf32, #tpu.memory_space<vmem>>, vector<1x1x256xf32>
    %640 = vector.shape_cast %639 : vector<1x1x256xf32> to vector<1x256xf32>
    %641 = vector.broadcast %640 : vector<1x256xf32> to vector<16x256xf32>
    %642 = arith.mulf %638, %641 : vector<16x256xf32>
    %643 = arith.addf %634, %642 : vector<16x256xf32>
    %644 = vector.extract_strided_slice %626 {offsets = [32, 0], sizes = [16, 256], strides = [1, 1]} : vector<144x256xf32> to vector<16x256xf32>
    %645 = vector.extract_strided_slice %644 {offsets = [0, 241], sizes = [16, 15], strides = [1, 1]} : vector<16x256xf32> to vector<16x15xf32>
    %646 = vector.extract_strided_slice %644 {offsets = [0, 0], sizes = [16, 241], strides = [1, 1]} : vector<16x256xf32> to vector<16x241xf32>
    %647 = tpu.concatenate %645, %646 in 1 : vector<16x15xf32>, vector<16x241xf32> -> vector<16x256xf32>
    %c2_272 = arith.constant 2 : index
    %c0_273 = arith.constant 0 : index
    %c0_274 = arith.constant 0 : index
    %648 = vector.load %arg12[%c2_272, %c0_273, %c0_274] : memref<9x1x256xf32, #tpu.memory_space<vmem>>, vector<1x1x256xf32>
    %649 = vector.shape_cast %648 : vector<1x1x256xf32> to vector<1x256xf32>
    %650 = vector.broadcast %649 : vector<1x256xf32> to vector<16x256xf32>
    %651 = arith.mulf %647, %650 : vector<16x256xf32>
    %652 = arith.addf %643, %651 : vector<16x256xf32>
    %653 = vector.extract_strided_slice %626 {offsets = [48, 0], sizes = [16, 256], strides = [1, 1]} : vector<144x256xf32> to vector<16x256xf32>
    %654 = vector.extract_strided_slice %653 {offsets = [0, 255], sizes = [16, 1], strides = [1, 1]} : vector<16x256xf32> to vector<16x1xf32>
    %655 = vector.extract_strided_slice %653 {offsets = [0, 0], sizes = [16, 255], strides = [1, 1]} : vector<16x256xf32> to vector<16x255xf32>
    %656 = tpu.concatenate %654, %655 in 1 : vector<16x1xf32>, vector<16x255xf32> -> vector<16x256xf32>
    %c3_275 = arith.constant 3 : index
    %c0_276 = arith.constant 0 : index
    %c0_277 = arith.constant 0 : index
    %657 = vector.load %arg12[%c3_275, %c0_276, %c0_277] : memref<9x1x256xf32, #tpu.memory_space<vmem>>, vector<1x1x256xf32>
    %658 = vector.shape_cast %657 : vector<1x1x256xf32> to vector<1x256xf32>
    %659 = vector.broadcast %658 : vector<1x256xf32> to vector<16x256xf32>
    %660 = arith.mulf %656, %659 : vector<16x256xf32>
    %661 = arith.addf %652, %660 : vector<16x256xf32>
    %662 = vector.extract_strided_slice %626 {offsets = [64, 0], sizes = [16, 256], strides = [1, 1]} : vector<144x256xf32> to vector<16x256xf32>
    %663 = arith.addf %661, %662 : vector<16x256xf32>
    %664 = vector.extract_strided_slice %626 {offsets = [80, 0], sizes = [16, 256], strides = [1, 1]} : vector<144x256xf32> to vector<16x256xf32>
    %665 = vector.extract_strided_slice %664 {offsets = [0, 1], sizes = [16, 255], strides = [1, 1]} : vector<16x256xf32> to vector<16x255xf32>
    %666 = vector.extract_strided_slice %664 {offsets = [0, 0], sizes = [16, 1], strides = [1, 1]} : vector<16x256xf32> to vector<16x1xf32>
    %667 = tpu.concatenate %665, %666 in 1 : vector<16x255xf32>, vector<16x1xf32> -> vector<16x256xf32>
    %c5_278 = arith.constant 5 : index
    %c0_279 = arith.constant 0 : index
    %c0_280 = arith.constant 0 : index
    %668 = vector.load %arg12[%c5_278, %c0_279, %c0_280] : memref<9x1x256xf32, #tpu.memory_space<vmem>>, vector<1x1x256xf32>
    %669 = vector.shape_cast %668 : vector<1x1x256xf32> to vector<1x256xf32>
    %670 = vector.broadcast %669 : vector<1x256xf32> to vector<16x256xf32>
    %671 = arith.mulf %667, %670 : vector<16x256xf32>
    %672 = arith.addf %663, %671 : vector<16x256xf32>
    %673 = vector.extract_strided_slice %626 {offsets = [96, 0], sizes = [16, 256], strides = [1, 1]} : vector<144x256xf32> to vector<16x256xf32>
    %674 = vector.extract_strided_slice %673 {offsets = [0, 15], sizes = [16, 241], strides = [1, 1]} : vector<16x256xf32> to vector<16x241xf32>
    %675 = vector.extract_strided_slice %673 {offsets = [0, 0], sizes = [16, 15], strides = [1, 1]} : vector<16x256xf32> to vector<16x15xf32>
    %676 = tpu.concatenate %674, %675 in 1 : vector<16x241xf32>, vector<16x15xf32> -> vector<16x256xf32>
    %c6_281 = arith.constant 6 : index
    %c0_282 = arith.constant 0 : index
    %c0_283 = arith.constant 0 : index
    %677 = vector.load %arg12[%c6_281, %c0_282, %c0_283] : memref<9x1x256xf32, #tpu.memory_space<vmem>>, vector<1x1x256xf32>
    %678 = vector.shape_cast %677 : vector<1x1x256xf32> to vector<1x256xf32>
    %679 = vector.broadcast %678 : vector<1x256xf32> to vector<16x256xf32>
    %680 = arith.mulf %676, %679 : vector<16x256xf32>
    %681 = arith.addf %672, %680 : vector<16x256xf32>
    %682 = vector.extract_strided_slice %626 {offsets = [112, 0], sizes = [16, 256], strides = [1, 1]} : vector<144x256xf32> to vector<16x256xf32>
    %683 = vector.extract_strided_slice %682 {offsets = [0, 16], sizes = [16, 240], strides = [1, 1]} : vector<16x256xf32> to vector<16x240xf32>
    %684 = vector.extract_strided_slice %682 {offsets = [0, 0], sizes = [16, 16], strides = [1, 1]} : vector<16x256xf32> to vector<16x16xf32>
    %685 = tpu.concatenate %683, %684 in 1 : vector<16x240xf32>, vector<16x16xf32> -> vector<16x256xf32>
    %c7_284 = arith.constant 7 : index
    %c0_285 = arith.constant 0 : index
    %c0_286 = arith.constant 0 : index
    %686 = vector.load %arg12[%c7_284, %c0_285, %c0_286] : memref<9x1x256xf32, #tpu.memory_space<vmem>>, vector<1x1x256xf32>
    %687 = vector.shape_cast %686 : vector<1x1x256xf32> to vector<1x256xf32>
    %688 = vector.broadcast %687 : vector<1x256xf32> to vector<16x256xf32>
    %689 = arith.mulf %685, %688 : vector<16x256xf32>
    %690 = arith.addf %681, %689 : vector<16x256xf32>
    %691 = vector.extract_strided_slice %626 {offsets = [128, 0], sizes = [16, 256], strides = [1, 1]} : vector<144x256xf32> to vector<16x256xf32>
    %692 = vector.extract_strided_slice %691 {offsets = [0, 17], sizes = [16, 239], strides = [1, 1]} : vector<16x256xf32> to vector<16x239xf32>
    %693 = vector.extract_strided_slice %691 {offsets = [0, 0], sizes = [16, 17], strides = [1, 1]} : vector<16x256xf32> to vector<16x17xf32>
    %694 = tpu.concatenate %692, %693 in 1 : vector<16x239xf32>, vector<16x17xf32> -> vector<16x256xf32>
    %c8_287 = arith.constant 8 : index
    %c0_288 = arith.constant 0 : index
    %c0_289 = arith.constant 0 : index
    %695 = vector.load %arg12[%c8_287, %c0_288, %c0_289] : memref<9x1x256xf32, #tpu.memory_space<vmem>>, vector<1x1x256xf32>
    %696 = vector.shape_cast %695 : vector<1x1x256xf32> to vector<1x256xf32>
    %697 = vector.broadcast %696 : vector<1x256xf32> to vector<16x256xf32>
    %698 = arith.mulf %694, %697 : vector<16x256xf32>
    %699 = arith.addf %690, %698 : vector<16x256xf32>
    %c1_290 = arith.constant 1 : index
    %c0_291 = arith.constant 0 : index
    %c0_292 = arith.constant 0 : index
    %700 = vector.load %arg9[%c1_290, %c0_291, %c0_292] : memref<3x16x1xf32, #tpu.memory_space<vmem>>, vector<1x16x1xf32>
    %701 = vector.shape_cast %700 : vector<1x16x1xf32> to vector<16x1xf32>
    %702 = vector.broadcast %701 : vector<16x1xf32> to vector<16x256xf32>
    %703 = arith.addf %699, %702 : vector<16x256xf32>
    %cst_293 = arith.constant 0.000000e+00 : f32
    %704 = vector.broadcast %cst_293 : f32 to vector<16x256xf32>
    %705 = arith.cmpf ogt, %703, %704 : vector<16x256xf32>
    %cst_294 = arith.constant 2.000000e-01 : f32
    %706 = vector.broadcast %cst_294 : f32 to vector<16x256xf32>
    %707 = arith.mulf %706, %703 : vector<16x256xf32>
    %708 = arith.select %705, %703, %707 : vector<16x256xi1>, vector<16x256xf32>
    %709 = arith.truncf %708 : vector<16x256xf32> to vector<16x256xbf16>
    %c48_295 = arith.constant 48 : index
    %c0_296 = arith.constant 0 : index
    %710 = vector.load %arg14[%c48_295, %c0_296] : memref<80x256xbf16, #tpu.memory_space<vmem>>, vector<16x256xbf16>
    tpu.vector_store %arg14[%c48_295, %c0_296], %709 {strides = array<i32>} : memref<80x256xbf16, #tpu.memory_space<vmem>>, vector<16x256xbf16>,
    %c1_297 = arith.constant 1 : index
    %c0_298 = arith.constant 0 : index
    %c0_299 = arith.constant 0 : index
    %711 = vector.load %arg5[%c1_297, %c0_298, %c0_299] : memref<3x144x64xbf16, #tpu.memory_space<vmem>>, vector<1x144x64xbf16>
    %712 = vector.shape_cast %711 : vector<1x144x64xbf16> to vector<144x64xbf16>
    %c0_300 = arith.constant 0 : index
    %c0_301 = arith.constant 0 : index
    %713 = vector.load %arg14[%c0_300, %c0_301] : memref<80x256xbf16, #tpu.memory_space<vmem>>, vector<64x256xbf16>
    %cst_302 = arith.constant dense<0.000000e+00> : vector<144x256xf32>
    %714 = tpu.matmul %712, %713, %cst_302 {dimension_numbers = #tpu.dot_dimension_numbers<[1], [0], [0], [1], [0, 0, 1, 1], [], []>} : vector<144x64xbf16>, vector<64x256xbf16>, vector<144x256xf32> -> vector<144x256xf32>
    %715 = vector.extract_strided_slice %714 {offsets = [0, 0], sizes = [16, 256], strides = [1, 1]} : vector<144x256xf32> to vector<16x256xf32>
    %716 = vector.extract_strided_slice %715 {offsets = [0, 239], sizes = [16, 17], strides = [1, 1]} : vector<16x256xf32> to vector<16x17xf32>
    %717 = vector.extract_strided_slice %715 {offsets = [0, 0], sizes = [16, 239], strides = [1, 1]} : vector<16x256xf32> to vector<16x239xf32>
    %718 = tpu.concatenate %716, %717 in 1 : vector<16x17xf32>, vector<16x239xf32> -> vector<16x256xf32>
    %c0_303 = arith.constant 0 : index
    %c0_304 = arith.constant 0 : index
    %c0_305 = arith.constant 0 : index
    %719 = vector.load %arg12[%c0_303, %c0_304, %c0_305] : memref<9x1x256xf32, #tpu.memory_space<vmem>>, vector<1x1x256xf32>
    %720 = vector.shape_cast %719 : vector<1x1x256xf32> to vector<1x256xf32>
    %721 = vector.broadcast %720 : vector<1x256xf32> to vector<16x256xf32>
    %722 = arith.mulf %718, %721 : vector<16x256xf32>
    %723 = vector.extract_strided_slice %714 {offsets = [16, 0], sizes = [16, 256], strides = [1, 1]} : vector<144x256xf32> to vector<16x256xf32>
    %724 = vector.extract_strided_slice %723 {offsets = [0, 240], sizes = [16, 16], strides = [1, 1]} : vector<16x256xf32> to vector<16x16xf32>
    %725 = vector.extract_strided_slice %723 {offsets = [0, 0], sizes = [16, 240], strides = [1, 1]} : vector<16x256xf32> to vector<16x240xf32>
    %726 = tpu.concatenate %724, %725 in 1 : vector<16x16xf32>, vector<16x240xf32> -> vector<16x256xf32>
    %c1_306 = arith.constant 1 : index
    %c0_307 = arith.constant 0 : index
    %c0_308 = arith.constant 0 : index
    %727 = vector.load %arg12[%c1_306, %c0_307, %c0_308] : memref<9x1x256xf32, #tpu.memory_space<vmem>>, vector<1x1x256xf32>
    %728 = vector.shape_cast %727 : vector<1x1x256xf32> to vector<1x256xf32>
    %729 = vector.broadcast %728 : vector<1x256xf32> to vector<16x256xf32>
    %730 = arith.mulf %726, %729 : vector<16x256xf32>
    %731 = arith.addf %722, %730 : vector<16x256xf32>
    %732 = vector.extract_strided_slice %714 {offsets = [32, 0], sizes = [16, 256], strides = [1, 1]} : vector<144x256xf32> to vector<16x256xf32>
    %733 = vector.extract_strided_slice %732 {offsets = [0, 241], sizes = [16, 15], strides = [1, 1]} : vector<16x256xf32> to vector<16x15xf32>
    %734 = vector.extract_strided_slice %732 {offsets = [0, 0], sizes = [16, 241], strides = [1, 1]} : vector<16x256xf32> to vector<16x241xf32>
    %735 = tpu.concatenate %733, %734 in 1 : vector<16x15xf32>, vector<16x241xf32> -> vector<16x256xf32>
    %c2_309 = arith.constant 2 : index
    %c0_310 = arith.constant 0 : index
    %c0_311 = arith.constant 0 : index
    %736 = vector.load %arg12[%c2_309, %c0_310, %c0_311] : memref<9x1x256xf32, #tpu.memory_space<vmem>>, vector<1x1x256xf32>
    %737 = vector.shape_cast %736 : vector<1x1x256xf32> to vector<1x256xf32>
    %738 = vector.broadcast %737 : vector<1x256xf32> to vector<16x256xf32>
    %739 = arith.mulf %735, %738 : vector<16x256xf32>
    %740 = arith.addf %731, %739 : vector<16x256xf32>
    %741 = vector.extract_strided_slice %714 {offsets = [48, 0], sizes = [16, 256], strides = [1, 1]} : vector<144x256xf32> to vector<16x256xf32>
    %742 = vector.extract_strided_slice %741 {offsets = [0, 255], sizes = [16, 1], strides = [1, 1]} : vector<16x256xf32> to vector<16x1xf32>
    %743 = vector.extract_strided_slice %741 {offsets = [0, 0], sizes = [16, 255], strides = [1, 1]} : vector<16x256xf32> to vector<16x255xf32>
    %744 = tpu.concatenate %742, %743 in 1 : vector<16x1xf32>, vector<16x255xf32> -> vector<16x256xf32>
    %c3_312 = arith.constant 3 : index
    %c0_313 = arith.constant 0 : index
    %c0_314 = arith.constant 0 : index
    %745 = vector.load %arg12[%c3_312, %c0_313, %c0_314] : memref<9x1x256xf32, #tpu.memory_space<vmem>>, vector<1x1x256xf32>
    %746 = vector.shape_cast %745 : vector<1x1x256xf32> to vector<1x256xf32>
    %747 = vector.broadcast %746 : vector<1x256xf32> to vector<16x256xf32>
    %748 = arith.mulf %744, %747 : vector<16x256xf32>
    %749 = arith.addf %740, %748 : vector<16x256xf32>
    %750 = vector.extract_strided_slice %714 {offsets = [64, 0], sizes = [16, 256], strides = [1, 1]} : vector<144x256xf32> to vector<16x256xf32>
    %751 = arith.addf %749, %750 : vector<16x256xf32>
    %752 = vector.extract_strided_slice %714 {offsets = [80, 0], sizes = [16, 256], strides = [1, 1]} : vector<144x256xf32> to vector<16x256xf32>
    %753 = vector.extract_strided_slice %752 {offsets = [0, 1], sizes = [16, 255], strides = [1, 1]} : vector<16x256xf32> to vector<16x255xf32>
    %754 = vector.extract_strided_slice %752 {offsets = [0, 0], sizes = [16, 1], strides = [1, 1]} : vector<16x256xf32> to vector<16x1xf32>
    %755 = tpu.concatenate %753, %754 in 1 : vector<16x255xf32>, vector<16x1xf32> -> vector<16x256xf32>
    %c5_315 = arith.constant 5 : index
    %c0_316 = arith.constant 0 : index
    %c0_317 = arith.constant 0 : index
    %756 = vector.load %arg12[%c5_315, %c0_316, %c0_317] : memref<9x1x256xf32, #tpu.memory_space<vmem>>, vector<1x1x256xf32>
    %757 = vector.shape_cast %756 : vector<1x1x256xf32> to vector<1x256xf32>
    %758 = vector.broadcast %757 : vector<1x256xf32> to vector<16x256xf32>
    %759 = arith.mulf %755, %758 : vector<16x256xf32>
    %760 = arith.addf %751, %759 : vector<16x256xf32>
    %761 = vector.extract_strided_slice %714 {offsets = [96, 0], sizes = [16, 256], strides = [1, 1]} : vector<144x256xf32> to vector<16x256xf32>
    %762 = vector.extract_strided_slice %761 {offsets = [0, 15], sizes = [16, 241], strides = [1, 1]} : vector<16x256xf32> to vector<16x241xf32>
    %763 = vector.extract_strided_slice %761 {offsets = [0, 0], sizes = [16, 15], strides = [1, 1]} : vector<16x256xf32> to vector<16x15xf32>
    %764 = tpu.concatenate %762, %763 in 1 : vector<16x241xf32>, vector<16x15xf32> -> vector<16x256xf32>
    %c6_318 = arith.constant 6 : index
    %c0_319 = arith.constant 0 : index
    %c0_320 = arith.constant 0 : index
    %765 = vector.load %arg12[%c6_318, %c0_319, %c0_320] : memref<9x1x256xf32, #tpu.memory_space<vmem>>, vector<1x1x256xf32>
    %766 = vector.shape_cast %765 : vector<1x1x256xf32> to vector<1x256xf32>
    %767 = vector.broadcast %766 : vector<1x256xf32> to vector<16x256xf32>
    %768 = arith.mulf %764, %767 : vector<16x256xf32>
    %769 = arith.addf %760, %768 : vector<16x256xf32>
    %770 = vector.extract_strided_slice %714 {offsets = [112, 0], sizes = [16, 256], strides = [1, 1]} : vector<144x256xf32> to vector<16x256xf32>
    %771 = vector.extract_strided_slice %770 {offsets = [0, 16], sizes = [16, 240], strides = [1, 1]} : vector<16x256xf32> to vector<16x240xf32>
    %772 = vector.extract_strided_slice %770 {offsets = [0, 0], sizes = [16, 16], strides = [1, 1]} : vector<16x256xf32> to vector<16x16xf32>
    %773 = tpu.concatenate %771, %772 in 1 : vector<16x240xf32>, vector<16x16xf32> -> vector<16x256xf32>
    %c7_321 = arith.constant 7 : index
    %c0_322 = arith.constant 0 : index
    %c0_323 = arith.constant 0 : index
    %774 = vector.load %arg12[%c7_321, %c0_322, %c0_323] : memref<9x1x256xf32, #tpu.memory_space<vmem>>, vector<1x1x256xf32>
    %775 = vector.shape_cast %774 : vector<1x1x256xf32> to vector<1x256xf32>
    %776 = vector.broadcast %775 : vector<1x256xf32> to vector<16x256xf32>
    %777 = arith.mulf %773, %776 : vector<16x256xf32>
    %778 = arith.addf %769, %777 : vector<16x256xf32>
    %779 = vector.extract_strided_slice %714 {offsets = [128, 0], sizes = [16, 256], strides = [1, 1]} : vector<144x256xf32> to vector<16x256xf32>
    %780 = vector.extract_strided_slice %779 {offsets = [0, 17], sizes = [16, 239], strides = [1, 1]} : vector<16x256xf32> to vector<16x239xf32>
    %781 = vector.extract_strided_slice %779 {offsets = [0, 0], sizes = [16, 17], strides = [1, 1]} : vector<16x256xf32> to vector<16x17xf32>
    %782 = tpu.concatenate %780, %781 in 1 : vector<16x239xf32>, vector<16x17xf32> -> vector<16x256xf32>
    %c8_324 = arith.constant 8 : index
    %c0_325 = arith.constant 0 : index
    %c0_326 = arith.constant 0 : index
    %783 = vector.load %arg12[%c8_324, %c0_325, %c0_326] : memref<9x1x256xf32, #tpu.memory_space<vmem>>, vector<1x1x256xf32>
    %784 = vector.shape_cast %783 : vector<1x1x256xf32> to vector<1x256xf32>
    %785 = vector.broadcast %784 : vector<1x256xf32> to vector<16x256xf32>
    %786 = arith.mulf %782, %785 : vector<16x256xf32>
    %787 = arith.addf %778, %786 : vector<16x256xf32>
    %c1_327 = arith.constant 1 : index
    %c0_328 = arith.constant 0 : index
    %c0_329 = arith.constant 0 : index
    %788 = vector.load %arg10[%c1_327, %c0_328, %c0_329] : memref<3x16x1xf32, #tpu.memory_space<vmem>>, vector<1x16x1xf32>
    %789 = vector.shape_cast %788 : vector<1x16x1xf32> to vector<16x1xf32>
    %790 = vector.broadcast %789 : vector<16x1xf32> to vector<16x256xf32>
    %791 = arith.addf %787, %790 : vector<16x256xf32>
    %cst_330 = arith.constant 0.000000e+00 : f32
    %792 = vector.broadcast %cst_330 : f32 to vector<16x256xf32>
    %793 = arith.cmpf ogt, %791, %792 : vector<16x256xf32>
    %cst_331 = arith.constant 2.000000e-01 : f32
    %794 = vector.broadcast %cst_331 : f32 to vector<16x256xf32>
    %795 = arith.mulf %794, %791 : vector<16x256xf32>
    %796 = arith.select %793, %791, %795 : vector<16x256xi1>, vector<16x256xf32>
    %797 = arith.truncf %796 : vector<16x256xf32> to vector<16x256xbf16>
    %c64_332 = arith.constant 64 : index
    %c0_333 = arith.constant 0 : index
    %798 = vector.load %arg14[%c64_332, %c0_333] : memref<80x256xbf16, #tpu.memory_space<vmem>>, vector<16x256xbf16>
    tpu.vector_store %arg14[%c64_332, %c0_333], %797 {strides = array<i32>} : memref<80x256xbf16, #tpu.memory_space<vmem>>, vector<16x256xbf16>,
    %c1_334 = arith.constant 1 : index
    %c0_335 = arith.constant 0 : index
    %c0_336 = arith.constant 0 : index
    %799 = vector.load %arg6[%c1_334, %c0_335, %c0_336] : memref<3x144x80xbf16, #tpu.memory_space<vmem>>, vector<1x144x80xbf16>
    %800 = vector.shape_cast %799 : vector<1x144x80xbf16> to vector<144x80xbf16>
    %c0_337 = arith.constant 0 : index
    %c0_338 = arith.constant 0 : index
    %801 = vector.load %arg14[%c0_337, %c0_338] : memref<80x256xbf16, #tpu.memory_space<vmem>>, vector<80x256xbf16>
    %cst_339 = arith.constant dense<0.000000e+00> : vector<144x256xf32>
    %802 = tpu.matmul %800, %801, %cst_339 {dimension_numbers = #tpu.dot_dimension_numbers<[1], [0], [0], [1], [0, 0, 1, 1], [], []>} : vector<144x80xbf16>, vector<80x256xbf16>, vector<144x256xf32> -> vector<144x256xf32>
    %803 = vector.extract_strided_slice %802 {offsets = [0, 0], sizes = [16, 256], strides = [1, 1]} : vector<144x256xf32> to vector<16x256xf32>
    %804 = vector.extract_strided_slice %803 {offsets = [0, 239], sizes = [16, 17], strides = [1, 1]} : vector<16x256xf32> to vector<16x17xf32>
    %805 = vector.extract_strided_slice %803 {offsets = [0, 0], sizes = [16, 239], strides = [1, 1]} : vector<16x256xf32> to vector<16x239xf32>
    %806 = tpu.concatenate %804, %805 in 1 : vector<16x17xf32>, vector<16x239xf32> -> vector<16x256xf32>
    %c0_340 = arith.constant 0 : index
    %c0_341 = arith.constant 0 : index
    %c0_342 = arith.constant 0 : index
    %807 = vector.load %arg12[%c0_340, %c0_341, %c0_342] : memref<9x1x256xf32, #tpu.memory_space<vmem>>, vector<1x1x256xf32>
    %808 = vector.shape_cast %807 : vector<1x1x256xf32> to vector<1x256xf32>
    %809 = vector.broadcast %808 : vector<1x256xf32> to vector<16x256xf32>
    %810 = arith.mulf %806, %809 : vector<16x256xf32>
    %811 = vector.extract_strided_slice %802 {offsets = [16, 0], sizes = [16, 256], strides = [1, 1]} : vector<144x256xf32> to vector<16x256xf32>
    %812 = vector.extract_strided_slice %811 {offsets = [0, 240], sizes = [16, 16], strides = [1, 1]} : vector<16x256xf32> to vector<16x16xf32>
    %813 = vector.extract_strided_slice %811 {offsets = [0, 0], sizes = [16, 240], strides = [1, 1]} : vector<16x256xf32> to vector<16x240xf32>
    %814 = tpu.concatenate %812, %813 in 1 : vector<16x16xf32>, vector<16x240xf32> -> vector<16x256xf32>
    %c1_343 = arith.constant 1 : index
    %c0_344 = arith.constant 0 : index
    %c0_345 = arith.constant 0 : index
    %815 = vector.load %arg12[%c1_343, %c0_344, %c0_345] : memref<9x1x256xf32, #tpu.memory_space<vmem>>, vector<1x1x256xf32>
    %816 = vector.shape_cast %815 : vector<1x1x256xf32> to vector<1x256xf32>
    %817 = vector.broadcast %816 : vector<1x256xf32> to vector<16x256xf32>
    %818 = arith.mulf %814, %817 : vector<16x256xf32>
    %819 = arith.addf %810, %818 : vector<16x256xf32>
    %820 = vector.extract_strided_slice %802 {offsets = [32, 0], sizes = [16, 256], strides = [1, 1]} : vector<144x256xf32> to vector<16x256xf32>
    %821 = vector.extract_strided_slice %820 {offsets = [0, 241], sizes = [16, 15], strides = [1, 1]} : vector<16x256xf32> to vector<16x15xf32>
    %822 = vector.extract_strided_slice %820 {offsets = [0, 0], sizes = [16, 241], strides = [1, 1]} : vector<16x256xf32> to vector<16x241xf32>
    %823 = tpu.concatenate %821, %822 in 1 : vector<16x15xf32>, vector<16x241xf32> -> vector<16x256xf32>
    %c2_346 = arith.constant 2 : index
    %c0_347 = arith.constant 0 : index
    %c0_348 = arith.constant 0 : index
    %824 = vector.load %arg12[%c2_346, %c0_347, %c0_348] : memref<9x1x256xf32, #tpu.memory_space<vmem>>, vector<1x1x256xf32>
    %825 = vector.shape_cast %824 : vector<1x1x256xf32> to vector<1x256xf32>
    %826 = vector.broadcast %825 : vector<1x256xf32> to vector<16x256xf32>
    %827 = arith.mulf %823, %826 : vector<16x256xf32>
    %828 = arith.addf %819, %827 : vector<16x256xf32>
    %829 = vector.extract_strided_slice %802 {offsets = [48, 0], sizes = [16, 256], strides = [1, 1]} : vector<144x256xf32> to vector<16x256xf32>
    %830 = vector.extract_strided_slice %829 {offsets = [0, 255], sizes = [16, 1], strides = [1, 1]} : vector<16x256xf32> to vector<16x1xf32>
    %831 = vector.extract_strided_slice %829 {offsets = [0, 0], sizes = [16, 255], strides = [1, 1]} : vector<16x256xf32> to vector<16x255xf32>
    %832 = tpu.concatenate %830, %831 in 1 : vector<16x1xf32>, vector<16x255xf32> -> vector<16x256xf32>
    %c3_349 = arith.constant 3 : index
    %c0_350 = arith.constant 0 : index
    %c0_351 = arith.constant 0 : index
    %833 = vector.load %arg12[%c3_349, %c0_350, %c0_351] : memref<9x1x256xf32, #tpu.memory_space<vmem>>, vector<1x1x256xf32>
    %834 = vector.shape_cast %833 : vector<1x1x256xf32> to vector<1x256xf32>
    %835 = vector.broadcast %834 : vector<1x256xf32> to vector<16x256xf32>
    %836 = arith.mulf %832, %835 : vector<16x256xf32>
    %837 = arith.addf %828, %836 : vector<16x256xf32>
    %838 = vector.extract_strided_slice %802 {offsets = [64, 0], sizes = [16, 256], strides = [1, 1]} : vector<144x256xf32> to vector<16x256xf32>
    %839 = arith.addf %837, %838 : vector<16x256xf32>
    %840 = vector.extract_strided_slice %802 {offsets = [80, 0], sizes = [16, 256], strides = [1, 1]} : vector<144x256xf32> to vector<16x256xf32>
    %841 = vector.extract_strided_slice %840 {offsets = [0, 1], sizes = [16, 255], strides = [1, 1]} : vector<16x256xf32> to vector<16x255xf32>
    %842 = vector.extract_strided_slice %840 {offsets = [0, 0], sizes = [16, 1], strides = [1, 1]} : vector<16x256xf32> to vector<16x1xf32>
    %843 = tpu.concatenate %841, %842 in 1 : vector<16x255xf32>, vector<16x1xf32> -> vector<16x256xf32>
    %c5_352 = arith.constant 5 : index
    %c0_353 = arith.constant 0 : index
    %c0_354 = arith.constant 0 : index
    %844 = vector.load %arg12[%c5_352, %c0_353, %c0_354] : memref<9x1x256xf32, #tpu.memory_space<vmem>>, vector<1x1x256xf32>
    %845 = vector.shape_cast %844 : vector<1x1x256xf32> to vector<1x256xf32>
    %846 = vector.broadcast %845 : vector<1x256xf32> to vector<16x256xf32>
    %847 = arith.mulf %843, %846 : vector<16x256xf32>
    %848 = arith.addf %839, %847 : vector<16x256xf32>
    %849 = vector.extract_strided_slice %802 {offsets = [96, 0], sizes = [16, 256], strides = [1, 1]} : vector<144x256xf32> to vector<16x256xf32>
    %850 = vector.extract_strided_slice %849 {offsets = [0, 15], sizes = [16, 241], strides = [1, 1]} : vector<16x256xf32> to vector<16x241xf32>
    %851 = vector.extract_strided_slice %849 {offsets = [0, 0], sizes = [16, 15], strides = [1, 1]} : vector<16x256xf32> to vector<16x15xf32>
    %852 = tpu.concatenate %850, %851 in 1 : vector<16x241xf32>, vector<16x15xf32> -> vector<16x256xf32>
    %c6_355 = arith.constant 6 : index
    %c0_356 = arith.constant 0 : index
    %c0_357 = arith.constant 0 : index
    %853 = vector.load %arg12[%c6_355, %c0_356, %c0_357] : memref<9x1x256xf32, #tpu.memory_space<vmem>>, vector<1x1x256xf32>
    %854 = vector.shape_cast %853 : vector<1x1x256xf32> to vector<1x256xf32>
    %855 = vector.broadcast %854 : vector<1x256xf32> to vector<16x256xf32>
    %856 = arith.mulf %852, %855 : vector<16x256xf32>
    %857 = arith.addf %848, %856 : vector<16x256xf32>
    %858 = vector.extract_strided_slice %802 {offsets = [112, 0], sizes = [16, 256], strides = [1, 1]} : vector<144x256xf32> to vector<16x256xf32>
    %859 = vector.extract_strided_slice %858 {offsets = [0, 16], sizes = [16, 240], strides = [1, 1]} : vector<16x256xf32> to vector<16x240xf32>
    %860 = vector.extract_strided_slice %858 {offsets = [0, 0], sizes = [16, 16], strides = [1, 1]} : vector<16x256xf32> to vector<16x16xf32>
    %861 = tpu.concatenate %859, %860 in 1 : vector<16x240xf32>, vector<16x16xf32> -> vector<16x256xf32>
    %c7_358 = arith.constant 7 : index
    %c0_359 = arith.constant 0 : index
    %c0_360 = arith.constant 0 : index
    %862 = vector.load %arg12[%c7_358, %c0_359, %c0_360] : memref<9x1x256xf32, #tpu.memory_space<vmem>>, vector<1x1x256xf32>
    %863 = vector.shape_cast %862 : vector<1x1x256xf32> to vector<1x256xf32>
    %864 = vector.broadcast %863 : vector<1x256xf32> to vector<16x256xf32>
    %865 = arith.mulf %861, %864 : vector<16x256xf32>
    %866 = arith.addf %857, %865 : vector<16x256xf32>
    %867 = vector.extract_strided_slice %802 {offsets = [128, 0], sizes = [16, 256], strides = [1, 1]} : vector<144x256xf32> to vector<16x256xf32>
    %868 = vector.extract_strided_slice %867 {offsets = [0, 17], sizes = [16, 239], strides = [1, 1]} : vector<16x256xf32> to vector<16x239xf32>
    %869 = vector.extract_strided_slice %867 {offsets = [0, 0], sizes = [16, 17], strides = [1, 1]} : vector<16x256xf32> to vector<16x17xf32>
    %870 = tpu.concatenate %868, %869 in 1 : vector<16x239xf32>, vector<16x17xf32> -> vector<16x256xf32>
    %c8_361 = arith.constant 8 : index
    %c0_362 = arith.constant 0 : index
    %c0_363 = arith.constant 0 : index
    %871 = vector.load %arg12[%c8_361, %c0_362, %c0_363] : memref<9x1x256xf32, #tpu.memory_space<vmem>>, vector<1x1x256xf32>
    %872 = vector.shape_cast %871 : vector<1x1x256xf32> to vector<1x256xf32>
    %873 = vector.broadcast %872 : vector<1x256xf32> to vector<16x256xf32>
    %874 = arith.mulf %870, %873 : vector<16x256xf32>
    %875 = arith.addf %866, %874 : vector<16x256xf32>
    %c1_364 = arith.constant 1 : index
    %c0_365 = arith.constant 0 : index
    %c0_366 = arith.constant 0 : index
    %876 = vector.load %arg11[%c1_364, %c0_365, %c0_366] : memref<3x16x1xf32, #tpu.memory_space<vmem>>, vector<1x16x1xf32>
    %877 = vector.shape_cast %876 : vector<1x16x1xf32> to vector<16x1xf32>
    %878 = vector.broadcast %877 : vector<16x1xf32> to vector<16x256xf32>
    %879 = arith.addf %875, %878 : vector<16x256xf32>
    %cst_367 = arith.constant 2.000000e-01 : f32
    %880 = vector.broadcast %cst_367 : f32 to vector<16x256xf32>
    %881 = arith.mulf %880, %879 : vector<16x256xf32>
    %c0_368 = arith.constant 0 : index
    %c0_369 = arith.constant 0 : index
    %882 = vector.load %arg15[%c0_368, %c0_369] : memref<16x256xf32, #tpu.memory_space<vmem>>, vector<16x256xf32>
    %883 = arith.addf %881, %882 : vector<16x256xf32>
    %c0_370 = arith.constant 0 : index
    %c0_371 = arith.constant 0 : index
    %884 = vector.load %arg15[%c0_370, %c0_371] : memref<16x256xf32, #tpu.memory_space<vmem>>, vector<16x256xf32>
    tpu.vector_store %arg15[%c0_370, %c0_371], %883 {strides = array<i32>} : memref<16x256xf32, #tpu.memory_space<vmem>>, vector<16x256xf32>,
    %c0_372 = arith.constant 0 : index
    %c0_373 = arith.constant 0 : index
    %885 = vector.load %arg15[%c0_372, %c0_373] : memref<16x256xf32, #tpu.memory_space<vmem>>, vector<16x256xf32>
    %886 = arith.truncf %885 : vector<16x256xf32> to vector<16x256xbf16>
    %c0_374 = arith.constant 0 : index
    %c0_375 = arith.constant 0 : index
    %887 = vector.load %arg14[%c0_374, %c0_375] : memref<80x256xbf16, #tpu.memory_space<vmem>>, vector<16x256xbf16>
    tpu.vector_store %arg14[%c0_374, %c0_375], %886 {strides = array<i32>} : memref<80x256xbf16, #tpu.memory_space<vmem>>, vector<16x256xbf16>,
    %c2_376 = arith.constant 2 : index
    %c0_377 = arith.constant 0 : index
    %c0_378 = arith.constant 0 : index
    %888 = vector.load %arg2[%c2_376, %c0_377, %c0_378] : memref<3x144x16xbf16, #tpu.memory_space<vmem>>, vector<1x144x16xbf16>
    %889 = vector.shape_cast %888 : vector<1x144x16xbf16> to vector<144x16xbf16>
    %c0_379 = arith.constant 0 : index
    %c0_380 = arith.constant 0 : index
    %890 = vector.load %arg14[%c0_379, %c0_380] : memref<80x256xbf16, #tpu.memory_space<vmem>>, vector<16x256xbf16>
    %cst_381 = arith.constant dense<0.000000e+00> : vector<144x256xf32>
    %891 = tpu.matmul %889, %890, %cst_381 {dimension_numbers = #tpu.dot_dimension_numbers<[1], [0], [0], [1], [0, 0, 1, 1], [], []>} : vector<144x16xbf16>, vector<16x256xbf16>, vector<144x256xf32> -> vector<144x256xf32>
    %892 = vector.extract_strided_slice %891 {offsets = [0, 0], sizes = [16, 256], strides = [1, 1]} : vector<144x256xf32> to vector<16x256xf32>
    %893 = vector.extract_strided_slice %892 {offsets = [0, 239], sizes = [16, 17], strides = [1, 1]} : vector<16x256xf32> to vector<16x17xf32>
    %894 = vector.extract_strided_slice %892 {offsets = [0, 0], sizes = [16, 239], strides = [1, 1]} : vector<16x256xf32> to vector<16x239xf32>
    %895 = tpu.concatenate %893, %894 in 1 : vector<16x17xf32>, vector<16x239xf32> -> vector<16x256xf32>
    %c0_382 = arith.constant 0 : index
    %c0_383 = arith.constant 0 : index
    %c0_384 = arith.constant 0 : index
    %896 = vector.load %arg12[%c0_382, %c0_383, %c0_384] : memref<9x1x256xf32, #tpu.memory_space<vmem>>, vector<1x1x256xf32>
    %897 = vector.shape_cast %896 : vector<1x1x256xf32> to vector<1x256xf32>
    %898 = vector.broadcast %897 : vector<1x256xf32> to vector<16x256xf32>
    %899 = arith.mulf %895, %898 : vector<16x256xf32>
    %900 = vector.extract_strided_slice %891 {offsets = [16, 0], sizes = [16, 256], strides = [1, 1]} : vector<144x256xf32> to vector<16x256xf32>
    %901 = vector.extract_strided_slice %900 {offsets = [0, 240], sizes = [16, 16], strides = [1, 1]} : vector<16x256xf32> to vector<16x16xf32>
    %902 = vector.extract_strided_slice %900 {offsets = [0, 0], sizes = [16, 240], strides = [1, 1]} : vector<16x256xf32> to vector<16x240xf32>
    %903 = tpu.concatenate %901, %902 in 1 : vector<16x16xf32>, vector<16x240xf32> -> vector<16x256xf32>
    %c1_385 = arith.constant 1 : index
    %c0_386 = arith.constant 0 : index
    %c0_387 = arith.constant 0 : index
    %904 = vector.load %arg12[%c1_385, %c0_386, %c0_387] : memref<9x1x256xf32, #tpu.memory_space<vmem>>, vector<1x1x256xf32>
    %905 = vector.shape_cast %904 : vector<1x1x256xf32> to vector<1x256xf32>
    %906 = vector.broadcast %905 : vector<1x256xf32> to vector<16x256xf32>
    %907 = arith.mulf %903, %906 : vector<16x256xf32>
    %908 = arith.addf %899, %907 : vector<16x256xf32>
    %909 = vector.extract_strided_slice %891 {offsets = [32, 0], sizes = [16, 256], strides = [1, 1]} : vector<144x256xf32> to vector<16x256xf32>
    %910 = vector.extract_strided_slice %909 {offsets = [0, 241], sizes = [16, 15], strides = [1, 1]} : vector<16x256xf32> to vector<16x15xf32>
    %911 = vector.extract_strided_slice %909 {offsets = [0, 0], sizes = [16, 241], strides = [1, 1]} : vector<16x256xf32> to vector<16x241xf32>
    %912 = tpu.concatenate %910, %911 in 1 : vector<16x15xf32>, vector<16x241xf32> -> vector<16x256xf32>
    %c2_388 = arith.constant 2 : index
    %c0_389 = arith.constant 0 : index
    %c0_390 = arith.constant 0 : index
    %913 = vector.load %arg12[%c2_388, %c0_389, %c0_390] : memref<9x1x256xf32, #tpu.memory_space<vmem>>, vector<1x1x256xf32>
    %914 = vector.shape_cast %913 : vector<1x1x256xf32> to vector<1x256xf32>
    %915 = vector.broadcast %914 : vector<1x256xf32> to vector<16x256xf32>
    %916 = arith.mulf %912, %915 : vector<16x256xf32>
    %917 = arith.addf %908, %916 : vector<16x256xf32>
    %918 = vector.extract_strided_slice %891 {offsets = [48, 0], sizes = [16, 256], strides = [1, 1]} : vector<144x256xf32> to vector<16x256xf32>
    %919 = vector.extract_strided_slice %918 {offsets = [0, 255], sizes = [16, 1], strides = [1, 1]} : vector<16x256xf32> to vector<16x1xf32>
    %920 = vector.extract_strided_slice %918 {offsets = [0, 0], sizes = [16, 255], strides = [1, 1]} : vector<16x256xf32> to vector<16x255xf32>
    %921 = tpu.concatenate %919, %920 in 1 : vector<16x1xf32>, vector<16x255xf32> -> vector<16x256xf32>
    %c3_391 = arith.constant 3 : index
    %c0_392 = arith.constant 0 : index
    %c0_393 = arith.constant 0 : index
    %922 = vector.load %arg12[%c3_391, %c0_392, %c0_393] : memref<9x1x256xf32, #tpu.memory_space<vmem>>, vector<1x1x256xf32>
    %923 = vector.shape_cast %922 : vector<1x1x256xf32> to vector<1x256xf32>
    %924 = vector.broadcast %923 : vector<1x256xf32> to vector<16x256xf32>
    %925 = arith.mulf %921, %924 : vector<16x256xf32>
    %926 = arith.addf %917, %925 : vector<16x256xf32>
    %927 = vector.extract_strided_slice %891 {offsets = [64, 0], sizes = [16, 256], strides = [1, 1]} : vector<144x256xf32> to vector<16x256xf32>
    %928 = arith.addf %926, %927 : vector<16x256xf32>
    %929 = vector.extract_strided_slice %891 {offsets = [80, 0], sizes = [16, 256], strides = [1, 1]} : vector<144x256xf32> to vector<16x256xf32>
    %930 = vector.extract_strided_slice %929 {offsets = [0, 1], sizes = [16, 255], strides = [1, 1]} : vector<16x256xf32> to vector<16x255xf32>
    %931 = vector.extract_strided_slice %929 {offsets = [0, 0], sizes = [16, 1], strides = [1, 1]} : vector<16x256xf32> to vector<16x1xf32>
    %932 = tpu.concatenate %930, %931 in 1 : vector<16x255xf32>, vector<16x1xf32> -> vector<16x256xf32>
    %c5_394 = arith.constant 5 : index
    %c0_395 = arith.constant 0 : index
    %c0_396 = arith.constant 0 : index
    %933 = vector.load %arg12[%c5_394, %c0_395, %c0_396] : memref<9x1x256xf32, #tpu.memory_space<vmem>>, vector<1x1x256xf32>
    %934 = vector.shape_cast %933 : vector<1x1x256xf32> to vector<1x256xf32>
    %935 = vector.broadcast %934 : vector<1x256xf32> to vector<16x256xf32>
    %936 = arith.mulf %932, %935 : vector<16x256xf32>
    %937 = arith.addf %928, %936 : vector<16x256xf32>
    %938 = vector.extract_strided_slice %891 {offsets = [96, 0], sizes = [16, 256], strides = [1, 1]} : vector<144x256xf32> to vector<16x256xf32>
    %939 = vector.extract_strided_slice %938 {offsets = [0, 15], sizes = [16, 241], strides = [1, 1]} : vector<16x256xf32> to vector<16x241xf32>
    %940 = vector.extract_strided_slice %938 {offsets = [0, 0], sizes = [16, 15], strides = [1, 1]} : vector<16x256xf32> to vector<16x15xf32>
    %941 = tpu.concatenate %939, %940 in 1 : vector<16x241xf32>, vector<16x15xf32> -> vector<16x256xf32>
    %c6_397 = arith.constant 6 : index
    %c0_398 = arith.constant 0 : index
    %c0_399 = arith.constant 0 : index
    %942 = vector.load %arg12[%c6_397, %c0_398, %c0_399] : memref<9x1x256xf32, #tpu.memory_space<vmem>>, vector<1x1x256xf32>
    %943 = vector.shape_cast %942 : vector<1x1x256xf32> to vector<1x256xf32>
    %944 = vector.broadcast %943 : vector<1x256xf32> to vector<16x256xf32>
    %945 = arith.mulf %941, %944 : vector<16x256xf32>
    %946 = arith.addf %937, %945 : vector<16x256xf32>
    %947 = vector.extract_strided_slice %891 {offsets = [112, 0], sizes = [16, 256], strides = [1, 1]} : vector<144x256xf32> to vector<16x256xf32>
    %948 = vector.extract_strided_slice %947 {offsets = [0, 16], sizes = [16, 240], strides = [1, 1]} : vector<16x256xf32> to vector<16x240xf32>
    %949 = vector.extract_strided_slice %947 {offsets = [0, 0], sizes = [16, 16], strides = [1, 1]} : vector<16x256xf32> to vector<16x16xf32>
    %950 = tpu.concatenate %948, %949 in 1 : vector<16x240xf32>, vector<16x16xf32> -> vector<16x256xf32>
    %c7_400 = arith.constant 7 : index
    %c0_401 = arith.constant 0 : index
    %c0_402 = arith.constant 0 : index
    %951 = vector.load %arg12[%c7_400, %c0_401, %c0_402] : memref<9x1x256xf32, #tpu.memory_space<vmem>>, vector<1x1x256xf32>
    %952 = vector.shape_cast %951 : vector<1x1x256xf32> to vector<1x256xf32>
    %953 = vector.broadcast %952 : vector<1x256xf32> to vector<16x256xf32>
    %954 = arith.mulf %950, %953 : vector<16x256xf32>
    %955 = arith.addf %946, %954 : vector<16x256xf32>
    %956 = vector.extract_strided_slice %891 {offsets = [128, 0], sizes = [16, 256], strides = [1, 1]} : vector<144x256xf32> to vector<16x256xf32>
    %957 = vector.extract_strided_slice %956 {offsets = [0, 17], sizes = [16, 239], strides = [1, 1]} : vector<16x256xf32> to vector<16x239xf32>
    %958 = vector.extract_strided_slice %956 {offsets = [0, 0], sizes = [16, 17], strides = [1, 1]} : vector<16x256xf32> to vector<16x17xf32>
    %959 = tpu.concatenate %957, %958 in 1 : vector<16x239xf32>, vector<16x17xf32> -> vector<16x256xf32>
    %c8_403 = arith.constant 8 : index
    %c0_404 = arith.constant 0 : index
    %c0_405 = arith.constant 0 : index
    %960 = vector.load %arg12[%c8_403, %c0_404, %c0_405] : memref<9x1x256xf32, #tpu.memory_space<vmem>>, vector<1x1x256xf32>
    %961 = vector.shape_cast %960 : vector<1x1x256xf32> to vector<1x256xf32>
    %962 = vector.broadcast %961 : vector<1x256xf32> to vector<16x256xf32>
    %963 = arith.mulf %959, %962 : vector<16x256xf32>
    %964 = arith.addf %955, %963 : vector<16x256xf32>
    %c2_406 = arith.constant 2 : index
    %c0_407 = arith.constant 0 : index
    %c0_408 = arith.constant 0 : index
    %965 = vector.load %arg7[%c2_406, %c0_407, %c0_408] : memref<3x16x1xf32, #tpu.memory_space<vmem>>, vector<1x16x1xf32>
    %966 = vector.shape_cast %965 : vector<1x16x1xf32> to vector<16x1xf32>
    %967 = vector.broadcast %966 : vector<16x1xf32> to vector<16x256xf32>
    %968 = arith.addf %964, %967 : vector<16x256xf32>
    %cst_409 = arith.constant 0.000000e+00 : f32
    %969 = vector.broadcast %cst_409 : f32 to vector<16x256xf32>
    %970 = arith.cmpf ogt, %968, %969 : vector<16x256xf32>
    %cst_410 = arith.constant 2.000000e-01 : f32
    %971 = vector.broadcast %cst_410 : f32 to vector<16x256xf32>
    %972 = arith.mulf %971, %968 : vector<16x256xf32>
    %973 = arith.select %970, %968, %972 : vector<16x256xi1>, vector<16x256xf32>
    %974 = arith.truncf %973 : vector<16x256xf32> to vector<16x256xbf16>
    %c16_411 = arith.constant 16 : index
    %c0_412 = arith.constant 0 : index
    %975 = vector.load %arg14[%c16_411, %c0_412] : memref<80x256xbf16, #tpu.memory_space<vmem>>, vector<16x256xbf16>
    tpu.vector_store %arg14[%c16_411, %c0_412], %974 {strides = array<i32>} : memref<80x256xbf16, #tpu.memory_space<vmem>>, vector<16x256xbf16>,
    %c2_413 = arith.constant 2 : index
    %c0_414 = arith.constant 0 : index
    %c0_415 = arith.constant 0 : index
    %976 = vector.load %arg3[%c2_413, %c0_414, %c0_415] : memref<3x144x32xbf16, #tpu.memory_space<vmem>>, vector<1x144x32xbf16>
    %977 = vector.shape_cast %976 : vector<1x144x32xbf16> to vector<144x32xbf16>
    %c0_416 = arith.constant 0 : index
    %c0_417 = arith.constant 0 : index
    %978 = vector.load %arg14[%c0_416, %c0_417] : memref<80x256xbf16, #tpu.memory_space<vmem>>, vector<32x256xbf16>
    %cst_418 = arith.constant dense<0.000000e+00> : vector<144x256xf32>
    %979 = tpu.matmul %977, %978, %cst_418 {dimension_numbers = #tpu.dot_dimension_numbers<[1], [0], [0], [1], [0, 0, 1, 1], [], []>} : vector<144x32xbf16>, vector<32x256xbf16>, vector<144x256xf32> -> vector<144x256xf32>
    %980 = vector.extract_strided_slice %979 {offsets = [0, 0], sizes = [16, 256], strides = [1, 1]} : vector<144x256xf32> to vector<16x256xf32>
    %981 = vector.extract_strided_slice %980 {offsets = [0, 239], sizes = [16, 17], strides = [1, 1]} : vector<16x256xf32> to vector<16x17xf32>
    %982 = vector.extract_strided_slice %980 {offsets = [0, 0], sizes = [16, 239], strides = [1, 1]} : vector<16x256xf32> to vector<16x239xf32>
    %983 = tpu.concatenate %981, %982 in 1 : vector<16x17xf32>, vector<16x239xf32> -> vector<16x256xf32>
    %c0_419 = arith.constant 0 : index
    %c0_420 = arith.constant 0 : index
    %c0_421 = arith.constant 0 : index
    %984 = vector.load %arg12[%c0_419, %c0_420, %c0_421] : memref<9x1x256xf32, #tpu.memory_space<vmem>>, vector<1x1x256xf32>
    %985 = vector.shape_cast %984 : vector<1x1x256xf32> to vector<1x256xf32>
    %986 = vector.broadcast %985 : vector<1x256xf32> to vector<16x256xf32>
    %987 = arith.mulf %983, %986 : vector<16x256xf32>
    %988 = vector.extract_strided_slice %979 {offsets = [16, 0], sizes = [16, 256], strides = [1, 1]} : vector<144x256xf32> to vector<16x256xf32>
    %989 = vector.extract_strided_slice %988 {offsets = [0, 240], sizes = [16, 16], strides = [1, 1]} : vector<16x256xf32> to vector<16x16xf32>
    %990 = vector.extract_strided_slice %988 {offsets = [0, 0], sizes = [16, 240], strides = [1, 1]} : vector<16x256xf32> to vector<16x240xf32>
    %991 = tpu.concatenate %989, %990 in 1 : vector<16x16xf32>, vector<16x240xf32> -> vector<16x256xf32>
    %c1_422 = arith.constant 1 : index
    %c0_423 = arith.constant 0 : index
    %c0_424 = arith.constant 0 : index
    %992 = vector.load %arg12[%c1_422, %c0_423, %c0_424] : memref<9x1x256xf32, #tpu.memory_space<vmem>>, vector<1x1x256xf32>
    %993 = vector.shape_cast %992 : vector<1x1x256xf32> to vector<1x256xf32>
    %994 = vector.broadcast %993 : vector<1x256xf32> to vector<16x256xf32>
    %995 = arith.mulf %991, %994 : vector<16x256xf32>
    %996 = arith.addf %987, %995 : vector<16x256xf32>
    %997 = vector.extract_strided_slice %979 {offsets = [32, 0], sizes = [16, 256], strides = [1, 1]} : vector<144x256xf32> to vector<16x256xf32>
    %998 = vector.extract_strided_slice %997 {offsets = [0, 241], sizes = [16, 15], strides = [1, 1]} : vector<16x256xf32> to vector<16x15xf32>
    %999 = vector.extract_strided_slice %997 {offsets = [0, 0], sizes = [16, 241], strides = [1, 1]} : vector<16x256xf32> to vector<16x241xf32>
    %1000 = tpu.concatenate %998, %999 in 1 : vector<16x15xf32>, vector<16x241xf32> -> vector<16x256xf32>
    %c2_425 = arith.constant 2 : index
    %c0_426 = arith.constant 0 : index
    %c0_427 = arith.constant 0 : index
    %1001 = vector.load %arg12[%c2_425, %c0_426, %c0_427] : memref<9x1x256xf32, #tpu.memory_space<vmem>>, vector<1x1x256xf32>
    %1002 = vector.shape_cast %1001 : vector<1x1x256xf32> to vector<1x256xf32>
    %1003 = vector.broadcast %1002 : vector<1x256xf32> to vector<16x256xf32>
    %1004 = arith.mulf %1000, %1003 : vector<16x256xf32>
    %1005 = arith.addf %996, %1004 : vector<16x256xf32>
    %1006 = vector.extract_strided_slice %979 {offsets = [48, 0], sizes = [16, 256], strides = [1, 1]} : vector<144x256xf32> to vector<16x256xf32>
    %1007 = vector.extract_strided_slice %1006 {offsets = [0, 255], sizes = [16, 1], strides = [1, 1]} : vector<16x256xf32> to vector<16x1xf32>
    %1008 = vector.extract_strided_slice %1006 {offsets = [0, 0], sizes = [16, 255], strides = [1, 1]} : vector<16x256xf32> to vector<16x255xf32>
    %1009 = tpu.concatenate %1007, %1008 in 1 : vector<16x1xf32>, vector<16x255xf32> -> vector<16x256xf32>
    %c3_428 = arith.constant 3 : index
    %c0_429 = arith.constant 0 : index
    %c0_430 = arith.constant 0 : index
    %1010 = vector.load %arg12[%c3_428, %c0_429, %c0_430] : memref<9x1x256xf32, #tpu.memory_space<vmem>>, vector<1x1x256xf32>
    %1011 = vector.shape_cast %1010 : vector<1x1x256xf32> to vector<1x256xf32>
    %1012 = vector.broadcast %1011 : vector<1x256xf32> to vector<16x256xf32>
    %1013 = arith.mulf %1009, %1012 : vector<16x256xf32>
    %1014 = arith.addf %1005, %1013 : vector<16x256xf32>
    %1015 = vector.extract_strided_slice %979 {offsets = [64, 0], sizes = [16, 256], strides = [1, 1]} : vector<144x256xf32> to vector<16x256xf32>
    %1016 = arith.addf %1014, %1015 : vector<16x256xf32>
    %1017 = vector.extract_strided_slice %979 {offsets = [80, 0], sizes = [16, 256], strides = [1, 1]} : vector<144x256xf32> to vector<16x256xf32>
    %1018 = vector.extract_strided_slice %1017 {offsets = [0, 1], sizes = [16, 255], strides = [1, 1]} : vector<16x256xf32> to vector<16x255xf32>
    %1019 = vector.extract_strided_slice %1017 {offsets = [0, 0], sizes = [16, 1], strides = [1, 1]} : vector<16x256xf32> to vector<16x1xf32>
    %1020 = tpu.concatenate %1018, %1019 in 1 : vector<16x255xf32>, vector<16x1xf32> -> vector<16x256xf32>
    %c5_431 = arith.constant 5 : index
    %c0_432 = arith.constant 0 : index
    %c0_433 = arith.constant 0 : index
    %1021 = vector.load %arg12[%c5_431, %c0_432, %c0_433] : memref<9x1x256xf32, #tpu.memory_space<vmem>>, vector<1x1x256xf32>
    %1022 = vector.shape_cast %1021 : vector<1x1x256xf32> to vector<1x256xf32>
    %1023 = vector.broadcast %1022 : vector<1x256xf32> to vector<16x256xf32>
    %1024 = arith.mulf %1020, %1023 : vector<16x256xf32>
    %1025 = arith.addf %1016, %1024 : vector<16x256xf32>
    %1026 = vector.extract_strided_slice %979 {offsets = [96, 0], sizes = [16, 256], strides = [1, 1]} : vector<144x256xf32> to vector<16x256xf32>
    %1027 = vector.extract_strided_slice %1026 {offsets = [0, 15], sizes = [16, 241], strides = [1, 1]} : vector<16x256xf32> to vector<16x241xf32>
    %1028 = vector.extract_strided_slice %1026 {offsets = [0, 0], sizes = [16, 15], strides = [1, 1]} : vector<16x256xf32> to vector<16x15xf32>
    %1029 = tpu.concatenate %1027, %1028 in 1 : vector<16x241xf32>, vector<16x15xf32> -> vector<16x256xf32>
    %c6_434 = arith.constant 6 : index
    %c0_435 = arith.constant 0 : index
    %c0_436 = arith.constant 0 : index
    %1030 = vector.load %arg12[%c6_434, %c0_435, %c0_436] : memref<9x1x256xf32, #tpu.memory_space<vmem>>, vector<1x1x256xf32>
    %1031 = vector.shape_cast %1030 : vector<1x1x256xf32> to vector<1x256xf32>
    %1032 = vector.broadcast %1031 : vector<1x256xf32> to vector<16x256xf32>
    %1033 = arith.mulf %1029, %1032 : vector<16x256xf32>
    %1034 = arith.addf %1025, %1033 : vector<16x256xf32>
    %1035 = vector.extract_strided_slice %979 {offsets = [112, 0], sizes = [16, 256], strides = [1, 1]} : vector<144x256xf32> to vector<16x256xf32>
    %1036 = vector.extract_strided_slice %1035 {offsets = [0, 16], sizes = [16, 240], strides = [1, 1]} : vector<16x256xf32> to vector<16x240xf32>
    %1037 = vector.extract_strided_slice %1035 {offsets = [0, 0], sizes = [16, 16], strides = [1, 1]} : vector<16x256xf32> to vector<16x16xf32>
    %1038 = tpu.concatenate %1036, %1037 in 1 : vector<16x240xf32>, vector<16x16xf32> -> vector<16x256xf32>
    %c7_437 = arith.constant 7 : index
    %c0_438 = arith.constant 0 : index
    %c0_439 = arith.constant 0 : index
    %1039 = vector.load %arg12[%c7_437, %c0_438, %c0_439] : memref<9x1x256xf32, #tpu.memory_space<vmem>>, vector<1x1x256xf32>
    %1040 = vector.shape_cast %1039 : vector<1x1x256xf32> to vector<1x256xf32>
    %1041 = vector.broadcast %1040 : vector<1x256xf32> to vector<16x256xf32>
    %1042 = arith.mulf %1038, %1041 : vector<16x256xf32>
    %1043 = arith.addf %1034, %1042 : vector<16x256xf32>
    %1044 = vector.extract_strided_slice %979 {offsets = [128, 0], sizes = [16, 256], strides = [1, 1]} : vector<144x256xf32> to vector<16x256xf32>
    %1045 = vector.extract_strided_slice %1044 {offsets = [0, 17], sizes = [16, 239], strides = [1, 1]} : vector<16x256xf32> to vector<16x239xf32>
    %1046 = vector.extract_strided_slice %1044 {offsets = [0, 0], sizes = [16, 17], strides = [1, 1]} : vector<16x256xf32> to vector<16x17xf32>
    %1047 = tpu.concatenate %1045, %1046 in 1 : vector<16x239xf32>, vector<16x17xf32> -> vector<16x256xf32>
    %c8_440 = arith.constant 8 : index
    %c0_441 = arith.constant 0 : index
    %c0_442 = arith.constant 0 : index
    %1048 = vector.load %arg12[%c8_440, %c0_441, %c0_442] : memref<9x1x256xf32, #tpu.memory_space<vmem>>, vector<1x1x256xf32>
    %1049 = vector.shape_cast %1048 : vector<1x1x256xf32> to vector<1x256xf32>
    %1050 = vector.broadcast %1049 : vector<1x256xf32> to vector<16x256xf32>
    %1051 = arith.mulf %1047, %1050 : vector<16x256xf32>
    %1052 = arith.addf %1043, %1051 : vector<16x256xf32>
    %c2_443 = arith.constant 2 : index
    %c0_444 = arith.constant 0 : index
    %c0_445 = arith.constant 0 : index
    %1053 = vector.load %arg8[%c2_443, %c0_444, %c0_445] : memref<3x16x1xf32, #tpu.memory_space<vmem>>, vector<1x16x1xf32>
    %1054 = vector.shape_cast %1053 : vector<1x16x1xf32> to vector<16x1xf32>
    %1055 = vector.broadcast %1054 : vector<16x1xf32> to vector<16x256xf32>
    %1056 = arith.addf %1052, %1055 : vector<16x256xf32>
    %cst_446 = arith.constant 0.000000e+00 : f32
    %1057 = vector.broadcast %cst_446 : f32 to vector<16x256xf32>
    %1058 = arith.cmpf ogt, %1056, %1057 : vector<16x256xf32>
    %cst_447 = arith.constant 2.000000e-01 : f32
    %1059 = vector.broadcast %cst_447 : f32 to vector<16x256xf32>
    %1060 = arith.mulf %1059, %1056 : vector<16x256xf32>
    %1061 = arith.select %1058, %1056, %1060 : vector<16x256xi1>, vector<16x256xf32>
    %1062 = arith.truncf %1061 : vector<16x256xf32> to vector<16x256xbf16>
    %c32_448 = arith.constant 32 : index
    %c0_449 = arith.constant 0 : index
    %1063 = vector.load %arg14[%c32_448, %c0_449] : memref<80x256xbf16, #tpu.memory_space<vmem>>, vector<16x256xbf16>
    tpu.vector_store %arg14[%c32_448, %c0_449], %1062 {strides = array<i32>} : memref<80x256xbf16, #tpu.memory_space<vmem>>, vector<16x256xbf16>,
    %c2_450 = arith.constant 2 : index
    %c0_451 = arith.constant 0 : index
    %c0_452 = arith.constant 0 : index
    %1064 = vector.load %arg4[%c2_450, %c0_451, %c0_452] : memref<3x144x48xbf16, #tpu.memory_space<vmem>>, vector<1x144x48xbf16>
    %1065 = vector.shape_cast %1064 : vector<1x144x48xbf16> to vector<144x48xbf16>
    %c0_453 = arith.constant 0 : index
    %c0_454 = arith.constant 0 : index
    %1066 = vector.load %arg14[%c0_453, %c0_454] : memref<80x256xbf16, #tpu.memory_space<vmem>>, vector<48x256xbf16>
    %cst_455 = arith.constant dense<0.000000e+00> : vector<144x256xf32>
    %1067 = tpu.matmul %1065, %1066, %cst_455 {dimension_numbers = #tpu.dot_dimension_numbers<[1], [0], [0], [1], [0, 0, 1, 1], [], []>} : vector<144x48xbf16>, vector<48x256xbf16>, vector<144x256xf32> -> vector<144x256xf32>
    %1068 = vector.extract_strided_slice %1067 {offsets = [0, 0], sizes = [16, 256], strides = [1, 1]} : vector<144x256xf32> to vector<16x256xf32>
    %1069 = vector.extract_strided_slice %1068 {offsets = [0, 239], sizes = [16, 17], strides = [1, 1]} : vector<16x256xf32> to vector<16x17xf32>
    %1070 = vector.extract_strided_slice %1068 {offsets = [0, 0], sizes = [16, 239], strides = [1, 1]} : vector<16x256xf32> to vector<16x239xf32>
    %1071 = tpu.concatenate %1069, %1070 in 1 : vector<16x17xf32>, vector<16x239xf32> -> vector<16x256xf32>
    %c0_456 = arith.constant 0 : index
    %c0_457 = arith.constant 0 : index
    %c0_458 = arith.constant 0 : index
    %1072 = vector.load %arg12[%c0_456, %c0_457, %c0_458] : memref<9x1x256xf32, #tpu.memory_space<vmem>>, vector<1x1x256xf32>
    %1073 = vector.shape_cast %1072 : vector<1x1x256xf32> to vector<1x256xf32>
    %1074 = vector.broadcast %1073 : vector<1x256xf32> to vector<16x256xf32>
    %1075 = arith.mulf %1071, %1074 : vector<16x256xf32>
    %1076 = vector.extract_strided_slice %1067 {offsets = [16, 0], sizes = [16, 256], strides = [1, 1]} : vector<144x256xf32> to vector<16x256xf32>
    %1077 = vector.extract_strided_slice %1076 {offsets = [0, 240], sizes = [16, 16], strides = [1, 1]} : vector<16x256xf32> to vector<16x16xf32>
    %1078 = vector.extract_strided_slice %1076 {offsets = [0, 0], sizes = [16, 240], strides = [1, 1]} : vector<16x256xf32> to vector<16x240xf32>
    %1079 = tpu.concatenate %1077, %1078 in 1 : vector<16x16xf32>, vector<16x240xf32> -> vector<16x256xf32>
    %c1_459 = arith.constant 1 : index
    %c0_460 = arith.constant 0 : index
    %c0_461 = arith.constant 0 : index
    %1080 = vector.load %arg12[%c1_459, %c0_460, %c0_461] : memref<9x1x256xf32, #tpu.memory_space<vmem>>, vector<1x1x256xf32>
    %1081 = vector.shape_cast %1080 : vector<1x1x256xf32> to vector<1x256xf32>
    %1082 = vector.broadcast %1081 : vector<1x256xf32> to vector<16x256xf32>
    %1083 = arith.mulf %1079, %1082 : vector<16x256xf32>
    %1084 = arith.addf %1075, %1083 : vector<16x256xf32>
    %1085 = vector.extract_strided_slice %1067 {offsets = [32, 0], sizes = [16, 256], strides = [1, 1]} : vector<144x256xf32> to vector<16x256xf32>
    %1086 = vector.extract_strided_slice %1085 {offsets = [0, 241], sizes = [16, 15], strides = [1, 1]} : vector<16x256xf32> to vector<16x15xf32>
    %1087 = vector.extract_strided_slice %1085 {offsets = [0, 0], sizes = [16, 241], strides = [1, 1]} : vector<16x256xf32> to vector<16x241xf32>
    %1088 = tpu.concatenate %1086, %1087 in 1 : vector<16x15xf32>, vector<16x241xf32> -> vector<16x256xf32>
    %c2_462 = arith.constant 2 : index
    %c0_463 = arith.constant 0 : index
    %c0_464 = arith.constant 0 : index
    %1089 = vector.load %arg12[%c2_462, %c0_463, %c0_464] : memref<9x1x256xf32, #tpu.memory_space<vmem>>, vector<1x1x256xf32>
    %1090 = vector.shape_cast %1089 : vector<1x1x256xf32> to vector<1x256xf32>
    %1091 = vector.broadcast %1090 : vector<1x256xf32> to vector<16x256xf32>
    %1092 = arith.mulf %1088, %1091 : vector<16x256xf32>
    %1093 = arith.addf %1084, %1092 : vector<16x256xf32>
    %1094 = vector.extract_strided_slice %1067 {offsets = [48, 0], sizes = [16, 256], strides = [1, 1]} : vector<144x256xf32> to vector<16x256xf32>
    %1095 = vector.extract_strided_slice %1094 {offsets = [0, 255], sizes = [16, 1], strides = [1, 1]} : vector<16x256xf32> to vector<16x1xf32>
    %1096 = vector.extract_strided_slice %1094 {offsets = [0, 0], sizes = [16, 255], strides = [1, 1]} : vector<16x256xf32> to vector<16x255xf32>
    %1097 = tpu.concatenate %1095, %1096 in 1 : vector<16x1xf32>, vector<16x255xf32> -> vector<16x256xf32>
    %c3_465 = arith.constant 3 : index
    %c0_466 = arith.constant 0 : index
    %c0_467 = arith.constant 0 : index
    %1098 = vector.load %arg12[%c3_465, %c0_466, %c0_467] : memref<9x1x256xf32, #tpu.memory_space<vmem>>, vector<1x1x256xf32>
    %1099 = vector.shape_cast %1098 : vector<1x1x256xf32> to vector<1x256xf32>
    %1100 = vector.broadcast %1099 : vector<1x256xf32> to vector<16x256xf32>
    %1101 = arith.mulf %1097, %1100 : vector<16x256xf32>
    %1102 = arith.addf %1093, %1101 : vector<16x256xf32>
    %1103 = vector.extract_strided_slice %1067 {offsets = [64, 0], sizes = [16, 256], strides = [1, 1]} : vector<144x256xf32> to vector<16x256xf32>
    %1104 = arith.addf %1102, %1103 : vector<16x256xf32>
    %1105 = vector.extract_strided_slice %1067 {offsets = [80, 0], sizes = [16, 256], strides = [1, 1]} : vector<144x256xf32> to vector<16x256xf32>
    %1106 = vector.extract_strided_slice %1105 {offsets = [0, 1], sizes = [16, 255], strides = [1, 1]} : vector<16x256xf32> to vector<16x255xf32>
    %1107 = vector.extract_strided_slice %1105 {offsets = [0, 0], sizes = [16, 1], strides = [1, 1]} : vector<16x256xf32> to vector<16x1xf32>
    %1108 = tpu.concatenate %1106, %1107 in 1 : vector<16x255xf32>, vector<16x1xf32> -> vector<16x256xf32>
    %c5_468 = arith.constant 5 : index
    %c0_469 = arith.constant 0 : index
    %c0_470 = arith.constant 0 : index
    %1109 = vector.load %arg12[%c5_468, %c0_469, %c0_470] : memref<9x1x256xf32, #tpu.memory_space<vmem>>, vector<1x1x256xf32>
    %1110 = vector.shape_cast %1109 : vector<1x1x256xf32> to vector<1x256xf32>
    %1111 = vector.broadcast %1110 : vector<1x256xf32> to vector<16x256xf32>
    %1112 = arith.mulf %1108, %1111 : vector<16x256xf32>
    %1113 = arith.addf %1104, %1112 : vector<16x256xf32>
    %1114 = vector.extract_strided_slice %1067 {offsets = [96, 0], sizes = [16, 256], strides = [1, 1]} : vector<144x256xf32> to vector<16x256xf32>
    %1115 = vector.extract_strided_slice %1114 {offsets = [0, 15], sizes = [16, 241], strides = [1, 1]} : vector<16x256xf32> to vector<16x241xf32>
    %1116 = vector.extract_strided_slice %1114 {offsets = [0, 0], sizes = [16, 15], strides = [1, 1]} : vector<16x256xf32> to vector<16x15xf32>
    %1117 = tpu.concatenate %1115, %1116 in 1 : vector<16x241xf32>, vector<16x15xf32> -> vector<16x256xf32>
    %c6_471 = arith.constant 6 : index
    %c0_472 = arith.constant 0 : index
    %c0_473 = arith.constant 0 : index
    %1118 = vector.load %arg12[%c6_471, %c0_472, %c0_473] : memref<9x1x256xf32, #tpu.memory_space<vmem>>, vector<1x1x256xf32>
    %1119 = vector.shape_cast %1118 : vector<1x1x256xf32> to vector<1x256xf32>
    %1120 = vector.broadcast %1119 : vector<1x256xf32> to vector<16x256xf32>
    %1121 = arith.mulf %1117, %1120 : vector<16x256xf32>
    %1122 = arith.addf %1113, %1121 : vector<16x256xf32>
    %1123 = vector.extract_strided_slice %1067 {offsets = [112, 0], sizes = [16, 256], strides = [1, 1]} : vector<144x256xf32> to vector<16x256xf32>
    %1124 = vector.extract_strided_slice %1123 {offsets = [0, 16], sizes = [16, 240], strides = [1, 1]} : vector<16x256xf32> to vector<16x240xf32>
    %1125 = vector.extract_strided_slice %1123 {offsets = [0, 0], sizes = [16, 16], strides = [1, 1]} : vector<16x256xf32> to vector<16x16xf32>
    %1126 = tpu.concatenate %1124, %1125 in 1 : vector<16x240xf32>, vector<16x16xf32> -> vector<16x256xf32>
    %c7_474 = arith.constant 7 : index
    %c0_475 = arith.constant 0 : index
    %c0_476 = arith.constant 0 : index
    %1127 = vector.load %arg12[%c7_474, %c0_475, %c0_476] : memref<9x1x256xf32, #tpu.memory_space<vmem>>, vector<1x1x256xf32>
    %1128 = vector.shape_cast %1127 : vector<1x1x256xf32> to vector<1x256xf32>
    %1129 = vector.broadcast %1128 : vector<1x256xf32> to vector<16x256xf32>
    %1130 = arith.mulf %1126, %1129 : vector<16x256xf32>
    %1131 = arith.addf %1122, %1130 : vector<16x256xf32>
    %1132 = vector.extract_strided_slice %1067 {offsets = [128, 0], sizes = [16, 256], strides = [1, 1]} : vector<144x256xf32> to vector<16x256xf32>
    %1133 = vector.extract_strided_slice %1132 {offsets = [0, 17], sizes = [16, 239], strides = [1, 1]} : vector<16x256xf32> to vector<16x239xf32>
    %1134 = vector.extract_strided_slice %1132 {offsets = [0, 0], sizes = [16, 17], strides = [1, 1]} : vector<16x256xf32> to vector<16x17xf32>
    %1135 = tpu.concatenate %1133, %1134 in 1 : vector<16x239xf32>, vector<16x17xf32> -> vector<16x256xf32>
    %c8_477 = arith.constant 8 : index
    %c0_478 = arith.constant 0 : index
    %c0_479 = arith.constant 0 : index
    %1136 = vector.load %arg12[%c8_477, %c0_478, %c0_479] : memref<9x1x256xf32, #tpu.memory_space<vmem>>, vector<1x1x256xf32>
    %1137 = vector.shape_cast %1136 : vector<1x1x256xf32> to vector<1x256xf32>
    %1138 = vector.broadcast %1137 : vector<1x256xf32> to vector<16x256xf32>
    %1139 = arith.mulf %1135, %1138 : vector<16x256xf32>
    %1140 = arith.addf %1131, %1139 : vector<16x256xf32>
    %c2_480 = arith.constant 2 : index
    %c0_481 = arith.constant 0 : index
    %c0_482 = arith.constant 0 : index
    %1141 = vector.load %arg9[%c2_480, %c0_481, %c0_482] : memref<3x16x1xf32, #tpu.memory_space<vmem>>, vector<1x16x1xf32>
    %1142 = vector.shape_cast %1141 : vector<1x16x1xf32> to vector<16x1xf32>
    %1143 = vector.broadcast %1142 : vector<16x1xf32> to vector<16x256xf32>
    %1144 = arith.addf %1140, %1143 : vector<16x256xf32>
    %cst_483 = arith.constant 0.000000e+00 : f32
    %1145 = vector.broadcast %cst_483 : f32 to vector<16x256xf32>
    %1146 = arith.cmpf ogt, %1144, %1145 : vector<16x256xf32>
    %cst_484 = arith.constant 2.000000e-01 : f32
    %1147 = vector.broadcast %cst_484 : f32 to vector<16x256xf32>
    %1148 = arith.mulf %1147, %1144 : vector<16x256xf32>
    %1149 = arith.select %1146, %1144, %1148 : vector<16x256xi1>, vector<16x256xf32>
    %1150 = arith.truncf %1149 : vector<16x256xf32> to vector<16x256xbf16>
    %c48_485 = arith.constant 48 : index
    %c0_486 = arith.constant 0 : index
    %1151 = vector.load %arg14[%c48_485, %c0_486] : memref<80x256xbf16, #tpu.memory_space<vmem>>, vector<16x256xbf16>
    tpu.vector_store %arg14[%c48_485, %c0_486], %1150 {strides = array<i32>} : memref<80x256xbf16, #tpu.memory_space<vmem>>, vector<16x256xbf16>,
    %c2_487 = arith.constant 2 : index
    %c0_488 = arith.constant 0 : index
    %c0_489 = arith.constant 0 : index
    %1152 = vector.load %arg5[%c2_487, %c0_488, %c0_489] : memref<3x144x64xbf16, #tpu.memory_space<vmem>>, vector<1x144x64xbf16>
    %1153 = vector.shape_cast %1152 : vector<1x144x64xbf16> to vector<144x64xbf16>
    %c0_490 = arith.constant 0 : index
    %c0_491 = arith.constant 0 : index
    %1154 = vector.load %arg14[%c0_490, %c0_491] : memref<80x256xbf16, #tpu.memory_space<vmem>>, vector<64x256xbf16>
    %cst_492 = arith.constant dense<0.000000e+00> : vector<144x256xf32>
    %1155 = tpu.matmul %1153, %1154, %cst_492 {dimension_numbers = #tpu.dot_dimension_numbers<[1], [0], [0], [1], [0, 0, 1, 1], [], []>} : vector<144x64xbf16>, vector<64x256xbf16>, vector<144x256xf32> -> vector<144x256xf32>
    %1156 = vector.extract_strided_slice %1155 {offsets = [0, 0], sizes = [16, 256], strides = [1, 1]} : vector<144x256xf32> to vector<16x256xf32>
    %1157 = vector.extract_strided_slice %1156 {offsets = [0, 239], sizes = [16, 17], strides = [1, 1]} : vector<16x256xf32> to vector<16x17xf32>
    %1158 = vector.extract_strided_slice %1156 {offsets = [0, 0], sizes = [16, 239], strides = [1, 1]} : vector<16x256xf32> to vector<16x239xf32>
    %1159 = tpu.concatenate %1157, %1158 in 1 : vector<16x17xf32>, vector<16x239xf32> -> vector<16x256xf32>
    %c0_493 = arith.constant 0 : index
    %c0_494 = arith.constant 0 : index
    %c0_495 = arith.constant 0 : index
    %1160 = vector.load %arg12[%c0_493, %c0_494, %c0_495] : memref<9x1x256xf32, #tpu.memory_space<vmem>>, vector<1x1x256xf32>
    %1161 = vector.shape_cast %1160 : vector<1x1x256xf32> to vector<1x256xf32>
    %1162 = vector.broadcast %1161 : vector<1x256xf32> to vector<16x256xf32>
    %1163 = arith.mulf %1159, %1162 : vector<16x256xf32>
    %1164 = vector.extract_strided_slice %1155 {offsets = [16, 0], sizes = [16, 256], strides = [1, 1]} : vector<144x256xf32> to vector<16x256xf32>
    %1165 = vector.extract_strided_slice %1164 {offsets = [0, 240], sizes = [16, 16], strides = [1, 1]} : vector<16x256xf32> to vector<16x16xf32>
    %1166 = vector.extract_strided_slice %1164 {offsets = [0, 0], sizes = [16, 240], strides = [1, 1]} : vector<16x256xf32> to vector<16x240xf32>
    %1167 = tpu.concatenate %1165, %1166 in 1 : vector<16x16xf32>, vector<16x240xf32> -> vector<16x256xf32>
    %c1_496 = arith.constant 1 : index
    %c0_497 = arith.constant 0 : index
    %c0_498 = arith.constant 0 : index
    %1168 = vector.load %arg12[%c1_496, %c0_497, %c0_498] : memref<9x1x256xf32, #tpu.memory_space<vmem>>, vector<1x1x256xf32>
    %1169 = vector.shape_cast %1168 : vector<1x1x256xf32> to vector<1x256xf32>
    %1170 = vector.broadcast %1169 : vector<1x256xf32> to vector<16x256xf32>
    %1171 = arith.mulf %1167, %1170 : vector<16x256xf32>
    %1172 = arith.addf %1163, %1171 : vector<16x256xf32>
    %1173 = vector.extract_strided_slice %1155 {offsets = [32, 0], sizes = [16, 256], strides = [1, 1]} : vector<144x256xf32> to vector<16x256xf32>
    %1174 = vector.extract_strided_slice %1173 {offsets = [0, 241], sizes = [16, 15], strides = [1, 1]} : vector<16x256xf32> to vector<16x15xf32>
    %1175 = vector.extract_strided_slice %1173 {offsets = [0, 0], sizes = [16, 241], strides = [1, 1]} : vector<16x256xf32> to vector<16x241xf32>
    %1176 = tpu.concatenate %1174, %1175 in 1 : vector<16x15xf32>, vector<16x241xf32> -> vector<16x256xf32>
    %c2_499 = arith.constant 2 : index
    %c0_500 = arith.constant 0 : index
    %c0_501 = arith.constant 0 : index
    %1177 = vector.load %arg12[%c2_499, %c0_500, %c0_501] : memref<9x1x256xf32, #tpu.memory_space<vmem>>, vector<1x1x256xf32>
    %1178 = vector.shape_cast %1177 : vector<1x1x256xf32> to vector<1x256xf32>
    %1179 = vector.broadcast %1178 : vector<1x256xf32> to vector<16x256xf32>
    %1180 = arith.mulf %1176, %1179 : vector<16x256xf32>
    %1181 = arith.addf %1172, %1180 : vector<16x256xf32>
    %1182 = vector.extract_strided_slice %1155 {offsets = [48, 0], sizes = [16, 256], strides = [1, 1]} : vector<144x256xf32> to vector<16x256xf32>
    %1183 = vector.extract_strided_slice %1182 {offsets = [0, 255], sizes = [16, 1], strides = [1, 1]} : vector<16x256xf32> to vector<16x1xf32>
    %1184 = vector.extract_strided_slice %1182 {offsets = [0, 0], sizes = [16, 255], strides = [1, 1]} : vector<16x256xf32> to vector<16x255xf32>
    %1185 = tpu.concatenate %1183, %1184 in 1 : vector<16x1xf32>, vector<16x255xf32> -> vector<16x256xf32>
    %c3_502 = arith.constant 3 : index
    %c0_503 = arith.constant 0 : index
    %c0_504 = arith.constant 0 : index
    %1186 = vector.load %arg12[%c3_502, %c0_503, %c0_504] : memref<9x1x256xf32, #tpu.memory_space<vmem>>, vector<1x1x256xf32>
    %1187 = vector.shape_cast %1186 : vector<1x1x256xf32> to vector<1x256xf32>
    %1188 = vector.broadcast %1187 : vector<1x256xf32> to vector<16x256xf32>
    %1189 = arith.mulf %1185, %1188 : vector<16x256xf32>
    %1190 = arith.addf %1181, %1189 : vector<16x256xf32>
    %1191 = vector.extract_strided_slice %1155 {offsets = [64, 0], sizes = [16, 256], strides = [1, 1]} : vector<144x256xf32> to vector<16x256xf32>
    %1192 = arith.addf %1190, %1191 : vector<16x256xf32>
    %1193 = vector.extract_strided_slice %1155 {offsets = [80, 0], sizes = [16, 256], strides = [1, 1]} : vector<144x256xf32> to vector<16x256xf32>
    %1194 = vector.extract_strided_slice %1193 {offsets = [0, 1], sizes = [16, 255], strides = [1, 1]} : vector<16x256xf32> to vector<16x255xf32>
    %1195 = vector.extract_strided_slice %1193 {offsets = [0, 0], sizes = [16, 1], strides = [1, 1]} : vector<16x256xf32> to vector<16x1xf32>
    %1196 = tpu.concatenate %1194, %1195 in 1 : vector<16x255xf32>, vector<16x1xf32> -> vector<16x256xf32>
    %c5_505 = arith.constant 5 : index
    %c0_506 = arith.constant 0 : index
    %c0_507 = arith.constant 0 : index
    %1197 = vector.load %arg12[%c5_505, %c0_506, %c0_507] : memref<9x1x256xf32, #tpu.memory_space<vmem>>, vector<1x1x256xf32>
    %1198 = vector.shape_cast %1197 : vector<1x1x256xf32> to vector<1x256xf32>
    %1199 = vector.broadcast %1198 : vector<1x256xf32> to vector<16x256xf32>
    %1200 = arith.mulf %1196, %1199 : vector<16x256xf32>
    %1201 = arith.addf %1192, %1200 : vector<16x256xf32>
    %1202 = vector.extract_strided_slice %1155 {offsets = [96, 0], sizes = [16, 256], strides = [1, 1]} : vector<144x256xf32> to vector<16x256xf32>
    %1203 = vector.extract_strided_slice %1202 {offsets = [0, 15], sizes = [16, 241], strides = [1, 1]} : vector<16x256xf32> to vector<16x241xf32>
    %1204 = vector.extract_strided_slice %1202 {offsets = [0, 0], sizes = [16, 15], strides = [1, 1]} : vector<16x256xf32> to vector<16x15xf32>
    %1205 = tpu.concatenate %1203, %1204 in 1 : vector<16x241xf32>, vector<16x15xf32> -> vector<16x256xf32>
    %c6_508 = arith.constant 6 : index
    %c0_509 = arith.constant 0 : index
    %c0_510 = arith.constant 0 : index
    %1206 = vector.load %arg12[%c6_508, %c0_509, %c0_510] : memref<9x1x256xf32, #tpu.memory_space<vmem>>, vector<1x1x256xf32>
    %1207 = vector.shape_cast %1206 : vector<1x1x256xf32> to vector<1x256xf32>
    %1208 = vector.broadcast %1207 : vector<1x256xf32> to vector<16x256xf32>
    %1209 = arith.mulf %1205, %1208 : vector<16x256xf32>
    %1210 = arith.addf %1201, %1209 : vector<16x256xf32>
    %1211 = vector.extract_strided_slice %1155 {offsets = [112, 0], sizes = [16, 256], strides = [1, 1]} : vector<144x256xf32> to vector<16x256xf32>
    %1212 = vector.extract_strided_slice %1211 {offsets = [0, 16], sizes = [16, 240], strides = [1, 1]} : vector<16x256xf32> to vector<16x240xf32>
    %1213 = vector.extract_strided_slice %1211 {offsets = [0, 0], sizes = [16, 16], strides = [1, 1]} : vector<16x256xf32> to vector<16x16xf32>
    %1214 = tpu.concatenate %1212, %1213 in 1 : vector<16x240xf32>, vector<16x16xf32> -> vector<16x256xf32>
    %c7_511 = arith.constant 7 : index
    %c0_512 = arith.constant 0 : index
    %c0_513 = arith.constant 0 : index
    %1215 = vector.load %arg12[%c7_511, %c0_512, %c0_513] : memref<9x1x256xf32, #tpu.memory_space<vmem>>, vector<1x1x256xf32>
    %1216 = vector.shape_cast %1215 : vector<1x1x256xf32> to vector<1x256xf32>
    %1217 = vector.broadcast %1216 : vector<1x256xf32> to vector<16x256xf32>
    %1218 = arith.mulf %1214, %1217 : vector<16x256xf32>
    %1219 = arith.addf %1210, %1218 : vector<16x256xf32>
    %1220 = vector.extract_strided_slice %1155 {offsets = [128, 0], sizes = [16, 256], strides = [1, 1]} : vector<144x256xf32> to vector<16x256xf32>
    %1221 = vector.extract_strided_slice %1220 {offsets = [0, 17], sizes = [16, 239], strides = [1, 1]} : vector<16x256xf32> to vector<16x239xf32>
    %1222 = vector.extract_strided_slice %1220 {offsets = [0, 0], sizes = [16, 17], strides = [1, 1]} : vector<16x256xf32> to vector<16x17xf32>
    %1223 = tpu.concatenate %1221, %1222 in 1 : vector<16x239xf32>, vector<16x17xf32> -> vector<16x256xf32>
    %c8_514 = arith.constant 8 : index
    %c0_515 = arith.constant 0 : index
    %c0_516 = arith.constant 0 : index
    %1224 = vector.load %arg12[%c8_514, %c0_515, %c0_516] : memref<9x1x256xf32, #tpu.memory_space<vmem>>, vector<1x1x256xf32>
    %1225 = vector.shape_cast %1224 : vector<1x1x256xf32> to vector<1x256xf32>
    %1226 = vector.broadcast %1225 : vector<1x256xf32> to vector<16x256xf32>
    %1227 = arith.mulf %1223, %1226 : vector<16x256xf32>
    %1228 = arith.addf %1219, %1227 : vector<16x256xf32>
    %c2_517 = arith.constant 2 : index
    %c0_518 = arith.constant 0 : index
    %c0_519 = arith.constant 0 : index
    %1229 = vector.load %arg10[%c2_517, %c0_518, %c0_519] : memref<3x16x1xf32, #tpu.memory_space<vmem>>, vector<1x16x1xf32>
    %1230 = vector.shape_cast %1229 : vector<1x16x1xf32> to vector<16x1xf32>
    %1231 = vector.broadcast %1230 : vector<16x1xf32> to vector<16x256xf32>
    %1232 = arith.addf %1228, %1231 : vector<16x256xf32>
    %cst_520 = arith.constant 0.000000e+00 : f32
    %1233 = vector.broadcast %cst_520 : f32 to vector<16x256xf32>
    %1234 = arith.cmpf ogt, %1232, %1233 : vector<16x256xf32>
    %cst_521 = arith.constant 2.000000e-01 : f32
    %1235 = vector.broadcast %cst_521 : f32 to vector<16x256xf32>
    %1236 = arith.mulf %1235, %1232 : vector<16x256xf32>
    %1237 = arith.select %1234, %1232, %1236 : vector<16x256xi1>, vector<16x256xf32>
    %1238 = arith.truncf %1237 : vector<16x256xf32> to vector<16x256xbf16>
    %c64_522 = arith.constant 64 : index
    %c0_523 = arith.constant 0 : index
    %1239 = vector.load %arg14[%c64_522, %c0_523] : memref<80x256xbf16, #tpu.memory_space<vmem>>, vector<16x256xbf16>
    tpu.vector_store %arg14[%c64_522, %c0_523], %1238 {strides = array<i32>} : memref<80x256xbf16, #tpu.memory_space<vmem>>, vector<16x256xbf16>,
    %c2_524 = arith.constant 2 : index
    %c0_525 = arith.constant 0 : index
    %c0_526 = arith.constant 0 : index
    %1240 = vector.load %arg6[%c2_524, %c0_525, %c0_526] : memref<3x144x80xbf16, #tpu.memory_space<vmem>>, vector<1x144x80xbf16>
    %1241 = vector.shape_cast %1240 : vector<1x144x80xbf16> to vector<144x80xbf16>
    %c0_527 = arith.constant 0 : index
    %c0_528 = arith.constant 0 : index
    %1242 = vector.load %arg14[%c0_527, %c0_528] : memref<80x256xbf16, #tpu.memory_space<vmem>>, vector<80x256xbf16>
    %cst_529 = arith.constant dense<0.000000e+00> : vector<144x256xf32>
    %1243 = tpu.matmul %1241, %1242, %cst_529 {dimension_numbers = #tpu.dot_dimension_numbers<[1], [0], [0], [1], [0, 0, 1, 1], [], []>} : vector<144x80xbf16>, vector<80x256xbf16>, vector<144x256xf32> -> vector<144x256xf32>
    %1244 = vector.extract_strided_slice %1243 {offsets = [0, 0], sizes = [16, 256], strides = [1, 1]} : vector<144x256xf32> to vector<16x256xf32>
    %1245 = vector.extract_strided_slice %1244 {offsets = [0, 239], sizes = [16, 17], strides = [1, 1]} : vector<16x256xf32> to vector<16x17xf32>
    %1246 = vector.extract_strided_slice %1244 {offsets = [0, 0], sizes = [16, 239], strides = [1, 1]} : vector<16x256xf32> to vector<16x239xf32>
    %1247 = tpu.concatenate %1245, %1246 in 1 : vector<16x17xf32>, vector<16x239xf32> -> vector<16x256xf32>
    %c0_530 = arith.constant 0 : index
    %c0_531 = arith.constant 0 : index
    %c0_532 = arith.constant 0 : index
    %1248 = vector.load %arg12[%c0_530, %c0_531, %c0_532] : memref<9x1x256xf32, #tpu.memory_space<vmem>>, vector<1x1x256xf32>
    %1249 = vector.shape_cast %1248 : vector<1x1x256xf32> to vector<1x256xf32>
    %1250 = vector.broadcast %1249 : vector<1x256xf32> to vector<16x256xf32>
    %1251 = arith.mulf %1247, %1250 : vector<16x256xf32>
    %1252 = vector.extract_strided_slice %1243 {offsets = [16, 0], sizes = [16, 256], strides = [1, 1]} : vector<144x256xf32> to vector<16x256xf32>
    %1253 = vector.extract_strided_slice %1252 {offsets = [0, 240], sizes = [16, 16], strides = [1, 1]} : vector<16x256xf32> to vector<16x16xf32>
    %1254 = vector.extract_strided_slice %1252 {offsets = [0, 0], sizes = [16, 240], strides = [1, 1]} : vector<16x256xf32> to vector<16x240xf32>
    %1255 = tpu.concatenate %1253, %1254 in 1 : vector<16x16xf32>, vector<16x240xf32> -> vector<16x256xf32>
    %c1_533 = arith.constant 1 : index
    %c0_534 = arith.constant 0 : index
    %c0_535 = arith.constant 0 : index
    %1256 = vector.load %arg12[%c1_533, %c0_534, %c0_535] : memref<9x1x256xf32, #tpu.memory_space<vmem>>, vector<1x1x256xf32>
    %1257 = vector.shape_cast %1256 : vector<1x1x256xf32> to vector<1x256xf32>
    %1258 = vector.broadcast %1257 : vector<1x256xf32> to vector<16x256xf32>
    %1259 = arith.mulf %1255, %1258 : vector<16x256xf32>
    %1260 = arith.addf %1251, %1259 : vector<16x256xf32>
    %1261 = vector.extract_strided_slice %1243 {offsets = [32, 0], sizes = [16, 256], strides = [1, 1]} : vector<144x256xf32> to vector<16x256xf32>
    %1262 = vector.extract_strided_slice %1261 {offsets = [0, 241], sizes = [16, 15], strides = [1, 1]} : vector<16x256xf32> to vector<16x15xf32>
    %1263 = vector.extract_strided_slice %1261 {offsets = [0, 0], sizes = [16, 241], strides = [1, 1]} : vector<16x256xf32> to vector<16x241xf32>
    %1264 = tpu.concatenate %1262, %1263 in 1 : vector<16x15xf32>, vector<16x241xf32> -> vector<16x256xf32>
    %c2_536 = arith.constant 2 : index
    %c0_537 = arith.constant 0 : index
    %c0_538 = arith.constant 0 : index
    %1265 = vector.load %arg12[%c2_536, %c0_537, %c0_538] : memref<9x1x256xf32, #tpu.memory_space<vmem>>, vector<1x1x256xf32>
    %1266 = vector.shape_cast %1265 : vector<1x1x256xf32> to vector<1x256xf32>
    %1267 = vector.broadcast %1266 : vector<1x256xf32> to vector<16x256xf32>
    %1268 = arith.mulf %1264, %1267 : vector<16x256xf32>
    %1269 = arith.addf %1260, %1268 : vector<16x256xf32>
    %1270 = vector.extract_strided_slice %1243 {offsets = [48, 0], sizes = [16, 256], strides = [1, 1]} : vector<144x256xf32> to vector<16x256xf32>
    %1271 = vector.extract_strided_slice %1270 {offsets = [0, 255], sizes = [16, 1], strides = [1, 1]} : vector<16x256xf32> to vector<16x1xf32>
    %1272 = vector.extract_strided_slice %1270 {offsets = [0, 0], sizes = [16, 255], strides = [1, 1]} : vector<16x256xf32> to vector<16x255xf32>
    %1273 = tpu.concatenate %1271, %1272 in 1 : vector<16x1xf32>, vector<16x255xf32> -> vector<16x256xf32>
    %c3_539 = arith.constant 3 : index
    %c0_540 = arith.constant 0 : index
    %c0_541 = arith.constant 0 : index
    %1274 = vector.load %arg12[%c3_539, %c0_540, %c0_541] : memref<9x1x256xf32, #tpu.memory_space<vmem>>, vector<1x1x256xf32>
    %1275 = vector.shape_cast %1274 : vector<1x1x256xf32> to vector<1x256xf32>
    %1276 = vector.broadcast %1275 : vector<1x256xf32> to vector<16x256xf32>
    %1277 = arith.mulf %1273, %1276 : vector<16x256xf32>
    %1278 = arith.addf %1269, %1277 : vector<16x256xf32>
    %1279 = vector.extract_strided_slice %1243 {offsets = [64, 0], sizes = [16, 256], strides = [1, 1]} : vector<144x256xf32> to vector<16x256xf32>
    %1280 = arith.addf %1278, %1279 : vector<16x256xf32>
    %1281 = vector.extract_strided_slice %1243 {offsets = [80, 0], sizes = [16, 256], strides = [1, 1]} : vector<144x256xf32> to vector<16x256xf32>
    %1282 = vector.extract_strided_slice %1281 {offsets = [0, 1], sizes = [16, 255], strides = [1, 1]} : vector<16x256xf32> to vector<16x255xf32>
    %1283 = vector.extract_strided_slice %1281 {offsets = [0, 0], sizes = [16, 1], strides = [1, 1]} : vector<16x256xf32> to vector<16x1xf32>
    %1284 = tpu.concatenate %1282, %1283 in 1 : vector<16x255xf32>, vector<16x1xf32> -> vector<16x256xf32>
    %c5_542 = arith.constant 5 : index
    %c0_543 = arith.constant 0 : index
    %c0_544 = arith.constant 0 : index
    %1285 = vector.load %arg12[%c5_542, %c0_543, %c0_544] : memref<9x1x256xf32, #tpu.memory_space<vmem>>, vector<1x1x256xf32>
    %1286 = vector.shape_cast %1285 : vector<1x1x256xf32> to vector<1x256xf32>
    %1287 = vector.broadcast %1286 : vector<1x256xf32> to vector<16x256xf32>
    %1288 = arith.mulf %1284, %1287 : vector<16x256xf32>
    %1289 = arith.addf %1280, %1288 : vector<16x256xf32>
    %1290 = vector.extract_strided_slice %1243 {offsets = [96, 0], sizes = [16, 256], strides = [1, 1]} : vector<144x256xf32> to vector<16x256xf32>
    %1291 = vector.extract_strided_slice %1290 {offsets = [0, 15], sizes = [16, 241], strides = [1, 1]} : vector<16x256xf32> to vector<16x241xf32>
    %1292 = vector.extract_strided_slice %1290 {offsets = [0, 0], sizes = [16, 15], strides = [1, 1]} : vector<16x256xf32> to vector<16x15xf32>
    %1293 = tpu.concatenate %1291, %1292 in 1 : vector<16x241xf32>, vector<16x15xf32> -> vector<16x256xf32>
    %c6_545 = arith.constant 6 : index
    %c0_546 = arith.constant 0 : index
    %c0_547 = arith.constant 0 : index
    %1294 = vector.load %arg12[%c6_545, %c0_546, %c0_547] : memref<9x1x256xf32, #tpu.memory_space<vmem>>, vector<1x1x256xf32>
    %1295 = vector.shape_cast %1294 : vector<1x1x256xf32> to vector<1x256xf32>
    %1296 = vector.broadcast %1295 : vector<1x256xf32> to vector<16x256xf32>
    %1297 = arith.mulf %1293, %1296 : vector<16x256xf32>
    %1298 = arith.addf %1289, %1297 : vector<16x256xf32>
    %1299 = vector.extract_strided_slice %1243 {offsets = [112, 0], sizes = [16, 256], strides = [1, 1]} : vector<144x256xf32> to vector<16x256xf32>
    %1300 = vector.extract_strided_slice %1299 {offsets = [0, 16], sizes = [16, 240], strides = [1, 1]} : vector<16x256xf32> to vector<16x240xf32>
    %1301 = vector.extract_strided_slice %1299 {offsets = [0, 0], sizes = [16, 16], strides = [1, 1]} : vector<16x256xf32> to vector<16x16xf32>
    %1302 = tpu.concatenate %1300, %1301 in 1 : vector<16x240xf32>, vector<16x16xf32> -> vector<16x256xf32>
    %c7_548 = arith.constant 7 : index
    %c0_549 = arith.constant 0 : index
    %c0_550 = arith.constant 0 : index
    %1303 = vector.load %arg12[%c7_548, %c0_549, %c0_550] : memref<9x1x256xf32, #tpu.memory_space<vmem>>, vector<1x1x256xf32>
    %1304 = vector.shape_cast %1303 : vector<1x1x256xf32> to vector<1x256xf32>
    %1305 = vector.broadcast %1304 : vector<1x256xf32> to vector<16x256xf32>
    %1306 = arith.mulf %1302, %1305 : vector<16x256xf32>
    %1307 = arith.addf %1298, %1306 : vector<16x256xf32>
    %1308 = vector.extract_strided_slice %1243 {offsets = [128, 0], sizes = [16, 256], strides = [1, 1]} : vector<144x256xf32> to vector<16x256xf32>
    %1309 = vector.extract_strided_slice %1308 {offsets = [0, 17], sizes = [16, 239], strides = [1, 1]} : vector<16x256xf32> to vector<16x239xf32>
    %1310 = vector.extract_strided_slice %1308 {offsets = [0, 0], sizes = [16, 17], strides = [1, 1]} : vector<16x256xf32> to vector<16x17xf32>
    %1311 = tpu.concatenate %1309, %1310 in 1 : vector<16x239xf32>, vector<16x17xf32> -> vector<16x256xf32>
    %c8_551 = arith.constant 8 : index
    %c0_552 = arith.constant 0 : index
    %c0_553 = arith.constant 0 : index
    %1312 = vector.load %arg12[%c8_551, %c0_552, %c0_553] : memref<9x1x256xf32, #tpu.memory_space<vmem>>, vector<1x1x256xf32>
    %1313 = vector.shape_cast %1312 : vector<1x1x256xf32> to vector<1x256xf32>
    %1314 = vector.broadcast %1313 : vector<1x256xf32> to vector<16x256xf32>
    %1315 = arith.mulf %1311, %1314 : vector<16x256xf32>
    %1316 = arith.addf %1307, %1315 : vector<16x256xf32>
    %c2_554 = arith.constant 2 : index
    %c0_555 = arith.constant 0 : index
    %c0_556 = arith.constant 0 : index
    %1317 = vector.load %arg11[%c2_554, %c0_555, %c0_556] : memref<3x16x1xf32, #tpu.memory_space<vmem>>, vector<1x16x1xf32>
    %1318 = vector.shape_cast %1317 : vector<1x16x1xf32> to vector<16x1xf32>
    %1319 = vector.broadcast %1318 : vector<16x1xf32> to vector<16x256xf32>
    %1320 = arith.addf %1316, %1319 : vector<16x256xf32>
    %cst_557 = arith.constant 2.000000e-01 : f32
    %1321 = vector.broadcast %cst_557 : f32 to vector<16x256xf32>
    %1322 = arith.mulf %1321, %1320 : vector<16x256xf32>
    %c0_558 = arith.constant 0 : index
    %c0_559 = arith.constant 0 : index
    %1323 = vector.load %arg15[%c0_558, %c0_559] : memref<16x256xf32, #tpu.memory_space<vmem>>, vector<16x256xf32>
    %1324 = arith.addf %1322, %1323 : vector<16x256xf32>
    %c0_560 = arith.constant 0 : index
    %c0_561 = arith.constant 0 : index
    %1325 = vector.load %arg15[%c0_560, %c0_561] : memref<16x256xf32, #tpu.memory_space<vmem>>, vector<16x256xf32>
    tpu.vector_store %arg15[%c0_560, %c0_561], %1324 {strides = array<i32>} : memref<16x256xf32, #tpu.memory_space<vmem>>, vector<16x256xf32>,
    %c0_562 = arith.constant 0 : index
    %c0_563 = arith.constant 0 : index
    %1326 = vector.load %arg15[%c0_562, %c0_563] : memref<16x256xf32, #tpu.memory_space<vmem>>, vector<16x256xf32>
    %cst_564 = arith.constant 2.000000e-01 : f32
    %1327 = vector.broadcast %cst_564 : f32 to vector<16x256xf32>
    %1328 = arith.mulf %1327, %1326 : vector<16x256xf32>
    %c0_565 = arith.constant 0 : index
    %c0_566 = arith.constant 0 : index
    %c0_567 = arith.constant 0 : index
    %1329 = vector.load %arg1[%c0_565, %c0_566, %c0_567] : memref<1x16x256xf32, #tpu.memory_space<vmem>>, vector<1x16x256xf32>
    %1330 = vector.shape_cast %1329 : vector<1x16x256xf32> to vector<16x256xf32>
    %1331 = arith.addf %1328, %1330 : vector<16x256xf32>
    %c0_568 = arith.constant 0 : index
    %c0_569 = arith.constant 0 : index
    %c0_570 = arith.constant 0 : index
    %1332 = vector.load %arg13[%c0_568, %c0_569, %c0_570] : memref<1x16x256xf32, #tpu.memory_space<vmem>>, vector<1x16x256xf32>
    %1333 = vector.shape_cast %1332 : vector<1x16x256xf32> to vector<16x256xf32>
    %1334 = vector.shape_cast %1331 : vector<16x256xf32> to vector<1x16x256xf32>
    tpu.vector_store %arg13[%c0_568, %c0_569, %c0_570], %1334 {strides = array<i32>} : memref<1x16x256xf32, #tpu.memory_space<vmem>>, vector<1x16x256xf32>,
    return
  }
  func.func @transform_0(%arg0: i32) -> (i32, i32, i32) {
    %c0_i32 = arith.constant 0 : i32
    %c0_i32_0 = arith.constant 0 : i32
    %c0_i32_1 = arith.constant 0 : i32
    return %arg0, %c0_i32, %c0_i32_0 : i32, i32, i32
  }
  func.func @transform_1(%arg0: i32) -> (i32, i32, i32) {
    %c0_i32 = arith.constant 0 : i32
    %c0_i32_0 = arith.constant 0 : i32
    %c0_i32_1 = arith.constant 0 : i32
    %c0_i32_2 = arith.constant 0 : i32
    return %c0_i32, %c0_i32_0, %c0_i32_1 : i32, i32, i32
  }
  func.func @transform_2(%arg0: i32) -> (i32, i32, i32) {
    %c0_i32 = arith.constant 0 : i32
    %c0_i32_0 = arith.constant 0 : i32
    %c0_i32_1 = arith.constant 0 : i32
    %c0_i32_2 = arith.constant 0 : i32
    return %c0_i32, %c0_i32_0, %c0_i32_1 : i32, i32, i32
  }
  func.func @transform_3(%arg0: i32) -> (i32, i32, i32) {
    %c0_i32 = arith.constant 0 : i32
    %c0_i32_0 = arith.constant 0 : i32
    %c0_i32_1 = arith.constant 0 : i32
    %c0_i32_2 = arith.constant 0 : i32
    return %c0_i32, %c0_i32_0, %c0_i32_1 : i32, i32, i32
  }
  func.func @transform_4(%arg0: i32) -> (i32, i32, i32) {
    %c0_i32 = arith.constant 0 : i32
    %c0_i32_0 = arith.constant 0 : i32
    %c0_i32_1 = arith.constant 0 : i32
    %c0_i32_2 = arith.constant 0 : i32
    return %c0_i32, %c0_i32_0, %c0_i32_1 : i32, i32, i32
  }
  func.func @transform_5(%arg0: i32) -> (i32, i32, i32) {
    %c0_i32 = arith.constant 0 : i32
    %c0_i32_0 = arith.constant 0 : i32
    %c0_i32_1 = arith.constant 0 : i32
    %c0_i32_2 = arith.constant 0 : i32
    return %c0_i32, %c0_i32_0, %c0_i32_1 : i32, i32, i32
  }
  func.func @transform_6(%arg0: i32) -> (i32, i32, i32) {
    %c0_i32 = arith.constant 0 : i32
    %c0_i32_0 = arith.constant 0 : i32
    %c0_i32_1 = arith.constant 0 : i32
    %c0_i32_2 = arith.constant 0 : i32
    return %c0_i32, %c0_i32_0, %c0_i32_1 : i32, i32, i32
  }
  func.func @transform_7(%arg0: i32) -> (i32, i32, i32) {
    %c0_i32 = arith.constant 0 : i32
    %c0_i32_0 = arith.constant 0 : i32
    %c0_i32_1 = arith.constant 0 : i32
    %c0_i32_2 = arith.constant 0 : i32
    return %c0_i32, %c0_i32_0, %c0_i32_1 : i32, i32, i32
  }
  func.func @transform_8(%arg0: i32) -> (i32, i32, i32) {
    %c0_i32 = arith.constant 0 : i32
    %c0_i32_0 = arith.constant 0 : i32
    %c0_i32_1 = arith.constant 0 : i32
    %c0_i32_2 = arith.constant 0 : i32
    return %c0_i32, %c0_i32_0, %c0_i32_1 : i32, i32, i32
  }
  func.func @transform_9(%arg0: i32) -> (i32, i32, i32) {
    %c0_i32 = arith.constant 0 : i32
    %c0_i32_0 = arith.constant 0 : i32
    %c0_i32_1 = arith.constant 0 : i32
    %c0_i32_2 = arith.constant 0 : i32
    return %c0_i32, %c0_i32_0, %c0_i32_1 : i32, i32, i32
  }
  func.func @transform_10(%arg0: i32) -> (i32, i32, i32) {
    %c0_i32 = arith.constant 0 : i32
    %c0_i32_0 = arith.constant 0 : i32
    %c0_i32_1 = arith.constant 0 : i32
    %c0_i32_2 = arith.constant 0 : i32
    return %c0_i32, %c0_i32_0, %c0_i32_1 : i32, i32, i32
  }
  func.func @transform_11(%arg0: i32) -> (i32, i32, i32) {
    %c0_i32 = arith.constant 0 : i32
    %c0_i32_0 = arith.constant 0 : i32
    %c0_i32_1 = arith.constant 0 : i32
    %c0_i32_2 = arith.constant 0 : i32
    return %c0_i32, %c0_i32_0, %c0_i32_1 : i32, i32, i32
  }
  func.func @transform_12(%arg0: i32) -> (i32, i32, i32) {
    %c0_i32 = arith.constant 0 : i32
    %c0_i32_0 = arith.constant 0 : i32
    %c0_i32_1 = arith.constant 0 : i32
    return %arg0, %c0_i32, %c0_i32_0 : i32, i32, i32
  }
}

</mosaic_0001>

<llo_original>
// kernel: rrdb_forward.1
$region0: #{rrdb_forward.1}
  #allocation0 [shape = 'u32[]', space=smem, size = 0x4, offset = 0x4, fixed_abs, tag = 'smem constant byte address 0x4 - core index']
  #allocation1 [shape = 'u32[144,128]{1,0:T(1,128)}', space=vmem, size = 0x12000, scoped, tag = 'internal scratch']
  #allocation2 [shape = 'bf16[80,256]{1,0:T(16,128)(2,1)}', space=vmem, size = 0xa000, scoped, tag = 'scratch operand']
  #allocation3 [shape = 'f32[16,256]{1,0:T(8,128)}', space=vmem, size = 0x4000, scoped, tag = 'scratch operand']
  %s0 = inlined_call_operand.vmem [shape: f32[2,16,256], index: 0, kind: input, shape index: {}]
  %s1 = inlined_call_operand.vmem [shape: bf16[3,144,16], index: 1, kind: input, shape index: {}]
  %s2 = inlined_call_operand.vmem [shape: bf16[3,144,32], index: 2, kind: input, shape index: {}]
  %s3 = inlined_call_operand.vmem [shape: bf16[3,144,48], index: 3, kind: input, shape index: {}]
  %s4 = inlined_call_operand.vmem [shape: bf16[3,144,64], index: 4, kind: input, shape index: {}]
  %s5 = inlined_call_operand.vmem [shape: bf16[3,144,80], index: 5, kind: input, shape index: {}]
  %s6 = inlined_call_operand.vmem [shape: f32[3,16,1], index: 6, kind: input, shape index: {}]
  %s7 = inlined_call_operand.vmem [shape: f32[3,16,1], index: 7, kind: input, shape index: {}]
  %s8 = inlined_call_operand.vmem [shape: f32[3,16,1], index: 8, kind: input, shape index: {}]
  %s9 = inlined_call_operand.vmem [shape: f32[3,16,1], index: 9, kind: input, shape index: {}]
  %s10 = inlined_call_operand.vmem [shape: f32[3,16,1], index: 10, kind: input, shape index: {}]
  %s11 = inlined_call_operand.vmem [shape: f32[9,1,256], index: 11, kind: input, shape index: {}]
  %s12 = inlined_call_operand.vmem [shape: f32[2,16,256], index: 12, kind: output, shape index: {}]
  %s13 = sld [smem:[#allocation0]]
  $region81: #{rrdb_forward.1} parent=0
    _
  %s15 = ssub.s32 1, %s13
  %s16 = scalar_select 0, %s15, %s13
  loop: start=0, step=1, limit=4
  $region2: #{rrdb_forward.1} parent=0 // loop_pre_header
    _
  $region3: #{rrdb_forward.1} parent=0 // loop_header
    %s18 = sphi 0, %s22
    %p19 = scmp.ge.s32.totalorder %s18, 4
    %s28 = sphi 0, %s30
    %s31 = sphi 0, %s28
    %s32 = sphi 0, %s31
    %s48 = sphi 0, %s32
    %s52 = sphi 0, %s52
    %s54 = sphi 0, %s52
    %s55 = sphi 0, %s54
    %s69 = sphi 0, %s55
    %s73 = sphi 0, %s73
    %s75 = sphi 0, %s73
    %s76 = sphi 0, %s75
    %s90 = sphi 0, %s76
    %s94 = sphi 0, %s94
    %s96 = sphi 0, %s94
    %s97 = sphi 0, %s96
    %s111 = sphi 0, %s97
    %s115 = sphi 0, %s115
    %s117 = sphi 0, %s115
    %s118 = sphi 0, %s117
    %s132 = sphi 0, %s118
    %s136 = sphi 0, %s136
    %s138 = sphi 0, %s136
    %s139 = sphi 0, %s138
    %s153 = sphi 0, %s139
    %s157 = sphi 0, %s157
    %s159 = sphi 0, %s157
    %s160 = sphi 0, %s159
    %s174 = sphi 0, %s160
    %s178 = sphi 0, %s178
    %s180 = sphi 0, %s178
    %s181 = sphi 0, %s180
    %s195 = sphi 0, %s181
    %s199 = sphi 0, %s199
    %s201 = sphi 0, %s199
    %s202 = sphi 0, %s201
    %s216 = sphi 0, %s202
    %s220 = sphi 0, %s220
    %s222 = sphi 0, %s220
    %s223 = sphi 0, %s222
    %s237 = sphi 0, %s223
    %s241 = sphi 0, %s241
    %s243 = sphi 0, %s241
    %s244 = sphi 0, %s243
    %s258 = sphi 0, %s244
    %s262 = sphi 0, %s262
    %s264 = sphi 0, %s262
    %s265 = sphi 0, %s264
    %s279 = sphi 0, %s265
    %s285 = sphi 0, %s287
    %s288 = sphi 0, %s285
    %s289 = sphi 0, %s288
    %s305 = sphi 0, %s289
  $region4: #{rrdb_forward.1} parent=0 // loop_header_branch
    %21 = sbr.rel (%p19) target = $region8
  $region5: #{rrdb_forward.1} parent=0 // loop_body
    %s23 = ssub.s32 %s18, 1
    %s24 = ssub.s32 %s18, 2
    %s25 = sadd.s32 %s18, 1
    %s26 = ssub.s32 %s18, %s25
    %p27 = scmp.eq.s32.totalorder %s26, 0
    %s29 = sadd.s32 %s28, 1
    %s30 = scalar_select %p27, %s28, %s29
    %p33 = pneg %p27
    %p34 = scmp.eq.s32.totalorder %s18, 1
    %p35 = por %p33, %p34
    %p36 = scmp.ne.s32.totalorder %s28, %s31
    %p37 = scmp.eq.s32.totalorder %s18, 0
    %p38 = por %p36, %p37
    %p39 = scmp.ne.s32.totalorder %s28, %s31
    %p40 = scmp.eq.s32.totalorder %s23, 1
    %p41 = por %p39, %p40
    %p42 = scmp.ne.s32.totalorder %s31, %s32
    %p43 = scmp.eq.s32.totalorder %s23, 0
    %p44 = por %p42, %p43
    %p45 = scmp.ne.s32.totalorder %s31, %s32
    %p46 = scmp.eq.s32.totalorder %s24, 1
    %p47 = por %p45, %p46
    %p49 = scmp.ne.s32.totalorder %s32, %s48
    %p50 = scmp.eq.s32.totalorder %s24, 0
    %p51 = por %p49, %p50
    %s53 = sadd.s32 %s52, 1
    %p56 = scmp.eq.s32.totalorder %s18, 1
    %p57 = scmp.ne.s32.totalorder %s52, %s54
    %p58 = scmp.eq.s32.totalorder %s18, 0
    %p59 = por %p57, %p58
    %p60 = scmp.ne.s32.totalorder %s52, %s54
    %p61 = scmp.eq.s32.totalorder %s23, 1
    %p62 = por %p60, %p61
    %p63 = scmp.ne.s32.totalorder %s54, %s55
    %p64 = scmp.eq.s32.totalorder %s23, 0
    %p65 = por %p63, %p64
    %p66 = scmp.ne.s32.totalorder %s54, %s55
    %p67 = scmp.eq.s32.totalorder %s24, 1
    %p68 = por %p66, %p67
    %p70 = scmp.ne.s32.totalorder %s55, %s69
    %p71 = scmp.eq.s32.totalorder %s24, 0
    %p72 = por %p70, %p71
    %s74 = sadd.s32 %s73, 1
    %p77 = scmp.eq.s32.totalorder %s18, 1
    %p78 = scmp.ne.s32.totalorder %s73, %s75
    %p79 = scmp.eq.s32.totalorder %s18, 0
    %p80 = por %p78, %p79
    %p81 = scmp.ne.s32.totalorder %s73, %s75
    %p82 = scmp.eq.s32.totalorder %s23, 1
    %p83 = por %p81, %p82
    %p84 = scmp.ne.s32.totalorder %s75, %s76
    %p85 = scmp.eq.s32.totalorder %s23, 0
    %p86 = por %p84, %p85
    %p87 = scmp.ne.s32.totalorder %s75, %s76
    %p88 = scmp.eq.s32.totalorder %s24, 1
    %p89 = por %p87, %p88
    %p91 = scmp.ne.s32.totalorder %s76, %s90
    %p92 = scmp.eq.s32.totalorder %s24, 0
    %p93 = por %p91, %p92
    %s95 = sadd.s32 %s94, 1
    %p98 = scmp.eq.s32.totalorder %s18, 1
    %p99 = scmp.ne.s32.totalorder %s94, %s96
    %p100 = scmp.eq.s32.totalorder %s18, 0
    %p101 = por %p99, %p100
    %p102 = scmp.ne.s32.totalorder %s94, %s96
    %p103 = scmp.eq.s32.totalorder %s23, 1
    %p104 = por %p102, %p103
    %p105 = scmp.ne.s32.totalorder %s96, %s97
    %p106 = scmp.eq.s32.totalorder %s23, 0
    %p107 = por %p105, %p106
    %p108 = scmp.ne.s32.totalorder %s96, %s97
    %p109 = scmp.eq.s32.totalorder %s24, 1
    %p110 = por %p108, %p109
    %p112 = scmp.ne.s32.totalorder %s97, %s111
    %p113 = scmp.eq.s32.totalorder %s24, 0
    %p114 = por %p112, %p113
    %s116 = sadd.s32 %s115, 1
    %p119 = scmp.eq.s32.totalorder %s18, 1
    %p120 = scmp.ne.s32.totalorder %s115, %s117
    %p121 = scmp.eq.s32.totalorder %s18, 0
    %p122 = por %p120, %p121
    %p123 = scmp.ne.s32.totalorder %s115, %s117
    %p124 = scmp.eq.s32.totalorder %s23, 1
    %p125 = por %p123, %p124
    %p126 = scmp.ne.s32.totalorder %s117, %s118
    %p127 = scmp.eq.s32.totalorder %s23, 0
    %p128 = por %p126, %p127
    %p129 = scmp.ne.s32.totalorder %s117, %s118
    %p130 = scmp.eq.s32.totalorder %s24, 1
    %p131 = por %p129, %p130
    %p133 = scmp.ne.s32.totalorder %s118, %s132
    %p134 = scmp.eq.s32.totalorder %s24, 0
    %p135 = por %p133, %p134
    %s137 = sadd.s32 %s136, 1
    %p140 = scmp.eq.s32.totalorder %s18, 1
    %p141 = scmp.ne.s32.totalorder %s136, %s138
    %p142 = scmp.eq.s32.totalorder %s18, 0
    %p143 = por %p141, %p142
    %p144 = scmp.ne.s32.totalorder %s136, %s138
    %p145 = scmp.eq.s32.totalorder %s23, 1
    %p146 = por %p144, %p145
    %p147 = scmp.ne.s32.totalorder %s138, %s139
    %p148 = scmp.eq.s32.totalorder %s23, 0
    %p149 = por %p147, %p148
    %p150 = scmp.ne.s32.totalorder %s138, %s139
    %p151 = scmp.eq.s32.totalorder %s24, 1
    %p152 = por %p150, %p151
    %p154 = scmp.ne.s32.totalorder %s139, %s153
    %p155 = scmp.eq.s32.totalorder %s24, 0
    %p156 = por %p154, %p155
    %s158 = sadd.s32 %s157, 1
    %p161 = scmp.eq.s32.totalorder %s18, 1
    %p162 = scmp.ne.s32.totalorder %s157, %s159
    %p163 = scmp.eq.s32.totalorder %s18, 0
    %p164 = por %p162, %p163
    %p165 = scmp.ne.s32.totalorder %s157, %s159
    %p166 = scmp.eq.s32.totalorder %s23, 1
    %p167 = por %p165, %p166
    %p168 = scmp.ne.s32.totalorder %s159, %s160
    %p169 = scmp.eq.s32.totalorder %s23, 0
    %p170 = por %p168, %p169
    %p171 = scmp.ne.s32.totalorder %s159, %s160
    %p172 = scmp.eq.s32.totalorder %s24, 1
    %p173 = por %p171, %p172
    %p175 = scmp.ne.s32.totalorder %s160, %s174
    %p176 = scmp.eq.s32.totalorder %s24, 0
    %p177 = por %p175, %p176
    %s179 = sadd.s32 %s178, 1
    %p182 = scmp.eq.s32.totalorder %s18, 1
    %p183 = scmp.ne.s32.totalorder %s178, %s180
    %p184 = scmp.eq.s32.totalorder %s18, 0
    %p185 = por %p183, %p184
    %p186 = scmp.ne.s32.totalorder %s178, %s180
    %p187 = scmp.eq.s32.totalorder %s23, 1
    %p188 = por %p186, %p187
    %p189 = scmp.ne.s32.totalorder %s180, %s181
    %p190 = scmp.eq.s32.totalorder %s23, 0
    %p191 = por %p189, %p190
    %p192 = scmp.ne.s32.totalorder %s180, %s181
    %p193 = scmp.eq.s32.totalorder %s24, 1
    %p194 = por %p192, %p193
    %p196 = scmp.ne.s32.totalorder %s181, %s195
    %p197 = scmp.eq.s32.totalorder %s24, 0
    %p198 = por %p196, %p197
    %s200 = sadd.s32 %s199, 1
    %p203 = scmp.eq.s32.totalorder %s18, 1
    %p204 = scmp.ne.s32.totalorder %s199, %s201
    %p205 = scmp.eq.s32.totalorder %s18, 0
    %p206 = por %p204, %p205
    %p207 = scmp.ne.s32.totalorder %s199, %s201
    %p208 = scmp.eq.s32.totalorder %s23, 1
    %p209 = por %p207, %p208
    %p210 = scmp.ne.s32.totalorder %s201, %s202
    %p211 = scmp.eq.s32.totalorder %s23, 0
    %p212 = por %p210, %p211
    %p213 = scmp.ne.s32.totalorder %s201, %s202
    %p214 = scmp.eq.s32.totalorder %s24, 1
    %p215 = por %p213, %p214
    %p217 = scmp.ne.s32.totalorder %s202, %s216
    %p218 = scmp.eq.s32.totalorder %s24, 0
    %p219 = por %p217, %p218
    %s221 = sadd.s32 %s220, 1
    %p224 = scmp.eq.s32.totalorder %s18, 1
    %p225 = scmp.ne.s32.totalorder %s220, %s222
    %p226 = scmp.eq.s32.totalorder %s18, 0
    %p227 = por %p225, %p226
    %p228 = scmp.ne.s32.totalorder %s220, %s222
    %p229 = scmp.eq.s32.totalorder %s23, 1
    %p230 = por %p228, %p229
    %p231 = scmp.ne.s32.totalorder %s222, %s223
    %p232 = scmp.eq.s32.totalorder %s23, 0
    %p233 = por %p231, %p232
    %p234 = scmp.ne.s32.totalorder %s222, %s223
    %p235 = scmp.eq.s32.totalorder %s24, 1
    %p236 = por %p234, %p235
    %p238 = scmp.ne.s32.totalorder %s223, %s237
    %p239 = scmp.eq.s32.totalorder %s24, 0
    %p240 = por %p238, %p239
    %s242 = sadd.s32 %s241, 1
    %p245 = scmp.eq.s32.totalorder %s18, 1
    %p246 = scmp.ne.s32.totalorder %s241, %s243
    %p247 = scmp.eq.s32.totalorder %s18, 0
    %p248 = por %p246, %p247
    %p249 = scmp.ne.s32.totalorder %s241, %s243
    %p250 = scmp.eq.s32.totalorder %s23, 1
    %p251 = por %p249, %p250
    %p252 = scmp.ne.s32.totalorder %s243, %s244
    %p253 = scmp.eq.s32.totalorder %s23, 0
    %p254 = por %p252, %p253
    %p255 = scmp.ne.s32.totalorder %s243, %s244
    %p256 = scmp.eq.s32.totalorder %s24, 1
    %p257 = por %p255, %p256
    %p259 = scmp.ne.s32.totalorder %s244, %s258
    %p260 = scmp.eq.s32.totalorder %s24, 0
    %p261 = por %p259, %p260
    %s263 = sadd.s32 %s262, 1
    %p266 = scmp.eq.s32.totalorder %s18, 1
    %p267 = scmp.ne.s32.totalorder %s262, %s264
    %p268 = scmp.eq.s32.totalorder %s18, 0
    %p269 = por %p267, %p268
    %p270 = scmp.ne.s32.totalorder %s262, %s264
    %p271 = scmp.eq.s32.totalorder %s23, 1
    %p272 = por %p270, %p271
    %p273 = scmp.ne.s32.totalorder %s264, %s265
    %p274 = scmp.eq.s32.totalorder %s23, 0
    %p275 = por %p273, %p274
    %p276 = scmp.ne.s32.totalorder %s264, %s265
    %p277 = scmp.eq.s32.totalorder %s24, 1
    %p278 = por %p276, %p277
    %p280 = scmp.ne.s32.totalorder %s265, %s279
    %p281 = scmp.eq.s32.totalorder %s24, 0
    %p282 = por %p280, %p281
    %s283 = ssub.s32 %s18, %s25
    %p284 = scmp.eq.s32.totalorder %s283, 0
    %s286 = sadd.s32 %s285, 1
    %s287 = scalar_select %p284, %s285, %s286
    %p290 = pneg %p284
    %p291 = scmp.eq.s32.totalorder %s18, 1
    %p292 = por %p290, %p291
    %p293 = scmp.ne.s32.totalorder %s285, %s288
    %p294 = scmp.eq.s32.totalorder %s18, 0
    %p295 = por %p293, %p294
    %p296 = scmp.ne.s32.totalorder %s285, %s288
    %p297 = scmp.eq.s32.totalorder %s23, 1
    %p298 = por %p296, %p297
    %p299 = scmp.ne.s32.totalorder %s288, %s289
    %p300 = scmp.eq.s32.totalorder %s23, 0
    %p301 = por %p299, %p300
    %p302 = scmp.ne.s32.totalorder %s288, %s289
    %p303 = scmp.eq.s32.totalorder %s24, 1
    %p304 = por %p302, %p303
    %p306 = scmp.ne.s32.totalorder %s289, %s305
    %p307 = scmp.eq.s32.totalorder %s24, 0
    %p308 = por %p306, %p307
    %p309 = scmp.le.s32.totalorder 1, %s18
    %p310 = scmp.lt.s32.totalorder %s18, 3
    %p311 = pnand %p309, %p310
    %p312 = pneg %p311
    // Predicated region
    $region9: #{rrdb_forward.1} parent=5 // pred_check
      _
    $region10: #{rrdb_forward.1} parent=5 // pred_check_branch
      %314 = sbr.rel (%p311) target = $region12
    $region11: #{rrdb_forward.1} parent=5 // pred_region
      %s315 = ssub.s32 %s18, 1
      // Predicated region
      $region13: #{rrdb_forward.1} parent=11 // pred_check
        %p316 = pneg %p65
      $region14: #{rrdb_forward.1} parent=11 // pred_check_branch
        %318 = sbr.rel (%p316) target = $region16
      $region15: #{rrdb_forward.1} parent=11 // pred_region
        _
      $region16: #{rrdb_forward.1} parent=11 // pred_fallthru
        _
      // Predicated region
      $region17: #{rrdb_forward.1} parent=11 // pred_check
        %p319 = pneg %p86
      $region18: #{rrdb_forward.1} parent=11 // pred_check_branch
        %321 = sbr.rel (%p319) target = $region20
      $region19: #{rrdb_forward.1} parent=11 // pred_region
        _
      $region20: #{rrdb_forward.1} parent=11 // pred_fallthru
        _
      // Predicated region
      $region21: #{rrdb_forward.1} parent=11 // pred_check
        %p322 = pneg %p107
      $region22: #{rrdb_forward.1} parent=11 // pred_check_branch
        %324 = sbr.rel (%p322) target = $region24
      $region23: #{rrdb_forward.1} parent=11 // pred_region
        _
      $region24: #{rrdb_forward.1} parent=11 // pred_fallthru
        _
      // Predicated region
      $region25: #{rrdb_forward.1} parent=11 // pred_check
        %p325 = pneg %p128
      $region26: #{rrdb_forward.1} parent=11 // pred_check_branch
        %327 = sbr.rel (%p325) target = $region28
      $region27: #{rrdb_forward.1} parent=11 // pred_region
        _
      $region28: #{rrdb_forward.1} parent=11 // pred_fallthru
        _
      // Predicated region
      $region29: #{rrdb_forward.1} parent=11 // pred_check
        %p328 = pneg %p149
      $region30: #{rrdb_forward.1} parent=11 // pred_check_branch
        %330 = sbr.rel (%p328) target = $region32
      $region31: #{rrdb_forward.1} parent=11 // pred_region
        _
      $region32: #{rrdb_forward.1} parent=11 // pred_fallthru
        _
      // Predicated region
      $region33: #{rrdb_forward.1} parent=11 // pred_check
        %p331 = pneg %p170
      $region34: #{rrdb_forward.1} parent=11 // pred_check_branch
        %333 = sbr.rel (%p331) target = $region36
      $region35: #{rrdb_forward.1} parent=11 // pred_region
        _
      $region36: #{rrdb_forward.1} parent=11 // pred_fallthru
        _
      // Predicated region
      $region37: #{rrdb_forward.1} parent=11 // pred_check
        %p334 = pneg %p191
      $region38: #{rrdb_forward.1} parent=11 // pred_check_branch
        %336 = sbr.rel (%p334) target = $region40
      $region39: #{rrdb_forward.1} parent=11 // pred_region
        _
      $region40: #{rrdb_forward.1} parent=11 // pred_fallthru
        _
      // Predicated region
      $region41: #{rrdb_forward.1} parent=11 // pred_check
        %p337 = pneg %p212
      $region42: #{rrdb_forward.1} parent=11 // pred_check_branch
        %339 = sbr.rel (%p337) target = $region44
      $region43: #{rrdb_forward.1} parent=11 // pred_region
        _
      $region44: #{rrdb_forward.1} parent=11 // pred_fallthru
        _
      // Predicated region
      $region45: #{rrdb_forward.1} parent=11 // pred_check
        %p340 = pneg %p233
      $region46: #{rrdb_forward.1} parent=11 // pred_check_branch
        %342 = sbr.rel (%p340) target = $region48
      $region47: #{rrdb_forward.1} parent=11 // pred_region
        _
      $region48: #{rrdb_forward.1} parent=11 // pred_fallthru
        _
      // Predicated region
      $region49: #{rrdb_forward.1} parent=11 // pred_check
        %p343 = pneg %p254
      $region50: #{rrdb_forward.1} parent=11 // pred_check_branch
        %345 = sbr.rel (%p343) target = $region52
      $region51: #{rrdb_forward.1} parent=11 // pred_region
        _
      $region52: #{rrdb_forward.1} parent=11 // pred_fallthru
        _
      // Predicated region
      $region53: #{rrdb_forward.1} parent=11 // pred_check
        %p346 = pneg %p275
      $region54: #{rrdb_forward.1} parent=11 // pred_check_branch
        %348 = sbr.rel (%p346) target = $region56
      $region55: #{rrdb_forward.1} parent=11 // pred_region
        _
      $region56: #{rrdb_forward.1} parent=11 // pred_fallthru
        _
    $region12: #{rrdb_forward.1} parent=5 // pred_fallthru
      _
    %p349 = scmp.lt.s32.totalorder %s18, 2
    // Predicated region
    $region57: #{rrdb_forward.1} parent=5 // pred_check
      %p350 = pneg %p349
    $region58: #{rrdb_forward.1} parent=5 // pred_check_branch
      %352 = sbr.rel (%p350) target = $region60
    $region59: #{rrdb_forward.1} parent=5 // pred_region
      // Predicated region
      $region61: #{rrdb_forward.1} parent=59 // pred_check
        %p353 = pneg %p38
      $region62: #{rrdb_forward.1} parent=59 // pred_check_branch
        %355 = sbr.rel (%p353) target = $region64
      $region63: #{rrdb_forward.1} parent=59 // pred_region
        %p356 = scmp.lt.s32.totalorder %s18, 1
        %s357 = scalar_select %p356, %s18, 1
        %s358 = smul.addr %s357, 4
        %s359 = smul.addr %s358, 8
        %s360 = scalar_lea.vmem %s0, %s359
      $region64: #{rrdb_forward.1} parent=59 // pred_fallthru
        _
    $region60: #{rrdb_forward.1} parent=5 // pred_fallthru
      _
    %p361 = scmp.le.s32.totalorder 1, %s18
    %p362 = scmp.lt.s32.totalorder %s18, 3
    %p363 = pnand %p361, %p362
    %p364 = pneg %p363
    // Predicated region
    $region65: #{rrdb_forward.1} parent=5 // pred_check
      _
    $region66: #{rrdb_forward.1} parent=5 // pred_check_branch
      %366 = sbr.rel (%p363) target = $region68
    $region67: #{rrdb_forward.1} parent=5 // pred_region
      %s367 = ssub.s32 %s18, 1
      %p368 = scmp.lt.s32.totalorder %s23, 1
      %s369 = scalar_select %p368, %s23, 1
      %s370 = smul.addr %s369, 4
      %s371 = smul.addr %s370, 8
      %s372 = scalar_lea.vmem %s0, %s371
      %p373 = pneg %p44
      %p374 = pneg %p41
      %p375 = pneg %p65
      %p376 = pneg %p62
      %p377 = pneg %p86
      %p378 = pneg %p83
      %p379 = pneg %p107
      %p380 = pneg %p104
      %p381 = pneg %p128
      %p382 = pneg %p125
      %p383 = pneg %p149
      %p384 = pneg %p146
      %p385 = pneg %p170
      %p386 = pneg %p167
      %p387 = pneg %p191
      %p388 = pneg %p188
      %p389 = pneg %p212
      %p390 = pneg %p209
      %p391 = pneg %p233
      %p392 = pneg %p230
      %p393 = pneg %p254
      %p394 = pneg %p251
      %p395 = pneg %p275
      %p396 = pneg %p272
      %p397 = pneg %p301
      %p398 = pneg %p298
      %p399 = scmp.lt.s32.totalorder %s23, 1
      %s400 = scalar_select %p399, %s23, 1
      %s401 = smul.addr %s400, 4
      %s402 = smul.addr %s401, 8
      %s403 = scalar_lea.vmem %s12, %s402
      %p404 = scmp.lt.s32.totalorder %s23, 1
      %s405 = scalar_select %p404, %s23, 1
      %s406 = smul.addr %s405, 4
      %s407 = smul.addr %s406, 8
      %s408 = scalar_lea.vmem %s0, %s407
      %p409 = scmp.lt.s32.totalorder %s23, 1
      %s410 = scalar_select %p409, %s23, 1
      %s411 = smul.addr %s410, 4
      %s412 = smul.addr %s411, 8
      %s413 = scalar_lea.vmem %s12, %s412
      %v415 = vld [vmem:[%s408] sm:$0xff]
      %v416 = vld [vmem:[%s408 + $0x8] sm:$0xff]
      %v417 = vld [vmem:[%s408 + $0x10] sm:$0xff]
      %v418 = vld [vmem:[%s408 + $0x18] sm:$0xff]
      %419 = vst [vmem:[#allocation3] sm:$0xff] %v415
      %420 = vst [vmem:[#allocation3 + $0x8] sm:$0xff] %v416
      %421 = vst [vmem:[#allocation3 + $0x10] sm:$0xff] %v417
      %422 = vst [vmem:[#allocation3 + $0x18] sm:$0xff] %v418
      %v423 = vld [vmem:[#allocation3] sm:$0xff]
      %v424 = vld [vmem:[#allocation3 + $0x8] sm:$0xff]
      %v425 = vld [vmem:[#allocation3 + $0x10] sm:$0xff]
      %v426 = vld [vmem:[#allocation3 + $0x18] sm:$0xff]
      %v427 = vpack.c.bf16 %v425, %v423
      %v428 = vpack.c.bf16 %v426, %v424
      %429 = vst [vmem:[#allocation2] sm:$0xff] %v427
      %430 = vst [vmem:[#allocation2 + $0x8] sm:$0xff] %v428
      %v431 = vld [vmem:[%s1] sm:$0xf]
      %v432 = vld [vmem:[%s1 + $0x4] sm:$0xf]
      %v433 = vld [vmem:[%s1 + $0x8] sm:$0xf]
      %v434 = vld [vmem:[%s1 + $0xc] sm:$0xf]
      %v435 = vld [vmem:[%s1 + $0x10] sm:$0xf]
      %v436 = vld [vmem:[%s1 + $0x14] sm:$0xf]
      %v437 = vld [vmem:[%s1 + $0x18] sm:$0xf]
      %v438 = vld [vmem:[%s1 + $0x1c] sm:$0xf]
      %v439 = vld [vmem:[%s1 + $0x20] sm:$0xf]
      %v440 = vld [vmem:[%s1 + $0x24] sm:$0xf]
      %v441 = vld [vmem:[%s1 + $0x28] sm:$0xf]
      %v442 = vld [vmem:[%s1 + $0x2c] sm:$0xf]
      %v443 = vld [vmem:[%s1 + $0x30] sm:$0xf]
      %v444 = vld [vmem:[%s1 + $0x34] sm:$0xf]
      %v445 = vld [vmem:[%s1 + $0x38] sm:$0xf]
      %v446 = vld [vmem:[%s1 + $0x3c] sm:$0xf]
      %v447 = vld [vmem:[%s1 + $0x40] sm:$0xf]
      %v448 = vld [vmem:[%s1 + $0x44] sm:$0xf]
      %v449 = vld [vmem:[#allocation2] sm:$0xff]
      %v450 = vld [vmem:[#allocation2 + $0x8] sm:$0xff]
      %v469 = vunpack.c.l.b16 %v431
      %v470 = vunpack.c.l.b16 %v432
      %v471 = vunpack.c.l.b16 %v433
      %v472 = vunpack.c.l.b16 %v434
      %v473 = vunpack.c.l.b16 %v435
      %v474 = vunpack.c.l.b16 %v436
      %v475 = vunpack.c.l.b16 %v437
      %v476 = vunpack.c.l.b16 %v438
      %v477 = vunpack.c.l.b16 %v439
      %v478 = vunpack.c.l.b16 %v440
      %v479 = vunpack.c.l.b16 %v441
      %v480 = vunpack.c.l.b16 %v442
      %v481 = vunpack.c.l.b16 %v443
      %v482 = vunpack.c.l.b16 %v444
      %v483 = vunpack.c.l.b16 %v445
      %v484 = vunpack.c.l.b16 %v446
      %v485 = vunpack.c.l.b16 %v447
      %v486 = vunpack.c.l.b16 %v448
      %v487 = vpack.c.b16 %v470, %v469
      %v488 = vpack.c.b16 %v472, %v471
      %v489 = vpack.c.b16 %v474, %v473
      %v490 = vpack.c.b16 %v476, %v475
      %v491 = vpack.c.b16 %v478, %v477
      %v492 = vpack.c.b16 %v480, %v479
      %v493 = vpack.c.b16 %v482, %v481
      %v494 = vpack.c.b16 %v484, %v483
      %v495 = vpack.c.b16 %v486, %v485
      %vm496 = vcmask 130048
      %v498 = vsel %vm496, %v487, 0
      %v501 = vsel %vm496, %v488, 0
      %v504 = vsel %vm496, %v489, 0
      %v507 = vsel %vm496, %v490, 0
      %v510 = vsel %vm496, %v491, 0
      %v513 = vsel %vm496, %v492, 0
      %v516 = vsel %vm496, %v493, 0
      %v519 = vsel %vm496, %v494, 0
      %v522 = vsel %vm496, %v495, 0
      %524 = vmatprep.subr.bf16.mxu0 %v450
      %525 = vmatpush1.bf16.msra.mxu0 %v449
      %526 = vmatprep.subr.bf16.mxu0 0
      %527 = vmatpush1.bf16.msra.mxu0 0
      %528 = vmatprep.subr.bf16.mxu0 0
      %529 = vmatpush1.bf16.msra.mxu0 0
      %530 = vmatprep.subr.bf16.mxu0 0
      %531 = vmatpush1.bf16.msra.mxu0 0
      %532 = vmatprep.subr.bf16.mxu0 0
      %533 = vmatpush1.bf16.msra.mxu0 0
      %534 = vmatprep.subr.bf16.mxu0 0
      %535 = vmatpush1.bf16.msra.mxu0 0
      %536 = vmatprep.subr.bf16.mxu0 0
      %537 = vmatpush1.bf16.msra.mxu0 0
      %538 = vmatprep.subr.bf16.mxu0 0
      %539 = vmatpush1.bf16.msra.mxu0 0
      %540 = vmatprep.subr.bf16.mxu0 0
      %541 = vmatpush1.bf16.msra.mxu0 0
      %542 = vmatprep.subr.bf16.mxu0 0
      %543 = vmatpush1.bf16.msra.mxu0 0
      %544 = vmatprep.subr.bf16.mxu0 0
      %545 = vmatpush1.bf16.msra.mxu0 0
      %546 = vmatprep.subr.bf16.mxu0 0
      %547 = vmatpush1.bf16.msra.mxu0 0
      %548 = vmatprep.subr.bf16.mxu0 0
      %549 = vmatpush1.bf16.msra.mxu0 0
      %550 = vmatprep.subr.bf16.mxu0 0
      %551 = vmatpush1.bf16.msra.mxu0 0
      %552 = vmatprep.subr.bf16.mxu0 0
      %553 = vmatpush1.bf16.msra.mxu0 0
      %554 = vmatprep.subr.bf16.mxu0 0
      %555 = vmatpush1.bf16.msra.mxu0 0
      %556 = vmatprep.mubr.bf16.mxu0 0
      %557 = vmatmul.mubr.bf16.gmra.mrb[0].mxu0 %v498
      %v558 = vpop.f32.mrb[0].mxu0
      %v559 = vadd.f32 0.0, %v558
      %v560 = vpop.f32.mrb[0].mxu0
      %v561 = vadd.f32 0.0, %v560
      %v562 = vpop.f32.mrb[0].mxu0
      %v563 = vadd.f32 0.0, %v562
      %v564 = vpop.f32.mrb[0].mxu0
      %v565 = vadd.f32 0.0, %v564
      %566 = vmatprep.mubr.bf16.mxu0 0
      %567 = vmatmul.mubr.bf16.gmra.mrb[0].mxu0 %v501
      %v568 = vpop.f32.mrb[0].mxu0
      %v569 = vadd.f32 0.0, %v568
      %v570 = vpop.f32.mrb[0].mxu0
      %v571 = vadd.f32 0.0, %v570
      %v572 = vpop.f32.mrb[0].mxu0
      %v573 = vadd.f32 0.0, %v572
      %v574 = vpop.f32.mrb[0].mxu0
      %v575 = vadd.f32 0.0, %v574
      %576 = vmatprep.mubr.bf16.mxu0 0
      %577 = vmatmul.mubr.bf16.gmra.mrb[0].mxu0 %v504
      %v578 = vpop.f32.mrb[0].mxu0
      %v579 = vadd.f32 0.0, %v578
      %v580 = vpop.f32.mrb[0].mxu0
      %v581 = vadd.f32 0.0, %v580
      %v582 = vpop.f32.mrb[0].mxu0
      %v583 = vadd.f32 0.0, %v582
      %v584 = vpop.f32.mrb[0].mxu0
      %v585 = vadd.f32 0.0, %v584
      %586 = vmatprep.mubr.bf16.mxu0 0
      %587 = vmatmul.mubr.bf16.gmra.mrb[0].mxu0 %v507
      %v588 = vpop.f32.mrb[0].mxu0
      %v589 = vadd.f32 0.0, %v588
      %v590 = vpop.f32.mrb[0].mxu0
      %v591 = vadd.f32 0.0, %v590
      %v592 = vpop.f32.mrb[0].mxu0
      %v593 = vadd.f32 0.0, %v592
      %v594 = vpop.f32.mrb[0].mxu0
      %v595 = vadd.f32 0.0, %v594
      %596 = vmatprep.mubr.bf16.mxu0 0
      %597 = vmatmul.mubr.bf16.gmra.mrb[0].mxu0 %v510
      %v598 = vpop.f32.mrb[0].mxu0
      %v599 = vadd.f32 0.0, %v598
      %v600 = vpop.f32.mrb[0].mxu0
      %v601 = vadd.f32 0.0, %v600
      %v602 = vpop.f32.mrb[0].mxu0
      %v603 = vadd.f32 0.0, %v602
      %v604 = vpop.f32.mrb[0].mxu0
      %v605 = vadd.f32 0.0, %v604
      %606 = vmatprep.mubr.bf16.mxu0 0
      %607 = vmatmul.mubr.bf16.gmra.mrb[0].mxu0 %v513
      %v608 = vpop.f32.mrb[0].mxu0
      %v609 = vadd.f32 0.0, %v608
      %v610 = vpop.f32.mrb[0].mxu0
      %v611 = vadd.f32 0.0, %v610
      %v612 = vpop.f32.mrb[0].mxu0
      %v613 = vadd.f32 0.0, %v612
      %v614 = vpop.f32.mrb[0].mxu0
      %v615 = vadd.f32 0.0, %v614
      %616 = vmatprep.mubr.bf16.mxu0 0
      %617 = vmatmul.mubr.bf16.gmra.mrb[0].mxu0 %v516
      %v618 = vpop.f32.mrb[0].mxu0
      %v619 = vadd.f32 0.0, %v618
      %v620 = vpop.f32.mrb[0].mxu0
      %v621 = vadd.f32 0.0, %v620
      %v622 = vpop.f32.mrb[0].mxu0
      %v623 = vadd.f32 0.0, %v622
      %v624 = vpop.f32.mrb[0].mxu0
      %v625 = vadd.f32 0.0, %v624
      %626 = vmatprep.mubr.bf16.mxu0 0
      %627 = vmatmul.mubr.bf16.gmra.mrb[0].mxu0 %v519
      %v628 = vpop.f32.mrb[0].mxu0
      %v629 = vadd.f32 0.0, %v628
      %v630 = vpop.f32.mrb[0].mxu0
      %v631 = vadd.f32 0.0, %v630
      %v632 = vpop.f32.mrb[0].mxu0
      %v633 = vadd.f32 0.0, %v632
      %v634 = vpop.f32.mrb[0].mxu0
      %v635 = vadd.f32 0.0, %v634
      %636 = vmatprep.mubr.bf16.mxu0 0
      %637 = vmatmul.mubr.bf16.gmra.mrb[0].mxu0 %v522
      %v638 = vpop.f32.mrb[0].mxu0
      %v639 = vadd.f32 0.0, %v638
      %v640 = vpop.f32.mrb[0].mxu0
      %v641 = vadd.f32 0.0, %v640
      %v642 = vpop.f32.mrb[0].mxu0
      %v643 = vadd.f32 0.0, %v642
      %v644 = vpop.f32.mrb[0].mxu0
      %v645 = vadd.f32 0.0, %v644
      %646 = vdwg.mxu0
      %649 = vrot.lane.b32.xlu0 %v561, 17
      %v650 = vpop.permute.xlu0 %649
      %651 = vrot.lane.b32.xlu0 %v565, 17
      %v652 = vpop.permute.xlu0 %651
      %657 = vrot.lane.b32.xlu0 %v559, 17
      %v658 = vpop.permute.xlu0 %657
      %659 = vrot.lane.b32.xlu0 %v563, 17
      %v660 = vpop.permute.xlu0 %659
      %vm661 = vcmask 138240
      %v662 = vsel %vm661, %v658, %v650
      %v663 = vsel %vm661, %v660, %v652
      %v668 = vsel %vm661, %v650, %v658
      %v669 = vsel %vm661, %v652, %v660
      %v670 = vld [vmem:[%s11] sm:$0x3]
      %v672 = vlaneseq
      %v673 = vshrl.u32 %v672, 7
      %v674 = vsub.s32 0, %v673
      %v675 = vrot.slane %v670, %v674
      %v676 = vlaneseq
      %v677 = vshrl.u32 %v676, 7
      %v678 = vsub.s32 1, %v677
      %v679 = vrot.slane %v670, %v678
      %v682 = vmul.f32 %v668, %v675
      %v683 = vmul.f32 %v662, %v679
      %v684 = vmul.f32 %v669, %v675
      %v685 = vmul.f32 %v663, %v679
      %688 = vrot.lane.b32.xlu0 %v571, 16
      %v689 = vpop.permute.xlu0 %688
      %690 = vrot.lane.b32.xlu0 %v575, 16
      %v691 = vpop.permute.xlu0 %690
      %696 = vrot.lane.b32.xlu0 %v569, 16
      %v697 = vpop.permute.xlu0 %696
      %698 = vrot.lane.b32.xlu0 %v573, 16
      %v699 = vpop.permute.xlu0 %698
      %v700 = vsel %vm496, %v697, %v689
      %v701 = vsel %vm496, %v699, %v691
      %v706 = vsel %vm496, %v689, %v697
      %v707 = vsel %vm496, %v691, %v699
      %s708 = scalar_lea.vmem %s11, 2
      %v709 = vld [vmem:[%s708] sm:$0x3]
      %v711 = vlaneseq
      %v712 = vshrl.u32 %v711, 7
      %v713 = vsub.s32 0, %v712
      %v714 = vrot.slane %v709, %v713
      %v715 = vlaneseq
      %v716 = vshrl.u32 %v715, 7
      %v717 = vsub.s32 1, %v716
      %v718 = vrot.slane %v709, %v717
      %v721 = vmul.f32 %v706, %v714
      %v722 = vmul.f32 %v700, %v718
      %v723 = vmul.f32 %v707, %v714
      %v724 = vmul.f32 %v701, %v718
      %v725 = vadd.f32 %v682, %v721
      %v726 = vadd.f32 %v683, %v722
      %v727 = vadd.f32 %v684, %v723
      %v728 = vadd.f32 %v685, %v724
      %731 = vrot.lane.b32.xlu0 %v581, 15
      %v732 = vpop.permute.xlu0 %731
      %733 = vrot.lane.b32.xlu0 %v585, 15
      %v734 = vpop.permute.xlu0 %733
      %739 = vrot.lane.b32.xlu0 %v579, 15
      %v740 = vpop.permute.xlu0 %739
      %741 = vrot.lane.b32.xlu0 %v583, 15
      %v742 = vpop.permute.xlu0 %741
      %vm743 = vcmask 121856
      %v744 = vsel %vm743, %v740, %v732
      %v745 = vsel %vm743, %v742, %v734
      %v750 = vsel %vm743, %v732, %v740
      %v751 = vsel %vm743, %v734, %v742
      %s752 = scalar_lea.vmem %s11, 4
      %v753 = vld [vmem:[%s752] sm:$0x3]
      %v755 = vlaneseq
      %v756 = vshrl.u32 %v755, 7
      %v757 = vsub.s32 0, %v756
      %v758 = vrot.slane %v753, %v757
      %v759 = vlaneseq
      %v760 = vshrl.u32 %v759, 7
      %v761 = vsub.s32 1, %v760
      %v762 = vrot.slane %v753, %v761
      %v765 = vmul.f32 %v750, %v758
      %v766 = vmul.f32 %v744, %v762
      %v767 = vmul.f32 %v751, %v758
      %v768 = vmul.f32 %v745, %v762
      %v769 = vadd.f32 %v725, %v765
      %v770 = vadd.f32 %v726, %v766
      %v771 = vadd.f32 %v727, %v767
      %v772 = vadd.f32 %v728, %v768
      %775 = vrot.lane.b32.xlu0 %v591, 1
      %v776 = vpop.permute.xlu0 %775
      %777 = vrot.lane.b32.xlu0 %v595, 1
      %v778 = vpop.permute.xlu0 %777
      %783 = vrot.lane.b32.xlu0 %v589, 1
      %v784 = vpop.permute.xlu0 %783
      %785 = vrot.lane.b32.xlu0 %v593, 1
      %v786 = vpop.permute.xlu0 %785
      %vm787 = vcmask 7168
      %v788 = vsel %vm787, %v784, %v776
      %v789 = vsel %vm787, %v786, %v778
      %v794 = vsel %vm787, %v776, %v784
      %v795 = vsel %vm787, %v778, %v786
      %s796 = scalar_lea.vmem %s11, 6
      %v797 = vld [vmem:[%s796] sm:$0x3]
      %v799 = vlaneseq
      %v800 = vshrl.u32 %v799, 7
      %v801 = vsub.s32 0, %v800
      %v802 = vrot.slane %v797, %v801
      %v803 = vlaneseq
      %v804 = vshrl.u32 %v803, 7
      %v805 = vsub.s32 1, %v804
      %v806 = vrot.slane %v797, %v805
      %v809 = vmul.f32 %v794, %v802
      %v810 = vmul.f32 %v788, %v806
      %v811 = vmul.f32 %v795, %v802
      %v812 = vmul.f32 %v789, %v806
      %v813 = vadd.f32 %v769, %v809
      %v814 = vadd.f32 %v770, %v810
      %v815 = vadd.f32 %v771, %v811
      %v816 = vadd.f32 %v772, %v812
      %v817 = vadd.f32 %v813, %v599
      %v818 = vadd.f32 %v814, %v601
      %v819 = vadd.f32 %v815, %v603
      %v820 = vadd.f32 %v816, %v605
      %825 = vrot.lane.b32.xlu0 %v609, 127
      %v826 = vpop.permute.xlu0 %825
      %827 = vrot.lane.b32.xlu0 %v611, 127
      %v828 = vpop.permute.xlu0 %827
      %829 = vrot.lane.b32.xlu0 %v613, 127
      %v830 = vpop.permute.xlu0 %829
      %831 = vrot.lane.b32.xlu0 %v615, 127
      %v832 = vpop.permute.xlu0 %831
      %vm833 = vcmask 1039360
      %v834 = vsel %vm833, %v826, %v828
      %v835 = vsel %vm833, %v830, %v832
      %v842 = vsel %vm833, %v828, %v826
      %v843 = vsel %vm833, %v832, %v830
      %s844 = scalar_lea.vmem %s11, 10
      %v845 = vld [vmem:[%s844] sm:$0x3]
      %v847 = vlaneseq
      %v848 = vshrl.u32 %v847, 7
      %v849 = vsub.s32 0, %v848
      %v850 = vrot.slane %v845, %v849
      %v851 = vlaneseq
      %v852 = vshrl.u32 %v851, 7
      %v853 = vsub.s32 1, %v852
      %v854 = vrot.slane %v845, %v853
      %v857 = vmul.f32 %v834, %v850
      %v858 = vmul.f32 %v842, %v854
      %v859 = vmul.f32 %v835, %v850
      %v860 = vmul.f32 %v843, %v854
      %v861 = vadd.f32 %v817, %v857
      %v862 = vadd.f32 %v818, %v858
      %v863 = vadd.f32 %v819, %v859
      %v864 = vadd.f32 %v820, %v860
      %869 = vrot.lane.b32.xlu0 %v619, 113
      %v870 = vpop.permute.xlu0 %869
      %871 = vrot.lane.b32.xlu0 %v621, 113
      %v872 = vpop.permute.xlu0 %871
      %873 = vrot.lane.b32.xlu0 %v623, 113
      %v874 = vpop.permute.xlu0 %873
      %875 = vrot.lane.b32.xlu0 %v625, 113
      %v876 = vpop.permute.xlu0 %875
      %vm877 = vcmask 924672
      %v878 = vsel %vm877, %v870, %v872
      %v879 = vsel %vm877, %v874, %v876
      %v886 = vsel %vm877, %v872, %v870
      %v887 = vsel %vm877, %v876, %v874
      %s888 = scalar_lea.vmem %s11, 12
      %v889 = vld [vmem:[%s888] sm:$0x3]
      %v891 = vlaneseq
      %v892 = vshrl.u32 %v891, 7
      %v893 = vsub.s32 0, %v892
      %v894 = vrot.slane %v889, %v893
      %v895 = vlaneseq
      %v896 = vshrl.u32 %v895, 7
      %v897 = vsub.s32 1, %v896
      %v898 = vrot.slane %v889, %v897
      %v901 = vmul.f32 %v878, %v894
      %v902 = vmul.f32 %v886, %v898
      %v903 = vmul.f32 %v879, %v894
      %v904 = vmul.f32 %v887, %v898
      %v905 = vadd.f32 %v861, %v901
      %v906 = vadd.f32 %v862, %v902
      %v907 = vadd.f32 %v863, %v903
      %v908 = vadd.f32 %v864, %v904
      %913 = vrot.lane.b32.xlu0 %v629, 112
      %v914 = vpop.permute.xlu0 %913
      %915 = vrot.lane.b32.xlu0 %v631, 112
      %v916 = vpop.permute.xlu0 %915
      %917 = vrot.lane.b32.xlu0 %v633, 112
      %v918 = vpop.permute.xlu0 %917
      %919 = vrot.lane.b32.xlu0 %v635, 112
      %v920 = vpop.permute.xlu0 %919
      %vm921 = vcmask 916480
      %v922 = vsel %vm921, %v914, %v916
      %v923 = vsel %vm921, %v918, %v920
      %v930 = vsel %vm921, %v916, %v914
      %v931 = vsel %vm921, %v920, %v918
      %s932 = scalar_lea.vmem %s11, 14
      %v933 = vld [vmem:[%s932] sm:$0x3]
      %v935 = vlaneseq
      %v936 = vshrl.u32 %v935, 7
      %v937 = vsub.s32 0, %v936
      %v938 = vrot.slane %v933, %v937
      %v939 = vlaneseq
      %v940 = vshrl.u32 %v939, 7
      %v941 = vsub.s32 1, %v940
      %v942 = vrot.slane %v933, %v941
      %v945 = vmul.f32 %v922, %v938
      %v946 = vmul.f32 %v930, %v942
      %v947 = vmul.f32 %v923, %v938
      %v948 = vmul.f32 %v931, %v942
      %v949 = vadd.f32 %v905, %v945
      %v950 = vadd.f32 %v906, %v946
      %v951 = vadd.f32 %v907, %v947
      %v952 = vadd.f32 %v908, %v948
      %957 = vrot.lane.b32.xlu0 %v639, 111
      %v958 = vpop.permute.xlu0 %957
      %959 = vrot.lane.b32.xlu0 %v641, 111
      %v960 = vpop.permute.xlu0 %959
      %961 = vrot.lane.b32.xlu0 %v643, 111
      %v962 = vpop.permute.xlu0 %961
      %963 = vrot.lane.b32.xlu0 %v645, 111
      %v964 = vpop.permute.xlu0 %963
      %vm965 = vcmask 908288
      %v966 = vsel %vm965, %v958, %v960
      %v967 = vsel %vm965, %v962, %v964
      %v974 = vsel %vm965, %v960, %v958
      %v975 = vsel %vm965, %v964, %v962
      %s976 = scalar_lea.vmem %s11, 16
      %v977 = vld [vmem:[%s976] sm:$0x3]
      %v979 = vlaneseq
      %v980 = vshrl.u32 %v979, 7
      %v981 = vsub.s32 0, %v980
      %v982 = vrot.slane %v977, %v981
      %v983 = vlaneseq
      %v984 = vshrl.u32 %v983, 7
      %v985 = vsub.s32 1, %v984
      %v986 = vrot.slane %v977, %v985
      %v989 = vmul.f32 %v966, %v982
      %v990 = vmul.f32 %v974, %v986
      %v991 = vmul.f32 %v967, %v982
      %v992 = vmul.f32 %v975, %v986
      %v993 = vadd.f32 %v949, %v989
      %v994 = vadd.f32 %v950, %v990
      %v995 = vadd.f32 %v951, %v991
      %v996 = vadd.f32 %v952, %v992
      %v997 = vld [vmem:[%s6] sm:$0xff]
      %v998 = vld [vmem:[%s6 + $0x8] sm:$0xff]
      %1000 = vset.pattern.permute.xlu0 0
      %1001 = vperm.xlu0 %1000, %v997
      %v1002 = vpop.permute.xlu0 %1001
      %1005 = vset.pattern.permute.xlu0 0
      %1006 = vperm.xlu0 %1005, %v998
      %v1007 = vpop.permute.xlu0 %1006
      %v1009 = vadd.f32 %v993, %v1002
      %v1010 = vadd.f32 %v994, %v1002
      %v1011 = vadd.f32 %v995, %v1007
      %v1012 = vadd.f32 %v996, %v1007
      %vm1013 = vcmp.gt.f32.partialorder %v1009, 0.0
      %vm1014 = vcmp.gt.f32.partialorder %v1010, 0.0
      %vm1015 = vcmp.gt.f32.partialorder %v1011, 0.0
      %vm1016 = vcmp.gt.f32.partialorder %v1012, 0.0
      %v1017 = vmul.f32 %v1009, 0.2
      %v1018 = vmul.f32 %v1010, 0.2
      %v1019 = vmul.f32 %v1011, 0.2
      %v1020 = vmul.f32 %v1012, 0.2
      %v1021 = vsel %vm1013, %v1009, %v1017
      %v1022 = vsel %vm1014, %v1010, %v1018
      %v1023 = vsel %vm1015, %v1011, %v1019
      %v1024 = vsel %vm1016, %v1012, %v1020
      %v1025 = vpack.c.bf16 %v1023, %v1021
      %v1026 = vpack.c.bf16 %v1024, %v1022
      %1027 = vst [vmem:[#allocation2 + $0x10] sm:$0xff] %v1025
      %1028 = vst [vmem:[#allocation2 + $0x18] sm:$0xff] %v1026
      %v1029 = vld [vmem:[%s2] sm:$0xf]
      %v1030 = vld [vmem:[%s2 + $0x4] sm:$0xf]
      %v1031 = vld [vmem:[%s2 + $0x8] sm:$0xf]
      %v1032 = vld [vmem:[%s2 + $0xc] sm:$0xf]
      %v1033 = vld [vmem:[%s2 + $0x10] sm:$0xf]
      %v1034 = vld [vmem:[%s2 + $0x14] sm:$0xf]
      %v1035 = vld [vmem:[%s2 + $0x18] sm:$0xf]
      %v1036 = vld [vmem:[%s2 + $0x1c] sm:$0xf]
      %v1037 = vld [vmem:[%s2 + $0x20] sm:$0xf]
      %v1038 = vld [vmem:[%s2 + $0x24] sm:$0xf]
      %v1039 = vld [vmem:[%s2 + $0x28] sm:$0xf]
      %v1040 = vld [vmem:[%s2 + $0x2c] sm:$0xf]
      %v1041 = vld [vmem:[%s2 + $0x30] sm:$0xf]
      %v1042 = vld [vmem:[%s2 + $0x34] sm:$0xf]
      %v1043 = vld [vmem:[%s2 + $0x38] sm:$0xf]
      %v1044 = vld [vmem:[%s2 + $0x3c] sm:$0xf]
      %v1045 = vld [vmem:[%s2 + $0x40] sm:$0xf]
      %v1046 = vld [vmem:[%s2 + $0x44] sm:$0xf]
      %v1047 = vld [vmem:[#allocation2] sm:$0xff]
      %v1048 = vld [vmem:[#allocation2 + $0x8] sm:$0xff]
      %v1049 = vld [vmem:[#allocation2 + $0x10] sm:$0xff]
      %v1050 = vld [vmem:[#allocation2 + $0x18] sm:$0xff]
      %v1069 = vunpack.c.l.b16 %v1029
      %v1070 = vunpack.c.l.b16 %v1030
      %v1071 = vunpack.c.l.b16 %v1031
      %v1072 = vunpack.c.l.b16 %v1032
      %v1073 = vunpack.c.l.b16 %v1033
      %v1074 = vunpack.c.l.b16 %v1034
      %v1075 = vunpack.c.l.b16 %v1035
      %v1076 = vunpack.c.l.b16 %v1036
      %v1077 = vunpack.c.l.b16 %v1037
      %v1078 = vunpack.c.l.b16 %v1038
      %v1079 = vunpack.c.l.b16 %v1039
      %v1080 = vunpack.c.l.b16 %v1040
      %v1081 = vunpack.c.l.b16 %v1041
      %v1082 = vunpack.c.l.b16 %v1042
      %v1083 = vunpack.c.l.b16 %v1043
      %v1084 = vunpack.c.l.b16 %v1044
      %v1085 = vunpack.c.l.b16 %v1045
      %v1086 = vunpack.c.l.b16 %v1046
      %v1087 = vpack.c.b16 %v1070, %v1069
      %v1088 = vpack.c.b16 %v1072, %v1071
      %v1089 = vpack.c.b16 %v1074, %v1073
      %v1090 = vpack.c.b16 %v1076, %v1075
      %v1091 = vpack.c.b16 %v1078, %v1077
      %v1092 = vpack.c.b16 %v1080, %v1079
      %v1093 = vpack.c.b16 %v1082, %v1081
      %v1094 = vpack.c.b16 %v1084, %v1083
      %v1095 = vpack.c.b16 %v1086, %v1085
      %vm1096 = vcmask 261120
      %v1098 = vsel %vm1096, %v1087, 0
      %v1101 = vsel %vm1096, %v1088, 0
      %v1104 = vsel %vm1096, %v1089, 0
      %v1107 = vsel %vm1096, %v1090, 0
      %v1110 = vsel %vm1096, %v1091, 0
      %v1113 = vsel %vm1096, %v1092, 0
      %v1116 = vsel %vm1096, %v1093, 0
      %v1119 = vsel %vm1096, %v1094, 0
      %v1122 = vsel %vm1096, %v1095, 0
      %1124 = vmatprep.subr.bf16.mxu0 %v1048
      %1125 = vmatpush1.bf16.msra.mxu0 %v1047
      %1126 = vmatprep.subr.bf16.mxu0 %v1050
      %1127 = vmatpush1.bf16.msra.mxu0 %v1049
      %1128 = vmatprep.subr.bf16.mxu0 0
      %1129 = vmatpush1.bf16.msra.mxu0 0
      %1130 = vmatprep.subr.bf16.mxu0 0
      %1131 = vmatpush1.bf16.msra.mxu0 0
      %1132 = vmatprep.subr.bf16.mxu0 0
      %1133 = vmatpush1.bf16.msra.mxu0 0
      %1134 = vmatprep.subr.bf16.mxu0 0
      %1135 = vmatpush1.bf16.msra.mxu0 0
      %1136 = vmatprep.subr.bf16.mxu0 0
      %1137 = vmatpush1.bf16.msra.mxu0 0
      %1138 = vmatprep.subr.bf16.mxu0 0
      %1139 = vmatpush1.bf16.msra.mxu0 0
      %1140 = vmatprep.subr.bf16.mxu0 0
      %1141 = vmatpush1.bf16.msra.mxu0 0
      %1142 = vmatprep.subr.bf16.mxu0 0
      %1143 = vmatpush1.bf16.msra.mxu0 0
      %1144 = vmatprep.subr.bf16.mxu0 0
      %1145 = vmatpush1.bf16.msra.mxu0 0
      %1146 = vmatprep.subr.bf16.mxu0 0
      %1147 = vmatpush1.bf16.msra.mxu0 0
      %1148 = vmatprep.subr.bf16.mxu0 0
      %1149 = vmatpush1.bf16.msra.mxu0 0
      %1150 = vmatprep.subr.bf16.mxu0 0
      %1151 = vmatpush1.bf16.msra.mxu0 0
      %1152 = vmatprep.subr.bf16.mxu0 0
      %1153 = vmatpush1.bf16.msra.mxu0 0
      %1154 = vmatprep.subr.bf16.mxu0 0
      %1155 = vmatpush1.bf16.msra.mxu0 0
      %1156 = vmatprep.mubr.bf16.mxu0 0
      %1157 = vmatmul.mubr.bf16.gmra.mrb[0].mxu0 %v1098
      %v1158 = vpop.f32.mrb[0].mxu0
      %v1159 = vadd.f32 0.0, %v1158
      %v1160 = vpop.f32.mrb[0].mxu0
      %v1161 = vadd.f32 0.0, %v1160
      %v1162 = vpop.f32.mrb[0].mxu0
      %v1163 = vadd.f32 0.0, %v1162
      %v1164 = vpop.f32.mrb[0].mxu0
      %v1165 = vadd.f32 0.0, %v1164
      %1166 = vmatprep.mubr.bf16.mxu0 0
      %1167 = vmatmul.mubr.bf16.gmra.mrb[0].mxu0 %v1101
      %v1168 = vpop.f32.mrb[0].mxu0
      %v1169 = vadd.f32 0.0, %v1168
      %v1170 = vpop.f32.mrb[0].mxu0
      %v1171 = vadd.f32 0.0, %v1170
      %v1172 = vpop.f32.mrb[0].mxu0
      %v1173 = vadd.f32 0.0, %v1172
      %v1174 = vpop.f32.mrb[0].mxu0
      %v1175 = vadd.f32 0.0, %v1174
      %1176 = vmatprep.mubr.bf16.mxu0 0
      %1177 = vmatmul.mubr.bf16.gmra.mrb[0].mxu0 %v1104
      %v1178 = vpop.f32.mrb[0].mxu0
      %v1179 = vadd.f32 0.0, %v1178
      %v1180 = vpop.f32.mrb[0].mxu0
      %v1181 = vadd.f32 0.0, %v1180
      %v1182 = vpop.f32.mrb[0].mxu0
      %v1183 = vadd.f32 0.0, %v1182
      %v1184 = vpop.f32.mrb[0].mxu0
      %v1185 = vadd.f32 0.0, %v1184
      %1186 = vmatprep.mubr.bf16.mxu0 0
      %1187 = vmatmul.mubr.bf16.gmra.mrb[0].mxu0 %v1107
      %v1188 = vpop.f32.mrb[0].mxu0
      %v1189 = vadd.f32 0.0, %v1188
      %v1190 = vpop.f32.mrb[0].mxu0
      %v1191 = vadd.f32 0.0, %v1190
      %v1192 = vpop.f32.mrb[0].mxu0
      %v1193 = vadd.f32 0.0, %v1192
      %v1194 = vpop.f32.mrb[0].mxu0
      %v1195 = vadd.f32 0.0, %v1194
      %1196 = vmatprep.mubr.bf16.mxu0 0
      %1197 = vmatmul.mubr.bf16.gmra.mrb[0].mxu0 %v1110
      %v1198 = vpop.f32.mrb[0].mxu0
      %v1199 = vadd.f32 0.0, %v1198
      %v1200 = vpop.f32.mrb[0].mxu0
      %v1201 = vadd.f32 0.0, %v1200
      %v1202 = vpop.f32.mrb[0].mxu0
      %v1203 = vadd.f32 0.0, %v1202
      %v1204 = vpop.f32.mrb[0].mxu0
      %v1205 = vadd.f32 0.0, %v1204
      %1206 = vmatprep.mubr.bf16.mxu0 0
      %1207 = vmatmul.mubr.bf16.gmra.mrb[0].mxu0 %v1113
      %v1208 = vpop.f32.mrb[0].mxu0
      %v1209 = vadd.f32 0.0, %v1208
      %v1210 = vpop.f32.mrb[0].mxu0
      %v1211 = vadd.f32 0.0, %v1210
      %v1212 = vpop.f32.mrb[0].mxu0
      %v1213 = vadd.f32 0.0, %v1212
      %v1214 = vpop.f32.mrb[0].mxu0
      %v1215 = vadd.f32 0.0, %v1214
      %1216 = vmatprep.mubr.bf16.mxu0 0
      %1217 = vmatmul.mubr.bf16.gmra.mrb[0].mxu0 %v1116
      %v1218 = vpop.f32.mrb[0].mxu0
      %v1219 = vadd.f32 0.0, %v1218
      %v1220 = vpop.f32.mrb[0].mxu0
      %v1221 = vadd.f32 0.0, %v1220
      %v1222 = vpop.f32.mrb[0].mxu0
      %v1223 = vadd.f32 0.0, %v1222
      %v1224 = vpop.f32.mrb[0].mxu0
      %v1225 = vadd.f32 0.0, %v1224
      %1226 = vmatprep.mubr.bf16.mxu0 0
      %1227 = vmatmul.mubr.bf16.gmra.mrb[0].mxu0 %v1119
      %v1228 = vpop.f32.mrb[0].mxu0
      %v1229 = vadd.f32 0.0, %v1228
      %v1230 = vpop.f32.mrb[0].mxu0
      %v1231 = vadd.f32 0.0, %v1230
      %v1232 = vpop.f32.mrb[0].mxu0
      %v1233 = vadd.f32 0.0, %v1232
      %v1234 = vpop.f32.mrb[0].mxu0
      %v1235 = vadd.f32 0.0, %v1234
      %1236 = vmatprep.mubr.bf16.mxu0 0
      %1237 = vmatmul.mubr.bf16.gmra.mrb[0].mxu0 %v1122
      %v1238 = vpop.f32.mrb[0].mxu0
      %v1239 = vadd.f32 0.0, %v1238
      %v1240 = vpop.f32.mrb[0].mxu0
      %v1241 = vadd.f32 0.0, %v1240
      %v1242 = vpop.f32.mrb[0].mxu0
      %v1243 = vadd.f32 0.0, %v1242
      %v1244 = vpop.f32.mrb[0].mxu0
      %v1245 = vadd.f32 0.0, %v1244
      %1246 = vdwg.mxu0
      %1249 = vrot.lane.b32.xlu0 %v1161, 17
      %v1250 = vpop.permute.xlu0 %1249
      %1251 = vrot.lane.b32.xlu0 %v1165, 17
      %v1252 = vpop.permute.xlu0 %1251
      %1257 = vrot.lane.b32.xlu0 %v1159, 17
      %v1258 = vpop.permute.xlu0 %1257
      %1259 = vrot.lane.b32.xlu0 %v1163, 17
      %v1260 = vpop.permute.xlu0 %1259
      %v1261 = vsel %vm661, %v1258, %v1250
      %v1262 = vsel %vm661, %v1260, %v1252
      %v1267 = vsel %vm661, %v1250, %v1258
      %v1268 = vsel %vm661, %v1252, %v1260
      %v1269 = vld [vmem:[%s11] sm:$0x3]
      %v1271 = vlaneseq
      %v1272 = vshrl.u32 %v1271, 7
      %v1273 = vsub.s32 0, %v1272
      %v1274 = vrot.slane %v1269, %v1273
      %v1275 = vlaneseq
      %v1276 = vshrl.u32 %v1275, 7
      %v1277 = vsub.s32 1, %v1276
      %v1278 = vrot.slane %v1269, %v1277
      %v1281 = vmul.f32 %v1267, %v1274
      %v1282 = vmul.f32 %v1261, %v1278
      %v1283 = vmul.f32 %v1268, %v1274
      %v1284 = vmul.f32 %v1262, %v1278
      %1287 = vrot.lane.b32.xlu0 %v1171, 16
      %v1288 = vpop.permute.xlu0 %1287
      %1289 = vrot.lane.b32.xlu0 %v1175, 16
      %v1290 = vpop.permute.xlu0 %1289
      %1295 = vrot.lane.b32.xlu0 %v1169, 16
      %v1296 = vpop.permute.xlu0 %1295
      %1297 = vrot.lane.b32.xlu0 %v1173, 16
      %v1298 = vpop.permute.xlu0 %1297
      %v1299 = vsel %vm496, %v1296, %v1288
      %v1300 = vsel %vm496, %v1298, %v1290
      %v1305 = vsel %vm496, %v1288, %v1296
      %v1306 = vsel %vm496, %v1290, %v1298
      %v1307 = vld [vmem:[%s708] sm:$0x3]
      %v1309 = vlaneseq
      %v1310 = vshrl.u32 %v1309, 7
      %v1311 = vsub.s32 0, %v1310
      %v1312 = vrot.slane %v1307, %v1311
      %v1313 = vlaneseq
      %v1314 = vshrl.u32 %v1313, 7
      %v1315 = vsub.s32 1, %v1314
      %v1316 = vrot.slane %v1307, %v1315
      %v1319 = vmul.f32 %v1305, %v1312
      %v1320 = vmul.f32 %v1299, %v1316
      %v1321 = vmul.f32 %v1306, %v1312
      %v1322 = vmul.f32 %v1300, %v1316
      %v1323 = vadd.f32 %v1281, %v1319
      %v1324 = vadd.f32 %v1282, %v1320
      %v1325 = vadd.f32 %v1283, %v1321
      %v1326 = vadd.f32 %v1284, %v1322
      %1329 = vrot.lane.b32.xlu0 %v1181, 15
      %v1330 = vpop.permute.xlu0 %1329
      %1331 = vrot.lane.b32.xlu0 %v1185, 15
      %v1332 = vpop.permute.xlu0 %1331
      %1337 = vrot.lane.b32.xlu0 %v1179, 15
      %v1338 = vpop.permute.xlu0 %1337
      %1339 = vrot.lane.b32.xlu0 %v1183, 15
      %v1340 = vpop.permute.xlu0 %1339
      %v1341 = vsel %vm743, %v1338, %v1330
      %v1342 = vsel %vm743, %v1340, %v1332
      %v1347 = vsel %vm743, %v1330, %v1338
      %v1348 = vsel %vm743, %v1332, %v1340
      %v1349 = vld [vmem:[%s752] sm:$0x3]
      %v1351 = vlaneseq
      %v1352 = vshrl.u32 %v1351, 7
      %v1353 = vsub.s32 0, %v1352
      %v1354 = vrot.slane %v1349, %v1353
      %v1355 = vlaneseq
      %v1356 = vshrl.u32 %v1355, 7
      %v1357 = vsub.s32 1, %v1356
      %v1358 = vrot.slane %v1349, %v1357
      %v1361 = vmul.f32 %v1347, %v1354
      %v1362 = vmul.f32 %v1341, %v1358
      %v1363 = vmul.f32 %v1348, %v1354
      %v1364 = vmul.f32 %v1342, %v1358
      %v1365 = vadd.f32 %v1323, %v1361
      %v1366 = vadd.f32 %v1324, %v1362
      %v1367 = vadd.f32 %v1325, %v1363
      %v1368 = vadd.f32 %v1326, %v1364
      %1371 = vrot.lane.b32.xlu0 %v1191, 1
      %v1372 = vpop.permute.xlu0 %1371
      %1373 = vrot.lane.b32.xlu0 %v1195, 1
      %v1374 = vpop.permute.xlu0 %1373
      %1379 = vrot.lane.b32.xlu0 %v1189, 1
      %v1380 = vpop.permute.xlu0 %1379
      %1381 = vrot.lane.b32.xlu0 %v1193, 1
      %v1382 = vpop.permute.xlu0 %1381
      %v1383 = vsel %vm787, %v1380, %v1372
      %v1384 = vsel %vm787, %v1382, %v1374
      %v1389 = vsel %vm787, %v1372, %v1380
      %v1390 = vsel %vm787, %v1374, %v1382
      %v1391 = vld [vmem:[%s796] sm:$0x3]
      %v1393 = vlaneseq
      %v1394 = vshrl.u32 %v1393, 7
      %v1395 = vsub.s32 0, %v1394
      %v1396 = vrot.slane %v1391, %v1395
      %v1397 = vlaneseq
      %v1398 = vshrl.u32 %v1397, 7
      %v1399 = vsub.s32 1, %v1398
      %v1400 = vrot.slane %v1391, %v1399
      %v1403 = vmul.f32 %v1389, %v1396
      %v1404 = vmul.f32 %v1383, %v1400
      %v1405 = vmul.f32 %v1390, %v1396
      %v1406 = vmul.f32 %v1384, %v1400
      %v1407 = vadd.f32 %v1365, %v1403
      %v1408 = vadd.f32 %v1366, %v1404
      %v1409 = vadd.f32 %v1367, %v1405
      %v1410 = vadd.f32 %v1368, %v1406
      %v1411 = vadd.f32 %v1407, %v1199
      %v1412 = vadd.f32 %v1408, %v1201
      %v1413 = vadd.f32 %v1409, %v1203
      %v1414 = vadd.f32 %v1410, %v1205
      %1419 = vrot.lane.b32.xlu0 %v1209, 127
      %v1420 = vpop.permute.xlu0 %1419
      %1421 = vrot.lane.b32.xlu0 %v1211, 127
      %v1422 = vpop.permute.xlu0 %1421
      %1423 = vrot.lane.b32.xlu0 %v1213, 127
      %v1424 = vpop.permute.xlu0 %1423
      %1425 = vrot.lane.b32.xlu0 %v1215, 127
      %v1426 = vpop.permute.xlu0 %1425
      %v1427 = vsel %vm833, %v1420, %v1422
      %v1428 = vsel %vm833, %v1424, %v1426
      %v1435 = vsel %vm833, %v1422, %v1420
      %v1436 = vsel %vm833, %v1426, %v1424
      %v1437 = vld [vmem:[%s844] sm:$0x3]
      %v1439 = vlaneseq
      %v1440 = vshrl.u32 %v1439, 7
      %v1441 = vsub.s32 0, %v1440
      %v1442 = vrot.slane %v1437, %v1441
      %v1443 = vlaneseq
      %v1444 = vshrl.u32 %v1443, 7
      %v1445 = vsub.s32 1, %v1444
      %v1446 = vrot.slane %v1437, %v1445
      %v1449 = vmul.f32 %v1427, %v1442
      %v1450 = vmul.f32 %v1435, %v1446
      %v1451 = vmul.f32 %v1428, %v1442
      %v1452 = vmul.f32 %v1436, %v1446
      %v1453 = vadd.f32 %v1411, %v1449
      %v1454 = vadd.f32 %v1412, %v1450
      %v1455 = vadd.f32 %v1413, %v1451
      %v1456 = vadd.f32 %v1414, %v1452
      %1461 = vrot.lane.b32.xlu0 %v1219, 113
      %v1462 = vpop.permute.xlu0 %1461
      %1463 = vrot.lane.b32.xlu0 %v1221, 113
      %v1464 = vpop.permute.xlu0 %1463
      %1465 = vrot.lane.b32.xlu0 %v1223, 113
      %v1466 = vpop.permute.xlu0 %1465
      %1467 = vrot.lane.b32.xlu0 %v1225, 113
      %v1468 = vpop.permute.xlu0 %1467
      %v1469 = vsel %vm877, %v1462, %v1464
      %v1470 = vsel %vm877, %v1466, %v1468
      %v1477 = vsel %vm877, %v1464, %v1462
      %v1478 = vsel %vm877, %v1468, %v1466
      %v1479 = vld [vmem:[%s888] sm:$0x3]
      %v1481 = vlaneseq
      %v1482 = vshrl.u32 %v1481, 7
      %v1483 = vsub.s32 0, %v1482
      %v1484 = vrot.slane %v1479, %v1483
      %v1485 = vlaneseq
      %v1486 = vshrl.u32 %v1485, 7
      %v1487 = vsub.s32 1, %v1486
      %v1488 = vrot.slane %v1479, %v1487
      %v1491 = vmul.f32 %v1469, %v1484
      %v1492 = vmul.f32 %v1477, %v1488
      %v1493 = vmul.f32 %v1470, %v1484
      %v1494 = vmul.f32 %v1478, %v1488
      %v1495 = vadd.f32 %v1453, %v1491
      %v1496 = vadd.f32 %v1454, %v1492
      %v1497 = vadd.f32 %v1455, %v1493
      %v1498 = vadd.f32 %v1456, %v1494
      %1503 = vrot.lane.b32.xlu0 %v1229, 112
      %v1504 = vpop.permute.xlu0 %1503
      %1505 = vrot.lane.b32.xlu0 %v1231, 112
      %v1506 = vpop.permute.xlu0 %1505
      %1507 = vrot.lane.b32.xlu0 %v1233, 112
      %v1508 = vpop.permute.xlu0 %1507
      %1509 = vrot.lane.b32.xlu0 %v1235, 112
      %v1510 = vpop.permute.xlu0 %1509
      %v1511 = vsel %vm921, %v1504, %v1506
      %v1512 = vsel %vm921, %v1508, %v1510
      %v1519 = vsel %vm921, %v1506, %v1504
      %v1520 = vsel %vm921, %v1510, %v1508
      %v1521 = vld [vmem:[%s932] sm:$0x3]
      %v1523 = vlaneseq
      %v1524 = vshrl.u32 %v1523, 7
      %v1525 = vsub.s32 0, %v1524
      %v1526 = vrot.slane %v1521, %v1525
      %v1527 = vlaneseq
      %v1528 = vshrl.u32 %v1527, 7
      %v1529 = vsub.s32 1, %v1528
      %v1530 = vrot.slane %v1521, %v1529
      %v1533 = vmul.f32 %v1511, %v1526
      %v1534 = vmul.f32 %v1519, %v1530
      %v1535 = vmul.f32 %v1512, %v1526
      %v1536 = vmul.f32 %v1520, %v1530
      %v1537 = vadd.f32 %v1495, %v1533
      %v1538 = vadd.f32 %v1496, %v1534
      %v1539 = vadd.f32 %v1497, %v1535
      %v1540 = vadd.f32 %v1498, %v1536
      %1545 = vrot.lane.b32.xlu0 %v1239, 111
      %v1546 = vpop.permute.xlu0 %1545
      %1547 = vrot.lane.b32.xlu0 %v1241, 111
      %v1548 = vpop.permute.xlu0 %1547
      %1549 = vrot.lane.b32.xlu0 %v1243, 111
      %v1550 = vpop.permute.xlu0 %1549
      %1551 = vrot.lane.b32.xlu0 %v1245, 111
      %v1552 = vpop.permute.xlu0 %1551
      %v1553 = vsel %vm965, %v1546, %v1548
      %v1554 = vsel %vm965, %v1550, %v1552
      %v1561 = vsel %vm965, %v1548, %v1546
      %v1562 = vsel %vm965, %v1552, %v1550
      %v1563 = vld [vmem:[%s976] sm:$0x3]
      %v1565 = vlaneseq
      %v1566 = vshrl.u32 %v1565, 7
      %v1567 = vsub.s32 0, %v1566
      %v1568 = vrot.slane %v1563, %v1567
      %v1569 = vlaneseq
      %v1570 = vshrl.u32 %v1569, 7
      %v1571 = vsub.s32 1, %v1570
      %v1572 = vrot.slane %v1563, %v1571
      %v1575 = vmul.f32 %v1553, %v1568
      %v1576 = vmul.f32 %v1561, %v1572
      %v1577 = vmul.f32 %v1554, %v1568
      %v1578 = vmul.f32 %v1562, %v1572
      %v1579 = vadd.f32 %v1537, %v1575
      %v1580 = vadd.f32 %v1538, %v1576
      %v1581 = vadd.f32 %v1539, %v1577
      %v1582 = vadd.f32 %v1540, %v1578
      %v1583 = vld [vmem:[%s7] sm:$0xff]
      %v1584 = vld [vmem:[%s7 + $0x8] sm:$0xff]
      %1586 = vset.pattern.permute.xlu0 0
      %1587 = vperm.xlu0 %1586, %v1583
      %v1588 = vpop.permute.xlu0 %1587
      %1591 = vset.pattern.permute.xlu0 0
      %1592 = vperm.xlu0 %1591, %v1584
      %v1593 = vpop.permute.xlu0 %1592
      %v1595 = vadd.f32 %v1579, %v1588
      %v1596 = vadd.f32 %v1580, %v1588
      %v1597 = vadd.f32 %v1581, %v1593
      %v1598 = vadd.f32 %v1582, %v1593
      %vm1599 = vcmp.gt.f32.partialorder %v1595, 0.0
      %vm1600 = vcmp.gt.f32.partialorder %v1596, 0.0
      %vm1601 = vcmp.gt.f32.partialorder %v1597, 0.0
      %vm1602 = vcmp.gt.f32.partialorder %v1598, 0.0
      %v1603 = vmul.f32 %v1595, 0.2
      %v1604 = vmul.f32 %v1596, 0.2
      %v1605 = vmul.f32 %v1597, 0.2
      %v1606 = vmul.f32 %v1598, 0.2
      %v1607 = vsel %vm1599, %v1595, %v1603
      %v1608 = vsel %vm1600, %v1596, %v1604
      %v1609 = vsel %vm1601, %v1597, %v1605
      %v1610 = vsel %vm1602, %v1598, %v1606
      %v1611 = vpack.c.bf16 %v1609, %v1607
      %v1612 = vpack.c.bf16 %v1610, %v1608
      %1613 = vst [vmem:[#allocation2 + $0x20] sm:$0xff] %v1611
      %1614 = vst [vmem:[#allocation2 + $0x28] sm:$0xff] %v1612
      %v1615 = vld [vmem:[%s3] sm:$0xf]
      %v1616 = vld [vmem:[%s3 + $0x4] sm:$0xf]
      %v1617 = vld [vmem:[%s3 + $0x8] sm:$0xf]
      %v1618 = vld [vmem:[%s3 + $0xc] sm:$0xf]
      %v1619 = vld [vmem:[%s3 + $0x10] sm:$0xf]
      %v1620 = vld [vmem:[%s3 + $0x14] sm:$0xf]
      %v1621 = vld [vmem:[%s3 + $0x18] sm:$0xf]
      %v1622 = vld [vmem:[%s3 + $0x1c] sm:$0xf]
      %v1623 = vld [vmem:[%s3 + $0x20] sm:$0xf]
      %v1624 = vld [vmem:[%s3 + $0x24] sm:$0xf]
      %v1625 = vld [vmem:[%s3 + $0x28] sm:$0xf]
      %v1626 = vld [vmem:[%s3 + $0x2c] sm:$0xf]
      %v1627 = vld [vmem:[%s3 + $0x30] sm:$0xf]
      %v1628 = vld [vmem:[%s3 + $0x34] sm:$0xf]
      %v1629 = vld [vmem:[%s3 + $0x38] sm:$0xf]
      %v1630 = vld [vmem:[%s3 + $0x3c] sm:$0xf]
      %v1631 = vld [vmem:[%s3 + $0x40] sm:$0xf]
      %v1632 = vld [vmem:[%s3 + $0x44] sm:$0xf]
      %v1633 = vld [vmem:[#allocation2] sm:$0xff]
      %v1634 = vld [vmem:[#allocation2 + $0x8] sm:$0xff]
      %v1635 = vld [vmem:[#allocation2 + $0x10] sm:$0xff]
      %v1636 = vld [vmem:[#allocation2 + $0x18] sm:$0xff]
      %v1637 = vld [vmem:[#allocation2 + $0x20] sm:$0xff]
      %v1638 = vld [vmem:[#allocation2 + $0x28] sm:$0xff]
      %v1657 = vunpack.c.l.b16 %v1615
      %v1658 = vunpack.c.l.b16 %v1616
      %v1659 = vunpack.c.l.b16 %v1617
      %v1660 = vunpack.c.l.b16 %v1618
      %v1661 = vunpack.c.l.b16 %v1619
      %v1662 = vunpack.c.l.b16 %v1620
      %v1663 = vunpack.c.l.b16 %v1621
      %v1664 = vunpack.c.l.b16 %v1622
      %v1665 = vunpack.c.l.b16 %v1623
      %v1666 = vunpack.c.l.b16 %v1624
      %v1667 = vunpack.c.l.b16 %v1625
      %v1668 = vunpack.c.l.b16 %v1626
      %v1669 = vunpack.c.l.b16 %v1627
      %v1670 = vunpack.c.l.b16 %v1628
      %v1671 = vunpack.c.l.b16 %v1629
      %v1672 = vunpack.c.l.b16 %v1630
      %v1673 = vunpack.c.l.b16 %v1631
      %v1674 = vunpack.c.l.b16 %v1632
      %v1675 = vpack.c.b16 %v1658, %v1657
      %v1676 = vpack.c.b16 %v1660, %v1659
      %v1677 = vpack.c.b16 %v1662, %v1661
      %v1678 = vpack.c.b16 %v1664, %v1663
      %v1679 = vpack.c.b16 %v1666, %v1665
      %v1680 = vpack.c.b16 %v1668, %v1667
      %v1681 = vpack.c.b16 %v1670, %v1669
      %v1682 = vpack.c.b16 %v1672, %v1671
      %v1683 = vpack.c.b16 %v1674, %v1673
      %vm1684 = vcmask 392192
      %v1686 = vsel %vm1684, %v1675, 0
      %v1689 = vsel %vm1684, %v1676, 0
      %v1692 = vsel %vm1684, %v1677, 0
      %v1695 = vsel %vm1684, %v1678, 0
      %v1698 = vsel %vm1684, %v1679, 0
      %v1701 = vsel %vm1684, %v1680, 0
      %v1704 = vsel %vm1684, %v1681, 0
      %v1707 = vsel %vm1684, %v1682, 0
      %v1710 = vsel %vm1684, %v1683, 0
      %1712 = vmatprep.subr.bf16.mxu0 %v1634
      %1713 = vmatpush1.bf16.msra.mxu0 %v1633
      %1714 = vmatprep.subr.bf16.mxu0 %v1636
      %1715 = vmatpush1.bf16.msra.mxu0 %v1635
      %1716 = vmatprep.subr.bf16.mxu0 %v1638
      %1717 = vmatpush1.bf16.msra.mxu0 %v1637
      %1718 = vmatprep.subr.bf16.mxu0 0
      %1719 = vmatpush1.bf16.msra.mxu0 0
      %1720 = vmatprep.subr.bf16.mxu0 0
      %1721 = vmatpush1.bf16.msra.mxu0 0
      %1722 = vmatprep.subr.bf16.mxu0 0
      %1723 = vmatpush1.bf16.msra.mxu0 0
      %1724 = vmatprep.subr.bf16.mxu0 0
      %1725 = vmatpush1.bf16.msra.mxu0 0
      %1726 = vmatprep.subr.bf16.mxu0 0
      %1727 = vmatpush1.bf16.msra.mxu0 0
      %1728 = vmatprep.subr.bf16.mxu0 0
      %1729 = vmatpush1.bf16.msra.mxu0 0
      %1730 = vmatprep.subr.bf16.mxu0 0
      %1731 = vmatpush1.bf16.msra.mxu0 0
      %1732 = vmatprep.subr.bf16.mxu0 0
      %1733 = vmatpush1.bf16.msra.mxu0 0
      %1734 = vmatprep.subr.bf16.mxu0 0
      %1735 = vmatpush1.bf16.msra.mxu0 0
      %1736 = vmatprep.subr.bf16.mxu0 0
      %1737 = vmatpush1.bf16.msra.mxu0 0
      %1738 = vmatprep.subr.bf16.mxu0 0
      %1739 = vmatpush1.bf16.msra.mxu0 0
      %1740 = vmatprep.subr.bf16.mxu0 0
      %1741 = vmatpush1.bf16.msra.mxu0 0
      %1742 = vmatprep.subr.bf16.mxu0 0
      %1743 = vmatpush1.bf16.msra.mxu0 0
      %1744 = vmatprep.mubr.bf16.mxu0 0
      %1745 = vmatmul.mubr.bf16.gmra.mrb[0].mxu0 %v1686
      %v1746 = vpop.f32.mrb[0].mxu0
      %v1747 = vadd.f32 0.0, %v1746
      %v1748 = vpop.f32.mrb[0].mxu0
      %v1749 = vadd.f32 0.0, %v1748
      %v1750 = vpop.f32.mrb[0].mxu0
      %v1751 = vadd.f32 0.0, %v1750
      %v1752 = vpop.f32.mrb[0].mxu0
      %v1753 = vadd.f32 0.0, %v1752
      %1754 = vmatprep.mubr.bf16.mxu0 0
      %1755 = vmatmul.mubr.bf16.gmra.mrb[0].mxu0 %v1689
      %v1756 = vpop.f32.mrb[0].mxu0
      %v1757 = vadd.f32 0.0, %v1756
      %v1758 = vpop.f32.mrb[0].mxu0
      %v1759 = vadd.f32 0.0, %v1758
      %v1760 = vpop.f32.mrb[0].mxu0
      %v1761 = vadd.f32 0.0, %v1760
      %v1762 = vpop.f32.mrb[0].mxu0
      %v1763 = vadd.f32 0.0, %v1762
      %1764 = vmatprep.mubr.bf16.mxu0 0
      %1765 = vmatmul.mubr.bf16.gmra.mrb[0].mxu0 %v1692
      %v1766 = vpop.f32.mrb[0].mxu0
      %v1767 = vadd.f32 0.0, %v1766
      %v1768 = vpop.f32.mrb[0].mxu0
      %v1769 = vadd.f32 0.0, %v1768
      %v1770 = vpop.f32.mrb[0].mxu0
      %v1771 = vadd.f32 0.0, %v1770
      %v1772 = vpop.f32.mrb[0].mxu0
      %v1773 = vadd.f32 0.0, %v1772
      %1774 = vmatprep.mubr.bf16.mxu0 0
      %1775 = vmatmul.mubr.bf16.gmra.mrb[0].mxu0 %v1695
      %v1776 = vpop.f32.mrb[0].mxu0
      %v1777 = vadd.f32 0.0, %v1776
      %v1778 = vpop.f32.mrb[0].mxu0
      %v1779 = vadd.f32 0.0, %v1778
      %v1780 = vpop.f32.mrb[0].mxu0
      %v1781 = vadd.f32 0.0, %v1780
      %v1782 = vpop.f32.mrb[0].mxu0
      %v1783 = vadd.f32 0.0, %v1782
      %1784 = vmatprep.mubr.bf16.mxu0 0
      %1785 = vmatmul.mubr.bf16.gmra.mrb[0].mxu0 %v1698
      %v1786 = vpop.f32.mrb[0].mxu0
      %v1787 = vadd.f32 0.0, %v1786
      %v1788 = vpop.f32.mrb[0].mxu0
      %v1789 = vadd.f32 0.0, %v1788
      %v1790 = vpop.f32.mrb[0].mxu0
      %v1791 = vadd.f32 0.0, %v1790
      %v1792 = vpop.f32.mrb[0].mxu0
      %v1793 = vadd.f32 0.0, %v1792
      %1794 = vmatprep.mubr.bf16.mxu0 0
      %1795 = vmatmul.mubr.bf16.gmra.mrb[0].mxu0 %v1701
      %v1796 = vpop.f32.mrb[0].mxu0
      %v1797 = vadd.f32 0.0, %v1796
      %v1798 = vpop.f32.mrb[0].mxu0
      %v1799 = vadd.f32 0.0, %v1798
      %v1800 = vpop.f32.mrb[0].mxu0
      %v1801 = vadd.f32 0.0, %v1800
      %v1802 = vpop.f32.mrb[0].mxu0
      %v1803 = vadd.f32 0.0, %v1802
      %1804 = vmatprep.mubr.bf16.mxu0 0
      %1805 = vmatmul.mubr.bf16.gmra.mrb[0].mxu0 %v1704
      %v1806 = vpop.f32.mrb[0].mxu0
      %v1807 = vadd.f32 0.0, %v1806
      %v1808 = vpop.f32.mrb[0].mxu0
      %v1809 = vadd.f32 0.0, %v1808
      %v1810 = vpop.f32.mrb[0].mxu0
      %v1811 = vadd.f32 0.0, %v1810
      %v1812 = vpop.f32.mrb[0].mxu0
      %v1813 = vadd.f32 0.0, %v1812
      %1814 = vmatprep.mubr.bf16.mxu0 0
      %1815 = vmatmul.mubr.bf16.gmra.mrb[0].mxu0 %v1707
      %v1816 = vpop.f32.mrb[0].mxu0
      %v1817 = vadd.f32 0.0, %v1816
      %v1818 = vpop.f32.mrb[0].mxu0
      %v1819 = vadd.f32 0.0, %v1818
      %v1820 = vpop.f32.mrb[0].mxu0
      %v1821 = vadd.f32 0.0, %v1820
      %v1822 = vpop.f32.mrb[0].mxu0
      %v1823 = vadd.f32 0.0, %v1822
      %1824 = vmatprep.mubr.bf16.mxu0 0
      %1825 = vmatmul.mubr.bf16.gmra.mrb[0].mxu0 %v1710
      %v1826 = vpop.f32.mrb[0].mxu0
      %v1827 = vadd.f32 0.0, %v1826
      %v1828 = vpop.f32.mrb[0].mxu0
      %v1829 = vadd.f32 0.0, %v1828
      %v1830 = vpop.f32.mrb[0].mxu0
      %v1831 = vadd.f32 0.0, %v1830
      %v1832 = vpop.f32.mrb[0].mxu0
      %v1833 = vadd.f32 0.0, %v1832
      %1834 = vdwg.mxu0
      %1837 = vrot.lane.b32.xlu0 %v1749, 17
      %v1838 = vpop.permute.xlu0 %1837
      %1839 = vrot.lane.b32.xlu0 %v1753, 17
      %v1840 = vpop.permute.xlu0 %1839
      %1845 = vrot.lane.b32.xlu0 %v1747, 17
      %v1846 = vpop.permute.xlu0 %1845
      %1847 = vrot.lane.b32.xlu0 %v1751, 17
      %v1848 = vpop.permute.xlu0 %1847
      %v1849 = vsel %vm661, %v1846, %v1838
      %v1850 = vsel %vm661, %v1848, %v1840
      %v1855 = vsel %vm661, %v1838, %v1846
      %v1856 = vsel %vm661, %v1840, %v1848
      %v1857 = vld [vmem:[%s11] sm:$0x3]
      %v1859 = vlaneseq
      %v1860 = vshrl.u32 %v1859, 7
      %v1861 = vsub.s32 0, %v1860
      %v1862 = vrot.slane %v1857, %v1861
      %v1863 = vlaneseq
      %v1864 = vshrl.u32 %v1863, 7
      %v1865 = vsub.s32 1, %v1864
      %v1866 = vrot.slane %v1857, %v1865
      %v1869 = vmul.f32 %v1855, %v1862
      %v1870 = vmul.f32 %v1849, %v1866
      %v1871 = vmul.f32 %v1856, %v1862
      %v1872 = vmul.f32 %v1850, %v1866
      %1875 = vrot.lane.b32.xlu0 %v1759, 16
      %v1876 = vpop.permute.xlu0 %1875
      %1877 = vrot.lane.b32.xlu0 %v1763, 16
      %v1878 = vpop.permute.xlu0 %1877
      %1883 = vrot.lane.b32.xlu0 %v1757, 16
      %v1884 = vpop.permute.xlu0 %1883
      %1885 = vrot.lane.b32.xlu0 %v1761, 16
      %v1886 = vpop.permute.xlu0 %1885
      %v1887 = vsel %vm496, %v1884, %v1876
      %v1888 = vsel %vm496, %v1886, %v1878
      %v1893 = vsel %vm496, %v1876, %v1884
      %v1894 = vsel %vm496, %v1878, %v1886
      %v1895 = vld [vmem:[%s708] sm:$0x3]
      %v1897 = vlaneseq
      %v1898 = vshrl.u32 %v1897, 7
      %v1899 = vsub.s32 0, %v1898
      %v1900 = vrot.slane %v1895, %v1899
      %v1901 = vlaneseq
      %v1902 = vshrl.u32 %v1901, 7
      %v1903 = vsub.s32 1, %v1902
      %v1904 = vrot.slane %v1895, %v1903
      %v1907 = vmul.f32 %v1893, %v1900
      %v1908 = vmul.f32 %v1887, %v1904
      %v1909 = vmul.f32 %v1894, %v1900
      %v1910 = vmul.f32 %v1888, %v1904
      %v1911 = vadd.f32 %v1869, %v1907
      %v1912 = vadd.f32 %v1870, %v1908
      %v1913 = vadd.f32 %v1871, %v1909
      %v1914 = vadd.f32 %v1872, %v1910
      %1917 = vrot.lane.b32.xlu0 %v1769, 15
      %v1918 = vpop.permute.xlu0 %1917
      %1919 = vrot.lane.b32.xlu0 %v1773, 15
      %v1920 = vpop.permute.xlu0 %1919
      %1925 = vrot.lane.b32.xlu0 %v1767, 15
      %v1926 = vpop.permute.xlu0 %1925
      %1927 = vrot.lane.b32.xlu0 %v1771, 15
      %v1928 = vpop.permute.xlu0 %1927
      %v1929 = vsel %vm743, %v1926, %v1918
      %v1930 = vsel %vm743, %v1928, %v1920
      %v1935 = vsel %vm743, %v1918, %v1926
      %v1936 = vsel %vm743, %v1920, %v1928
      %v1937 = vld [vmem:[%s752] sm:$0x3]
      %v1939 = vlaneseq
      %v1940 = vshrl.u32 %v1939, 7
      %v1941 = vsub.s32 0, %v1940
      %v1942 = vrot.slane %v1937, %v1941
      %v1943 = vlaneseq
      %v1944 = vshrl.u32 %v1943, 7
      %v1945 = vsub.s32 1, %v1944
      %v1946 = vrot.slane %v1937, %v1945
      %v1949 = vmul.f32 %v1935, %v1942
      %v1950 = vmul.f32 %v1929, %v1946
      %v1951 = vmul.f32 %v1936, %v1942
      %v1952 = vmul.f32 %v1930, %v1946
      %v1953 = vadd.f32 %v1911, %v1949
      %v1954 = vadd.f32 %v1912, %v1950
      %v1955 = vadd.f32 %v1913, %v1951
      %v1956 = vadd.f32 %v1914, %v1952
      %1959 = vrot.lane.b32.xlu0 %v1779, 1
      %v1960 = vpop.permute.xlu0 %1959
      %1961 = vrot.lane.b32.xlu0 %v1783, 1
      %v1962 = vpop.permute.xlu0 %1961
      %1967 = vrot.lane.b32.xlu0 %v1777, 1
      %v1968 = vpop.permute.xlu0 %1967
      %1969 = vrot.lane.b32.xlu0 %v1781, 1
      %v1970 = vpop.permute.xlu0 %1969
      %v1971 = vsel %vm787, %v1968, %v1960
      %v1972 = vsel %vm787, %v1970, %v1962
      %v1977 = vsel %vm787, %v1960, %v1968
      %v1978 = vsel %vm787, %v1962, %v1970
      %v1979 = vld [vmem:[%s796] sm:$0x3]
      %v1981 = vlaneseq
      %v1982 = vshrl.u32 %v1981, 7
      %v1983 = vsub.s32 0, %v1982
      %v1984 = vrot.slane %v1979, %v1983
      %v1985 = vlaneseq
      %v1986 = vshrl.u32 %v1985, 7
      %v1987 = vsub.s32 1, %v1986
      %v1988 = vrot.slane %v1979, %v1987
      %v1991 = vmul.f32 %v1977, %v1984
      %v1992 = vmul.f32 %v1971, %v1988
      %v1993 = vmul.f32 %v1978, %v1984
      %v1994 = vmul.f32 %v1972, %v1988
      %v1995 = vadd.f32 %v1953, %v1991
      %v1996 = vadd.f32 %v1954, %v1992
      %v1997 = vadd.f32 %v1955, %v1993
      %v1998 = vadd.f32 %v1956, %v1994
      %v1999 = vadd.f32 %v1995, %v1787
      %v2000 = vadd.f32 %v1996, %v1789
      %v2001 = vadd.f32 %v1997, %v1791
      %v2002 = vadd.f32 %v1998, %v1793
      %2007 = vrot.lane.b32.xlu0 %v1797, 127
      %v2008 = vpop.permute.xlu0 %2007
      %2009 = vrot.lane.b32.xlu0 %v1799, 127
      %v2010 = vpop.permute.xlu0 %2009
      %2011 = vrot.lane.b32.xlu0 %v1801, 127
      %v2012 = vpop.permute.xlu0 %2011
      %2013 = vrot.lane.b32.xlu0 %v1803, 127
      %v2014 = vpop.permute.xlu0 %2013
      %v2015 = vsel %vm833, %v2008, %v2010
      %v2016 = vsel %vm833, %v2012, %v2014
      %v2023 = vsel %vm833, %v2010, %v2008
      %v2024 = vsel %vm833, %v2014, %v2012
      %v2025 = vld [vmem:[%s844] sm:$0x3]
      %v2027 = vlaneseq
      %v2028 = vshrl.u32 %v2027, 7
      %v2029 = vsub.s32 0, %v2028
      %v2030 = vrot.slane %v2025, %v2029
      %v2031 = vlaneseq
      %v2032 = vshrl.u32 %v2031, 7
      %v2033 = vsub.s32 1, %v2032
      %v2034 = vrot.slane %v2025, %v2033
      %v2037 = vmul.f32 %v2015, %v2030
      %v2038 = vmul.f32 %v2023, %v2034
      %v2039 = vmul.f32 %v2016, %v2030
      %v2040 = vmul.f32 %v2024, %v2034
      %v2041 = vadd.f32 %v1999, %v2037
      %v2042 = vadd.f32 %v2000, %v2038
      %v2043 = vadd.f32 %v2001, %v2039
      %v2044 = vadd.f32 %v2002, %v2040
      %2049 = vrot.lane.b32.xlu0 %v1807, 113
      %v2050 = vpop.permute.xlu0 %2049
      %2051 = vrot.lane.b32.xlu0 %v1809, 113
      %v2052 = vpop.permute.xlu0 %2051
      %2053 = vrot.lane.b32.xlu0 %v1811, 113
      %v2054 = vpop.permute.xlu0 %2053
      %2055 = vrot.lane.b32.xlu0 %v1813, 113
      %v2056 = vpop.permute.xlu0 %2055
      %v2057 = vsel %vm877, %v2050, %v2052
      %v2058 = vsel %vm877, %v2054, %v2056
      %v2065 = vsel %vm877, %v2052, %v2050
      %v2066 = vsel %vm877, %v2056, %v2054
      %v2067 = vld [vmem:[%s888] sm:$0x3]
      %v2069 = vlaneseq
      %v2070 = vshrl.u32 %v2069, 7
      %v2071 = vsub.s32 0, %v2070
      %v2072 = vrot.slane %v2067, %v2071
      %v2073 = vlaneseq
      %v2074 = vshrl.u32 %v2073, 7
      %v2075 = vsub.s32 1, %v2074
      %v2076 = vrot.slane %v2067, %v2075
      %v2079 = vmul.f32 %v2057, %v2072
      %v2080 = vmul.f32 %v2065, %v2076
      %v2081 = vmul.f32 %v2058, %v2072
      %v2082 = vmul.f32 %v2066, %v2076
      %v2083 = vadd.f32 %v2041, %v2079
      %v2084 = vadd.f32 %v2042, %v2080
      %v2085 = vadd.f32 %v2043, %v2081
      %v2086 = vadd.f32 %v2044, %v2082
      %2091 = vrot.lane.b32.xlu0 %v1817, 112
      %v2092 = vpop.permute.xlu0 %2091
      %2093 = vrot.lane.b32.xlu0 %v1819, 112
      %v2094 = vpop.permute.xlu0 %2093
      %2095 = vrot.lane.b32.xlu0 %v1821, 112
      %v2096 = vpop.permute.xlu0 %2095
      %2097 = vrot.lane.b32.xlu0 %v1823, 112
      %v2098 = vpop.permute.xlu0 %2097
      %v2099 = vsel %vm921, %v2092, %v2094
      %v2100 = vsel %vm921, %v2096, %v2098
      %v2107 = vsel %vm921, %v2094, %v2092
      %v2108 = vsel %vm921, %v2098, %v2096
      %v2109 = vld [vmem:[%s932] sm:$0x3]
      %v2111 = vlaneseq
      %v2112 = vshrl.u32 %v2111, 7
      %v2113 = vsub.s32 0, %v2112
      %v2114 = vrot.slane %v2109, %v2113
      %v2115 = vlaneseq
      %v2116 = vshrl.u32 %v2115, 7
      %v2117 = vsub.s32 1, %v2116
      %v2118 = vrot.slane %v2109, %v2117
      %v2121 = vmul.f32 %v2099, %v2114
      %v2122 = vmul.f32 %v2107, %v2118
      %v2123 = vmul.f32 %v2100, %v2114
      %v2124 = vmul.f32 %v2108, %v2118
      %v2125 = vadd.f32 %v2083, %v2121
      %v2126 = vadd.f32 %v2084, %v2122
      %v2127 = vadd.f32 %v2085, %v2123
      %v2128 = vadd.f32 %v2086, %v2124
      %2133 = vrot.lane.b32.xlu0 %v1827, 111
      %v2134 = vpop.permute.xlu0 %2133
      %2135 = vrot.lane.b32.xlu0 %v1829, 111
      %v2136 = vpop.permute.xlu0 %2135
      %2137 = vrot.lane.b32.xlu0 %v1831, 111
      %v2138 = vpop.permute.xlu0 %2137
      %2139 = vrot.lane.b32.xlu0 %v1833, 111
      %v2140 = vpop.permute.xlu0 %2139
      %v2141 = vsel %vm965, %v2134, %v2136
      %v2142 = vsel %vm965, %v2138, %v2140
      %v2149 = vsel %vm965, %v2136, %v2134
      %v2150 = vsel %vm965, %v2140, %v2138
      %v2151 = vld [vmem:[%s976] sm:$0x3]
      %v2153 = vlaneseq
      %v2154 = vshrl.u32 %v2153, 7
      %v2155 = vsub.s32 0, %v2154
      %v2156 = vrot.slane %v2151, %v2155
      %v2157 = vlaneseq
      %v2158 = vshrl.u32 %v2157, 7
      %v2159 = vsub.s32 1, %v2158
      %v2160 = vrot.slane %v2151, %v2159
      %v2163 = vmul.f32 %v2141, %v2156
      %v2164 = vmul.f32 %v2149, %v2160
      %v2165 = vmul.f32 %v2142, %v2156
      %v2166 = vmul.f32 %v2150, %v2160
      %v2167 = vadd.f32 %v2125, %v2163
      %v2168 = vadd.f32 %v2126, %v2164
      %v2169 = vadd.f32 %v2127, %v2165
      %v2170 = vadd.f32 %v2128, %v2166
      %v2171 = vld [vmem:[%s8] sm:$0xff]
      %v2172 = vld [vmem:[%s8 + $0x8] sm:$0xff]
      %2174 = vset.pattern.permute.xlu0 0
      %2175 = vperm.xlu0 %2174, %v2171
      %v2176 = vpop.permute.xlu0 %2175
      %2179 = vset.pattern.permute.xlu0 0
      %2180 = vperm.xlu0 %2179, %v2172
      %v2181 = vpop.permute.xlu0 %2180
      %v2183 = vadd.f32 %v2167, %v2176
      %v2184 = vadd.f32 %v2168, %v2176
      %v2185 = vadd.f32 %v2169, %v2181
      %v2186 = vadd.f32 %v2170, %v2181
      %vm2187 = vcmp.gt.f32.partialorder %v2183, 0.0
      %vm2188 = vcmp.gt.f32.partialorder %v2184, 0.0
      %vm2189 = vcmp.gt.f32.partialorder %v2185, 0.0
      %vm2190 = vcmp.gt.f32.partialorder %v2186, 0.0
      %v2191 = vmul.f32 %v2183, 0.2
      %v2192 = vmul.f32 %v2184, 0.2
      %v2193 = vmul.f32 %v2185, 0.2
      %v2194 = vmul.f32 %v2186, 0.2
      %v2195 = vsel %vm2187, %v2183, %v2191
      %v2196 = vsel %vm2188, %v2184, %v2192
      %v2197 = vsel %vm2189, %v2185, %v2193
      %v2198 = vsel %vm2190, %v2186, %v2194
      %v2199 = vpack.c.bf16 %v2197, %v2195
      %v2200 = vpack.c.bf16 %v2198, %v2196
      %2201 = vst [vmem:[#allocation2 + $0x30] sm:$0xff] %v2199
      %2202 = vst [vmem:[#allocation2 + $0x38] sm:$0xff] %v2200
      %v2203 = vld [vmem:[%s4] sm:$0xf]
      %v2204 = vld [vmem:[%s4 + $0x4] sm:$0xf]
      %v2205 = vld [vmem:[%s4 + $0x8] sm:$0xf]
      %v2206 = vld [vmem:[%s4 + $0xc] sm:$0xf]
      %v2207 = vld [vmem:[%s4 + $0x10] sm:$0xf]
      %v2208 = vld [vmem:[%s4 + $0x14] sm:$0xf]
      %v2209 = vld [vmem:[%s4 + $0x18] sm:$0xf]
      %v2210 = vld [vmem:[%s4 + $0x1c] sm:$0xf]
      %v2211 = vld [vmem:[%s4 + $0x20] sm:$0xf]
      %v2212 = vld [vmem:[%s4 + $0x24] sm:$0xf]
      %v2213 = vld [vmem:[%s4 + $0x28] sm:$0xf]
      %v2214 = vld [vmem:[%s4 + $0x2c] sm:$0xf]
      %v2215 = vld [vmem:[%s4 + $0x30] sm:$0xf]
      %v2216 = vld [vmem:[%s4 + $0x34] sm:$0xf]
      %v2217 = vld [vmem:[%s4 + $0x38] sm:$0xf]
      %v2218 = vld [vmem:[%s4 + $0x3c] sm:$0xf]
      %v2219 = vld [vmem:[%s4 + $0x40] sm:$0xf]
      %v2220 = vld [vmem:[%s4 + $0x44] sm:$0xf]
      %v2221 = vld [vmem:[#allocation2] sm:$0xff]
      %v2222 = vld [vmem:[#allocation2 + $0x8] sm:$0xff]
      %v2223 = vld [vmem:[#allocation2 + $0x10] sm:$0xff]
      %v2224 = vld [vmem:[#allocation2 + $0x18] sm:$0xff]
      %v2225 = vld [vmem:[#allocation2 + $0x20] sm:$0xff]
      %v2226 = vld [vmem:[#allocation2 + $0x28] sm:$0xff]
      %v2227 = vld [vmem:[#allocation2 + $0x30] sm:$0xff]
      %v2228 = vld [vmem:[#allocation2 + $0x38] sm:$0xff]
      %v2247 = vunpack.c.l.b16 %v2203
      %v2248 = vunpack.c.l.b16 %v2204
      %v2249 = vunpack.c.l.b16 %v2205
      %v2250 = vunpack.c.l.b16 %v2206
      %v2251 = vunpack.c.l.b16 %v2207
      %v2252 = vunpack.c.l.b16 %v2208
      %v2253 = vunpack.c.l.b16 %v2209
      %v2254 = vunpack.c.l.b16 %v2210
      %v2255 = vunpack.c.l.b16 %v2211
      %v2256 = vunpack.c.l.b16 %v2212
      %v2257 = vunpack.c.l.b16 %v2213
      %v2258 = vunpack.c.l.b16 %v2214
      %v2259 = vunpack.c.l.b16 %v2215
      %v2260 = vunpack.c.l.b16 %v2216
      %v2261 = vunpack.c.l.b16 %v2217
      %v2262 = vunpack.c.l.b16 %v2218
      %v2263 = vunpack.c.l.b16 %v2219
      %v2264 = vunpack.c.l.b16 %v2220
      %v2265 = vpack.c.b16 %v2248, %v2247
      %v2266 = vpack.c.b16 %v2250, %v2249
      %v2267 = vpack.c.b16 %v2252, %v2251
      %v2268 = vpack.c.b16 %v2254, %v2253
      %v2269 = vpack.c.b16 %v2256, %v2255
      %v2270 = vpack.c.b16 %v2258, %v2257
      %v2271 = vpack.c.b16 %v2260, %v2259
      %v2272 = vpack.c.b16 %v2262, %v2261
      %v2273 = vpack.c.b16 %v2264, %v2263
      %vm2274 = vcmask 523264
      %v2276 = vsel %vm2274, %v2265, 0
      %v2279 = vsel %vm2274, %v2266, 0
      %v2282 = vsel %vm2274, %v2267, 0
      %v2285 = vsel %vm2274, %v2268, 0
      %v2288 = vsel %vm2274, %v2269, 0
      %v2291 = vsel %vm2274, %v2270, 0
      %v2294 = vsel %vm2274, %v2271, 0
      %v2297 = vsel %vm2274, %v2272, 0
      %v2300 = vsel %vm2274, %v2273, 0
      %2302 = vmatprep.subr.bf16.mxu0 %v2222
      %2303 = vmatpush1.bf16.msra.mxu0 %v2221
      %2304 = vmatprep.subr.bf16.mxu0 %v2224
      %2305 = vmatpush1.bf16.msra.mxu0 %v2223
      %2306 = vmatprep.subr.bf16.mxu0 %v2226
      %2307 = vmatpush1.bf16.msra.mxu0 %v2225
      %2308 = vmatprep.subr.bf16.mxu0 %v2228
      %2309 = vmatpush1.bf16.msra.mxu0 %v2227
      %2310 = vmatprep.subr.bf16.mxu0 0
      %2311 = vmatpush1.bf16.msra.mxu0 0
      %2312 = vmatprep.subr.bf16.mxu0 0
      %2313 = vmatpush1.bf16.msra.mxu0 0
      %2314 = vmatprep.subr.bf16.mxu0 0
      %2315 = vmatpush1.bf16.msra.mxu0 0
      %2316 = vmatprep.subr.bf16.mxu0 0
      %2317 = vmatpush1.bf16.msra.mxu0 0
      %2318 = vmatprep.subr.bf16.mxu0 0
      %2319 = vmatpush1.bf16.msra.mxu0 0
      %2320 = vmatprep.subr.bf16.mxu0 0
      %2321 = vmatpush1.bf16.msra.mxu0 0
      %2322 = vmatprep.subr.bf16.mxu0 0
      %2323 = vmatpush1.bf16.msra.mxu0 0
      %2324 = vmatprep.subr.bf16.mxu0 0
      %2325 = vmatpush1.bf16.msra.mxu0 0
      %2326 = vmatprep.subr.bf16.mxu0 0
      %2327 = vmatpush1.bf16.msra.mxu0 0
      %2328 = vmatprep.subr.bf16.mxu0 0
      %2329 = vmatpush1.bf16.msra.mxu0 0
      %2330 = vmatprep.subr.bf16.mxu0 0
      %2331 = vmatpush1.bf16.msra.mxu0 0
      %2332 = vmatprep.subr.bf16.mxu0 0
      %2333 = vmatpush1.bf16.msra.mxu0 0
      %2334 = vmatprep.mubr.bf16.mxu0 0
      %2335 = vmatmul.mubr.bf16.gmra.mrb[0].mxu0 %v2276
      %v2336 = vpop.f32.mrb[0].mxu0
      %v2337 = vadd.f32 0.0, %v2336
      %v2338 = vpop.f32.mrb[0].mxu0
      %v2339 = vadd.f32 0.0, %v2338
      %v2340 = vpop.f32.mrb[0].mxu0
      %v2341 = vadd.f32 0.0, %v2340
      %v2342 = vpop.f32.mrb[0].mxu0
      %v2343 = vadd.f32 0.0, %v2342
      %2344 = vmatprep.mubr.bf16.mxu0 0
      %2345 = vmatmul.mubr.bf16.gmra.mrb[0].mxu0 %v2279
      %v2346 = vpop.f32.mrb[0].mxu0
      %v2347 = vadd.f32 0.0, %v2346
      %v2348 = vpop.f32.mrb[0].mxu0
      %v2349 = vadd.f32 0.0, %v2348
      %v2350 = vpop.f32.mrb[0].mxu0
      %v2351 = vadd.f32 0.0, %v2350
      %v2352 = vpop.f32.mrb[0].mxu0
      %v2353 = vadd.f32 0.0, %v2352
      %2354 = vmatprep.mubr.bf16.mxu0 0
      %2355 = vmatmul.mubr.bf16.gmra.mrb[0].mxu0 %v2282
      %v2356 = vpop.f32.mrb[0].mxu0
      %v2357 = vadd.f32 0.0, %v2356
      %v2358 = vpop.f32.mrb[0].mxu0
      %v2359 = vadd.f32 0.0, %v2358
      %v2360 = vpop.f32.mrb[0].mxu0
      %v2361 = vadd.f32 0.0, %v2360
      %v2362 = vpop.f32.mrb[0].mxu0
      %v2363 = vadd.f32 0.0, %v2362
      %2364 = vmatprep.mubr.bf16.mxu0 0
      %2365 = vmatmul.mubr.bf16.gmra.mrb[0].mxu0 %v2285
      %v2366 = vpop.f32.mrb[0].mxu0
      %v2367 = vadd.f32 0.0, %v2366
      %v2368 = vpop.f32.mrb[0].mxu0
      %v2369 = vadd.f32 0.0, %v2368
      %v2370 = vpop.f32.mrb[0].mxu0
      %v2371 = vadd.f32 0.0, %v2370
      %v2372 = vpop.f32.mrb[0].mxu0
      %v2373 = vadd.f32 0.0, %v2372
      %2374 = vmatprep.mubr.bf16.mxu0 0
      %2375 = vmatmul.mubr.bf16.gmra.mrb[0].mxu0 %v2288
      %v2376 = vpop.f32.mrb[0].mxu0
      %v2377 = vadd.f32 0.0, %v2376
      %v2378 = vpop.f32.mrb[0].mxu0
      %v2379 = vadd.f32 0.0, %v2378
      %v2380 = vpop.f32.mrb[0].mxu0
      %v2381 = vadd.f32 0.0, %v2380
      %v2382 = vpop.f32.mrb[0].mxu0
      %v2383 = vadd.f32 0.0, %v2382
      %2384 = vmatprep.mubr.bf16.mxu0 0
      %2385 = vmatmul.mubr.bf16.gmra.mrb[0].mxu0 %v2291
      %v2386 = vpop.f32.mrb[0].mxu0
      %v2387 = vadd.f32 0.0, %v2386
      %v2388 = vpop.f32.mrb[0].mxu0
      %v2389 = vadd.f32 0.0, %v2388
      %v2390 = vpop.f32.mrb[0].mxu0
      %v2391 = vadd.f32 0.0, %v2390
      %v2392 = vpop.f32.mrb[0].mxu0
      %v2393 = vadd.f32 0.0, %v2392
      %2394 = vmatprep.mubr.bf16.mxu0 0
      %2395 = vmatmul.mubr.bf16.gmra.mrb[0].mxu0 %v2294
      %v2396 = vpop.f32.mrb[0].mxu0
      %v2397 = vadd.f32 0.0, %v2396
      %v2398 = vpop.f32.mrb[0].mxu0
      %v2399 = vadd.f32 0.0, %v2398
      %v2400 = vpop.f32.mrb[0].mxu0
      %v2401 = vadd.f32 0.0, %v2400
      %v2402 = vpop.f32.mrb[0].mxu0
      %v2403 = vadd.f32 0.0, %v2402
      %2404 = vmatprep.mubr.bf16.mxu0 0
      %2405 = vmatmul.mubr.bf16.gmra.mrb[0].mxu0 %v2297
      %v2406 = vpop.f32.mrb[0].mxu0
      %v2407 = vadd.f32 0.0, %v2406
      %v2408 = vpop.f32.mrb[0].mxu0
      %v2409 = vadd.f32 0.0, %v2408
      %v2410 = vpop.f32.mrb[0].mxu0
      %v2411 = vadd.f32 0.0, %v2410
      %v2412 = vpop.f32.mrb[0].mxu0
      %v2413 = vadd.f32 0.0, %v2412
      %2414 = vmatprep.mubr.bf16.mxu0 0
      %2415 = vmatmul.mubr.bf16.gmra.mrb[0].mxu0 %v2300
      %v2416 = vpop.f32.mrb[0].mxu0
      %v2417 = vadd.f32 0.0, %v2416
      %v2418 = vpop.f32.mrb[0].mxu0
      %v2419 = vadd.f32 0.0, %v2418
      %v2420 = vpop.f32.mrb[0].mxu0
      %v2421 = vadd.f32 0.0, %v2420
      %v2422 = vpop.f32.mrb[0].mxu0
      %v2423 = vadd.f32 0.0, %v2422
      %2424 = vdwg.mxu0
      %2427 = vrot.lane.b32.xlu0 %v2339, 17
      %v2428 = vpop.permute.xlu0 %2427
      %2429 = vrot.lane.b32.xlu0 %v2343, 17
      %v2430 = vpop.permute.xlu0 %2429
      %2435 = vrot.lane.b32.xlu0 %v2337, 17
      %v2436 = vpop.permute.xlu0 %2435
      %2437 = vrot.lane.b32.xlu0 %v2341, 17
      %v2438 = vpop.permute.xlu0 %2437
      %v2439 = vsel %vm661, %v2436, %v2428
      %v2440 = vsel %vm661, %v2438, %v2430
      %v2445 = vsel %vm661, %v2428, %v2436
      %v2446 = vsel %vm661, %v2430, %v2438
      %v2447 = vld [vmem:[%s11] sm:$0x3]
      %v2449 = vlaneseq
      %v2450 = vshrl.u32 %v2449, 7
      %v2451 = vsub.s32 0, %v2450
      %v2452 = vrot.slane %v2447, %v2451
      %v2453 = vlaneseq
      %v2454 = vshrl.u32 %v2453, 7
      %v2455 = vsub.s32 1, %v2454
      %v2456 = vrot.slane %v2447, %v2455
      %v2459 = vmul.f32 %v2445, %v2452
      %v2460 = vmul.f32 %v2439, %v2456
      %v2461 = vmul.f32 %v2446, %v2452
      %v2462 = vmul.f32 %v2440, %v2456
      %2465 = vrot.lane.b32.xlu0 %v2349, 16
      %v2466 = vpop.permute.xlu0 %2465
      %2467 = vrot.lane.b32.xlu0 %v2353, 16
      %v2468 = vpop.permute.xlu0 %2467
      %2473 = vrot.lane.b32.xlu0 %v2347, 16
      %v2474 = vpop.permute.xlu0 %2473
      %2475 = vrot.lane.b32.xlu0 %v2351, 16
      %v2476 = vpop.permute.xlu0 %2475
      %v2477 = vsel %vm496, %v2474, %v2466
      %v2478 = vsel %vm496, %v2476, %v2468
      %v2483 = vsel %vm496, %v2466, %v2474
      %v2484 = vsel %vm496, %v2468, %v2476
      %v2485 = vld [vmem:[%s708] sm:$0x3]
      %v2487 = vlaneseq
      %v2488 = vshrl.u32 %v2487, 7
      %v2489 = vsub.s32 0, %v2488
      %v2490 = vrot.slane %v2485, %v2489
      %v2491 = vlaneseq
      %v2492 = vshrl.u32 %v2491, 7
      %v2493 = vsub.s32 1, %v2492
      %v2494 = vrot.slane %v2485, %v2493
      %v2497 = vmul.f32 %v2483, %v2490
      %v2498 = vmul.f32 %v2477, %v2494
      %v2499 = vmul.f32 %v2484, %v2490
      %v2500 = vmul.f32 %v2478, %v2494
      %v2501 = vadd.f32 %v2459, %v2497
      %v2502 = vadd.f32 %v2460, %v2498
      %v2503 = vadd.f32 %v2461, %v2499
      %v2504 = vadd.f32 %v2462, %v2500
      %2507 = vrot.lane.b32.xlu0 %v2359, 15
      %v2508 = vpop.permute.xlu0 %2507
      %2509 = vrot.lane.b32.xlu0 %v2363, 15
      %v2510 = vpop.permute.xlu0 %2509
      %2515 = vrot.lane.b32.xlu0 %v2357, 15
      %v2516 = vpop.permute.xlu0 %2515
      %2517 = vrot.lane.b32.xlu0 %v2361, 15
      %v2518 = vpop.permute.xlu0 %2517
      %v2519 = vsel %vm743, %v2516, %v2508
      %v2520 = vsel %vm743, %v2518, %v2510
      %v2525 = vsel %vm743, %v2508, %v2516
      %v2526 = vsel %vm743, %v2510, %v2518
      %v2527 = vld [vmem:[%s752] sm:$0x3]
      %v2529 = vlaneseq
      %v2530 = vshrl.u32 %v2529, 7
      %v2531 = vsub.s32 0, %v2530
      %v2532 = vrot.slane %v2527, %v2531
      %v2533 = vlaneseq
      %v2534 = vshrl.u32 %v2533, 7
      %v2535 = vsub.s32 1, %v2534
      %v2536 = vrot.slane %v2527, %v2535
      %v2539 = vmul.f32 %v2525, %v2532
      %v2540 = vmul.f32 %v2519, %v2536
      %v2541 = vmul.f32 %v2526, %v2532
      %v2542 = vmul.f32 %v2520, %v2536
      %v2543 = vadd.f32 %v2501, %v2539
      %v2544 = vadd.f32 %v2502, %v2540
      %v2545 = vadd.f32 %v2503, %v2541
      %v2546 = vadd.f32 %v2504, %v2542
      %2549 = vrot.lane.b32.xlu0 %v2369, 1
      %v2550 = vpop.permute.xlu0 %2549
      %2551 = vrot.lane.b32.xlu0 %v2373, 1
      %v2552 = vpop.permute.xlu0 %2551
      %2557 = vrot.lane.b32.xlu0 %v2367, 1
      %v2558 = vpop.permute.xlu0 %2557
      %2559 = vrot.lane.b32.xlu0 %v2371, 1
      %v2560 = vpop.permute.xlu0 %2559
      %v2561 = vsel %vm787, %v2558, %v2550
      %v2562 = vsel %vm787, %v2560, %v2552
      %v2567 = vsel %vm787, %v2550, %v2558
      %v2568 = vsel %vm787, %v2552, %v2560
      %v2569 = vld [vmem:[%s796] sm:$0x3]
      %v2571 = vlaneseq
      %v2572 = vshrl.u32 %v2571, 7
      %v2573 = vsub.s32 0, %v2572
      %v2574 = vrot.slane %v2569, %v2573
      %v2575 = vlaneseq
      %v2576 = vshrl.u32 %v2575, 7
      %v2577 = vsub.s32 1, %v2576
      %v2578 = vrot.slane %v2569, %v2577
      %v2581 = vmul.f32 %v2567, %v2574
      %v2582 = vmul.f32 %v2561, %v2578
      %v2583 = vmul.f32 %v2568, %v2574
      %v2584 = vmul.f32 %v2562, %v2578
      %v2585 = vadd.f32 %v2543, %v2581
      %v2586 = vadd.f32 %v2544, %v2582
      %v2587 = vadd.f32 %v2545, %v2583
      %v2588 = vadd.f32 %v2546, %v2584
      %v2589 = vadd.f32 %v2585, %v2377
      %v2590 = vadd.f32 %v2586, %v2379
      %v2591 = vadd.f32 %v2587, %v2381
      %v2592 = vadd.f32 %v2588, %v2383
      %2597 = vrot.lane.b32.xlu0 %v2387, 127
      %v2598 = vpop.permute.xlu0 %2597
      %2599 = vrot.lane.b32.xlu0 %v2389, 127
      %v2600 = vpop.permute.xlu0 %2599
      %2601 = vrot.lane.b32.xlu0 %v2391, 127
      %v2602 = vpop.permute.xlu0 %2601
      %2603 = vrot.lane.b32.xlu0 %v2393, 127
      %v2604 = vpop.permute.xlu0 %2603
      %v2605 = vsel %vm833, %v2598, %v2600
      %v2606 = vsel %vm833, %v2602, %v2604
      %v2613 = vsel %vm833, %v2600, %v2598
      %v2614 = vsel %vm833, %v2604, %v2602
      %v2615 = vld [vmem:[%s844] sm:$0x3]
      %v2617 = vlaneseq
      %v2618 = vshrl.u32 %v2617, 7
      %v2619 = vsub.s32 0, %v2618
      %v2620 = vrot.slane %v2615, %v2619
      %v2621 = vlaneseq
      %v2622 = vshrl.u32 %v2621, 7
      %v2623 = vsub.s32 1, %v2622
      %v2624 = vrot.slane %v2615, %v2623
      %v2627 = vmul.f32 %v2605, %v2620
      %v2628 = vmul.f32 %v2613, %v2624
      %v2629 = vmul.f32 %v2606, %v2620
      %v2630 = vmul.f32 %v2614, %v2624
      %v2631 = vadd.f32 %v2589, %v2627
      %v2632 = vadd.f32 %v2590, %v2628
      %v2633 = vadd.f32 %v2591, %v2629
      %v2634 = vadd.f32 %v2592, %v2630
      %2639 = vrot.lane.b32.xlu0 %v2397, 113
      %v2640 = vpop.permute.xlu0 %2639
      %2641 = vrot.lane.b32.xlu0 %v2399, 113
      %v2642 = vpop.permute.xlu0 %2641
      %2643 = vrot.lane.b32.xlu0 %v2401, 113
      %v2644 = vpop.permute.xlu0 %2643
      %2645 = vrot.lane.b32.xlu0 %v2403, 113
      %v2646 = vpop.permute.xlu0 %2645
      %v2647 = vsel %vm877, %v2640, %v2642
      %v2648 = vsel %vm877, %v2644, %v2646
      %v2655 = vsel %vm877, %v2642, %v2640
      %v2656 = vsel %vm877, %v2646, %v2644
      %v2657 = vld [vmem:[%s888] sm:$0x3]
      %v2659 = vlaneseq
      %v2660 = vshrl.u32 %v2659, 7
      %v2661 = vsub.s32 0, %v2660
      %v2662 = vrot.slane %v2657, %v2661
      %v2663 = vlaneseq
      %v2664 = vshrl.u32 %v2663, 7
      %v2665 = vsub.s32 1, %v2664
      %v2666 = vrot.slane %v2657, %v2665
      %v2669 = vmul.f32 %v2647, %v2662
      %v2670 = vmul.f32 %v2655, %v2666
      %v2671 = vmul.f32 %v2648, %v2662
      %v2672 = vmul.f32 %v2656, %v2666
      %v2673 = vadd.f32 %v2631, %v2669
      %v2674 = vadd.f32 %v2632, %v2670
      %v2675 = vadd.f32 %v2633, %v2671
      %v2676 = vadd.f32 %v2634, %v2672
      %2681 = vrot.lane.b32.xlu0 %v2407, 112
      %v2682 = vpop.permute.xlu0 %2681
      %2683 = vrot.lane.b32.xlu0 %v2409, 112
      %v2684 = vpop.permute.xlu0 %2683
      %2685 = vrot.lane.b32.xlu0 %v2411, 112
      %v2686 = vpop.permute.xlu0 %2685
      %2687 = vrot.lane.b32.xlu0 %v2413, 112
      %v2688 = vpop.permute.xlu0 %2687
      %v2689 = vsel %vm921, %v2682, %v2684
      %v2690 = vsel %vm921, %v2686, %v2688
      %v2697 = vsel %vm921, %v2684, %v2682
      %v2698 = vsel %vm921, %v2688, %v2686
      %v2699 = vld [vmem:[%s932] sm:$0x3]
      %v2701 = vlaneseq
      %v2702 = vshrl.u32 %v2701, 7
      %v2703 = vsub.s32 0, %v2702
      %v2704 = vrot.slane %v2699, %v2703
      %v2705 = vlaneseq
      %v2706 = vshrl.u32 %v2705, 7
      %v2707 = vsub.s32 1, %v2706
      %v2708 = vrot.slane %v2699, %v2707
      %v2711 = vmul.f32 %v2689, %v2704
      %v2712 = vmul.f32 %v2697, %v2708
      %v2713 = vmul.f32 %v2690, %v2704
      %v2714 = vmul.f32 %v2698, %v2708
      %v2715 = vadd.f32 %v2673, %v2711
      %v2716 = vadd.f32 %v2674, %v2712
      %v2717 = vadd.f32 %v2675, %v2713
      %v2718 = vadd.f32 %v2676, %v2714
      %2723 = vrot.lane.b32.xlu0 %v2417, 111
      %v2724 = vpop.permute.xlu0 %2723
      %2725 = vrot.lane.b32.xlu0 %v2419, 111
      %v2726 = vpop.permute.xlu0 %2725
      %2727 = vrot.lane.b32.xlu0 %v2421, 111
      %v2728 = vpop.permute.xlu0 %2727
      %2729 = vrot.lane.b32.xlu0 %v2423, 111
      %v2730 = vpop.permute.xlu0 %2729
      %v2731 = vsel %vm965, %v2724, %v2726
      %v2732 = vsel %vm965, %v2728, %v2730
      %v2739 = vsel %vm965, %v2726, %v2724
      %v2740 = vsel %vm965, %v2730, %v2728
      %v2741 = vld [vmem:[%s976] sm:$0x3]
      %v2743 = vlaneseq
      %v2744 = vshrl.u32 %v2743, 7
      %v2745 = vsub.s32 0, %v2744
      %v2746 = vrot.slane %v2741, %v2745
      %v2747 = vlaneseq
      %v2748 = vshrl.u32 %v2747, 7
      %v2749 = vsub.s32 1, %v2748
      %v2750 = vrot.slane %v2741, %v2749
      %v2753 = vmul.f32 %v2731, %v2746
      %v2754 = vmul.f32 %v2739, %v2750
      %v2755 = vmul.f32 %v2732, %v2746
      %v2756 = vmul.f32 %v2740, %v2750
      %v2757 = vadd.f32 %v2715, %v2753
      %v2758 = vadd.f32 %v2716, %v2754
      %v2759 = vadd.f32 %v2717, %v2755
      %v2760 = vadd.f32 %v2718, %v2756
      %v2761 = vld [vmem:[%s9] sm:$0xff]
      %v2762 = vld [vmem:[%s9 + $0x8] sm:$0xff]
      %2764 = vset.pattern.permute.xlu0 0
      %2765 = vperm.xlu0 %2764, %v2761
      %v2766 = vpop.permute.xlu0 %2765
      %2769 = vset.pattern.permute.xlu0 0
      %2770 = vperm.xlu0 %2769, %v2762
      %v2771 = vpop.permute.xlu0 %2770
      %v2773 = vadd.f32 %v2757, %v2766
      %v2774 = vadd.f32 %v2758, %v2766
      %v2775 = vadd.f32 %v2759, %v2771
      %v2776 = vadd.f32 %v2760, %v2771
      %vm2777 = vcmp.gt.f32.partialorder %v2773, 0.0
      %vm2778 = vcmp.gt.f32.partialorder %v2774, 0.0
      %vm2779 = vcmp.gt.f32.partialorder %v2775, 0.0
      %vm2780 = vcmp.gt.f32.partialorder %v2776, 0.0
      %v2781 = vmul.f32 %v2773, 0.2
      %v2782 = vmul.f32 %v2774, 0.2
      %v2783 = vmul.f32 %v2775, 0.2
      %v2784 = vmul.f32 %v2776, 0.2
      %v2785 = vsel %vm2777, %v2773, %v2781
      %v2786 = vsel %vm2778, %v2774, %v2782
      %v2787 = vsel %vm2779, %v2775, %v2783
      %v2788 = vsel %vm2780, %v2776, %v2784
      %v2789 = vpack.c.bf16 %v2787, %v2785
      %v2790 = vpack.c.bf16 %v2788, %v2786
      %2791 = vst [vmem:[#allocation2 + $0x40] sm:$0xff] %v2789
      %2792 = vst [vmem:[#allocation2 + $0x48] sm:$0xff] %v2790
      %v2793 = vld [vmem:[%s5] sm:$0xf]
      %v2794 = vld [vmem:[%s5 + $0x4] sm:$0xf]
      %v2795 = vld [vmem:[%s5 + $0x8] sm:$0xf]
      %v2796 = vld [vmem:[%s5 + $0xc] sm:$0xf]
      %v2797 = vld [vmem:[%s5 + $0x10] sm:$0xf]
      %v2798 = vld [vmem:[%s5 + $0x14] sm:$0xf]
      %v2799 = vld [vmem:[%s5 + $0x18] sm:$0xf]
      %v2800 = vld [vmem:[%s5 + $0x1c] sm:$0xf]
      %v2801 = vld [vmem:[%s5 + $0x20] sm:$0xf]
      %v2802 = vld [vmem:[%s5 + $0x24] sm:$0xf]
      %v2803 = vld [vmem:[%s5 + $0x28] sm:$0xf]
      %v2804 = vld [vmem:[%s5 + $0x2c] sm:$0xf]
      %v2805 = vld [vmem:[%s5 + $0x30] sm:$0xf]
      %v2806 = vld [vmem:[%s5 + $0x34] sm:$0xf]
      %v2807 = vld [vmem:[%s5 + $0x38] sm:$0xf]
      %v2808 = vld [vmem:[%s5 + $0x3c] sm:$0xf]
      %v2809 = vld [vmem:[%s5 + $0x40] sm:$0xf]
      %v2810 = vld [vmem:[%s5 + $0x44] sm:$0xf]
      %v2811 = vld [vmem:[#allocation2] sm:$0xff]
      %v2812 = vld [vmem:[#allocation2 + $0x8] sm:$0xff]
      %v2813 = vld [vmem:[#allocation2 + $0x10] sm:$0xff]
      %v2814 = vld [vmem:[#allocation2 + $0x18] sm:$0xff]
      %v2815 = vld [vmem:[#allocation2 + $0x20] sm:$0xff]
      %v2816 = vld [vmem:[#allocation2 + $0x28] sm:$0xff]
      %v2817 = vld [vmem:[#allocation2 + $0x30] sm:$0xff]
      %v2818 = vld [vmem:[#allocation2 + $0x38] sm:$0xff]
      %v2819 = vld [vmem:[#allocation2 + $0x40] sm:$0xff]
      %v2820 = vld [vmem:[#allocation2 + $0x48] sm:$0xff]
      %v2839 = vunpack.c.l.b16 %v2793
      %v2840 = vunpack.c.l.b16 %v2794
      %v2841 = vunpack.c.l.b16 %v2795
      %v2842 = vunpack.c.l.b16 %v2796
      %v2843 = vunpack.c.l.b16 %v2797
      %v2844 = vunpack.c.l.b16 %v2798
      %v2845 = vunpack.c.l.b16 %v2799
      %v2846 = vunpack.c.l.b16 %v2800
      %v2847 = vunpack.c.l.b16 %v2801
      %v2848 = vunpack.c.l.b16 %v2802
      %v2849 = vunpack.c.l.b16 %v2803
      %v2850 = vunpack.c.l.b16 %v2804
      %v2851 = vunpack.c.l.b16 %v2805
      %v2852 = vunpack.c.l.b16 %v2806
      %v2853 = vunpack.c.l.b16 %v2807
      %v2854 = vunpack.c.l.b16 %v2808
      %v2855 = vunpack.c.l.b16 %v2809
      %v2856 = vunpack.c.l.b16 %v2810
      %v2857 = vpack.c.b16 %v2840, %v2839
      %v2858 = vpack.c.b16 %v2842, %v2841
      %v2859 = vpack.c.b16 %v2844, %v2843
      %v2860 = vpack.c.b16 %v2846, %v2845
      %v2861 = vpack.c.b16 %v2848, %v2847
      %v2862 = vpack.c.b16 %v2850, %v2849
      %v2863 = vpack.c.b16 %v2852, %v2851
      %v2864 = vpack.c.b16 %v2854, %v2853
      %v2865 = vpack.c.b16 %v2856, %v2855
      %vm2866 = vcmask 654336
      %v2868 = vsel %vm2866, %v2857, 0
      %v2871 = vsel %vm2866, %v2858, 0
      %v2874 = vsel %vm2866, %v2859, 0
      %v2877 = vsel %vm2866, %v2860, 0
      %v2880 = vsel %vm2866, %v2861, 0
      %v2883 = vsel %vm2866, %v2862, 0
      %v2886 = vsel %vm2866, %v2863, 0
      %v2889 = vsel %vm2866, %v2864, 0
      %v2892 = vsel %vm2866, %v2865, 0
      %2894 = vmatprep.subr.bf16.mxu0 %v2812
      %2895 = vmatpush1.bf16.msra.mxu0 %v2811
      %2896 = vmatprep.subr.bf16.mxu0 %v2814
      %2897 = vmatpush1.bf16.msra.mxu0 %v2813
      %2898 = vmatprep.subr.bf16.mxu0 %v2816
      %2899 = vmatpush1.bf16.msra.mxu0 %v2815
      %2900 = vmatprep.subr.bf16.mxu0 %v2818
      %2901 = vmatpush1.bf16.msra.mxu0 %v2817
      %2902 = vmatprep.subr.bf16.mxu0 %v2820
      %2903 = vmatpush1.bf16.msra.mxu0 %v2819
      %2904 = vmatprep.subr.bf16.mxu0 0
      %2905 = vmatpush1.bf16.msra.mxu0 0
      %2906 = vmatprep.subr.bf16.mxu0 0
      %2907 = vmatpush1.bf16.msra.mxu0 0
      %2908 = vmatprep.subr.bf16.mxu0 0
      %2909 = vmatpush1.bf16.msra.mxu0 0
      %2910 = vmatprep.subr.bf16.mxu0 0
      %2911 = vmatpush1.bf16.msra.mxu0 0
      %2912 = vmatprep.subr.bf16.mxu0 0
      %2913 = vmatpush1.bf16.msra.mxu0 0
      %2914 = vmatprep.subr.bf16.mxu0 0
      %2915 = vmatpush1.bf16.msra.mxu0 0
      %2916 = vmatprep.subr.bf16.mxu0 0
      %2917 = vmatpush1.bf16.msra.mxu0 0
      %2918 = vmatprep.subr.bf16.mxu0 0
      %2919 = vmatpush1.bf16.msra.mxu0 0
      %2920 = vmatprep.subr.bf16.mxu0 0
      %2921 = vmatpush1.bf16.msra.mxu0 0
      %2922 = vmatprep.subr.bf16.mxu0 0
      %2923 = vmatpush1.bf16.msra.mxu0 0
      %2924 = vmatprep.subr.bf16.mxu0 0
      %2925 = vmatpush1.bf16.msra.mxu0 0
      %2926 = vmatprep.mubr.bf16.mxu0 0
      %2927 = vmatmul.mubr.bf16.gmra.mrb[0].mxu0 %v2868
      %v2928 = vpop.f32.mrb[0].mxu0
      %v2929 = vadd.f32 0.0, %v2928
      %v2930 = vpop.f32.mrb[0].mxu0
      %v2931 = vadd.f32 0.0, %v2930
      %v2932 = vpop.f32.mrb[0].mxu0
      %v2933 = vadd.f32 0.0, %v2932
      %v2934 = vpop.f32.mrb[0].mxu0
      %v2935 = vadd.f32 0.0, %v2934
      %2936 = vmatprep.mubr.bf16.mxu0 0
      %2937 = vmatmul.mubr.bf16.gmra.mrb[0].mxu0 %v2871
      %v2938 = vpop.f32.mrb[0].mxu0
      %v2939 = vadd.f32 0.0, %v2938
      %v2940 = vpop.f32.mrb[0].mxu0
      %v2941 = vadd.f32 0.0, %v2940
      %v2942 = vpop.f32.mrb[0].mxu0
      %v2943 = vadd.f32 0.0, %v2942
      %v2944 = vpop.f32.mrb[0].mxu0
      %v2945 = vadd.f32 0.0, %v2944
      %2946 = vmatprep.mubr.bf16.mxu0 0
      %2947 = vmatmul.mubr.bf16.gmra.mrb[0].mxu0 %v2874
      %v2948 = vpop.f32.mrb[0].mxu0
      %v2949 = vadd.f32 0.0, %v2948
      %v2950 = vpop.f32.mrb[0].mxu0
      %v2951 = vadd.f32 0.0, %v2950
      %v2952 = vpop.f32.mrb[0].mxu0
      %v2953 = vadd.f32 0.0, %v2952
      %v2954 = vpop.f32.mrb[0].mxu0
      %v2955 = vadd.f32 0.0, %v2954
      %2956 = vmatprep.mubr.bf16.mxu0 0
      %2957 = vmatmul.mubr.bf16.gmra.mrb[0].mxu0 %v2877
      %v2958 = vpop.f32.mrb[0].mxu0
      %v2959 = vadd.f32 0.0, %v2958
      %v2960 = vpop.f32.mrb[0].mxu0
      %v2961 = vadd.f32 0.0, %v2960
      %v2962 = vpop.f32.mrb[0].mxu0
      %v2963 = vadd.f32 0.0, %v2962
      %v2964 = vpop.f32.mrb[0].mxu0
      %v2965 = vadd.f32 0.0, %v2964
      %2966 = vmatprep.mubr.bf16.mxu0 0
      %2967 = vmatmul.mubr.bf16.gmra.mrb[0].mxu0 %v2880
      %v2968 = vpop.f32.mrb[0].mxu0
      %v2969 = vadd.f32 0.0, %v2968
      %v2970 = vpop.f32.mrb[0].mxu0
      %v2971 = vadd.f32 0.0, %v2970
      %v2972 = vpop.f32.mrb[0].mxu0
      %v2973 = vadd.f32 0.0, %v2972
      %v2974 = vpop.f32.mrb[0].mxu0
      %v2975 = vadd.f32 0.0, %v2974
      %2976 = vmatprep.mubr.bf16.mxu0 0
      %2977 = vmatmul.mubr.bf16.gmra.mrb[0].mxu0 %v2883
      %v2978 = vpop.f32.mrb[0].mxu0
      %v2979 = vadd.f32 0.0, %v2978
      %v2980 = vpop.f32.mrb[0].mxu0
      %v2981 = vadd.f32 0.0, %v2980
      %v2982 = vpop.f32.mrb[0].mxu0
      %v2983 = vadd.f32 0.0, %v2982
      %v2984 = vpop.f32.mrb[0].mxu0
      %v2985 = vadd.f32 0.0, %v2984
      %2986 = vmatprep.mubr.bf16.mxu0 0
      %2987 = vmatmul.mubr.bf16.gmra.mrb[0].mxu0 %v2886
      %v2988 = vpop.f32.mrb[0].mxu0
      %v2989 = vadd.f32 0.0, %v2988
      %v2990 = vpop.f32.mrb[0].mxu0
      %v2991 = vadd.f32 0.0, %v2990
      %v2992 = vpop.f32.mrb[0].mxu0
      %v2993 = vadd.f32 0.0, %v2992
      %v2994 = vpop.f32.mrb[0].mxu0
      %v2995 = vadd.f32 0.0, %v2994
      %2996 = vmatprep.mubr.bf16.mxu0 0
      %2997 = vmatmul.mubr.bf16.gmra.mrb[0].mxu0 %v2889
      %v2998 = vpop.f32.mrb[0].mxu0
      %v2999 = vadd.f32 0.0, %v2998
      %v3000 = vpop.f32.mrb[0].mxu0
      %v3001 = vadd.f32 0.0, %v3000
      %v3002 = vpop.f32.mrb[0].mxu0
      %v3003 = vadd.f32 0.0, %v3002
      %v3004 = vpop.f32.mrb[0].mxu0
      %v3005 = vadd.f32 0.0, %v3004
      %3006 = vmatprep.mubr.bf16.mxu0 0
      %3007 = vmatmul.mubr.bf16.gmra.mrb[0].mxu0 %v2892
      %v3008 = vpop.f32.mrb[0].mxu0
      %v3009 = vadd.f32 0.0, %v3008
      %v3010 = vpop.f32.mrb[0].mxu0
      %v3011 = vadd.f32 0.0, %v3010
      %v3012 = vpop.f32.mrb[0].mxu0
      %v3013 = vadd.f32 0.0, %v3012
      %v3014 = vpop.f32.mrb[0].mxu0
      %v3015 = vadd.f32 0.0, %v3014
      %3016 = vdwg.mxu0
      %3019 = vrot.lane.b32.xlu0 %v2931, 17
      %v3020 = vpop.permute.xlu0 %3019
      %3021 = vrot.lane.b32.xlu0 %v2935, 17
      %v3022 = vpop.permute.xlu0 %3021
      %3027 = vrot.lane.b32.xlu0 %v2929, 17
      %v3028 = vpop.permute.xlu0 %3027
      %3029 = vrot.lane.b32.xlu0 %v2933, 17
      %v3030 = vpop.permute.xlu0 %3029
      %v3031 = vsel %vm661, %v3028, %v3020
      %v3032 = vsel %vm661, %v3030, %v3022
      %v3037 = vsel %vm661, %v3020, %v3028
      %v3038 = vsel %vm661, %v3022, %v3030
      %v3039 = vld [vmem:[%s11] sm:$0x3]
      %v3041 = vlaneseq
      %v3042 = vshrl.u32 %v3041, 7
      %v3043 = vsub.s32 0, %v3042
      %v3044 = vrot.slane %v3039, %v3043
      %v3045 = vlaneseq
      %v3046 = vshrl.u32 %v3045, 7
      %v3047 = vsub.s32 1, %v3046
      %v3048 = vrot.slane %v3039, %v3047
      %v3051 = vmul.f32 %v3037, %v3044
      %v3052 = vmul.f32 %v3031, %v3048
      %v3053 = vmul.f32 %v3038, %v3044
      %v3054 = vmul.f32 %v3032, %v3048
      %3057 = vrot.lane.b32.xlu0 %v2941, 16
      %v3058 = vpop.permute.xlu0 %3057
      %3059 = vrot.lane.b32.xlu0 %v2945, 16
      %v3060 = vpop.permute.xlu0 %3059
      %3065 = vrot.lane.b32.xlu0 %v2939, 16
      %v3066 = vpop.permute.xlu0 %3065
      %3067 = vrot.lane.b32.xlu0 %v2943, 16
      %v3068 = vpop.permute.xlu0 %3067
      %v3069 = vsel %vm496, %v3066, %v3058
      %v3070 = vsel %vm496, %v3068, %v3060
      %v3075 = vsel %vm496, %v3058, %v3066
      %v3076 = vsel %vm496, %v3060, %v3068
      %v3077 = vld [vmem:[%s708] sm:$0x3]
      %v3079 = vlaneseq
      %v3080 = vshrl.u32 %v3079, 7
      %v3081 = vsub.s32 0, %v3080
      %v3082 = vrot.slane %v3077, %v3081
      %v3083 = vlaneseq
      %v3084 = vshrl.u32 %v3083, 7
      %v3085 = vsub.s32 1, %v3084
      %v3086 = vrot.slane %v3077, %v3085
      %v3089 = vmul.f32 %v3075, %v3082
      %v3090 = vmul.f32 %v3069, %v3086
      %v3091 = vmul.f32 %v3076, %v3082
      %v3092 = vmul.f32 %v3070, %v3086
      %v3093 = vadd.f32 %v3051, %v3089
      %v3094 = vadd.f32 %v3052, %v3090
      %v3095 = vadd.f32 %v3053, %v3091
      %v3096 = vadd.f32 %v3054, %v3092
      %3099 = vrot.lane.b32.xlu0 %v2951, 15
      %v3100 = vpop.permute.xlu0 %3099
      %3101 = vrot.lane.b32.xlu0 %v2955, 15
      %v3102 = vpop.permute.xlu0 %3101
      %3107 = vrot.lane.b32.xlu0 %v2949, 15
      %v3108 = vpop.permute.xlu0 %3107
      %3109 = vrot.lane.b32.xlu0 %v2953, 15
      %v3110 = vpop.permute.xlu0 %3109
      %v3111 = vsel %vm743, %v3108, %v3100
      %v3112 = vsel %vm743, %v3110, %v3102
      %v3117 = vsel %vm743, %v3100, %v3108
      %v3118 = vsel %vm743, %v3102, %v3110
      %v3119 = vld [vmem:[%s752] sm:$0x3]
      %v3121 = vlaneseq
      %v3122 = vshrl.u32 %v3121, 7
      %v3123 = vsub.s32 0, %v3122
      %v3124 = vrot.slane %v3119, %v3123
      %v3125 = vlaneseq
      %v3126 = vshrl.u32 %v3125, 7
      %v3127 = vsub.s32 1, %v3126
      %v3128 = vrot.slane %v3119, %v3127
      %v3131 = vmul.f32 %v3117, %v3124
      %v3132 = vmul.f32 %v3111, %v3128
      %v3133 = vmul.f32 %v3118, %v3124
      %v3134 = vmul.f32 %v3112, %v3128
      %v3135 = vadd.f32 %v3093, %v3131
      %v3136 = vadd.f32 %v3094, %v3132
      %v3137 = vadd.f32 %v3095, %v3133
      %v3138 = vadd.f32 %v3096, %v3134
      %3141 = vrot.lane.b32.xlu0 %v2961, 1
      %v3142 = vpop.permute.xlu0 %3141
      %3143 = vrot.lane.b32.xlu0 %v2965, 1
      %v3144 = vpop.permute.xlu0 %3143
      %3149 = vrot.lane.b32.xlu0 %v2959, 1
      %v3150 = vpop.permute.xlu0 %3149
      %3151 = vrot.lane.b32.xlu0 %v2963, 1
      %v3152 = vpop.permute.xlu0 %3151
      %v3153 = vsel %vm787, %v3150, %v3142
      %v3154 = vsel %vm787, %v3152, %v3144
      %v3159 = vsel %vm787, %v3142, %v3150
      %v3160 = vsel %vm787, %v3144, %v3152
      %v3161 = vld [vmem:[%s796] sm:$0x3]
      %v3163 = vlaneseq
      %v3164 = vshrl.u32 %v3163, 7
      %v3165 = vsub.s32 0, %v3164
      %v3166 = vrot.slane %v3161, %v3165
      %v3167 = vlaneseq
      %v3168 = vshrl.u32 %v3167, 7
      %v3169 = vsub.s32 1, %v3168
      %v3170 = vrot.slane %v3161, %v3169
      %v3173 = vmul.f32 %v3159, %v3166
      %v3174 = vmul.f32 %v3153, %v3170
      %v3175 = vmul.f32 %v3160, %v3166
      %v3176 = vmul.f32 %v3154, %v3170
      %v3177 = vadd.f32 %v3135, %v3173
      %v3178 = vadd.f32 %v3136, %v3174
      %v3179 = vadd.f32 %v3137, %v3175
      %v3180 = vadd.f32 %v3138, %v3176
      %v3181 = vadd.f32 %v3177, %v2969
      %v3182 = vadd.f32 %v3178, %v2971
      %v3183 = vadd.f32 %v3179, %v2973
      %v3184 = vadd.f32 %v3180, %v2975
      %3189 = vrot.lane.b32.xlu0 %v2979, 127
      %v3190 = vpop.permute.xlu0 %3189
      %3191 = vrot.lane.b32.xlu0 %v2981, 127
      %v3192 = vpop.permute.xlu0 %3191
      %3193 = vrot.lane.b32.xlu0 %v2983, 127
      %v3194 = vpop.permute.xlu0 %3193
      %3195 = vrot.lane.b32.xlu0 %v2985, 127
      %v3196 = vpop.permute.xlu0 %3195
      %v3197 = vsel %vm833, %v3190, %v3192
      %v3198 = vsel %vm833, %v3194, %v3196
      %v3205 = vsel %vm833, %v3192, %v3190
      %v3206 = vsel %vm833, %v3196, %v3194
      %v3207 = vld [vmem:[%s844] sm:$0x3]
      %v3209 = vlaneseq
      %v3210 = vshrl.u32 %v3209, 7
      %v3211 = vsub.s32 0, %v3210
      %v3212 = vrot.slane %v3207, %v3211
      %v3213 = vlaneseq
      %v3214 = vshrl.u32 %v3213, 7
      %v3215 = vsub.s32 1, %v3214
      %v3216 = vrot.slane %v3207, %v3215
      %v3219 = vmul.f32 %v3197, %v3212
      %v3220 = vmul.f32 %v3205, %v3216
      %v3221 = vmul.f32 %v3198, %v3212
      %v3222 = vmul.f32 %v3206, %v3216
      %v3223 = vadd.f32 %v3181, %v3219
      %v3224 = vadd.f32 %v3182, %v3220
      %v3225 = vadd.f32 %v3183, %v3221
      %v3226 = vadd.f32 %v3184, %v3222
      %3231 = vrot.lane.b32.xlu0 %v2989, 113
      %v3232 = vpop.permute.xlu0 %3231
      %3233 = vrot.lane.b32.xlu0 %v2991, 113
      %v3234 = vpop.permute.xlu0 %3233
      %3235 = vrot.lane.b32.xlu0 %v2993, 113
      %v3236 = vpop.permute.xlu0 %3235
      %3237 = vrot.lane.b32.xlu0 %v2995, 113
      %v3238 = vpop.permute.xlu0 %3237
      %v3239 = vsel %vm877, %v3232, %v3234
      %v3240 = vsel %vm877, %v3236, %v3238
      %v3247 = vsel %vm877, %v3234, %v3232
      %v3248 = vsel %vm877, %v3238, %v3236
      %v3249 = vld [vmem:[%s888] sm:$0x3]
      %v3251 = vlaneseq
      %v3252 = vshrl.u32 %v3251, 7
      %v3253 = vsub.s32 0, %v3252
      %v3254 = vrot.slane %v3249, %v3253
      %v3255 = vlaneseq
      %v3256 = vshrl.u32 %v3255, 7
      %v3257 = vsub.s32 1, %v3256
      %v3258 = vrot.slane %v3249, %v3257
      %v3261 = vmul.f32 %v3239, %v3254
      %v3262 = vmul.f32 %v3247, %v3258
      %v3263 = vmul.f32 %v3240, %v3254
      %v3264 = vmul.f32 %v3248, %v3258
      %v3265 = vadd.f32 %v3223, %v3261
      %v3266 = vadd.f32 %v3224, %v3262
      %v3267 = vadd.f32 %v3225, %v3263
      %v3268 = vadd.f32 %v3226, %v3264
      %3273 = vrot.lane.b32.xlu0 %v2999, 112
      %v3274 = vpop.permute.xlu0 %3273
      %3275 = vrot.lane.b32.xlu0 %v3001, 112
      %v3276 = vpop.permute.xlu0 %3275
      %3277 = vrot.lane.b32.xlu0 %v3003, 112
      %v3278 = vpop.permute.xlu0 %3277
      %3279 = vrot.lane.b32.xlu0 %v3005, 112
      %v3280 = vpop.permute.xlu0 %3279
      %v3281 = vsel %vm921, %v3274, %v3276
      %v3282 = vsel %vm921, %v3278, %v3280
      %v3289 = vsel %vm921, %v3276, %v3274
      %v3290 = vsel %vm921, %v3280, %v3278
      %v3291 = vld [vmem:[%s932] sm:$0x3]
      %v3293 = vlaneseq
      %v3294 = vshrl.u32 %v3293, 7
      %v3295 = vsub.s32 0, %v3294
      %v3296 = vrot.slane %v3291, %v3295
      %v3297 = vlaneseq
      %v3298 = vshrl.u32 %v3297, 7
      %v3299 = vsub.s32 1, %v3298
      %v3300 = vrot.slane %v3291, %v3299
      %v3303 = vmul.f32 %v3281, %v3296
      %v3304 = vmul.f32 %v3289, %v3300
      %v3305 = vmul.f32 %v3282, %v3296
      %v3306 = vmul.f32 %v3290, %v3300
      %v3307 = vadd.f32 %v3265, %v3303
      %v3308 = vadd.f32 %v3266, %v3304
      %v3309 = vadd.f32 %v3267, %v3305
      %v3310 = vadd.f32 %v3268, %v3306
      %3315 = vrot.lane.b32.xlu0 %v3009, 111
      %v3316 = vpop.permute.xlu0 %3315
      %3317 = vrot.lane.b32.xlu0 %v3011, 111
      %v3318 = vpop.permute.xlu0 %3317
      %3319 = vrot.lane.b32.xlu0 %v3013, 111
      %v3320 = vpop.permute.xlu0 %3319
      %3321 = vrot.lane.b32.xlu0 %v3015, 111
      %v3322 = vpop.permute.xlu0 %3321
      %v3323 = vsel %vm965, %v3316, %v3318
      %v3324 = vsel %vm965, %v3320, %v3322
      %v3331 = vsel %vm965, %v3318, %v3316
      %v3332 = vsel %vm965, %v3322, %v3320
      %v3333 = vld [vmem:[%s976] sm:$0x3]
      %v3335 = vlaneseq
      %v3336 = vshrl.u32 %v3335, 7
      %v3337 = vsub.s32 0, %v3336
      %v3338 = vrot.slane %v3333, %v3337
      %v3339 = vlaneseq
      %v3340 = vshrl.u32 %v3339, 7
      %v3341 = vsub.s32 1, %v3340
      %v3342 = vrot.slane %v3333, %v3341
      %v3345 = vmul.f32 %v3323, %v3338
      %v3346 = vmul.f32 %v3331, %v3342
      %v3347 = vmul.f32 %v3324, %v3338
      %v3348 = vmul.f32 %v3332, %v3342
      %v3349 = vadd.f32 %v3307, %v3345
      %v3350 = vadd.f32 %v3308, %v3346
      %v3351 = vadd.f32 %v3309, %v3347
      %v3352 = vadd.f32 %v3310, %v3348
      %v3353 = vld [vmem:[%s10] sm:$0xff]
      %v3354 = vld [vmem:[%s10 + $0x8] sm:$0xff]
      %3356 = vset.pattern.permute.xlu0 0
      %3357 = vperm.xlu0 %3356, %v3353
      %v3358 = vpop.permute.xlu0 %3357
      %3361 = vset.pattern.permute.xlu0 0
      %3362 = vperm.xlu0 %3361, %v3354
      %v3363 = vpop.permute.xlu0 %3362
      %v3365 = vadd.f32 %v3349, %v3358
      %v3366 = vadd.f32 %v3350, %v3358
      %v3367 = vadd.f32 %v3351, %v3363
      %v3368 = vadd.f32 %v3352, %v3363
      %v3369 = vmul.f32 %v3365, 0.2
      %v3370 = vmul.f32 %v3366, 0.2
      %v3371 = vmul.f32 %v3367, 0.2
      %v3372 = vmul.f32 %v3368, 0.2
      %v3373 = vld [vmem:[#allocation3] sm:$0xff]
      %v3374 = vld [vmem:[#allocation3 + $0x8] sm:$0xff]
      %v3375 = vld [vmem:[#allocation3 + $0x10] sm:$0xff]
      %v3376 = vld [vmem:[#allocation3 + $0x18] sm:$0xff]
      %v3377 = vadd.f32 %v3369, %v3373
      %v3378 = vadd.f32 %v3370, %v3374
      %v3379 = vadd.f32 %v3371, %v3375
      %v3380 = vadd.f32 %v3372, %v3376
      %3381 = vst [vmem:[#allocation3] sm:$0xff] %v3377
      %3382 = vst [vmem:[#allocation3 + $0x8] sm:$0xff] %v3378
      %3383 = vst [vmem:[#allocation3 + $0x10] sm:$0xff] %v3379
      %3384 = vst [vmem:[#allocation3 + $0x18] sm:$0xff] %v3380
      %v3385 = vld [vmem:[#allocation3] sm:$0xff]
      %v3386 = vld [vmem:[#allocation3 + $0x8] sm:$0xff]
      %v3387 = vld [vmem:[#allocation3 + $0x10] sm:$0xff]
      %v3388 = vld [vmem:[#allocation3 + $0x18] sm:$0xff]
      %v3389 = vpack.c.bf16 %v3387, %v3385
      %v3390 = vpack.c.bf16 %v3388, %v3386
      %3391 = vst [vmem:[#allocation2] sm:$0xff] %v3389
      %3392 = vst [vmem:[#allocation2 + $0x8] sm:$0xff] %v3390
      %s3393 = scalar_lea.vmem %s1, 72
      %v3394 = vld [vmem:[%s3393] sm:$0xf]
      %v3395 = vld [vmem:[%s3393 + $0x4] sm:$0xf]
      %v3396 = vld [vmem:[%s3393 + $0x8] sm:$0xf]
      %v3397 = vld [vmem:[%s3393 + $0xc] sm:$0xf]
      %v3398 = vld [vmem:[%s3393 + $0x10] sm:$0xf]
      %v3399 = vld [vmem:[%s3393 + $0x14] sm:$0xf]
      %v3400 = vld [vmem:[%s3393 + $0x18] sm:$0xf]
      %v3401 = vld [vmem:[%s3393 + $0x1c] sm:$0xf]
      %v3402 = vld [vmem:[%s3393 + $0x20] sm:$0xf]
      %v3403 = vld [vmem:[%s3393 + $0x24] sm:$0xf]
      %v3404 = vld [vmem:[%s3393 + $0x28] sm:$0xf]
      %v3405 = vld [vmem:[%s3393 + $0x2c] sm:$0xf]
      %v3406 = vld [vmem:[%s3393 + $0x30] sm:$0xf]
      %v3407 = vld [vmem:[%s3393 + $0x34] sm:$0xf]
      %v3408 = vld [vmem:[%s3393 + $0x38] sm:$0xf]
      %v3409 = vld [vmem:[%s3393 + $0x3c] sm:$0xf]
      %v3410 = vld [vmem:[%s3393 + $0x40] sm:$0xf]
      %v3411 = vld [vmem:[%s3393 + $0x44] sm:$0xf]
      %v3412 = vld [vmem:[#allocation2] sm:$0xff]
      %v3413 = vld [vmem:[#allocation2 + $0x8] sm:$0xff]
      %v3432 = vunpack.c.l.b16 %v3394
      %v3433 = vunpack.c.l.b16 %v3395
      %v3434 = vunpack.c.l.b16 %v3396
      %v3435 = vunpack.c.l.b16 %v3397
      %v3436 = vunpack.c.l.b16 %v3398
      %v3437 = vunpack.c.l.b16 %v3399
      %v3438 = vunpack.c.l.b16 %v3400
      %v3439 = vunpack.c.l.b16 %v3401
      %v3440 = vunpack.c.l.b16 %v3402
      %v3441 = vunpack.c.l.b16 %v3403
      %v3442 = vunpack.c.l.b16 %v3404
      %v3443 = vunpack.c.l.b16 %v3405
      %v3444 = vunpack.c.l.b16 %v3406
      %v3445 = vunpack.c.l.b16 %v3407
      %v3446 = vunpack.c.l.b16 %v3408
      %v3447 = vunpack.c.l.b16 %v3409
      %v3448 = vunpack.c.l.b16 %v3410
      %v3449 = vunpack.c.l.b16 %v3411
      %v3450 = vpack.c.b16 %v3433, %v3432
      %v3451 = vpack.c.b16 %v3435, %v3434
      %v3452 = vpack.c.b16 %v3437, %v3436
      %v3453 = vpack.c.b16 %v3439, %v3438
      %v3454 = vpack.c.b16 %v3441, %v3440
      %v3455 = vpack.c.b16 %v3443, %v3442
      %v3456 = vpack.c.b16 %v3445, %v3444
      %v3457 = vpack.c.b16 %v3447, %v3446
      %v3458 = vpack.c.b16 %v3449, %v3448
      %v3460 = vsel %vm496, %v3450, 0
      %v3463 = vsel %vm496, %v3451, 0
      %v3466 = vsel %vm496, %v3452, 0
      %v3469 = vsel %vm496, %v3453, 0
      %v3472 = vsel %vm496, %v3454, 0
      %v3475 = vsel %vm496, %v3455, 0
      %v3478 = vsel %vm496, %v3456, 0
      %v3481 = vsel %vm496, %v3457, 0
      %v3484 = vsel %vm496, %v3458, 0
      %3486 = vmatprep.subr.bf16.mxu0 %v3413
      %3487 = vmatpush1.bf16.msra.mxu0 %v3412
      %3488 = vmatprep.subr.bf16.mxu0 0
      %3489 = vmatpush1.bf16.msra.mxu0 0
      %3490 = vmatprep.subr.bf16.mxu0 0
      %3491 = vmatpush1.bf16.msra.mxu0 0
      %3492 = vmatprep.subr.bf16.mxu0 0
      %3493 = vmatpush1.bf16.msra.mxu0 0
      %3494 = vmatprep.subr.bf16.mxu0 0
      %3495 = vmatpush1.bf16.msra.mxu0 0
      %3496 = vmatprep.subr.bf16.mxu0 0
      %3497 = vmatpush1.bf16.msra.mxu0 0
      %3498 = vmatprep.subr.bf16.mxu0 0
      %3499 = vmatpush1.bf16.msra.mxu0 0
      %3500 = vmatprep.subr.bf16.mxu0 0
      %3501 = vmatpush1.bf16.msra.mxu0 0
      %3502 = vmatprep.subr.bf16.mxu0 0
      %3503 = vmatpush1.bf16.msra.mxu0 0
      %3504 = vmatprep.subr.bf16.mxu0 0
      %3505 = vmatpush1.bf16.msra.mxu0 0
      %3506 = vmatprep.subr.bf16.mxu0 0
      %3507 = vmatpush1.bf16.msra.mxu0 0
      %3508 = vmatprep.subr.bf16.mxu0 0
      %3509 = vmatpush1.bf16.msra.mxu0 0
      %3510 = vmatprep.subr.bf16.mxu0 0
      %3511 = vmatpush1.bf16.msra.mxu0 0
      %3512 = vmatprep.subr.bf16.mxu0 0
      %3513 = vmatpush1.bf16.msra.mxu0 0
      %3514 = vmatprep.subr.bf16.mxu0 0
      %3515 = vmatpush1.bf16.msra.mxu0 0
      %3516 = vmatprep.subr.bf16.mxu0 0
      %3517 = vmatpush1.bf16.msra.mxu0 0
      %3518 = vmatprep.mubr.bf16.mxu0 0
      %3519 = vmatmul.mubr.bf16.gmra.mrb[0].mxu0 %v3460
      %v3520 = vpop.f32.mrb[0].mxu0
      %v3521 = vadd.f32 0.0, %v3520
      %v3522 = vpop.f32.mrb[0].mxu0
      %v3523 = vadd.f32 0.0, %v3522
      %v3524 = vpop.f32.mrb[0].mxu0
      %v3525 = vadd.f32 0.0, %v3524
      %v3526 = vpop.f32.mrb[0].mxu0
      %v3527 = vadd.f32 0.0, %v3526
      %3528 = vmatprep.mubr.bf16.mxu0 0
      %3529 = vmatmul.mubr.bf16.gmra.mrb[0].mxu0 %v3463
      %v3530 = vpop.f32.mrb[0].mxu0
      %v3531 = vadd.f32 0.0, %v3530
      %v3532 = vpop.f32.mrb[0].mxu0
      %v3533 = vadd.f32 0.0, %v3532
      %v3534 = vpop.f32.mrb[0].mxu0
      %v3535 = vadd.f32 0.0, %v3534
      %v3536 = vpop.f32.mrb[0].mxu0
      %v3537 = vadd.f32 0.0, %v3536
      %3538 = vmatprep.mubr.bf16.mxu0 0
      %3539 = vmatmul.mubr.bf16.gmra.mrb[0].mxu0 %v3466
      %v3540 = vpop.f32.mrb[0].mxu0
      %v3541 = vadd.f32 0.0, %v3540
      %v3542 = vpop.f32.mrb[0].mxu0
      %v3543 = vadd.f32 0.0, %v3542
      %v3544 = vpop.f32.mrb[0].mxu0
      %v3545 = vadd.f32 0.0, %v3544
      %v3546 = vpop.f32.mrb[0].mxu0
      %v3547 = vadd.f32 0.0, %v3546
      %3548 = vmatprep.mubr.bf16.mxu0 0
      %3549 = vmatmul.mubr.bf16.gmra.mrb[0].mxu0 %v3469
      %v3550 = vpop.f32.mrb[0].mxu0
      %v3551 = vadd.f32 0.0, %v3550
      %v3552 = vpop.f32.mrb[0].mxu0
      %v3553 = vadd.f32 0.0, %v3552
      %v3554 = vpop.f32.mrb[0].mxu0
      %v3555 = vadd.f32 0.0, %v3554
      %v3556 = vpop.f32.mrb[0].mxu0
      %v3557 = vadd.f32 0.0, %v3556
      %3558 = vmatprep.mubr.bf16.mxu0 0
      %3559 = vmatmul.mubr.bf16.gmra.mrb[0].mxu0 %v3472
      %v3560 = vpop.f32.mrb[0].mxu0
      %v3561 = vadd.f32 0.0, %v3560
      %v3562 = vpop.f32.mrb[0].mxu0
      %v3563 = vadd.f32 0.0, %v3562
      %v3564 = vpop.f32.mrb[0].mxu0
      %v3565 = vadd.f32 0.0, %v3564
      %v3566 = vpop.f32.mrb[0].mxu0
      %v3567 = vadd.f32 0.0, %v3566
      %3568 = vmatprep.mubr.bf16.mxu0 0
      %3569 = vmatmul.mubr.bf16.gmra.mrb[0].mxu0 %v3475
      %v3570 = vpop.f32.mrb[0].mxu0
      %v3571 = vadd.f32 0.0, %v3570
      %v3572 = vpop.f32.mrb[0].mxu0
      %v3573 = vadd.f32 0.0, %v3572
      %v3574 = vpop.f32.mrb[0].mxu0
      %v3575 = vadd.f32 0.0, %v3574
      %v3576 = vpop.f32.mrb[0].mxu0
      %v3577 = vadd.f32 0.0, %v3576
      %3578 = vmatprep.mubr.bf16.mxu0 0
      %3579 = vmatmul.mubr.bf16.gmra.mrb[0].mxu0 %v3478
      %v3580 = vpop.f32.mrb[0].mxu0
      %v3581 = vadd.f32 0.0, %v3580
      %v3582 = vpop.f32.mrb[0].mxu0
      %v3583 = vadd.f32 0.0, %v3582
      %v3584 = vpop.f32.mrb[0].mxu0
      %v3585 = vadd.f32 0.0, %v3584
      %v3586 = vpop.f32.mrb[0].mxu0
      %v3587 = vadd.f32 0.0, %v3586
      %3588 = vmatprep.mubr.bf16.mxu0 0
      %3589 = vmatmul.mubr.bf16.gmra.mrb[0].mxu0 %v3481
      %v3590 = vpop.f32.mrb[0].mxu0
      %v3591 = vadd.f32 0.0, %v3590
      %v3592 = vpop.f32.mrb[0].mxu0
      %v3593 = vadd.f32 0.0, %v3592
      %v3594 = vpop.f32.mrb[0].mxu0
      %v3595 = vadd.f32 0.0, %v3594
      %v3596 = vpop.f32.mrb[0].mxu0
      %v3597 = vadd.f32 0.0, %v3596
      %3598 = vmatprep.mubr.bf16.mxu0 0
      %3599 = vmatmul.mubr.bf16.gmra.mrb[0].mxu0 %v3484
      %v3600 = vpop.f32.mrb[0].mxu0
      %v3601 = vadd.f32 0.0, %v3600
      %v3602 = vpop.f32.mrb[0].mxu0
      %v3603 = vadd.f32 0.0, %v3602
      %v3604 = vpop.f32.mrb[0].mxu0
      %v3605 = vadd.f32 0.0, %v3604
      %v3606 = vpop.f32.mrb[0].mxu0
      %v3607 = vadd.f32 0.0, %v3606
      %3608 = vdwg.mxu0
      %3611 = vrot.lane.b32.xlu0 %v3523, 17
      %v3612 = vpop.permute.xlu0 %3611
      %3613 = vrot.lane.b32.xlu0 %v3527, 17
      %v3614 = vpop.permute.xlu0 %3613
      %3619 = vrot.lane.b32.xlu0 %v3521, 17
      %v3620 = vpop.permute.xlu0 %3619
      %3621 = vrot.lane.b32.xlu0 %v3525, 17
      %v3622 = vpop.permute.xlu0 %3621
      %v3623 = vsel %vm661, %v3620, %v3612
      %v3624 = vsel %vm661, %v3622, %v3614
      %v3629 = vsel %vm661, %v3612, %v3620
      %v3630 = vsel %vm661, %v3614, %v3622
      %v3631 = vld [vmem:[%s11] sm:$0x3]
      %v3633 = vlaneseq
      %v3634 = vshrl.u32 %v3633, 7
      %v3635 = vsub.s32 0, %v3634
      %v3636 = vrot.slane %v3631, %v3635
      %v3637 = vlaneseq
      %v3638 = vshrl.u32 %v3637, 7
      %v3639 = vsub.s32 1, %v3638
      %v3640 = vrot.slane %v3631, %v3639
      %v3643 = vmul.f32 %v3629, %v3636
      %v3644 = vmul.f32 %v3623, %v3640
      %v3645 = vmul.f32 %v3630, %v3636
      %v3646 = vmul.f32 %v3624, %v3640
      %3649 = vrot.lane.b32.xlu0 %v3533, 16
      %v3650 = vpop.permute.xlu0 %3649
      %3651 = vrot.lane.b32.xlu0 %v3537, 16
      %v3652 = vpop.permute.xlu0 %3651
      %3657 = vrot.lane.b32.xlu0 %v3531, 16
      %v3658 = vpop.permute.xlu0 %3657
      %3659 = vrot.lane.b32.xlu0 %v3535, 16
      %v3660 = vpop.permute.xlu0 %3659
      %v3661 = vsel %vm496, %v3658, %v3650
      %v3662 = vsel %vm496, %v3660, %v3652
      %v3667 = vsel %vm496, %v3650, %v3658
      %v3668 = vsel %vm496, %v3652, %v3660
      %v3669 = vld [vmem:[%s708] sm:$0x3]
      %v3671 = vlaneseq
      %v3672 = vshrl.u32 %v3671, 7
      %v3673 = vsub.s32 0, %v3672
      %v3674 = vrot.slane %v3669, %v3673
      %v3675 = vlaneseq
      %v3676 = vshrl.u32 %v3675, 7
      %v3677 = vsub.s32 1, %v3676
      %v3678 = vrot.slane %v3669, %v3677
      %v3681 = vmul.f32 %v3667, %v3674
      %v3682 = vmul.f32 %v3661, %v3678
      %v3683 = vmul.f32 %v3668, %v3674
      %v3684 = vmul.f32 %v3662, %v3678
      %v3685 = vadd.f32 %v3643, %v3681
      %v3686 = vadd.f32 %v3644, %v3682
      %v3687 = vadd.f32 %v3645, %v3683
      %v3688 = vadd.f32 %v3646, %v3684
      %3691 = vrot.lane.b32.xlu0 %v3543, 15
      %v3692 = vpop.permute.xlu0 %3691
      %3693 = vrot.lane.b32.xlu0 %v3547, 15
      %v3694 = vpop.permute.xlu0 %3693
      %3699 = vrot.lane.b32.xlu0 %v3541, 15
      %v3700 = vpop.permute.xlu0 %3699
      %3701 = vrot.lane.b32.xlu0 %v3545, 15
      %v3702 = vpop.permute.xlu0 %3701
      %v3703 = vsel %vm743, %v3700, %v3692
      %v3704 = vsel %vm743, %v3702, %v3694
      %v3709 = vsel %vm743, %v3692, %v3700
      %v3710 = vsel %vm743, %v3694, %v3702
      %v3711 = vld [vmem:[%s752] sm:$0x3]
      %v3713 = vlaneseq
      %v3714 = vshrl.u32 %v3713, 7
      %v3715 = vsub.s32 0, %v3714
      %v3716 = vrot.slane %v3711, %v3715
      %v3717 = vlaneseq
      %v3718 = vshrl.u32 %v3717, 7
      %v3719 = vsub.s32 1, %v3718
      %v3720 = vrot.slane %v3711, %v3719
      %v3723 = vmul.f32 %v3709, %v3716
      %v3724 = vmul.f32 %v3703, %v3720
      %v3725 = vmul.f32 %v3710, %v3716
      %v3726 = vmul.f32 %v3704, %v3720
      %v3727 = vadd.f32 %v3685, %v3723
      %v3728 = vadd.f32 %v3686, %v3724
      %v3729 = vadd.f32 %v3687, %v3725
      %v3730 = vadd.f32 %v3688, %v3726
      %3733 = vrot.lane.b32.xlu0 %v3553, 1
      %v3734 = vpop.permute.xlu0 %3733
      %3735 = vrot.lane.b32.xlu0 %v3557, 1
      %v3736 = vpop.permute.xlu0 %3735
      %3741 = vrot.lane.b32.xlu0 %v3551, 1
      %v3742 = vpop.permute.xlu0 %3741
      %3743 = vrot.lane.b32.xlu0 %v3555, 1
      %v3744 = vpop.permute.xlu0 %3743
      %v3745 = vsel %vm787, %v3742, %v3734
      %v3746 = vsel %vm787, %v3744, %v3736
      %v3751 = vsel %vm787, %v3734, %v3742
      %v3752 = vsel %vm787, %v3736, %v3744
      %v3753 = vld [vmem:[%s796] sm:$0x3]
      %v3755 = vlaneseq
      %v3756 = vshrl.u32 %v3755, 7
      %v3757 = vsub.s32 0, %v3756
      %v3758 = vrot.slane %v3753, %v3757
      %v3759 = vlaneseq
      %v3760 = vshrl.u32 %v3759, 7
      %v3761 = vsub.s32 1, %v3760
      %v3762 = vrot.slane %v3753, %v3761
      %v3765 = vmul.f32 %v3751, %v3758
      %v3766 = vmul.f32 %v3745, %v3762
      %v3767 = vmul.f32 %v3752, %v3758
      %v3768 = vmul.f32 %v3746, %v3762
      %v3769 = vadd.f32 %v3727, %v3765
      %v3770 = vadd.f32 %v3728, %v3766
      %v3771 = vadd.f32 %v3729, %v3767
      %v3772 = vadd.f32 %v3730, %v3768
      %v3773 = vadd.f32 %v3769, %v3561
      %v3774 = vadd.f32 %v3770, %v3563
      %v3775 = vadd.f32 %v3771, %v3565
      %v3776 = vadd.f32 %v3772, %v3567
      %3781 = vrot.lane.b32.xlu0 %v3571, 127
      %v3782 = vpop.permute.xlu0 %3781
      %3783 = vrot.lane.b32.xlu0 %v3573, 127
      %v3784 = vpop.permute.xlu0 %3783
      %3785 = vrot.lane.b32.xlu0 %v3575, 127
      %v3786 = vpop.permute.xlu0 %3785
      %3787 = vrot.lane.b32.xlu0 %v3577, 127
      %v3788 = vpop.permute.xlu0 %3787
      %v3789 = vsel %vm833, %v3782, %v3784
      %v3790 = vsel %vm833, %v3786, %v3788
      %v3797 = vsel %vm833, %v3784, %v3782
      %v3798 = vsel %vm833, %v3788, %v3786
      %v3799 = vld [vmem:[%s844] sm:$0x3]
      %v3801 = vlaneseq
      %v3802 = vshrl.u32 %v3801, 7
      %v3803 = vsub.s32 0, %v3802
      %v3804 = vrot.slane %v3799, %v3803
      %v3805 = vlaneseq
      %v3806 = vshrl.u32 %v3805, 7
      %v3807 = vsub.s32 1, %v3806
      %v3808 = vrot.slane %v3799, %v3807
      %v3811 = vmul.f32 %v3789, %v3804
      %v3812 = vmul.f32 %v3797, %v3808
      %v3813 = vmul.f32 %v3790, %v3804
      %v3814 = vmul.f32 %v3798, %v3808
      %v3815 = vadd.f32 %v3773, %v3811
      %v3816 = vadd.f32 %v3774, %v3812
      %v3817 = vadd.f32 %v3775, %v3813
      %v3818 = vadd.f32 %v3776, %v3814
      %3823 = vrot.lane.b32.xlu0 %v3581, 113
      %v3824 = vpop.permute.xlu0 %3823
      %3825 = vrot.lane.b32.xlu0 %v3583, 113
      %v3826 = vpop.permute.xlu0 %3825
      %3827 = vrot.lane.b32.xlu0 %v3585, 113
      %v3828 = vpop.permute.xlu0 %3827
      %3829 = vrot.lane.b32.xlu0 %v3587, 113
      %v3830 = vpop.permute.xlu0 %3829
      %v3831 = vsel %vm877, %v3824, %v3826
      %v3832 = vsel %vm877, %v3828, %v3830
      %v3839 = vsel %vm877, %v3826, %v3824
      %v3840 = vsel %vm877, %v3830, %v3828
      %v3841 = vld [vmem:[%s888] sm:$0x3]
      %v3843 = vlaneseq
      %v3844 = vshrl.u32 %v3843, 7
      %v3845 = vsub.s32 0, %v3844
      %v3846 = vrot.slane %v3841, %v3845
      %v3847 = vlaneseq
      %v3848 = vshrl.u32 %v3847, 7
      %v3849 = vsub.s32 1, %v3848
      %v3850 = vrot.slane %v3841, %v3849
      %v3853 = vmul.f32 %v3831, %v3846
      %v3854 = vmul.f32 %v3839, %v3850
      %v3855 = vmul.f32 %v3832, %v3846
      %v3856 = vmul.f32 %v3840, %v3850
      %v3857 = vadd.f32 %v3815, %v3853
      %v3858 = vadd.f32 %v3816, %v3854
      %v3859 = vadd.f32 %v3817, %v3855
      %v3860 = vadd.f32 %v3818, %v3856
      %3865 = vrot.lane.b32.xlu0 %v3591, 112
      %v3866 = vpop.permute.xlu0 %3865
      %3867 = vrot.lane.b32.xlu0 %v3593, 112
      %v3868 = vpop.permute.xlu0 %3867
      %3869 = vrot.lane.b32.xlu0 %v3595, 112
      %v3870 = vpop.permute.xlu0 %3869
      %3871 = vrot.lane.b32.xlu0 %v3597, 112
      %v3872 = vpop.permute.xlu0 %3871
      %v3873 = vsel %vm921, %v3866, %v3868
      %v3874 = vsel %vm921, %v3870, %v3872
      %v3881 = vsel %vm921, %v3868, %v3866
      %v3882 = vsel %vm921, %v3872, %v3870
      %v3883 = vld [vmem:[%s932] sm:$0x3]
      %v3885 = vlaneseq
      %v3886 = vshrl.u32 %v3885, 7
      %v3887 = vsub.s32 0, %v3886
      %v3888 = vrot.slane %v3883, %v3887
      %v3889 = vlaneseq
      %v3890 = vshrl.u32 %v3889, 7
      %v3891 = vsub.s32 1, %v3890
      %v3892 = vrot.slane %v3883, %v3891
      %v3895 = vmul.f32 %v3873, %v3888
      %v3896 = vmul.f32 %v3881, %v3892
      %v3897 = vmul.f32 %v3874, %v3888
      %v3898 = vmul.f32 %v3882, %v3892
      %v3899 = vadd.f32 %v3857, %v3895
      %v3900 = vadd.f32 %v3858, %v3896
      %v3901 = vadd.f32 %v3859, %v3897
      %v3902 = vadd.f32 %v3860, %v3898
      %3907 = vrot.lane.b32.xlu0 %v3601, 111
      %v3908 = vpop.permute.xlu0 %3907
      %3909 = vrot.lane.b32.xlu0 %v3603, 111
      %v3910 = vpop.permute.xlu0 %3909
      %3911 = vrot.lane.b32.xlu0 %v3605, 111
      %v3912 = vpop.permute.xlu0 %3911
      %3913 = vrot.lane.b32.xlu0 %v3607, 111
      %v3914 = vpop.permute.xlu0 %3913
      %v3915 = vsel %vm965, %v3908, %v3910
      %v3916 = vsel %vm965, %v3912, %v3914
      %v3923 = vsel %vm965, %v3910, %v3908
      %v3924 = vsel %vm965, %v3914, %v3912
      %v3925 = vld [vmem:[%s976] sm:$0x3]
      %v3927 = vlaneseq
      %v3928 = vshrl.u32 %v3927, 7
      %v3929 = vsub.s32 0, %v3928
      %v3930 = vrot.slane %v3925, %v3929
      %v3931 = vlaneseq
      %v3932 = vshrl.u32 %v3931, 7
      %v3933 = vsub.s32 1, %v3932
      %v3934 = vrot.slane %v3925, %v3933
      %v3937 = vmul.f32 %v3915, %v3930
      %v3938 = vmul.f32 %v3923, %v3934
      %v3939 = vmul.f32 %v3916, %v3930
      %v3940 = vmul.f32 %v3924, %v3934
      %v3941 = vadd.f32 %v3899, %v3937
      %v3942 = vadd.f32 %v3900, %v3938
      %v3943 = vadd.f32 %v3901, %v3939
      %v3944 = vadd.f32 %v3902, %v3940
      %s3945 = scalar_lea.vmem %s6, 16
      %v3946 = vld [vmem:[%s3945] sm:$0xff]
      %v3947 = vld [vmem:[%s3945 + $0x8] sm:$0xff]
      %3949 = vset.pattern.permute.xlu0 0
      %3950 = vperm.xlu0 %3949, %v3946
      %v3951 = vpop.permute.xlu0 %3950
      %3954 = vset.pattern.permute.xlu0 0
      %3955 = vperm.xlu0 %3954, %v3947
      %v3956 = vpop.permute.xlu0 %3955
      %v3958 = vadd.f32 %v3941, %v3951
      %v3959 = vadd.f32 %v3942, %v3951
      %v3960 = vadd.f32 %v3943, %v3956
      %v3961 = vadd.f32 %v3944, %v3956
      %vm3962 = vcmp.gt.f32.partialorder %v3958, 0.0
      %vm3963 = vcmp.gt.f32.partialorder %v3959, 0.0
      %vm3964 = vcmp.gt.f32.partialorder %v3960, 0.0
      %vm3965 = vcmp.gt.f32.partialorder %v3961, 0.0
      %v3966 = vmul.f32 %v3958, 0.2
      %v3967 = vmul.f32 %v3959, 0.2
      %v3968 = vmul.f32 %v3960, 0.2
      %v3969 = vmul.f32 %v3961, 0.2
      %v3970 = vsel %vm3962, %v3958, %v3966
      %v3971 = vsel %vm3963, %v3959, %v3967
      %v3972 = vsel %vm3964, %v3960, %v3968
      %v3973 = vsel %vm3965, %v3961, %v3969
      %v3974 = vpack.c.bf16 %v3972, %v3970
      %v3975 = vpack.c.bf16 %v3973, %v3971
      %3976 = vst [vmem:[#allocation2 + $0x10] sm:$0xff] %v3974
      %3977 = vst [vmem:[#allocation2 + $0x18] sm:$0xff] %v3975
      %s3978 = scalar_lea.vmem %s2, 72
      %v3979 = vld [vmem:[%s3978] sm:$0xf]
      %v3980 = vld [vmem:[%s3978 + $0x4] sm:$0xf]
      %v3981 = vld [vmem:[%s3978 + $0x8] sm:$0xf]
      %v3982 = vld [vmem:[%s3978 + $0xc] sm:$0xf]
      %v3983 = vld [vmem:[%s3978 + $0x10] sm:$0xf]
      %v3984 = vld [vmem:[%s3978 + $0x14] sm:$0xf]
      %v3985 = vld [vmem:[%s3978 + $0x18] sm:$0xf]
      %v3986 = vld [vmem:[%s3978 + $0x1c] sm:$0xf]
      %v3987 = vld [vmem:[%s3978 + $0x20] sm:$0xf]
      %v3988 = vld [vmem:[%s3978 + $0x24] sm:$0xf]
      %v3989 = vld [vmem:[%s3978 + $0x28] sm:$0xf]
      %v3990 = vld [vmem:[%s3978 + $0x2c] sm:$0xf]
      %v3991 = vld [vmem:[%s3978 + $0x30] sm:$0xf]
      %v3992 = vld [vmem:[%s3978 + $0x34] sm:$0xf]
      %v3993 = vld [vmem:[%s3978 + $0x38] sm:$0xf]
      %v3994 = vld [vmem:[%s3978 + $0x3c] sm:$0xf]
      %v3995 = vld [vmem:[%s3978 + $0x40] sm:$0xf]
      %v3996 = vld [vmem:[%s3978 + $0x44] sm:$0xf]
      %v3997 = vld [vmem:[#allocation2] sm:$0xff]
      %v3998 = vld [vmem:[#allocation2 + $0x8] sm:$0xff]
      %v3999 = vld [vmem:[#allocation2 + $0x10] sm:$0xff]
      %v4000 = vld [vmem:[#allocation2 + $0x18] sm:$0xff]
      %v4019 = vunpack.c.l.b16 %v3979
      %v4020 = vunpack.c.l.b16 %v3980
      %v4021 = vunpack.c.l.b16 %v3981
      %v4022 = vunpack.c.l.b16 %v3982
      %v4023 = vunpack.c.l.b16 %v3983
      %v4024 = vunpack.c.l.b16 %v3984
      %v4025 = vunpack.c.l.b16 %v3985
      %v4026 = vunpack.c.l.b16 %v3986
      %v4027 = vunpack.c.l.b16 %v3987
      %v4028 = vunpack.c.l.b16 %v3988
      %v4029 = vunpack.c.l.b16 %v3989
      %v4030 = vunpack.c.l.b16 %v3990
      %v4031 = vunpack.c.l.b16 %v3991
      %v4032 = vunpack.c.l.b16 %v3992
      %v4033 = vunpack.c.l.b16 %v3993
      %v4034 = vunpack.c.l.b16 %v3994
      %v4035 = vunpack.c.l.b16 %v3995
      %v4036 = vunpack.c.l.b16 %v3996
      %v4037 = vpack.c.b16 %v4020, %v4019
      %v4038 = vpack.c.b16 %v4022, %v4021
      %v4039 = vpack.c.b16 %v4024, %v4023
      %v4040 = vpack.c.b16 %v4026, %v4025
      %v4041 = vpack.c.b16 %v4028, %v4027
      %v4042 = vpack.c.b16 %v4030, %v4029
      %v4043 = vpack.c.b16 %v4032, %v4031
      %v4044 = vpack.c.b16 %v4034, %v4033
      %v4045 = vpack.c.b16 %v4036, %v4035
      %v4047 = vsel %vm1096, %v4037, 0
      %v4050 = vsel %vm1096, %v4038, 0
      %v4053 = vsel %vm1096, %v4039, 0
      %v4056 = vsel %vm1096, %v4040, 0
      %v4059 = vsel %vm1096, %v4041, 0
      %v4062 = vsel %vm1096, %v4042, 0
      %v4065 = vsel %vm1096, %v4043, 0
      %v4068 = vsel %vm1096, %v4044, 0
      %v4071 = vsel %vm1096, %v4045, 0
      %4073 = vmatprep.subr.bf16.mxu0 %v3998
      %4074 = vmatpush1.bf16.msra.mxu0 %v3997
      %4075 = vmatprep.subr.bf16.mxu0 %v4000
      %4076 = vmatpush1.bf16.msra.mxu0 %v3999
      %4077 = vmatprep.subr.bf16.mxu0 0
      %4078 = vmatpush1.bf16.msra.mxu0 0
      %4079 = vmatprep.subr.bf16.mxu0 0
      %4080 = vmatpush1.bf16.msra.mxu0 0
      %4081 = vmatprep.subr.bf16.mxu0 0
      %4082 = vmatpush1.bf16.msra.mxu0 0
      %4083 = vmatprep.subr.bf16.mxu0 0
      %4084 = vmatpush1.bf16.msra.mxu0 0
      %4085 = vmatprep.subr.bf16.mxu0 0
      %4086 = vmatpush1.bf16.msra.mxu0 0
      %4087 = vmatprep.subr.bf16.mxu0 0
      %4088 = vmatpush1.bf16.msra.mxu0 0
      %4089 = vmatprep.subr.bf16.mxu0 0
      %4090 = vmatpush1.bf16.msra.mxu0 0
      %4091 = vmatprep.subr.bf16.mxu0 0
      %4092 = vmatpush1.bf16.msra.mxu0 0
      %4093 = vmatprep.subr.bf16.mxu0 0
      %4094 = vmatpush1.bf16.msra.mxu0 0
      %4095 = vmatprep.subr.bf16.mxu0 0
      %4096 = vmatpush1.bf16.msra.mxu0 0
      %4097 = vmatprep.subr.bf16.mxu0 0
      %4098 = vmatpush1.bf16.msra.mxu0 0
      %4099 = vmatprep.subr.bf16.mxu0 0
      %4100 = vmatpush1.bf16.msra.mxu0 0
      %4101 = vmatprep.subr.bf16.mxu0 0
      %4102 = vmatpush1.bf16.msra.mxu0 0
      %4103 = vmatprep.subr.bf16.mxu0 0
      %4104 = vmatpush1.bf16.msra.mxu0 0
      %4105 = vmatprep.mubr.bf16.mxu0 0
      %4106 = vmatmul.mubr.bf16.gmra.mrb[0].mxu0 %v4047
      %v4107 = vpop.f32.mrb[0].mxu0
      %v4108 = vadd.f32 0.0, %v4107
      %v4109 = vpop.f32.mrb[0].mxu0
      %v4110 = vadd.f32 0.0, %v4109
      %v4111 = vpop.f32.mrb[0].mxu0
      %v4112 = vadd.f32 0.0, %v4111
      %v4113 = vpop.f32.mrb[0].mxu0
      %v4114 = vadd.f32 0.0, %v4113
      %4115 = vmatprep.mubr.bf16.mxu0 0
      %4116 = vmatmul.mubr.bf16.gmra.mrb[0].mxu0 %v4050
      %v4117 = vpop.f32.mrb[0].mxu0
      %v4118 = vadd.f32 0.0, %v4117
      %v4119 = vpop.f32.mrb[0].mxu0
      %v4120 = vadd.f32 0.0, %v4119
      %v4121 = vpop.f32.mrb[0].mxu0
      %v4122 = vadd.f32 0.0, %v4121
      %v4123 = vpop.f32.mrb[0].mxu0
      %v4124 = vadd.f32 0.0, %v4123
      %4125 = vmatprep.mubr.bf16.mxu0 0
      %4126 = vmatmul.mubr.bf16.gmra.mrb[0].mxu0 %v4053
      %v4127 = vpop.f32.mrb[0].mxu0
      %v4128 = vadd.f32 0.0, %v4127
      %v4129 = vpop.f32.mrb[0].mxu0
      %v4130 = vadd.f32 0.0, %v4129
      %v4131 = vpop.f32.mrb[0].mxu0
      %v4132 = vadd.f32 0.0, %v4131
      %v4133 = vpop.f32.mrb[0].mxu0
      %v4134 = vadd.f32 0.0, %v4133
      %4135 = vmatprep.mubr.bf16.mxu0 0
      %4136 = vmatmul.mubr.bf16.gmra.mrb[0].mxu0 %v4056
      %v4137 = vpop.f32.mrb[0].mxu0
      %v4138 = vadd.f32 0.0, %v4137
      %v4139 = vpop.f32.mrb[0].mxu0
      %v4140 = vadd.f32 0.0, %v4139
      %v4141 = vpop.f32.mrb[0].mxu0
      %v4142 = vadd.f32 0.0, %v4141
      %v4143 = vpop.f32.mrb[0].mxu0
      %v4144 = vadd.f32 0.0, %v4143
      %4145 = vmatprep.mubr.bf16.mxu0 0
      %4146 = vmatmul.mubr.bf16.gmra.mrb[0].mxu0 %v4059
      %v4147 = vpop.f32.mrb[0].mxu0
      %v4148 = vadd.f32 0.0, %v4147
      %v4149 = vpop.f32.mrb[0].mxu0
      %v4150 = vadd.f32 0.0, %v4149
      %v4151 = vpop.f32.mrb[0].mxu0
      %v4152 = vadd.f32 0.0, %v4151
      %v4153 = vpop.f32.mrb[0].mxu0
      %v4154 = vadd.f32 0.0, %v4153
      %4155 = vmatprep.mubr.bf16.mxu0 0
      %4156 = vmatmul.mubr.bf16.gmra.mrb[0].mxu0 %v4062
      %v4157 = vpop.f32.mrb[0].mxu0
      %v4158 = vadd.f32 0.0, %v4157
      %v4159 = vpop.f32.mrb[0].mxu0
      %v4160 = vadd.f32 0.0, %v4159
      %v4161 = vpop.f32.mrb[0].mxu0
      %v4162 = vadd.f32 0.0, %v4161
      %v4163 = vpop.f32.mrb[0].mxu0
      %v4164 = vadd.f32 0.0, %v4163
      %4165 = vmatprep.mubr.bf16.mxu0 0
      %4166 = vmatmul.mubr.bf16.gmra.mrb[0].mxu0 %v4065
      %v4167 = vpop.f32.mrb[0].mxu0
      %v4168 = vadd.f32 0.0, %v4167
      %v4169 = vpop.f32.mrb[0].mxu0
      %v4170 = vadd.f32 0.0, %v4169
      %v4171 = vpop.f32.mrb[0].mxu0
      %v4172 = vadd.f32 0.0, %v4171
      %v4173 = vpop.f32.mrb[0].mxu0
      %v4174 = vadd.f32 0.0, %v4173
      %4175 = vmatprep.mubr.bf16.mxu0 0
      %4176 = vmatmul.mubr.bf16.gmra.mrb[0].mxu0 %v4068
      %v4177 = vpop.f32.mrb[0].mxu0
      %v4178 = vadd.f32 0.0, %v4177
      %v4179 = vpop.f32.mrb[0].mxu0
      %v4180 = vadd.f32 0.0, %v4179
      %v4181 = vpop.f32.mrb[0].mxu0
      %v4182 = vadd.f32 0.0, %v4181
      %v4183 = vpop.f32.mrb[0].mxu0
      %v4184 = vadd.f32 0.0, %v4183
      %4185 = vmatprep.mubr.bf16.mxu0 0
      %4186 = vmatmul.mubr.bf16.gmra.mrb[0].mxu0 %v4071
      %v4187 = vpop.f32.mrb[0].mxu0
      %v4188 = vadd.f32 0.0, %v4187
      %v4189 = vpop.f32.mrb[0].mxu0
      %v4190 = vadd.f32 0.0, %v4189
      %v4191 = vpop.f32.mrb[0].mxu0
      %v4192 = vadd.f32 0.0, %v4191
      %v4193 = vpop.f32.mrb[0].mxu0
      %v4194 = vadd.f32 0.0, %v4193
      %4195 = vdwg.mxu0
      %4198 = vrot.lane.b32.xlu0 %v4110, 17
      %v4199 = vpop.permute.xlu0 %4198
      %4200 = vrot.lane.b32.xlu0 %v4114, 17
      %v4201 = vpop.permute.xlu0 %4200
      %4206 = vrot.lane.b32.xlu0 %v4108, 17
      %v4207 = vpop.permute.xlu0 %4206
      %4208 = vrot.lane.b32.xlu0 %v4112, 17
      %v4209 = vpop.permute.xlu0 %4208
      %v4210 = vsel %vm661, %v4207, %v4199
      %v4211 = vsel %vm661, %v4209, %v4201
      %v4216 = vsel %vm661, %v4199, %v4207
      %v4217 = vsel %vm661, %v4201, %v4209
      %v4218 = vld [vmem:[%s11] sm:$0x3]
      %v4220 = vlaneseq
      %v4221 = vshrl.u32 %v4220, 7
      %v4222 = vsub.s32 0, %v4221
      %v4223 = vrot.slane %v4218, %v4222
      %v4224 = vlaneseq
      %v4225 = vshrl.u32 %v4224, 7
      %v4226 = vsub.s32 1, %v4225
      %v4227 = vrot.slane %v4218, %v4226
      %v4230 = vmul.f32 %v4216, %v4223
      %v4231 = vmul.f32 %v4210, %v4227
      %v4232 = vmul.f32 %v4217, %v4223
      %v4233 = vmul.f32 %v4211, %v4227
      %4236 = vrot.lane.b32.xlu0 %v4120, 16
      %v4237 = vpop.permute.xlu0 %4236
      %4238 = vrot.lane.b32.xlu0 %v4124, 16
      %v4239 = vpop.permute.xlu0 %4238
      %4244 = vrot.lane.b32.xlu0 %v4118, 16
      %v4245 = vpop.permute.xlu0 %4244
      %4246 = vrot.lane.b32.xlu0 %v4122, 16
      %v4247 = vpop.permute.xlu0 %4246
      %v4248 = vsel %vm496, %v4245, %v4237
      %v4249 = vsel %vm496, %v4247, %v4239
      %v4254 = vsel %vm496, %v4237, %v4245
      %v4255 = vsel %vm496, %v4239, %v4247
      %v4256 = vld [vmem:[%s708] sm:$0x3]
      %v4258 = vlaneseq
      %v4259 = vshrl.u32 %v4258, 7
      %v4260 = vsub.s32 0, %v4259
      %v4261 = vrot.slane %v4256, %v4260
      %v4262 = vlaneseq
      %v4263 = vshrl.u32 %v4262, 7
      %v4264 = vsub.s32 1, %v4263
      %v4265 = vrot.slane %v4256, %v4264
      %v4268 = vmul.f32 %v4254, %v4261
      %v4269 = vmul.f32 %v4248, %v4265
      %v4270 = vmul.f32 %v4255, %v4261
      %v4271 = vmul.f32 %v4249, %v4265
      %v4272 = vadd.f32 %v4230, %v4268
      %v4273 = vadd.f32 %v4231, %v4269
      %v4274 = vadd.f32 %v4232, %v4270
      %v4275 = vadd.f32 %v4233, %v4271
      %4278 = vrot.lane.b32.xlu0 %v4130, 15
      %v4279 = vpop.permute.xlu0 %4278
      %4280 = vrot.lane.b32.xlu0 %v4134, 15
      %v4281 = vpop.permute.xlu0 %4280
      %4286 = vrot.lane.b32.xlu0 %v4128, 15
      %v4287 = vpop.permute.xlu0 %4286
      %4288 = vrot.lane.b32.xlu0 %v4132, 15
      %v4289 = vpop.permute.xlu0 %4288
      %v4290 = vsel %vm743, %v4287, %v4279
      %v4291 = vsel %vm743, %v4289, %v4281
      %v4296 = vsel %vm743, %v4279, %v4287
      %v4297 = vsel %vm743, %v4281, %v4289
      %v4298 = vld [vmem:[%s752] sm:$0x3]
      %v4300 = vlaneseq
      %v4301 = vshrl.u32 %v4300, 7
      %v4302 = vsub.s32 0, %v4301
      %v4303 = vrot.slane %v4298, %v4302
      %v4304 = vlaneseq
      %v4305 = vshrl.u32 %v4304, 7
      %v4306 = vsub.s32 1, %v4305
      %v4307 = vrot.slane %v4298, %v4306
      %v4310 = vmul.f32 %v4296, %v4303
      %v4311 = vmul.f32 %v4290, %v4307
      %v4312 = vmul.f32 %v4297, %v4303
      %v4313 = vmul.f32 %v4291, %v4307
      %v4314 = vadd.f32 %v4272, %v4310
      %v4315 = vadd.f32 %v4273, %v4311
      %v4316 = vadd.f32 %v4274, %v4312
      %v4317 = vadd.f32 %v4275, %v4313
      %4320 = vrot.lane.b32.xlu0 %v4140, 1
      %v4321 = vpop.permute.xlu0 %4320
      %4322 = vrot.lane.b32.xlu0 %v4144, 1
      %v4323 = vpop.permute.xlu0 %4322
      %4328 = vrot.lane.b32.xlu0 %v4138, 1
      %v4329 = vpop.permute.xlu0 %4328
      %4330 = vrot.lane.b32.xlu0 %v4142, 1
      %v4331 = vpop.permute.xlu0 %4330
      %v4332 = vsel %vm787, %v4329, %v4321
      %v4333 = vsel %vm787, %v4331, %v4323
      %v4338 = vsel %vm787, %v4321, %v4329
      %v4339 = vsel %vm787, %v4323, %v4331
      %v4340 = vld [vmem:[%s796] sm:$0x3]
      %v4342 = vlaneseq
      %v4343 = vshrl.u32 %v4342, 7
      %v4344 = vsub.s32 0, %v4343
      %v4345 = vrot.slane %v4340, %v4344
      %v4346 = vlaneseq
      %v4347 = vshrl.u32 %v4346, 7
      %v4348 = vsub.s32 1, %v4347
      %v4349 = vrot.slane %v4340, %v4348
      %v4352 = vmul.f32 %v4338, %v4345
      %v4353 = vmul.f32 %v4332, %v4349
      %v4354 = vmul.f32 %v4339, %v4345
      %v4355 = vmul.f32 %v4333, %v4349
      %v4356 = vadd.f32 %v4314, %v4352
      %v4357 = vadd.f32 %v4315, %v4353
      %v4358 = vadd.f32 %v4316, %v4354
      %v4359 = vadd.f32 %v4317, %v4355
      %v4360 = vadd.f32 %v4356, %v4148
      %v4361 = vadd.f32 %v4357, %v4150
      %v4362 = vadd.f32 %v4358, %v4152
      %v4363 = vadd.f32 %v4359, %v4154
      %4368 = vrot.lane.b32.xlu0 %v4158, 127
      %v4369 = vpop.permute.xlu0 %4368
      %4370 = vrot.lane.b32.xlu0 %v4160, 127
      %v4371 = vpop.permute.xlu0 %4370
      %4372 = vrot.lane.b32.xlu0 %v4162, 127
      %v4373 = vpop.permute.xlu0 %4372
      %4374 = vrot.lane.b32.xlu0 %v4164, 127
      %v4375 = vpop.permute.xlu0 %4374
      %v4376 = vsel %vm833, %v4369, %v4371
      %v4377 = vsel %vm833, %v4373, %v4375
      %v4384 = vsel %vm833, %v4371, %v4369
      %v4385 = vsel %vm833, %v4375, %v4373
      %v4386 = vld [vmem:[%s844] sm:$0x3]
      %v4388 = vlaneseq
      %v4389 = vshrl.u32 %v4388, 7
      %v4390 = vsub.s32 0, %v4389
      %v4391 = vrot.slane %v4386, %v4390
      %v4392 = vlaneseq
      %v4393 = vshrl.u32 %v4392, 7
      %v4394 = vsub.s32 1, %v4393
      %v4395 = vrot.slane %v4386, %v4394
      %v4398 = vmul.f32 %v4376, %v4391
      %v4399 = vmul.f32 %v4384, %v4395
      %v4400 = vmul.f32 %v4377, %v4391
      %v4401 = vmul.f32 %v4385, %v4395
      %v4402 = vadd.f32 %v4360, %v4398
      %v4403 = vadd.f32 %v4361, %v4399
      %v4404 = vadd.f32 %v4362, %v4400
      %v4405 = vadd.f32 %v4363, %v4401
      %4410 = vrot.lane.b32.xlu0 %v4168, 113
      %v4411 = vpop.permute.xlu0 %4410
      %4412 = vrot.lane.b32.xlu0 %v4170, 113
      %v4413 = vpop.permute.xlu0 %4412
      %4414 = vrot.lane.b32.xlu0 %v4172, 113
      %v4415 = vpop.permute.xlu0 %4414
      %4416 = vrot.lane.b32.xlu0 %v4174, 113
      %v4417 = vpop.permute.xlu0 %4416
      %v4418 = vsel %vm877, %v4411, %v4413
      %v4419 = vsel %vm877, %v4415, %v4417
      %v4426 = vsel %vm877, %v4413, %v4411
      %v4427 = vsel %vm877, %v4417, %v4415
      %v4428 = vld [vmem:[%s888] sm:$0x3]
      %v4430 = vlaneseq
      %v4431 = vshrl.u32 %v4430, 7
      %v4432 = vsub.s32 0, %v4431
      %v4433 = vrot.slane %v4428, %v4432
      %v4434 = vlaneseq
      %v4435 = vshrl.u32 %v4434, 7
      %v4436 = vsub.s32 1, %v4435
      %v4437 = vrot.slane %v4428, %v4436
      %v4440 = vmul.f32 %v4418, %v4433
      %v4441 = vmul.f32 %v4426, %v4437
      %v4442 = vmul.f32 %v4419, %v4433
      %v4443 = vmul.f32 %v4427, %v4437
      %v4444 = vadd.f32 %v4402, %v4440
      %v4445 = vadd.f32 %v4403, %v4441
      %v4446 = vadd.f32 %v4404, %v4442
      %v4447 = vadd.f32 %v4405, %v4443
      %4452 = vrot.lane.b32.xlu0 %v4178, 112
      %v4453 = vpop.permute.xlu0 %4452
      %4454 = vrot.lane.b32.xlu0 %v4180, 112
      %v4455 = vpop.permute.xlu0 %4454
      %4456 = vrot.lane.b32.xlu0 %v4182, 112
      %v4457 = vpop.permute.xlu0 %4456
      %4458 = vrot.lane.b32.xlu0 %v4184, 112
      %v4459 = vpop.permute.xlu0 %4458
      %v4460 = vsel %vm921, %v4453, %v4455
      %v4461 = vsel %vm921, %v4457, %v4459
      %v4468 = vsel %vm921, %v4455, %v4453
      %v4469 = vsel %vm921, %v4459, %v4457
      %v4470 = vld [vmem:[%s932] sm:$0x3]
      %v4472 = vlaneseq
      %v4473 = vshrl.u32 %v4472, 7
      %v4474 = vsub.s32 0, %v4473
      %v4475 = vrot.slane %v4470, %v4474
      %v4476 = vlaneseq
      %v4477 = vshrl.u32 %v4476, 7
      %v4478 = vsub.s32 1, %v4477
      %v4479 = vrot.slane %v4470, %v4478
      %v4482 = vmul.f32 %v4460, %v4475
      %v4483 = vmul.f32 %v4468, %v4479
      %v4484 = vmul.f32 %v4461, %v4475
      %v4485 = vmul.f32 %v4469, %v4479
      %v4486 = vadd.f32 %v4444, %v4482
      %v4487 = vadd.f32 %v4445, %v4483
      %v4488 = vadd.f32 %v4446, %v4484
      %v4489 = vadd.f32 %v4447, %v4485
      %4494 = vrot.lane.b32.xlu0 %v4188, 111
      %v4495 = vpop.permute.xlu0 %4494
      %4496 = vrot.lane.b32.xlu0 %v4190, 111
      %v4497 = vpop.permute.xlu0 %4496
      %4498 = vrot.lane.b32.xlu0 %v4192, 111
      %v4499 = vpop.permute.xlu0 %4498
      %4500 = vrot.lane.b32.xlu0 %v4194, 111
      %v4501 = vpop.permute.xlu0 %4500
      %v4502 = vsel %vm965, %v4495, %v4497
      %v4503 = vsel %vm965, %v4499, %v4501
      %v4510 = vsel %vm965, %v4497, %v4495
      %v4511 = vsel %vm965, %v4501, %v4499
      %v4512 = vld [vmem:[%s976] sm:$0x3]
      %v4514 = vlaneseq
      %v4515 = vshrl.u32 %v4514, 7
      %v4516 = vsub.s32 0, %v4515
      %v4517 = vrot.slane %v4512, %v4516
      %v4518 = vlaneseq
      %v4519 = vshrl.u32 %v4518, 7
      %v4520 = vsub.s32 1, %v4519
      %v4521 = vrot.slane %v4512, %v4520
      %v4524 = vmul.f32 %v4502, %v4517
      %v4525 = vmul.f32 %v4510, %v4521
      %v4526 = vmul.f32 %v4503, %v4517
      %v4527 = vmul.f32 %v4511, %v4521
      %v4528 = vadd.f32 %v4486, %v4524
      %v4529 = vadd.f32 %v4487, %v4525
      %v4530 = vadd.f32 %v4488, %v4526
      %v4531 = vadd.f32 %v4489, %v4527
      %s4532 = scalar_lea.vmem %s7, 16
      %v4533 = vld [vmem:[%s4532] sm:$0xff]
      %v4534 = vld [vmem:[%s4532 + $0x8] sm:$0xff]
      %4536 = vset.pattern.permute.xlu0 0
      %4537 = vperm.xlu0 %4536, %v4533
      %v4538 = vpop.permute.xlu0 %4537
      %4541 = vset.pattern.permute.xlu0 0
      %4542 = vperm.xlu0 %4541, %v4534
      %v4543 = vpop.permute.xlu0 %4542
      %v4545 = vadd.f32 %v4528, %v4538
      %v4546 = vadd.f32 %v4529, %v4538
      %v4547 = vadd.f32 %v4530, %v4543
      %v4548 = vadd.f32 %v4531, %v4543
      %vm4549 = vcmp.gt.f32.partialorder %v4545, 0.0
      %vm4550 = vcmp.gt.f32.partialorder %v4546, 0.0
      %vm4551 = vcmp.gt.f32.partialorder %v4547, 0.0
      %vm4552 = vcmp.gt.f32.partialorder %v4548, 0.0
      %v4553 = vmul.f32 %v4545, 0.2
      %v4554 = vmul.f32 %v4546, 0.2
      %v4555 = vmul.f32 %v4547, 0.2
      %v4556 = vmul.f32 %v4548, 0.2
      %v4557 = vsel %vm4549, %v4545, %v4553
      %v4558 = vsel %vm4550, %v4546, %v4554
      %v4559 = vsel %vm4551, %v4547, %v4555
      %v4560 = vsel %vm4552, %v4548, %v4556
      %v4561 = vpack.c.bf16 %v4559, %v4557
      %v4562 = vpack.c.bf16 %v4560, %v4558
      %4563 = vst [vmem:[#allocation2 + $0x20] sm:$0xff] %v4561
      %4564 = vst [vmem:[#allocation2 + $0x28] sm:$0xff] %v4562
      %s4565 = scalar_lea.vmem %s3, 72
      %v4566 = vld [vmem:[%s4565] sm:$0xf]
      %v4567 = vld [vmem:[%s4565 + $0x4] sm:$0xf]
      %v4568 = vld [vmem:[%s4565 + $0x8] sm:$0xf]
      %v4569 = vld [vmem:[%s4565 + $0xc] sm:$0xf]
      %v4570 = vld [vmem:[%s4565 + $0x10] sm:$0xf]
      %v4571 = vld [vmem:[%s4565 + $0x14] sm:$0xf]
      %v4572 = vld [vmem:[%s4565 + $0x18] sm:$0xf]
      %v4573 = vld [vmem:[%s4565 + $0x1c] sm:$0xf]
      %v4574 = vld [vmem:[%s4565 + $0x20] sm:$0xf]
      %v4575 = vld [vmem:[%s4565 + $0x24] sm:$0xf]
      %v4576 = vld [vmem:[%s4565 + $0x28] sm:$0xf]
      %v4577 = vld [vmem:[%s4565 + $0x2c] sm:$0xf]
      %v4578 = vld [vmem:[%s4565 + $0x30] sm:$0xf]
      %v4579 = vld [vmem:[%s4565 + $0x34] sm:$0xf]
      %v4580 = vld [vmem:[%s4565 + $0x38] sm:$0xf]
      %v4581 = vld [vmem:[%s4565 + $0x3c] sm:$0xf]
      %v4582 = vld [vmem:[%s4565 + $0x40] sm:$0xf]
      %v4583 = vld [vmem:[%s4565 + $0x44] sm:$0xf]
      %v4584 = vld [vmem:[#allocation2] sm:$0xff]
      %v4585 = vld [vmem:[#allocation2 + $0x8] sm:$0xff]
      %v4586 = vld [vmem:[#allocation2 + $0x10] sm:$0xff]
      %v4587 = vld [vmem:[#allocation2 + $0x18] sm:$0xff]
      %v4588 = vld [vmem:[#allocation2 + $0x20] sm:$0xff]
      %v4589 = vld [vmem:[#allocation2 + $0x28] sm:$0xff]
      %v4608 = vunpack.c.l.b16 %v4566
      %v4609 = vunpack.c.l.b16 %v4567
      %v4610 = vunpack.c.l.b16 %v4568
      %v4611 = vunpack.c.l.b16 %v4569
      %v4612 = vunpack.c.l.b16 %v4570
      %v4613 = vunpack.c.l.b16 %v4571
      %v4614 = vunpack.c.l.b16 %v4572
      %v4615 = vunpack.c.l.b16 %v4573
      %v4616 = vunpack.c.l.b16 %v4574
      %v4617 = vunpack.c.l.b16 %v4575
      %v4618 = vunpack.c.l.b16 %v4576
      %v4619 = vunpack.c.l.b16 %v4577
      %v4620 = vunpack.c.l.b16 %v4578
      %v4621 = vunpack.c.l.b16 %v4579
      %v4622 = vunpack.c.l.b16 %v4580
      %v4623 = vunpack.c.l.b16 %v4581
      %v4624 = vunpack.c.l.b16 %v4582
      %v4625 = vunpack.c.l.b16 %v4583
      %v4626 = vpack.c.b16 %v4609, %v4608
      %v4627 = vpack.c.b16 %v4611, %v4610
      %v4628 = vpack.c.b16 %v4613, %v4612
      %v4629 = vpack.c.b16 %v4615, %v4614
      %v4630 = vpack.c.b16 %v4617, %v4616
      %v4631 = vpack.c.b16 %v4619, %v4618
      %v4632 = vpack.c.b16 %v4621, %v4620
      %v4633 = vpack.c.b16 %v4623, %v4622
      %v4634 = vpack.c.b16 %v4625, %v4624
      %v4636 = vsel %vm1684, %v4626, 0
      %v4639 = vsel %vm1684, %v4627, 0
      %v4642 = vsel %vm1684, %v4628, 0
      %v4645 = vsel %vm1684, %v4629, 0
      %v4648 = vsel %vm1684, %v4630, 0
      %v4651 = vsel %vm1684, %v4631, 0
      %v4654 = vsel %vm1684, %v4632, 0
      %v4657 = vsel %vm1684, %v4633, 0
      %v4660 = vsel %vm1684, %v4634, 0
      %4662 = vmatprep.subr.bf16.mxu0 %v4585
      %4663 = vmatpush1.bf16.msra.mxu0 %v4584
      %4664 = vmatprep.subr.bf16.mxu0 %v4587
      %4665 = vmatpush1.bf16.msra.mxu0 %v4586
      %4666 = vmatprep.subr.bf16.mxu0 %v4589
      %4667 = vmatpush1.bf16.msra.mxu0 %v4588
      %4668 = vmatprep.subr.bf16.mxu0 0
      %4669 = vmatpush1.bf16.msra.mxu0 0
      %4670 = vmatprep.subr.bf16.mxu0 0
      %4671 = vmatpush1.bf16.msra.mxu0 0
      %4672 = vmatprep.subr.bf16.mxu0 0
      %4673 = vmatpush1.bf16.msra.mxu0 0
      %4674 = vmatprep.subr.bf16.mxu0 0
      %4675 = vmatpush1.bf16.msra.mxu0 0
      %4676 = vmatprep.subr.bf16.mxu0 0
      %4677 = vmatpush1.bf16.msra.mxu0 0
      %4678 = vmatprep.subr.bf16.mxu0 0
      %4679 = vmatpush1.bf16.msra.mxu0 0
      %4680 = vmatprep.subr.bf16.mxu0 0
      %4681 = vmatpush1.bf16.msra.mxu0 0
      %4682 = vmatprep.subr.bf16.mxu0 0
      %4683 = vmatpush1.bf16.msra.mxu0 0
      %4684 = vmatprep.subr.bf16.mxu0 0
      %4685 = vmatpush1.bf16.msra.mxu0 0
      %4686 = vmatprep.subr.bf16.mxu0 0
      %4687 = vmatpush1.bf16.msra.mxu0 0
      %4688 = vmatprep.subr.bf16.mxu0 0
      %4689 = vmatpush1.bf16.msra.mxu0 0
      %4690 = vmatprep.subr.bf16.mxu0 0
      %4691 = vmatpush1.bf16.msra.mxu0 0
      %4692 = vmatprep.subr.bf16.mxu0 0
      %4693 = vmatpush1.bf16.msra.mxu0 0
      %4694 = vmatprep.mubr.bf16.mxu0 0
      %4695 = vmatmul.mubr.bf16.gmra.mrb[0].mxu0 %v4636
      %v4696 = vpop.f32.mrb[0].mxu0
      %v4697 = vadd.f32 0.0, %v4696
      %v4698 = vpop.f32.mrb[0].mxu0
      %v4699 = vadd.f32 0.0, %v4698
      %v4700 = vpop.f32.mrb[0].mxu0
      %v4701 = vadd.f32 0.0, %v4700
      %v4702 = vpop.f32.mrb[0].mxu0
      %v4703 = vadd.f32 0.0, %v4702
      %4704 = vmatprep.mubr.bf16.mxu0 0
      %4705 = vmatmul.mubr.bf16.gmra.mrb[0].mxu0 %v4639
      %v4706 = vpop.f32.mrb[0].mxu0
      %v4707 = vadd.f32 0.0, %v4706
      %v4708 = vpop.f32.mrb[0].mxu0
      %v4709 = vadd.f32 0.0, %v4708
      %v4710 = vpop.f32.mrb[0].mxu0
      %v4711 = vadd.f32 0.0, %v4710
      %v4712 = vpop.f32.mrb[0].mxu0
      %v4713 = vadd.f32 0.0, %v4712
      %4714 = vmatprep.mubr.bf16.mxu0 0
      %4715 = vmatmul.mubr.bf16.gmra.mrb[0].mxu0 %v4642
      %v4716 = vpop.f32.mrb[0].mxu0
      %v4717 = vadd.f32 0.0, %v4716
      %v4718 = vpop.f32.mrb[0].mxu0
      %v4719 = vadd.f32 0.0, %v4718
      %v4720 = vpop.f32.mrb[0].mxu0
      %v4721 = vadd.f32 0.0, %v4720
      %v4722 = vpop.f32.mrb[0].mxu0
      %v4723 = vadd.f32 0.0, %v4722
      %4724 = vmatprep.mubr.bf16.mxu0 0
      %4725 = vmatmul.mubr.bf16.gmra.mrb[0].mxu0 %v4645
      %v4726 = vpop.f32.mrb[0].mxu0
      %v4727 = vadd.f32 0.0, %v4726
      %v4728 = vpop.f32.mrb[0].mxu0
      %v4729 = vadd.f32 0.0, %v4728
      %v4730 = vpop.f32.mrb[0].mxu0
      %v4731 = vadd.f32 0.0, %v4730
      %v4732 = vpop.f32.mrb[0].mxu0
      %v4733 = vadd.f32 0.0, %v4732
      %4734 = vmatprep.mubr.bf16.mxu0 0
      %4735 = vmatmul.mubr.bf16.gmra.mrb[0].mxu0 %v4648
      %v4736 = vpop.f32.mrb[0].mxu0
      %v4737 = vadd.f32 0.0, %v4736
      %v4738 = vpop.f32.mrb[0].mxu0
      %v4739 = vadd.f32 0.0, %v4738
      %v4740 = vpop.f32.mrb[0].mxu0
      %v4741 = vadd.f32 0.0, %v4740
      %v4742 = vpop.f32.mrb[0].mxu0
      %v4743 = vadd.f32 0.0, %v4742
      %4744 = vmatprep.mubr.bf16.mxu0 0
      %4745 = vmatmul.mubr.bf16.gmra.mrb[0].mxu0 %v4651
      %v4746 = vpop.f32.mrb[0].mxu0
      %v4747 = vadd.f32 0.0, %v4746
      %v4748 = vpop.f32.mrb[0].mxu0
      %v4749 = vadd.f32 0.0, %v4748
      %v4750 = vpop.f32.mrb[0].mxu0
      %v4751 = vadd.f32 0.0, %v4750
      %v4752 = vpop.f32.mrb[0].mxu0
      %v4753 = vadd.f32 0.0, %v4752
      %4754 = vmatprep.mubr.bf16.mxu0 0
      %4755 = vmatmul.mubr.bf16.gmra.mrb[0].mxu0 %v4654
      %v4756 = vpop.f32.mrb[0].mxu0
      %v4757 = vadd.f32 0.0, %v4756
      %v4758 = vpop.f32.mrb[0].mxu0
      %v4759 = vadd.f32 0.0, %v4758
      %v4760 = vpop.f32.mrb[0].mxu0
      %v4761 = vadd.f32 0.0, %v4760
      %v4762 = vpop.f32.mrb[0].mxu0
      %v4763 = vadd.f32 0.0, %v4762
      %4764 = vmatprep.mubr.bf16.mxu0 0
      %4765 = vmatmul.mubr.bf16.gmra.mrb[0].mxu0 %v4657
      %v4766 = vpop.f32.mrb[0].mxu0
      %v4767 = vadd.f32 0.0, %v4766
      %v4768 = vpop.f32.mrb[0].mxu0
      %v4769 = vadd.f32 0.0, %v4768
      %v4770 = vpop.f32.mrb[0].mxu0
      %v4771 = vadd.f32 0.0, %v4770
      %v4772 = vpop.f32.mrb[0].mxu0
      %v4773 = vadd.f32 0.0, %v4772
      %4774 = vmatprep.mubr.bf16.mxu0 0
      %4775 = vmatmul.mubr.bf16.gmra.mrb[0].mxu0 %v4660
      %v4776 = vpop.f32.mrb[0].mxu0
      %v4777 = vadd.f32 0.0, %v4776
      %v4778 = vpop.f32.mrb[0].mxu0
      %v4779 = vadd.f32 0.0, %v4778
      %v4780 = vpop.f32.mrb[0].mxu0
      %v4781 = vadd.f32 0.0, %v4780
      %v4782 = vpop.f32.mrb[0].mxu0
      %v4783 = vadd.f32 0.0, %v4782
      %4784 = vdwg.mxu0
      %4787 = vrot.lane.b32.xlu0 %v4699, 17
      %v4788 = vpop.permute.xlu0 %4787
      %4789 = vrot.lane.b32.xlu0 %v4703, 17
      %v4790 = vpop.permute.xlu0 %4789
      %4795 = vrot.lane.b32.xlu0 %v4697, 17
      %v4796 = vpop.permute.xlu0 %4795
      %4797 = vrot.lane.b32.xlu0 %v4701, 17
      %v4798 = vpop.permute.xlu0 %4797
      %v4799 = vsel %vm661, %v4796, %v4788
      %v4800 = vsel %vm661, %v4798, %v4790
      %v4805 = vsel %vm661, %v4788, %v4796
      %v4806 = vsel %vm661, %v4790, %v4798
      %v4807 = vld [vmem:[%s11] sm:$0x3]
      %v4809 = vlaneseq
      %v4810 = vshrl.u32 %v4809, 7
      %v4811 = vsub.s32 0, %v4810
      %v4812 = vrot.slane %v4807, %v4811
      %v4813 = vlaneseq
      %v4814 = vshrl.u32 %v4813, 7
      %v4815 = vsub.s32 1, %v4814
      %v4816 = vrot.slane %v4807, %v4815
      %v4819 = vmul.f32 %v4805, %v4812
      %v4820 = vmul.f32 %v4799, %v4816
      %v4821 = vmul.f32 %v4806, %v4812
      %v4822 = vmul.f32 %v4800, %v4816
      %4825 = vrot.lane.b32.xlu0 %v4709, 16
      %v4826 = vpop.permute.xlu0 %4825
      %4827 = vrot.lane.b32.xlu0 %v4713, 16
      %v4828 = vpop.permute.xlu0 %4827
      %4833 = vrot.lane.b32.xlu0 %v4707, 16
      %v4834 = vpop.permute.xlu0 %4833
      %4835 = vrot.lane.b32.xlu0 %v4711, 16
      %v4836 = vpop.permute.xlu0 %4835
      %v4837 = vsel %vm496, %v4834, %v4826
      %v4838 = vsel %vm496, %v4836, %v4828
      %v4843 = vsel %vm496, %v4826, %v4834
      %v4844 = vsel %vm496, %v4828, %v4836
      %v4845 = vld [vmem:[%s708] sm:$0x3]
      %v4847 = vlaneseq
      %v4848 = vshrl.u32 %v4847, 7
      %v4849 = vsub.s32 0, %v4848
      %v4850 = vrot.slane %v4845, %v4849
      %v4851 = vlaneseq
      %v4852 = vshrl.u32 %v4851, 7
      %v4853 = vsub.s32 1, %v4852
      %v4854 = vrot.slane %v4845, %v4853
      %v4857 = vmul.f32 %v4843, %v4850
      %v4858 = vmul.f32 %v4837, %v4854
      %v4859 = vmul.f32 %v4844, %v4850
      %v4860 = vmul.f32 %v4838, %v4854
      %v4861 = vadd.f32 %v4819, %v4857
      %v4862 = vadd.f32 %v4820, %v4858
      %v4863 = vadd.f32 %v4821, %v4859
      %v4864 = vadd.f32 %v4822, %v4860
      %4867 = vrot.lane.b32.xlu0 %v4719, 15
      %v4868 = vpop.permute.xlu0 %4867
      %4869 = vrot.lane.b32.xlu0 %v4723, 15
      %v4870 = vpop.permute.xlu0 %4869
      %4875 = vrot.lane.b32.xlu0 %v4717, 15
      %v4876 = vpop.permute.xlu0 %4875
      %4877 = vrot.lane.b32.xlu0 %v4721, 15
      %v4878 = vpop.permute.xlu0 %4877
      %v4879 = vsel %vm743, %v4876, %v4868
      %v4880 = vsel %vm743, %v4878, %v4870
      %v4885 = vsel %vm743, %v4868, %v4876
      %v4886 = vsel %vm743, %v4870, %v4878
      %v4887 = vld [vmem:[%s752] sm:$0x3]
      %v4889 = vlaneseq
      %v4890 = vshrl.u32 %v4889, 7
      %v4891 = vsub.s32 0, %v4890
      %v4892 = vrot.slane %v4887, %v4891
      %v4893 = vlaneseq
      %v4894 = vshrl.u32 %v4893, 7
      %v4895 = vsub.s32 1, %v4894
      %v4896 = vrot.slane %v4887, %v4895
      %v4899 = vmul.f32 %v4885, %v4892
      %v4900 = vmul.f32 %v4879, %v4896
      %v4901 = vmul.f32 %v4886, %v4892
      %v4902 = vmul.f32 %v4880, %v4896
      %v4903 = vadd.f32 %v4861, %v4899
      %v4904 = vadd.f32 %v4862, %v4900
      %v4905 = vadd.f32 %v4863, %v4901
      %v4906 = vadd.f32 %v4864, %v4902
      %4909 = vrot.lane.b32.xlu0 %v4729, 1
      %v4910 = vpop.permute.xlu0 %4909
      %4911 = vrot.lane.b32.xlu0 %v4733, 1
      %v4912 = vpop.permute.xlu0 %4911
      %4917 = vrot.lane.b32.xlu0 %v4727, 1
      %v4918 = vpop.permute.xlu0 %4917
      %4919 = vrot.lane.b32.xlu0 %v4731, 1
      %v4920 = vpop.permute.xlu0 %4919
      %v4921 = vsel %vm787, %v4918, %v4910
      %v4922 = vsel %vm787, %v4920, %v4912
      %v4927 = vsel %vm787, %v4910, %v4918
      %v4928 = vsel %vm787, %v4912, %v4920
      %v4929 = vld [vmem:[%s796] sm:$0x3]
      %v4931 = vlaneseq
      %v4932 = vshrl.u32 %v4931, 7
      %v4933 = vsub.s32 0, %v4932
      %v4934 = vrot.slane %v4929, %v4933
      %v4935 = vlaneseq
      %v4936 = vshrl.u32 %v4935, 7
      %v4937 = vsub.s32 1, %v4936
      %v4938 = vrot.slane %v4929, %v4937
      %v4941 = vmul.f32 %v4927, %v4934
      %v4942 = vmul.f32 %v4921, %v4938
      %v4943 = vmul.f32 %v4928, %v4934
      %v4944 = vmul.f32 %v4922, %v4938
      %v4945 = vadd.f32 %v4903, %v4941
      %v4946 = vadd.f32 %v4904, %v4942
      %v4947 = vadd.f32 %v4905, %v4943
      %v4948 = vadd.f32 %v4906, %v4944
      %v4949 = vadd.f32 %v4945, %v4737
      %v4950 = vadd.f32 %v4946, %v4739
      %v4951 = vadd.f32 %v4947, %v4741
      %v4952 = vadd.f32 %v4948, %v4743
      %4957 = vrot.lane.b32.xlu0 %v4747, 127
      %v4958 = vpop.permute.xlu0 %4957
      %4959 = vrot.lane.b32.xlu0 %v4749, 127
      %v4960 = vpop.permute.xlu0 %4959
      %4961 = vrot.lane.b32.xlu0 %v4751, 127
      %v4962 = vpop.permute.xlu0 %4961
      %4963 = vrot.lane.b32.xlu0 %v4753, 127
      %v4964 = vpop.permute.xlu0 %4963
      %v4965 = vsel %vm833, %v4958, %v4960
      %v4966 = vsel %vm833, %v4962, %v4964
      %v4973 = vsel %vm833, %v4960, %v4958
      %v4974 = vsel %vm833, %v4964, %v4962
      %v4975 = vld [vmem:[%s844] sm:$0x3]
      %v4977 = vlaneseq
      %v4978 = vshrl.u32 %v4977, 7
      %v4979 = vsub.s32 0, %v4978
      %v4980 = vrot.slane %v4975, %v4979
      %v4981 = vlaneseq
      %v4982 = vshrl.u32 %v4981, 7
      %v4983 = vsub.s32 1, %v4982
      %v4984 = vrot.slane %v4975, %v4983
      %v4987 = vmul.f32 %v4965, %v4980
      %v4988 = vmul.f32 %v4973, %v4984
      %v4989 = vmul.f32 %v4966, %v4980
      %v4990 = vmul.f32 %v4974, %v4984
      %v4991 = vadd.f32 %v4949, %v4987
      %v4992 = vadd.f32 %v4950, %v4988
      %v4993 = vadd.f32 %v4951, %v4989
      %v4994 = vadd.f32 %v4952, %v4990
      %4999 = vrot.lane.b32.xlu0 %v4757, 113
      %v5000 = vpop.permute.xlu0 %4999
      %5001 = vrot.lane.b32.xlu0 %v4759, 113
      %v5002 = vpop.permute.xlu0 %5001
      %5003 = vrot.lane.b32.xlu0 %v4761, 113
      %v5004 = vpop.permute.xlu0 %5003
      %5005 = vrot.lane.b32.xlu0 %v4763, 113
      %v5006 = vpop.permute.xlu0 %5005
      %v5007 = vsel %vm877, %v5000, %v5002
      %v5008 = vsel %vm877, %v5004, %v5006
      %v5015 = vsel %vm877, %v5002, %v5000
      %v5016 = vsel %vm877, %v5006, %v5004
      %v5017 = vld [vmem:[%s888] sm:$0x3]
      %v5019 = vlaneseq
      %v5020 = vshrl.u32 %v5019, 7
      %v5021 = vsub.s32 0, %v5020
      %v5022 = vrot.slane %v5017, %v5021
      %v5023 = vlaneseq
      %v5024 = vshrl.u32 %v5023, 7
      %v5025 = vsub.s32 1, %v5024
      %v5026 = vrot.slane %v5017, %v5025
      %v5029 = vmul.f32 %v5007, %v5022
      %v5030 = vmul.f32 %v5015, %v5026
      %v5031 = vmul.f32 %v5008, %v5022
      %v5032 = vmul.f32 %v5016, %v5026
      %v5033 = vadd.f32 %v4991, %v5029
      %v5034 = vadd.f32 %v4992, %v5030
      %v5035 = vadd.f32 %v4993, %v5031
      %v5036 = vadd.f32 %v4994, %v5032
      %5041 = vrot.lane.b32.xlu0 %v4767, 112
      %v5042 = vpop.permute.xlu0 %5041
      %5043 = vrot.lane.b32.xlu0 %v4769, 112
      %v5044 = vpop.permute.xlu0 %5043
      %5045 = vrot.lane.b32.xlu0 %v4771, 112
      %v5046 = vpop.permute.xlu0 %5045
      %5047 = vrot.lane.b32.xlu0 %v4773, 112
      %v5048 = vpop.permute.xlu0 %5047
      %v5049 = vsel %vm921, %v5042, %v5044
      %v5050 = vsel %vm921, %v5046, %v5048
      %v5057 = vsel %vm921, %v5044, %v5042
      %v5058 = vsel %vm921, %v5048, %v5046
      %v5059 = vld [vmem:[%s932] sm:$0x3]
      %v5061 = vlaneseq
      %v5062 = vshrl.u32 %v5061, 7
      %v5063 = vsub.s32 0, %v5062
      %v5064 = vrot.slane %v5059, %v5063
      %v5065 = vlaneseq
      %v5066 = vshrl.u32 %v5065, 7
      %v5067 = vsub.s32 1, %v5066
      %v5068 = vrot.slane %v5059, %v5067
      %v5071 = vmul.f32 %v5049, %v5064
      %v5072 = vmul.f32 %v5057, %v5068
      %v5073 = vmul.f32 %v5050, %v5064
      %v5074 = vmul.f32 %v5058, %v5068
      %v5075 = vadd.f32 %v5033, %v5071
      %v5076 = vadd.f32 %v5034, %v5072
      %v5077 = vadd.f32 %v5035, %v5073
      %v5078 = vadd.f32 %v5036, %v5074
      %5083 = vrot.lane.b32.xlu0 %v4777, 111
      %v5084 = vpop.permute.xlu0 %5083
      %5085 = vrot.lane.b32.xlu0 %v4779, 111
      %v5086 = vpop.permute.xlu0 %5085
      %5087 = vrot.lane.b32.xlu0 %v4781, 111
      %v5088 = vpop.permute.xlu0 %5087
      %5089 = vrot.lane.b32.xlu0 %v4783, 111
      %v5090 = vpop.permute.xlu0 %5089
      %v5091 = vsel %vm965, %v5084, %v5086
      %v5092 = vsel %vm965, %v5088, %v5090
      %v5099 = vsel %vm965, %v5086, %v5084
      %v5100 = vsel %vm965, %v5090, %v5088
      %v5101 = vld [vmem:[%s976] sm:$0x3]
      %v5103 = vlaneseq
      %v5104 = vshrl.u32 %v5103, 7
      %v5105 = vsub.s32 0, %v5104
      %v5106 = vrot.slane %v5101, %v5105
      %v5107 = vlaneseq
      %v5108 = vshrl.u32 %v5107, 7
      %v5109 = vsub.s32 1, %v5108
      %v5110 = vrot.slane %v5101, %v5109
      %v5113 = vmul.f32 %v5091, %v5106
      %v5114 = vmul.f32 %v5099, %v5110
      %v5115 = vmul.f32 %v5092, %v5106
      %v5116 = vmul.f32 %v5100, %v5110
      %v5117 = vadd.f32 %v5075, %v5113
      %v5118 = vadd.f32 %v5076, %v5114
      %v5119 = vadd.f32 %v5077, %v5115
      %v5120 = vadd.f32 %v5078, %v5116
      %s5121 = scalar_lea.vmem %s8, 16
      %v5122 = vld [vmem:[%s5121] sm:$0xff]
      %v5123 = vld [vmem:[%s5121 + $0x8] sm:$0xff]
      %5125 = vset.pattern.permute.xlu0 0
      %5126 = vperm.xlu0 %5125, %v5122
      %v5127 = vpop.permute.xlu0 %5126
      %5130 = vset.pattern.permute.xlu0 0
      %5131 = vperm.xlu0 %5130, %v5123
      %v5132 = vpop.permute.xlu0 %5131
      %v5134 = vadd.f32 %v5117, %v5127
      %v5135 = vadd.f32 %v5118, %v5127
      %v5136 = vadd.f32 %v5119, %v5132
      %v5137 = vadd.f32 %v5120, %v5132
      %vm5138 = vcmp.gt.f32.partialorder %v5134, 0.0
      %vm5139 = vcmp.gt.f32.partialorder %v5135, 0.0
      %vm5140 = vcmp.gt.f32.partialorder %v5136, 0.0
      %vm5141 = vcmp.gt.f32.partialorder %v5137, 0.0
      %v5142 = vmul.f32 %v5134, 0.2
      %v5143 = vmul.f32 %v5135, 0.2
      %v5144 = vmul.f32 %v5136, 0.2
      %v5145 = vmul.f32 %v5137, 0.2
      %v5146 = vsel %vm5138, %v5134, %v5142
      %v5147 = vsel %vm5139, %v5135, %v5143
      %v5148 = vsel %vm5140, %v5136, %v5144
      %v5149 = vsel %vm5141, %v5137, %v5145
      %v5150 = vpack.c.bf16 %v5148, %v5146
      %v5151 = vpack.c.bf16 %v5149, %v5147
      %5152 = vst [vmem:[#allocation2 + $0x30] sm:$0xff] %v5150
      %5153 = vst [vmem:[#allocation2 + $0x38] sm:$0xff] %v5151
      %s5154 = scalar_lea.vmem %s4, 72
      %v5155 = vld [vmem:[%s5154] sm:$0xf]
      %v5156 = vld [vmem:[%s5154 + $0x4] sm:$0xf]
      %v5157 = vld [vmem:[%s5154 + $0x8] sm:$0xf]
      %v5158 = vld [vmem:[%s5154 + $0xc] sm:$0xf]
      %v5159 = vld [vmem:[%s5154 + $0x10] sm:$0xf]
      %v5160 = vld [vmem:[%s5154 + $0x14] sm:$0xf]
      %v5161 = vld [vmem:[%s5154 + $0x18] sm:$0xf]
      %v5162 = vld [vmem:[%s5154 + $0x1c] sm:$0xf]
      %v5163 = vld [vmem:[%s5154 + $0x20] sm:$0xf]
      %v5164 = vld [vmem:[%s5154 + $0x24] sm:$0xf]
      %v5165 = vld [vmem:[%s5154 + $0x28] sm:$0xf]
      %v5166 = vld [vmem:[%s5154 + $0x2c] sm:$0xf]
      %v5167 = vld [vmem:[%s5154 + $0x30] sm:$0xf]
      %v5168 = vld [vmem:[%s5154 + $0x34] sm:$0xf]
      %v5169 = vld [vmem:[%s5154 + $0x38] sm:$0xf]
      %v5170 = vld [vmem:[%s5154 + $0x3c] sm:$0xf]
      %v5171 = vld [vmem:[%s5154 + $0x40] sm:$0xf]
      %v5172 = vld [vmem:[%s5154 + $0x44] sm:$0xf]
      %v5173 = vld [vmem:[#allocation2] sm:$0xff]
      %v5174 = vld [vmem:[#allocation2 + $0x8] sm:$0xff]
      %v5175 = vld [vmem:[#allocation2 + $0x10] sm:$0xff]
      %v5176 = vld [vmem:[#allocation2 + $0x18] sm:$0xff]
      %v5177 = vld [vmem:[#allocation2 + $0x20] sm:$0xff]
      %v5178 = vld [vmem:[#allocation2 + $0x28] sm:$0xff]
      %v5179 = vld [vmem:[#allocation2 + $0x30] sm:$0xff]
      %v5180 = vld [vmem:[#allocation2 + $0x38] sm:$0xff]
      %v5199 = vunpack.c.l.b16 %v5155
      %v5200 = vunpack.c.l.b16 %v5156
      %v5201 = vunpack.c.l.b16 %v5157
      %v5202 = vunpack.c.l.b16 %v5158
      %v5203 = vunpack.c.l.b16 %v5159
      %v5204 = vunpack.c.l.b16 %v5160
      %v5205 = vunpack.c.l.b16 %v5161
      %v5206 = vunpack.c.l.b16 %v5162
      %v5207 = vunpack.c.l.b16 %v5163
      %v5208 = vunpack.c.l.b16 %v5164
      %v5209 = vunpack.c.l.b16 %v5165
      %v5210 = vunpack.c.l.b16 %v5166
      %v5211 = vunpack.c.l.b16 %v5167
      %v5212 = vunpack.c.l.b16 %v5168
      %v5213 = vunpack.c.l.b16 %v5169
      %v5214 = vunpack.c.l.b16 %v5170
      %v5215 = vunpack.c.l.b16 %v5171
      %v5216 = vunpack.c.l.b16 %v5172
      %v5217 = vpack.c.b16 %v5200, %v5199
      %v5218 = vpack.c.b16 %v5202, %v5201
      %v5219 = vpack.c.b16 %v5204, %v5203
      %v5220 = vpack.c.b16 %v5206, %v5205
      %v5221 = vpack.c.b16 %v5208, %v5207
      %v5222 = vpack.c.b16 %v5210, %v5209
      %v5223 = vpack.c.b16 %v5212, %v5211
      %v5224 = vpack.c.b16 %v5214, %v5213
      %v5225 = vpack.c.b16 %v5216, %v5215
      %v5227 = vsel %vm2274, %v5217, 0
      %v5230 = vsel %vm2274, %v5218, 0
      %v5233 = vsel %vm2274, %v5219, 0
      %v5236 = vsel %vm2274, %v5220, 0
      %v5239 = vsel %vm2274, %v5221, 0
      %v5242 = vsel %vm2274, %v5222, 0
      %v5245 = vsel %vm2274, %v5223, 0
      %v5248 = vsel %vm2274, %v5224, 0
      %v5251 = vsel %vm2274, %v5225, 0
      %5253 = vmatprep.subr.bf16.mxu0 %v5174
      %5254 = vmatpush1.bf16.msra.mxu0 %v5173
      %5255 = vmatprep.subr.bf16.mxu0 %v5176
      %5256 = vmatpush1.bf16.msra.mxu0 %v5175
      %5257 = vmatprep.subr.bf16.mxu0 %v5178
      %5258 = vmatpush1.bf16.msra.mxu0 %v5177
      %5259 = vmatprep.subr.bf16.mxu0 %v5180
      %5260 = vmatpush1.bf16.msra.mxu0 %v5179
      %5261 = vmatprep.subr.bf16.mxu0 0
      %5262 = vmatpush1.bf16.msra.mxu0 0
      %5263 = vmatprep.subr.bf16.mxu0 0
      %5264 = vmatpush1.bf16.msra.mxu0 0
      %5265 = vmatprep.subr.bf16.mxu0 0
      %5266 = vmatpush1.bf16.msra.mxu0 0
      %5267 = vmatprep.subr.bf16.mxu0 0
      %5268 = vmatpush1.bf16.msra.mxu0 0
      %5269 = vmatprep.subr.bf16.mxu0 0
      %5270 = vmatpush1.bf16.msra.mxu0 0
      %5271 = vmatprep.subr.bf16.mxu0 0
      %5272 = vmatpush1.bf16.msra.mxu0 0
      %5273 = vmatprep.subr.bf16.mxu0 0
      %5274 = vmatpush1.bf16.msra.mxu0 0
      %5275 = vmatprep.subr.bf16.mxu0 0
      %5276 = vmatpush1.bf16.msra.mxu0 0
      %5277 = vmatprep.subr.bf16.mxu0 0
      %5278 = vmatpush1.bf16.msra.mxu0 0
      %5279 = vmatprep.subr.bf16.mxu0 0
      %5280 = vmatpush1.bf16.msra.mxu0 0
      %5281 = vmatprep.subr.bf16.mxu0 0
      %5282 = vmatpush1.bf16.msra.mxu0 0
      %5283 = vmatprep.subr.bf16.mxu0 0
      %5284 = vmatpush1.bf16.msra.mxu0 0
      %5285 = vmatprep.mubr.bf16.mxu0 0
      %5286 = vmatmul.mubr.bf16.gmra.mrb[0].mxu0 %v5227
      %v5287 = vpop.f32.mrb[0].mxu0
      %v5288 = vadd.f32 0.0, %v5287
      %v5289 = vpop.f32.mrb[0].mxu0
      %v5290 = vadd.f32 0.0, %v5289
      %v5291 = vpop.f32.mrb[0].mxu0
      %v5292 = vadd.f32 0.0, %v5291
      %v5293 = vpop.f32.mrb[0].mxu0
      %v5294 = vadd.f32 0.0, %v5293
      %5295 = vmatprep.mubr.bf16.mxu0 0
      %5296 = vmatmul.mubr.bf16.gmra.mrb[0].mxu0 %v5230
      %v5297 = vpop.f32.mrb[0].mxu0
      %v5298 = vadd.f32 0.0, %v5297
      %v5299 = vpop.f32.mrb[0].mxu0
      %v5300 = vadd.f32 0.0, %v5299
      %v5301 = vpop.f32.mrb[0].mxu0
      %v5302 = vadd.f32 0.0, %v5301
      %v5303 = vpop.f32.mrb[0].mxu0
      %v5304 = vadd.f32 0.0, %v5303
      %5305 = vmatprep.mubr.bf16.mxu0 0
      %5306 = vmatmul.mubr.bf16.gmra.mrb[0].mxu0 %v5233
      %v5307 = vpop.f32.mrb[0].mxu0
      %v5308 = vadd.f32 0.0, %v5307
      %v5309 = vpop.f32.mrb[0].mxu0
      %v5310 = vadd.f32 0.0, %v5309
      %v5311 = vpop.f32.mrb[0].mxu0
      %v5312 = vadd.f32 0.0, %v5311
      %v5313 = vpop.f32.mrb[0].mxu0
      %v5314 = vadd.f32 0.0, %v5313
      %5315 = vmatprep.mubr.bf16.mxu0 0
      %5316 = vmatmul.mubr.bf16.gmra.mrb[0].mxu0 %v5236
      %v5317 = vpop.f32.mrb[0].mxu0
      %v5318 = vadd.f32 0.0, %v5317
      %v5319 = vpop.f32.mrb[0].mxu0
      %v5320 = vadd.f32 0.0, %v5319
      %v5321 = vpop.f32.mrb[0].mxu0
      %v5322 = vadd.f32 0.0, %v5321
      %v5323 = vpop.f32.mrb[0].mxu0
      %v5324 = vadd.f32 0.0, %v5323
      %5325 = vmatprep.mubr.bf16.mxu0 0
      %5326 = vmatmul.mubr.bf16.gmra.mrb[0].mxu0 %v5239
      %v5327 = vpop.f32.mrb[0].mxu0
      %v5328 = vadd.f32 0.0, %v5327
      %v5329 = vpop.f32.mrb[0].mxu0
      %v5330 = vadd.f32 0.0, %v5329
      %v5331 = vpop.f32.mrb[0].mxu0
      %v5332 = vadd.f32 0.0, %v5331
      %v5333 = vpop.f32.mrb[0].mxu0
      %v5334 = vadd.f32 0.0, %v5333
      %5335 = vmatprep.mubr.bf16.mxu0 0
      %5336 = vmatmul.mubr.bf16.gmra.mrb[0].mxu0 %v5242
      %v5337 = vpop.f32.mrb[0].mxu0
      %v5338 = vadd.f32 0.0, %v5337
      %v5339 = vpop.f32.mrb[0].mxu0
      %v5340 = vadd.f32 0.0, %v5339
      %v5341 = vpop.f32.mrb[0].mxu0
      %v5342 = vadd.f32 0.0, %v5341
      %v5343 = vpop.f32.mrb[0].mxu0
      %v5344 = vadd.f32 0.0, %v5343
      %5345 = vmatprep.mubr.bf16.mxu0 0
      %5346 = vmatmul.mubr.bf16.gmra.mrb[0].mxu0 %v5245
      %v5347 = vpop.f32.mrb[0].mxu0
      %v5348 = vadd.f32 0.0, %v5347
      %v5349 = vpop.f32.mrb[0].mxu0
      %v5350 = vadd.f32 0.0, %v5349
      %v5351 = vpop.f32.mrb[0].mxu0
      %v5352 = vadd.f32 0.0, %v5351
      %v5353 = vpop.f32.mrb[0].mxu0
      %v5354 = vadd.f32 0.0, %v5353
      %5355 = vmatprep.mubr.bf16.mxu0 0
      %5356 = vmatmul.mubr.bf16.gmra.mrb[0].mxu0 %v5248
      %v5357 = vpop.f32.mrb[0].mxu0
      %v5358 = vadd.f32 0.0, %v5357
      %v5359 = vpop.f32.mrb[0].mxu0
      %v5360 = vadd.f32 0.0, %v5359
      %v5361 = vpop.f32.mrb[0].mxu0
      %v5362 = vadd.f32 0.0, %v5361
      %v5363 = vpop.f32.mrb[0].mxu0
      %v5364 = vadd.f32 0.0, %v5363
      %5365 = vmatprep.mubr.bf16.mxu0 0
      %5366 = vmatmul.mubr.bf16.gmra.mrb[0].mxu0 %v5251
      %v5367 = vpop.f32.mrb[0].mxu0
      %v5368 = vadd.f32 0.0, %v5367
      %v5369 = vpop.f32.mrb[0].mxu0
      %v5370 = vadd.f32 0.0, %v5369
      %v5371 = vpop.f32.mrb[0].mxu0
      %v5372 = vadd.f32 0.0, %v5371
      %v5373 = vpop.f32.mrb[0].mxu0
      %v5374 = vadd.f32 0.0, %v5373
      %5375 = vdwg.mxu0
      %5378 = vrot.lane.b32.xlu0 %v5290, 17
      %v5379 = vpop.permute.xlu0 %5378
      %5380 = vrot.lane.b32.xlu0 %v5294, 17
      %v5381 = vpop.permute.xlu0 %5380
      %5386 = vrot.lane.b32.xlu0 %v5288, 17
      %v5387 = vpop.permute.xlu0 %5386
      %5388 = vrot.lane.b32.xlu0 %v5292, 17
      %v5389 = vpop.permute.xlu0 %5388
      %v5390 = vsel %vm661, %v5387, %v5379
      %v5391 = vsel %vm661, %v5389, %v5381
      %v5396 = vsel %vm661, %v5379, %v5387
      %v5397 = vsel %vm661, %v5381, %v5389
      %v5398 = vld [vmem:[%s11] sm:$0x3]
      %v5400 = vlaneseq
      %v5401 = vshrl.u32 %v5400, 7
      %v5402 = vsub.s32 0, %v5401
      %v5403 = vrot.slane %v5398, %v5402
      %v5404 = vlaneseq
      %v5405 = vshrl.u32 %v5404, 7
      %v5406 = vsub.s32 1, %v5405
      %v5407 = vrot.slane %v5398, %v5406
      %v5410 = vmul.f32 %v5396, %v5403
      %v5411 = vmul.f32 %v5390, %v5407
      %v5412 = vmul.f32 %v5397, %v5403
      %v5413 = vmul.f32 %v5391, %v5407
      %5416 = vrot.lane.b32.xlu0 %v5300, 16
      %v5417 = vpop.permute.xlu0 %5416
      %5418 = vrot.lane.b32.xlu0 %v5304, 16
      %v5419 = vpop.permute.xlu0 %5418
      %5424 = vrot.lane.b32.xlu0 %v5298, 16
      %v5425 = vpop.permute.xlu0 %5424
      %5426 = vrot.lane.b32.xlu0 %v5302, 16
      %v5427 = vpop.permute.xlu0 %5426
      %v5428 = vsel %vm496, %v5425, %v5417
      %v5429 = vsel %vm496, %v5427, %v5419
      %v5434 = vsel %vm496, %v5417, %v5425
      %v5435 = vsel %vm496, %v5419, %v5427
      %v5436 = vld [vmem:[%s708] sm:$0x3]
      %v5438 = vlaneseq
      %v5439 = vshrl.u32 %v5438, 7
      %v5440 = vsub.s32 0, %v5439
      %v5441 = vrot.slane %v5436, %v5440
      %v5442 = vlaneseq
      %v5443 = vshrl.u32 %v5442, 7
      %v5444 = vsub.s32 1, %v5443
      %v5445 = vrot.slane %v5436, %v5444
      %v5448 = vmul.f32 %v5434, %v5441
      %v5449 = vmul.f32 %v5428, %v5445
      %v5450 = vmul.f32 %v5435, %v5441
      %v5451 = vmul.f32 %v5429, %v5445
      %v5452 = vadd.f32 %v5410, %v5448
      %v5453 = vadd.f32 %v5411, %v5449
      %v5454 = vadd.f32 %v5412, %v5450
      %v5455 = vadd.f32 %v5413, %v5451
      %5458 = vrot.lane.b32.xlu0 %v5310, 15
      %v5459 = vpop.permute.xlu0 %5458
      %5460 = vrot.lane.b32.xlu0 %v5314, 15
      %v5461 = vpop.permute.xlu0 %5460
      %5466 = vrot.lane.b32.xlu0 %v5308, 15
      %v5467 = vpop.permute.xlu0 %5466
      %5468 = vrot.lane.b32.xlu0 %v5312, 15
      %v5469 = vpop.permute.xlu0 %5468
      %v5470 = vsel %vm743, %v5467, %v5459
      %v5471 = vsel %vm743, %v5469, %v5461
      %v5476 = vsel %vm743, %v5459, %v5467
      %v5477 = vsel %vm743, %v5461, %v5469
      %v5478 = vld [vmem:[%s752] sm:$0x3]
      %v5480 = vlaneseq
      %v5481 = vshrl.u32 %v5480, 7
      %v5482 = vsub.s32 0, %v5481
      %v5483 = vrot.slane %v5478, %v5482
      %v5484 = vlaneseq
      %v5485 = vshrl.u32 %v5484, 7
      %v5486 = vsub.s32 1, %v5485
      %v5487 = vrot.slane %v5478, %v5486
      %v5490 = vmul.f32 %v5476, %v5483
      %v5491 = vmul.f32 %v5470, %v5487
      %v5492 = vmul.f32 %v5477, %v5483
      %v5493 = vmul.f32 %v5471, %v5487
      %v5494 = vadd.f32 %v5452, %v5490
      %v5495 = vadd.f32 %v5453, %v5491
      %v5496 = vadd.f32 %v5454, %v5492
      %v5497 = vadd.f32 %v5455, %v5493
      %5500 = vrot.lane.b32.xlu0 %v5320, 1
      %v5501 = vpop.permute.xlu0 %5500
      %5502 = vrot.lane.b32.xlu0 %v5324, 1
      %v5503 = vpop.permute.xlu0 %5502
      %5508 = vrot.lane.b32.xlu0 %v5318, 1
      %v5509 = vpop.permute.xlu0 %5508
      %5510 = vrot.lane.b32.xlu0 %v5322, 1
      %v5511 = vpop.permute.xlu0 %5510
      %v5512 = vsel %vm787, %v5509, %v5501
      %v5513 = vsel %vm787, %v5511, %v5503
      %v5518 = vsel %vm787, %v5501, %v5509
      %v5519 = vsel %vm787, %v5503, %v5511
      %v5520 = vld [vmem:[%s796] sm:$0x3]
      %v5522 = vlaneseq
      %v5523 = vshrl.u32 %v5522, 7
      %v5524 = vsub.s32 0, %v5523
      %v5525 = vrot.slane %v5520, %v5524
      %v5526 = vlaneseq
      %v5527 = vshrl.u32 %v5526, 7
      %v5528 = vsub.s32 1, %v5527
      %v5529 = vrot.slane %v5520, %v5528
      %v5532 = vmul.f32 %v5518, %v5525
      %v5533 = vmul.f32 %v5512, %v5529
      %v5534 = vmul.f32 %v5519, %v5525
      %v5535 = vmul.f32 %v5513, %v5529
      %v5536 = vadd.f32 %v5494, %v5532
      %v5537 = vadd.f32 %v5495, %v5533
      %v5538 = vadd.f32 %v5496, %v5534
      %v5539 = vadd.f32 %v5497, %v5535
      %v5540 = vadd.f32 %v5536, %v5328
      %v5541 = vadd.f32 %v5537, %v5330
      %v5542 = vadd.f32 %v5538, %v5332
      %v5543 = vadd.f32 %v5539, %v5334
      %5548 = vrot.lane.b32.xlu0 %v5338, 127
      %v5549 = vpop.permute.xlu0 %5548
      %5550 = vrot.lane.b32.xlu0 %v5340, 127
      %v5551 = vpop.permute.xlu0 %5550
      %5552 = vrot.lane.b32.xlu0 %v5342, 127
      %v5553 = vpop.permute.xlu0 %5552
      %5554 = vrot.lane.b32.xlu0 %v5344, 127
      %v5555 = vpop.permute.xlu0 %5554
      %v5556 = vsel %vm833, %v5549, %v5551
      %v5557 = vsel %vm833, %v5553, %v5555
      %v5564 = vsel %vm833, %v5551, %v5549
      %v5565 = vsel %vm833, %v5555, %v5553
      %v5566 = vld [vmem:[%s844] sm:$0x3]
      %v5568 = vlaneseq
      %v5569 = vshrl.u32 %v5568, 7
      %v5570 = vsub.s32 0, %v5569
      %v5571 = vrot.slane %v5566, %v5570
      %v5572 = vlaneseq
      %v5573 = vshrl.u32 %v5572, 7
      %v5574 = vsub.s32 1, %v5573
      %v5575 = vrot.slane %v5566, %v5574
      %v5578 = vmul.f32 %v5556, %v5571
      %v5579 = vmul.f32 %v5564, %v5575
      %v5580 = vmul.f32 %v5557, %v5571
      %v5581 = vmul.f32 %v5565, %v5575
      %v5582 = vadd.f32 %v5540, %v5578
      %v5583 = vadd.f32 %v5541, %v5579
      %v5584 = vadd.f32 %v5542, %v5580
      %v5585 = vadd.f32 %v5543, %v5581
      %5590 = vrot.lane.b32.xlu0 %v5348, 113
      %v5591 = vpop.permute.xlu0 %5590
      %5592 = vrot.lane.b32.xlu0 %v5350, 113
      %v5593 = vpop.permute.xlu0 %5592
      %5594 = vrot.lane.b32.xlu0 %v5352, 113
      %v5595 = vpop.permute.xlu0 %5594
      %5596 = vrot.lane.b32.xlu0 %v5354, 113
      %v5597 = vpop.permute.xlu0 %5596
      %v5598 = vsel %vm877, %v5591, %v5593
      %v5599 = vsel %vm877, %v5595, %v5597
      %v5606 = vsel %vm877, %v5593, %v5591
      %v5607 = vsel %vm877, %v5597, %v5595
      %v5608 = vld [vmem:[%s888] sm:$0x3]
      %v5610 = vlaneseq
      %v5611 = vshrl.u32 %v5610, 7
      %v5612 = vsub.s32 0, %v5611
      %v5613 = vrot.slane %v5608, %v5612
      %v5614 = vlaneseq
      %v5615 = vshrl.u32 %v5614, 7
      %v5616 = vsub.s32 1, %v5615
      %v5617 = vrot.slane %v5608, %v5616
      %v5620 = vmul.f32 %v5598, %v5613
      %v5621 = vmul.f32 %v5606, %v5617
      %v5622 = vmul.f32 %v5599, %v5613
      %v5623 = vmul.f32 %v5607, %v5617
      %v5624 = vadd.f32 %v5582, %v5620
      %v5625 = vadd.f32 %v5583, %v5621
      %v5626 = vadd.f32 %v5584, %v5622
      %v5627 = vadd.f32 %v5585, %v5623
      %5632 = vrot.lane.b32.xlu0 %v5358, 112
      %v5633 = vpop.permute.xlu0 %5632
      %5634 = vrot.lane.b32.xlu0 %v5360, 112
      %v5635 = vpop.permute.xlu0 %5634
      %5636 = vrot.lane.b32.xlu0 %v5362, 112
      %v5637 = vpop.permute.xlu0 %5636
      %5638 = vrot.lane.b32.xlu0 %v5364, 112
      %v5639 = vpop.permute.xlu0 %5638
      %v5640 = vsel %vm921, %v5633, %v5635
      %v5641 = vsel %vm921, %v5637, %v5639
      %v5648 = vsel %vm921, %v5635, %v5633
      %v5649 = vsel %vm921, %v5639, %v5637
      %v5650 = vld [vmem:[%s932] sm:$0x3]
      %v5652 = vlaneseq
      %v5653 = vshrl.u32 %v5652, 7
      %v5654 = vsub.s32 0, %v5653
      %v5655 = vrot.slane %v5650, %v5654
      %v5656 = vlaneseq
      %v5657 = vshrl.u32 %v5656, 7
      %v5658 = vsub.s32 1, %v5657
      %v5659 = vrot.slane %v5650, %v5658
      %v5662 = vmul.f32 %v5640, %v5655
      %v5663 = vmul.f32 %v5648, %v5659
      %v5664 = vmul.f32 %v5641, %v5655
      %v5665 = vmul.f32 %v5649, %v5659
      %v5666 = vadd.f32 %v5624, %v5662
      %v5667 = vadd.f32 %v5625, %v5663
      %v5668 = vadd.f32 %v5626, %v5664
      %v5669 = vadd.f32 %v5627, %v5665
      %5674 = vrot.lane.b32.xlu0 %v5368, 111
      %v5675 = vpop.permute.xlu0 %5674
      %5676 = vrot.lane.b32.xlu0 %v5370, 111
      %v5677 = vpop.permute.xlu0 %5676
      %5678 = vrot.lane.b32.xlu0 %v5372, 111
      %v5679 = vpop.permute.xlu0 %5678
      %5680 = vrot.lane.b32.xlu0 %v5374, 111
      %v5681 = vpop.permute.xlu0 %5680
      %v5682 = vsel %vm965, %v5675, %v5677
      %v5683 = vsel %vm965, %v5679, %v5681
      %v5690 = vsel %vm965, %v5677, %v5675
      %v5691 = vsel %vm965, %v5681, %v5679
      %v5692 = vld [vmem:[%s976] sm:$0x3]
      %v5694 = vlaneseq
      %v5695 = vshrl.u32 %v5694, 7
      %v5696 = vsub.s32 0, %v5695
      %v5697 = vrot.slane %v5692, %v5696
      %v5698 = vlaneseq
      %v5699 = vshrl.u32 %v5698, 7
      %v5700 = vsub.s32 1, %v5699
      %v5701 = vrot.slane %v5692, %v5700
      %v5704 = vmul.f32 %v5682, %v5697
      %v5705 = vmul.f32 %v5690, %v5701
      %v5706 = vmul.f32 %v5683, %v5697
      %v5707 = vmul.f32 %v5691, %v5701
      %v5708 = vadd.f32 %v5666, %v5704
      %v5709 = vadd.f32 %v5667, %v5705
      %v5710 = vadd.f32 %v5668, %v5706
      %v5711 = vadd.f32 %v5669, %v5707
      %s5712 = scalar_lea.vmem %s9, 16
      %v5713 = vld [vmem:[%s5712] sm:$0xff]
      %v5714 = vld [vmem:[%s5712 + $0x8] sm:$0xff]
      %5716 = vset.pattern.permute.xlu0 0
      %5717 = vperm.xlu0 %5716, %v5713
      %v5718 = vpop.permute.xlu0 %5717
      %5721 = vset.pattern.permute.xlu0 0
      %5722 = vperm.xlu0 %5721, %v5714
      %v5723 = vpop.permute.xlu0 %5722
      %v5725 = vadd.f32 %v5708, %v5718
      %v5726 = vadd.f32 %v5709, %v5718
      %v5727 = vadd.f32 %v5710, %v5723
      %v5728 = vadd.f32 %v5711, %v5723
      %vm5729 = vcmp.gt.f32.partialorder %v5725, 0.0
      %vm5730 = vcmp.gt.f32.partialorder %v5726, 0.0
      %vm5731 = vcmp.gt.f32.partialorder %v5727, 0.0
      %vm5732 = vcmp.gt.f32.partialorder %v5728, 0.0
      %v5733 = vmul.f32 %v5725, 0.2
      %v5734 = vmul.f32 %v5726, 0.2
      %v5735 = vmul.f32 %v5727, 0.2
      %v5736 = vmul.f32 %v5728, 0.2
      %v5737 = vsel %vm5729, %v5725, %v5733
      %v5738 = vsel %vm5730, %v5726, %v5734
      %v5739 = vsel %vm5731, %v5727, %v5735
      %v5740 = vsel %vm5732, %v5728, %v5736
      %v5741 = vpack.c.bf16 %v5739, %v5737
      %v5742 = vpack.c.bf16 %v5740, %v5738
      %5743 = vst [vmem:[#allocation2 + $0x40] sm:$0xff] %v5741
      %5744 = vst [vmem:[#allocation2 + $0x48] sm:$0xff] %v5742
      %s5745 = scalar_lea.vmem %s5, 72
      %v5746 = vld [vmem:[%s5745] sm:$0xf]
      %v5747 = vld [vmem:[%s5745 + $0x4] sm:$0xf]
      %v5748 = vld [vmem:[%s5745 + $0x8] sm:$0xf]
      %v5749 = vld [vmem:[%s5745 + $0xc] sm:$0xf]
      %v5750 = vld [vmem:[%s5745 + $0x10] sm:$0xf]
      %v5751 = vld [vmem:[%s5745 + $0x14] sm:$0xf]
      %v5752 = vld [vmem:[%s5745 + $0x18] sm:$0xf]
      %v5753 = vld [vmem:[%s5745 + $0x1c] sm:$0xf]
      %v5754 = vld [vmem:[%s5745 + $0x20] sm:$0xf]
      %v5755 = vld [vmem:[%s5745 + $0x24] sm:$0xf]
      %v5756 = vld [vmem:[%s5745 + $0x28] sm:$0xf]
      %v5757 = vld [vmem:[%s5745 + $0x2c] sm:$0xf]
      %v5758 = vld [vmem:[%s5745 + $0x30] sm:$0xf]
      %v5759 = vld [vmem:[%s5745 + $0x34] sm:$0xf]
      %v5760 = vld [vmem:[%s5745 + $0x38] sm:$0xf]
      %v5761 = vld [vmem:[%s5745 + $0x3c] sm:$0xf]
      %v5762 = vld [vmem:[%s5745 + $0x40] sm:$0xf]
      %v5763 = vld [vmem:[%s5745 + $0x44] sm:$0xf]
      %v5764 = vld [vmem:[#allocation2] sm:$0xff]
      %v5765 = vld [vmem:[#allocation2 + $0x8] sm:$0xff]
      %v5766 = vld [vmem:[#allocation2 + $0x10] sm:$0xff]
      %v5767 = vld [vmem:[#allocation2 + $0x18] sm:$0xff]
      %v5768 = vld [vmem:[#allocation2 + $0x20] sm:$0xff]
      %v5769 = vld [vmem:[#allocation2 + $0x28] sm:$0xff]
      %v5770 = vld [vmem:[#allocation2 + $0x30] sm:$0xff]
      %v5771 = vld [vmem:[#allocation2 + $0x38] sm:$0xff]
      %v5772 = vld [vmem:[#allocation2 + $0x40] sm:$0xff]
      %v5773 = vld [vmem:[#allocation2 + $0x48] sm:$0xff]
      %v5792 = vunpack.c.l.b16 %v5746
      %v5793 = vunpack.c.l.b16 %v5747
      %v5794 = vunpack.c.l.b16 %v5748
      %v5795 = vunpack.c.l.b16 %v5749
      %v5796 = vunpack.c.l.b16 %v5750
      %v5797 = vunpack.c.l.b16 %v5751
      %v5798 = vunpack.c.l.b16 %v5752
      %v5799 = vunpack.c.l.b16 %v5753
      %v5800 = vunpack.c.l.b16 %v5754
      %v5801 = vunpack.c.l.b16 %v5755
      %v5802 = vunpack.c.l.b16 %v5756
      %v5803 = vunpack.c.l.b16 %v5757
      %v5804 = vunpack.c.l.b16 %v5758
      %v5805 = vunpack.c.l.b16 %v5759
      %v5806 = vunpack.c.l.b16 %v5760
      %v5807 = vunpack.c.l.b16 %v5761
      %v5808 = vunpack.c.l.b16 %v5762
      %v5809 = vunpack.c.l.b16 %v5763
      %v5810 = vpack.c.b16 %v5793, %v5792
      %v5811 = vpack.c.b16 %v5795, %v5794
      %v5812 = vpack.c.b16 %v5797, %v5796
      %v5813 = vpack.c.b16 %v5799, %v5798
      %v5814 = vpack.c.b16 %v5801, %v5800
      %v5815 = vpack.c.b16 %v5803, %v5802
      %v5816 = vpack.c.b16 %v5805, %v5804
      %v5817 = vpack.c.b16 %v5807, %v5806
      %v5818 = vpack.c.b16 %v5809, %v5808
      %v5820 = vsel %vm2866, %v5810, 0
      %v5823 = vsel %vm2866, %v5811, 0
      %v5826 = vsel %vm2866, %v5812, 0
      %v5829 = vsel %vm2866, %v5813, 0
      %v5832 = vsel %vm2866, %v5814, 0
      %v5835 = vsel %vm2866, %v5815, 0
      %v5838 = vsel %vm2866, %v5816, 0
      %v5841 = vsel %vm2866, %v5817, 0
      %v5844 = vsel %vm2866, %v5818, 0
      %5846 = vmatprep.subr.bf16.mxu0 %v5765
      %5847 = vmatpush1.bf16.msra.mxu0 %v5764
      %5848 = vmatprep.subr.bf16.mxu0 %v5767
      %5849 = vmatpush1.bf16.msra.mxu0 %v5766
      %5850 = vmatprep.subr.bf16.mxu0 %v5769
      %5851 = vmatpush1.bf16.msra.mxu0 %v5768
      %5852 = vmatprep.subr.bf16.mxu0 %v5771
      %5853 = vmatpush1.bf16.msra.mxu0 %v5770
      %5854 = vmatprep.subr.bf16.mxu0 %v5773
      %5855 = vmatpush1.bf16.msra.mxu0 %v5772
      %5856 = vmatprep.subr.bf16.mxu0 0
      %5857 = vmatpush1.bf16.msra.mxu0 0
      %5858 = vmatprep.subr.bf16.mxu0 0
      %5859 = vmatpush1.bf16.msra.mxu0 0
      %5860 = vmatprep.subr.bf16.mxu0 0
      %5861 = vmatpush1.bf16.msra.mxu0 0
      %5862 = vmatprep.subr.bf16.mxu0 0
      %5863 = vmatpush1.bf16.msra.mxu0 0
      %5864 = vmatprep.subr.bf16.mxu0 0
      %5865 = vmatpush1.bf16.msra.mxu0 0
      %5866 = vmatprep.subr.bf16.mxu0 0
      %5867 = vmatpush1.bf16.msra.mxu0 0
      %5868 = vmatprep.subr.bf16.mxu0 0
      %5869 = vmatpush1.bf16.msra.mxu0 0
      %5870 = vmatprep.subr.bf16.mxu0 0
      %5871 = vmatpush1.bf16.msra.mxu0 0
      %5872 = vmatprep.subr.bf16.mxu0 0
      %5873 = vmatpush1.bf16.msra.mxu0 0
      %5874 = vmatprep.subr.bf16.mxu0 0
      %5875 = vmatpush1.bf16.msra.mxu0 0
      %5876 = vmatprep.subr.bf16.mxu0 0
      %5877 = vmatpush1.bf16.msra.mxu0 0
      %5878 = vmatprep.mubr.bf16.mxu0 0
      %5879 = vmatmul.mubr.bf16.gmra.mrb[0].mxu0 %v5820
      %v5880 = vpop.f32.mrb[0].mxu0
      %v5881 = vadd.f32 0.0, %v5880
      %v5882 = vpop.f32.mrb[0].mxu0
      %v5883 = vadd.f32 0.0, %v5882
      %v5884 = vpop.f32.mrb[0].mxu0
      %v5885 = vadd.f32 0.0, %v5884
      %v5886 = vpop.f32.mrb[0].mxu0
      %v5887 = vadd.f32 0.0, %v5886
      %5888 = vmatprep.mubr.bf16.mxu0 0
      %5889 = vmatmul.mubr.bf16.gmra.mrb[0].mxu0 %v5823
      %v5890 = vpop.f32.mrb[0].mxu0
      %v5891 = vadd.f32 0.0, %v5890
      %v5892 = vpop.f32.mrb[0].mxu0
      %v5893 = vadd.f32 0.0, %v5892
      %v5894 = vpop.f32.mrb[0].mxu0
      %v5895 = vadd.f32 0.0, %v5894
      %v5896 = vpop.f32.mrb[0].mxu0
      %v5897 = vadd.f32 0.0, %v5896
      %5898 = vmatprep.mubr.bf16.mxu0 0
      %5899 = vmatmul.mubr.bf16.gmra.mrb[0].mxu0 %v5826
      %v5900 = vpop.f32.mrb[0].mxu0
      %v5901 = vadd.f32 0.0, %v5900
      %v5902 = vpop.f32.mrb[0].mxu0
      %v5903 = vadd.f32 0.0, %v5902
      %v5904 = vpop.f32.mrb[0].mxu0
      %v5905 = vadd.f32 0.0, %v5904
      %v5906 = vpop.f32.mrb[0].mxu0
      %v5907 = vadd.f32 0.0, %v5906
      %5908 = vmatprep.mubr.bf16.mxu0 0
      %5909 = vmatmul.mubr.bf16.gmra.mrb[0].mxu0 %v5829
      %v5910 = vpop.f32.mrb[0].mxu0
      %v5911 = vadd.f32 0.0, %v5910
      %v5912 = vpop.f32.mrb[0].mxu0
      %v5913 = vadd.f32 0.0, %v5912
      %v5914 = vpop.f32.mrb[0].mxu0
      %v5915 = vadd.f32 0.0, %v5914
      %v5916 = vpop.f32.mrb[0].mxu0
      %v5917 = vadd.f32 0.0, %v5916
      %5918 = vmatprep.mubr.bf16.mxu0 0
      %5919 = vmatmul.mubr.bf16.gmra.mrb[0].mxu0 %v5832
      %v5920 = vpop.f32.mrb[0].mxu0
      %v5921 = vadd.f32 0.0, %v5920
      %v5922 = vpop.f32.mrb[0].mxu0
      %v5923 = vadd.f32 0.0, %v5922
      %v5924 = vpop.f32.mrb[0].mxu0
      %v5925 = vadd.f32 0.0, %v5924
      %v5926 = vpop.f32.mrb[0].mxu0
      %v5927 = vadd.f32 0.0, %v5926
      %5928 = vmatprep.mubr.bf16.mxu0 0
      %5929 = vmatmul.mubr.bf16.gmra.mrb[0].mxu0 %v5835
      %v5930 = vpop.f32.mrb[0].mxu0
      %v5931 = vadd.f32 0.0, %v5930
      %v5932 = vpop.f32.mrb[0].mxu0
      %v5933 = vadd.f32 0.0, %v5932
      %v5934 = vpop.f32.mrb[0].mxu0
      %v5935 = vadd.f32 0.0, %v5934
      %v5936 = vpop.f32.mrb[0].mxu0
      %v5937 = vadd.f32 0.0, %v5936
      %5938 = vmatprep.mubr.bf16.mxu0 0
      %5939 = vmatmul.mubr.bf16.gmra.mrb[0].mxu0 %v5838
      %v5940 = vpop.f32.mrb[0].mxu0
      %v5941 = vadd.f32 0.0, %v5940
      %v5942 = vpop.f32.mrb[0].mxu0
      %v5943 = vadd.f32 0.0, %v5942
      %v5944 = vpop.f32.mrb[0].mxu0
      %v5945 = vadd.f32 0.0, %v5944
      %v5946 = vpop.f32.mrb[0].mxu0
      %v5947 = vadd.f32 0.0, %v5946
      %5948 = vmatprep.mubr.bf16.mxu0 0
      %5949 = vmatmul.mubr.bf16.gmra.mrb[0].mxu0 %v5841
      %v5950 = vpop.f32.mrb[0].mxu0
      %v5951 = vadd.f32 0.0, %v5950
      %v5952 = vpop.f32.mrb[0].mxu0
      %v5953 = vadd.f32 0.0, %v5952
      %v5954 = vpop.f32.mrb[0].mxu0
      %v5955 = vadd.f32 0.0, %v5954
      %v5956 = vpop.f32.mrb[0].mxu0
      %v5957 = vadd.f32 0.0, %v5956
      %5958 = vmatprep.mubr.bf16.mxu0 0
      %5959 = vmatmul.mubr.bf16.gmra.mrb[0].mxu0 %v5844
      %v5960 = vpop.f32.mrb[0].mxu0
      %v5961 = vadd.f32 0.0, %v5960
      %v5962 = vpop.f32.mrb[0].mxu0
      %v5963 = vadd.f32 0.0, %v5962
      %v5964 = vpop.f32.mrb[0].mxu0
      %v5965 = vadd.f32 0.0, %v5964
      %v5966 = vpop.f32.mrb[0].mxu0
      %v5967 = vadd.f32 0.0, %v5966
      %5968 = vdwg.mxu0
      %5971 = vrot.lane.b32.xlu0 %v5883, 17
      %v5972 = vpop.permute.xlu0 %5971
      %5973 = vrot.lane.b32.xlu0 %v5887, 17
      %v5974 = vpop.permute.xlu0 %5973
      %5979 = vrot.lane.b32.xlu0 %v5881, 17
      %v5980 = vpop.permute.xlu0 %5979
      %5981 = vrot.lane.b32.xlu0 %v5885, 17
      %v5982 = vpop.permute.xlu0 %5981
      %v5983 = vsel %vm661, %v5980, %v5972
      %v5984 = vsel %vm661, %v5982, %v5974
      %v5989 = vsel %vm661, %v5972, %v5980
      %v5990 = vsel %vm661, %v5974, %v5982
      %v5991 = vld [vmem:[%s11] sm:$0x3]
      %v5993 = vlaneseq
      %v5994 = vshrl.u32 %v5993, 7
      %v5995 = vsub.s32 0, %v5994
      %v5996 = vrot.slane %v5991, %v5995
      %v5997 = vlaneseq
      %v5998 = vshrl.u32 %v5997, 7
      %v5999 = vsub.s32 1, %v5998
      %v6000 = vrot.slane %v5991, %v5999
      %v6003 = vmul.f32 %v5989, %v5996
      %v6004 = vmul.f32 %v5983, %v6000
      %v6005 = vmul.f32 %v5990, %v5996
      %v6006 = vmul.f32 %v5984, %v6000
      %6009 = vrot.lane.b32.xlu0 %v5893, 16
      %v6010 = vpop.permute.xlu0 %6009
      %6011 = vrot.lane.b32.xlu0 %v5897, 16
      %v6012 = vpop.permute.xlu0 %6011
      %6017 = vrot.lane.b32.xlu0 %v5891, 16
      %v6018 = vpop.permute.xlu0 %6017
      %6019 = vrot.lane.b32.xlu0 %v5895, 16
      %v6020 = vpop.permute.xlu0 %6019
      %v6021 = vsel %vm496, %v6018, %v6010
      %v6022 = vsel %vm496, %v6020, %v6012
      %v6027 = vsel %vm496, %v6010, %v6018
      %v6028 = vsel %vm496, %v6012, %v6020
      %v6029 = vld [vmem:[%s708] sm:$0x3]
      %v6031 = vlaneseq
      %v6032 = vshrl.u32 %v6031, 7
      %v6033 = vsub.s32 0, %v6032
      %v6034 = vrot.slane %v6029, %v6033
      %v6035 = vlaneseq
      %v6036 = vshrl.u32 %v6035, 7
      %v6037 = vsub.s32 1, %v6036
      %v6038 = vrot.slane %v6029, %v6037
      %v6041 = vmul.f32 %v6027, %v6034
      %v6042 = vmul.f32 %v6021, %v6038
      %v6043 = vmul.f32 %v6028, %v6034
      %v6044 = vmul.f32 %v6022, %v6038
      %v6045 = vadd.f32 %v6003, %v6041
      %v6046 = vadd.f32 %v6004, %v6042
      %v6047 = vadd.f32 %v6005, %v6043
      %v6048 = vadd.f32 %v6006, %v6044
      %6051 = vrot.lane.b32.xlu0 %v5903, 15
      %v6052 = vpop.permute.xlu0 %6051
      %6053 = vrot.lane.b32.xlu0 %v5907, 15
      %v6054 = vpop.permute.xlu0 %6053
      %6059 = vrot.lane.b32.xlu0 %v5901, 15
      %v6060 = vpop.permute.xlu0 %6059
      %6061 = vrot.lane.b32.xlu0 %v5905, 15
      %v6062 = vpop.permute.xlu0 %6061
      %v6063 = vsel %vm743, %v6060, %v6052
      %v6064 = vsel %vm743, %v6062, %v6054
      %v6069 = vsel %vm743, %v6052, %v6060
      %v6070 = vsel %vm743, %v6054, %v6062
      %v6071 = vld [vmem:[%s752] sm:$0x3]
      %v6073 = vlaneseq
      %v6074 = vshrl.u32 %v6073, 7
      %v6075 = vsub.s32 0, %v6074
      %v6076 = vrot.slane %v6071, %v6075
      %v6077 = vlaneseq
      %v6078 = vshrl.u32 %v6077, 7
      %v6079 = vsub.s32 1, %v6078
      %v6080 = vrot.slane %v6071, %v6079
      %v6083 = vmul.f32 %v6069, %v6076
      %v6084 = vmul.f32 %v6063, %v6080
      %v6085 = vmul.f32 %v6070, %v6076
      %v6086 = vmul.f32 %v6064, %v6080
      %v6087 = vadd.f32 %v6045, %v6083
      %v6088 = vadd.f32 %v6046, %v6084
      %v6089 = vadd.f32 %v6047, %v6085
      %v6090 = vadd.f32 %v6048, %v6086
      %6093 = vrot.lane.b32.xlu0 %v5913, 1
      %v6094 = vpop.permute.xlu0 %6093
      %6095 = vrot.lane.b32.xlu0 %v5917, 1
      %v6096 = vpop.permute.xlu0 %6095
      %6101 = vrot.lane.b32.xlu0 %v5911, 1
      %v6102 = vpop.permute.xlu0 %6101
      %6103 = vrot.lane.b32.xlu0 %v5915, 1
      %v6104 = vpop.permute.xlu0 %6103
      %v6105 = vsel %vm787, %v6102, %v6094
      %v6106 = vsel %vm787, %v6104, %v6096
      %v6111 = vsel %vm787, %v6094, %v6102
      %v6112 = vsel %vm787, %v6096, %v6104
      %v6113 = vld [vmem:[%s796] sm:$0x3]
      %v6115 = vlaneseq
      %v6116 = vshrl.u32 %v6115, 7
      %v6117 = vsub.s32 0, %v6116
      %v6118 = vrot.slane %v6113, %v6117
      %v6119 = vlaneseq
      %v6120 = vshrl.u32 %v6119, 7
      %v6121 = vsub.s32 1, %v6120
      %v6122 = vrot.slane %v6113, %v6121
      %v6125 = vmul.f32 %v6111, %v6118
      %v6126 = vmul.f32 %v6105, %v6122
      %v6127 = vmul.f32 %v6112, %v6118
      %v6128 = vmul.f32 %v6106, %v6122
      %v6129 = vadd.f32 %v6087, %v6125
      %v6130 = vadd.f32 %v6088, %v6126
      %v6131 = vadd.f32 %v6089, %v6127
      %v6132 = vadd.f32 %v6090, %v6128
      %v6133 = vadd.f32 %v6129, %v5921
      %v6134 = vadd.f32 %v6130, %v5923
      %v6135 = vadd.f32 %v6131, %v5925
      %v6136 = vadd.f32 %v6132, %v5927
      %6141 = vrot.lane.b32.xlu0 %v5931, 127
      %v6142 = vpop.permute.xlu0 %6141
      %6143 = vrot.lane.b32.xlu0 %v5933, 127
      %v6144 = vpop.permute.xlu0 %6143
      %6145 = vrot.lane.b32.xlu0 %v5935, 127
      %v6146 = vpop.permute.xlu0 %6145
      %6147 = vrot.lane.b32.xlu0 %v5937, 127
      %v6148 = vpop.permute.xlu0 %6147
      %v6149 = vsel %vm833, %v6142, %v6144
      %v6150 = vsel %vm833, %v6146, %v6148
      %v6157 = vsel %vm833, %v6144, %v6142
      %v6158 = vsel %vm833, %v6148, %v6146
      %v6159 = vld [vmem:[%s844] sm:$0x3]
      %v6161 = vlaneseq
      %v6162 = vshrl.u32 %v6161, 7
      %v6163 = vsub.s32 0, %v6162
      %v6164 = vrot.slane %v6159, %v6163
      %v6165 = vlaneseq
      %v6166 = vshrl.u32 %v6165, 7
      %v6167 = vsub.s32 1, %v6166
      %v6168 = vrot.slane %v6159, %v6167
      %v6171 = vmul.f32 %v6149, %v6164
      %v6172 = vmul.f32 %v6157, %v6168
      %v6173 = vmul.f32 %v6150, %v6164
      %v6174 = vmul.f32 %v6158, %v6168
      %v6175 = vadd.f32 %v6133, %v6171
      %v6176 = vadd.f32 %v6134, %v6172
      %v6177 = vadd.f32 %v6135, %v6173
      %v6178 = vadd.f32 %v6136, %v6174
      %6183 = vrot.lane.b32.xlu0 %v5941, 113
      %v6184 = vpop.permute.xlu0 %6183
      %6185 = vrot.lane.b32.xlu0 %v5943, 113
      %v6186 = vpop.permute.xlu0 %6185
      %6187 = vrot.lane.b32.xlu0 %v5945, 113
      %v6188 = vpop.permute.xlu0 %6187
      %6189 = vrot.lane.b32.xlu0 %v5947, 113
      %v6190 = vpop.permute.xlu0 %6189
      %v6191 = vsel %vm877, %v6184, %v6186
      %v6192 = vsel %vm877, %v6188, %v6190
      %v6199 = vsel %vm877, %v6186, %v6184
      %v6200 = vsel %vm877, %v6190, %v6188
      %v6201 = vld [vmem:[%s888] sm:$0x3]
      %v6203 = vlaneseq
      %v6204 = vshrl.u32 %v6203, 7
      %v6205 = vsub.s32 0, %v6204
      %v6206 = vrot.slane %v6201, %v6205
      %v6207 = vlaneseq
      %v6208 = vshrl.u32 %v6207, 7
      %v6209 = vsub.s32 1, %v6208
      %v6210 = vrot.slane %v6201, %v6209
      %v6213 = vmul.f32 %v6191, %v6206
      %v6214 = vmul.f32 %v6199, %v6210
      %v6215 = vmul.f32 %v6192, %v6206
      %v6216 = vmul.f32 %v6200, %v6210
      %v6217 = vadd.f32 %v6175, %v6213
      %v6218 = vadd.f32 %v6176, %v6214
      %v6219 = vadd.f32 %v6177, %v6215
      %v6220 = vadd.f32 %v6178, %v6216
      %6225 = vrot.lane.b32.xlu0 %v5951, 112
      %v6226 = vpop.permute.xlu0 %6225
      %6227 = vrot.lane.b32.xlu0 %v5953, 112
      %v6228 = vpop.permute.xlu0 %6227
      %6229 = vrot.lane.b32.xlu0 %v5955, 112
      %v6230 = vpop.permute.xlu0 %6229
      %6231 = vrot.lane.b32.xlu0 %v5957, 112
      %v6232 = vpop.permute.xlu0 %6231
      %v6233 = vsel %vm921, %v6226, %v6228
      %v6234 = vsel %vm921, %v6230, %v6232
      %v6241 = vsel %vm921, %v6228, %v6226
      %v6242 = vsel %vm921, %v6232, %v6230
      %v6243 = vld [vmem:[%s932] sm:$0x3]
      %v6245 = vlaneseq
      %v6246 = vshrl.u32 %v6245, 7
      %v6247 = vsub.s32 0, %v6246
      %v6248 = vrot.slane %v6243, %v6247
      %v6249 = vlaneseq
      %v6250 = vshrl.u32 %v6249, 7
      %v6251 = vsub.s32 1, %v6250
      %v6252 = vrot.slane %v6243, %v6251
      %v6255 = vmul.f32 %v6233, %v6248
      %v6256 = vmul.f32 %v6241, %v6252
      %v6257 = vmul.f32 %v6234, %v6248
      %v6258 = vmul.f32 %v6242, %v6252
      %v6259 = vadd.f32 %v6217, %v6255
      %v6260 = vadd.f32 %v6218, %v6256
      %v6261 = vadd.f32 %v6219, %v6257
      %v6262 = vadd.f32 %v6220, %v6258
      %6267 = vrot.lane.b32.xlu0 %v5961, 111
      %v6268 = vpop.permute.xlu0 %6267
      %6269 = vrot.lane.b32.xlu0 %v5963, 111
      %v6270 = vpop.permute.xlu0 %6269
      %6271 = vrot.lane.b32.xlu0 %v5965, 111
      %v6272 = vpop.permute.xlu0 %6271
      %6273 = vrot.lane.b32.xlu0 %v5967, 111
      %v6274 = vpop.permute.xlu0 %6273
      %v6275 = vsel %vm965, %v6268, %v6270
      %v6276 = vsel %vm965, %v6272, %v6274
      %v6283 = vsel %vm965, %v6270, %v6268
      %v6284 = vsel %vm965, %v6274, %v6272
      %v6285 = vld [vmem:[%s976] sm:$0x3]
      %v6287 = vlaneseq
      %v6288 = vshrl.u32 %v6287, 7
      %v6289 = vsub.s32 0, %v6288
      %v6290 = vrot.slane %v6285, %v6289
      %v6291 = vlaneseq
      %v6292 = vshrl.u32 %v6291, 7
      %v6293 = vsub.s32 1, %v6292
      %v6294 = vrot.slane %v6285, %v6293
      %v6297 = vmul.f32 %v6275, %v6290
      %v6298 = vmul.f32 %v6283, %v6294
      %v6299 = vmul.f32 %v6276, %v6290
      %v6300 = vmul.f32 %v6284, %v6294
      %v6301 = vadd.f32 %v6259, %v6297
      %v6302 = vadd.f32 %v6260, %v6298
      %v6303 = vadd.f32 %v6261, %v6299
      %v6304 = vadd.f32 %v6262, %v6300
      %s6305 = scalar_lea.vmem %s10, 16
      %v6306 = vld [vmem:[%s6305] sm:$0xff]
      %v6307 = vld [vmem:[%s6305 + $0x8] sm:$0xff]
      %6309 = vset.pattern.permute.xlu0 0
      %6310 = vperm.xlu0 %6309, %v6306
      %v6311 = vpop.permute.xlu0 %6310
      %6314 = vset.pattern.permute.xlu0 0
      %6315 = vperm.xlu0 %6314, %v6307
      %v6316 = vpop.permute.xlu0 %6315
      %v6318 = vadd.f32 %v6301, %v6311
      %v6319 = vadd.f32 %v6302, %v6311
      %v6320 = vadd.f32 %v6303, %v6316
      %v6321 = vadd.f32 %v6304, %v6316
      %v6322 = vmul.f32 %v6318, 0.2
      %v6323 = vmul.f32 %v6319, 0.2
      %v6324 = vmul.f32 %v6320, 0.2
      %v6325 = vmul.f32 %v6321, 0.2
      %v6326 = vld [vmem:[#allocation3] sm:$0xff]
      %v6327 = vld [vmem:[#allocation3 + $0x8] sm:$0xff]
      %v6328 = vld [vmem:[#allocation3 + $0x10] sm:$0xff]
      %v6329 = vld [vmem:[#allocation3 + $0x18] sm:$0xff]
      %v6330 = vadd.f32 %v6322, %v6326
      %v6331 = vadd.f32 %v6323, %v6327
      %v6332 = vadd.f32 %v6324, %v6328
      %v6333 = vadd.f32 %v6325, %v6329
      %6334 = vst [vmem:[#allocation3] sm:$0xff] %v6330
      %6335 = vst [vmem:[#allocation3 + $0x8] sm:$0xff] %v6331
      %6336 = vst [vmem:[#allocation3 + $0x10] sm:$0xff] %v6332
      %6337 = vst [vmem:[#allocation3 + $0x18] sm:$0xff] %v6333
      %v6338 = vld [vmem:[#allocation3] sm:$0xff]
      %v6339 = vld [vmem:[#allocation3 + $0x8] sm:$0xff]
      %v6340 = vld [vmem:[#allocation3 + $0x10] sm:$0xff]
      %v6341 = vld [vmem:[#allocation3 + $0x18] sm:$0xff]
      %v6342 = vpack.c.bf16 %v6340, %v6338
      %v6343 = vpack.c.bf16 %v6341, %v6339
      %6344 = vst [vmem:[#allocation2] sm:$0xff] %v6342
      %6345 = vst [vmem:[#allocation2 + $0x8] sm:$0xff] %v6343
      %s6346 = scalar_lea.vmem %s1, 144
      %v6347 = vld [vmem:[%s6346] sm:$0xf]
      %v6348 = vld [vmem:[%s6346 + $0x4] sm:$0xf]
      %v6349 = vld [vmem:[%s6346 + $0x8] sm:$0xf]
      %v6350 = vld [vmem:[%s6346 + $0xc] sm:$0xf]
      %v6351 = vld [vmem:[%s6346 + $0x10] sm:$0xf]
      %v6352 = vld [vmem:[%s6346 + $0x14] sm:$0xf]
      %v6353 = vld [vmem:[%s6346 + $0x18] sm:$0xf]
      %v6354 = vld [vmem:[%s6346 + $0x1c] sm:$0xf]
      %v6355 = vld [vmem:[%s6346 + $0x20] sm:$0xf]
      %v6356 = vld [vmem:[%s6346 + $0x24] sm:$0xf]
      %v6357 = vld [vmem:[%s6346 + $0x28] sm:$0xf]
      %v6358 = vld [vmem:[%s6346 + $0x2c] sm:$0xf]
      %v6359 = vld [vmem:[%s6346 + $0x30] sm:$0xf]
      %v6360 = vld [vmem:[%s6346 + $0x34] sm:$0xf]
      %v6361 = vld [vmem:[%s6346 + $0x38] sm:$0xf]
      %v6362 = vld [vmem:[%s6346 + $0x3c] sm:$0xf]
      %v6363 = vld [vmem:[%s6346 + $0x40] sm:$0xf]
      %v6364 = vld [vmem:[%s6346 + $0x44] sm:$0xf]
      %v6365 = vld [vmem:[#allocation2] sm:$0xff]
      %v6366 = vld [vmem:[#allocation2 + $0x8] sm:$0xff]
      %v6385 = vunpack.c.l.b16 %v6347
      %v6386 = vunpack.c.l.b16 %v6348
      %v6387 = vunpack.c.l.b16 %v6349
      %v6388 = vunpack.c.l.b16 %v6350
      %v6389 = vunpack.c.l.b16 %v6351
      %v6390 = vunpack.c.l.b16 %v6352
      %v6391 = vunpack.c.l.b16 %v6353
      %v6392 = vunpack.c.l.b16 %v6354
      %v6393 = vunpack.c.l.b16 %v6355
      %v6394 = vunpack.c.l.b16 %v6356
      %v6395 = vunpack.c.l.b16 %v6357
      %v6396 = vunpack.c.l.b16 %v6358
      %v6397 = vunpack.c.l.b16 %v6359
      %v6398 = vunpack.c.l.b16 %v6360
      %v6399 = vunpack.c.l.b16 %v6361
      %v6400 = vunpack.c.l.b16 %v6362
      %v6401 = vunpack.c.l.b16 %v6363
      %v6402 = vunpack.c.l.b16 %v6364
      %v6403 = vpack.c.b16 %v6386, %v6385
      %v6404 = vpack.c.b16 %v6388, %v6387
      %v6405 = vpack.c.b16 %v6390, %v6389
      %v6406 = vpack.c.b16 %v6392, %v6391
      %v6407 = vpack.c.b16 %v6394, %v6393
      %v6408 = vpack.c.b16 %v6396, %v6395
      %v6409 = vpack.c.b16 %v6398, %v6397
      %v6410 = vpack.c.b16 %v6400, %v6399
      %v6411 = vpack.c.b16 %v6402, %v6401
      %v6413 = vsel %vm496, %v6403, 0
      %v6416 = vsel %vm496, %v6404, 0
      %v6419 = vsel %vm496, %v6405, 0
      %v6422 = vsel %vm496, %v6406, 0
      %v6425 = vsel %vm496, %v6407, 0
      %v6428 = vsel %vm496, %v6408, 0
      %v6431 = vsel %vm496, %v6409, 0
      %v6434 = vsel %vm496, %v6410, 0
      %v6437 = vsel %vm496, %v6411, 0
      %6439 = vmatprep.subr.bf16.mxu0 %v6366
      %6440 = vmatpush1.bf16.msra.mxu0 %v6365
      %6441 = vmatprep.subr.bf16.mxu0 0
      %6442 = vmatpush1.bf16.msra.mxu0 0
      %6443 = vmatprep.subr.bf16.mxu0 0
      %6444 = vmatpush1.bf16.msra.mxu0 0
      %6445 = vmatprep.subr.bf16.mxu0 0
      %6446 = vmatpush1.bf16.msra.mxu0 0
      %6447 = vmatprep.subr.bf16.mxu0 0
      %6448 = vmatpush1.bf16.msra.mxu0 0
      %6449 = vmatprep.subr.bf16.mxu0 0
      %6450 = vmatpush1.bf16.msra.mxu0 0
      %6451 = vmatprep.subr.bf16.mxu0 0
      %6452 = vmatpush1.bf16.msra.mxu0 0
      %6453 = vmatprep.subr.bf16.mxu0 0
      %6454 = vmatpush1.bf16.msra.mxu0 0
      %6455 = vmatprep.subr.bf16.mxu0 0
      %6456 = vmatpush1.bf16.msra.mxu0 0
      %6457 = vmatprep.subr.bf16.mxu0 0
      %6458 = vmatpush1.bf16.msra.mxu0 0
      %6459 = vmatprep.subr.bf16.mxu0 0
      %6460 = vmatpush1.bf16.msra.mxu0 0
      %6461 = vmatprep.subr.bf16.mxu0 0
      %6462 = vmatpush1.bf16.msra.mxu0 0
      %6463 = vmatprep.subr.bf16.mxu0 0
      %6464 = vmatpush1.bf16.msra.mxu0 0
      %6465 = vmatprep.subr.bf16.mxu0 0
      %6466 = vmatpush1.bf16.msra.mxu0 0
      %6467 = vmatprep.subr.bf16.mxu0 0
      %6468 = vmatpush1.bf16.msra.mxu0 0
      %6469 = vmatprep.subr.bf16.mxu0 0
      %6470 = vmatpush1.bf16.msra.mxu0 0
      %6471 = vmatprep.mubr.bf16.mxu0 0
      %6472 = vmatmul.mubr.bf16.gmra.mrb[0].mxu0 %v6413
      %v6473 = vpop.f32.mrb[0].mxu0
      %v6474 = vadd.f32 0.0, %v6473
      %v6475 = vpop.f32.mrb[0].mxu0
      %v6476 = vadd.f32 0.0, %v6475
      %v6477 = vpop.f32.mrb[0].mxu0
      %v6478 = vadd.f32 0.0, %v6477
      %v6479 = vpop.f32.mrb[0].mxu0
      %v6480 = vadd.f32 0.0, %v6479
      %6481 = vmatprep.mubr.bf16.mxu0 0
      %6482 = vmatmul.mubr.bf16.gmra.mrb[0].mxu0 %v6416
      %v6483 = vpop.f32.mrb[0].mxu0
      %v6484 = vadd.f32 0.0, %v6483
      %v6485 = vpop.f32.mrb[0].mxu0
      %v6486 = vadd.f32 0.0, %v6485
      %v6487 = vpop.f32.mrb[0].mxu0
      %v6488 = vadd.f32 0.0, %v6487
      %v6489 = vpop.f32.mrb[0].mxu0
      %v6490 = vadd.f32 0.0, %v6489
      %6491 = vmatprep.mubr.bf16.mxu0 0
      %6492 = vmatmul.mubr.bf16.gmra.mrb[0].mxu0 %v6419
      %v6493 = vpop.f32.mrb[0].mxu0
      %v6494 = vadd.f32 0.0, %v6493
      %v6495 = vpop.f32.mrb[0].mxu0
      %v6496 = vadd.f32 0.0, %v6495
      %v6497 = vpop.f32.mrb[0].mxu0
      %v6498 = vadd.f32 0.0, %v6497
      %v6499 = vpop.f32.mrb[0].mxu0
      %v6500 = vadd.f32 0.0, %v6499
      %6501 = vmatprep.mubr.bf16.mxu0 0
      %6502 = vmatmul.mubr.bf16.gmra.mrb[0].mxu0 %v6422
      %v6503 = vpop.f32.mrb[0].mxu0
      %v6504 = vadd.f32 0.0, %v6503
      %v6505 = vpop.f32.mrb[0].mxu0
      %v6506 = vadd.f32 0.0, %v6505
      %v6507 = vpop.f32.mrb[0].mxu0
      %v6508 = vadd.f32 0.0, %v6507
      %v6509 = vpop.f32.mrb[0].mxu0
      %v6510 = vadd.f32 0.0, %v6509
      %6511 = vmatprep.mubr.bf16.mxu0 0
      %6512 = vmatmul.mubr.bf16.gmra.mrb[0].mxu0 %v6425
      %v6513 = vpop.f32.mrb[0].mxu0
      %v6514 = vadd.f32 0.0, %v6513
      %v6515 = vpop.f32.mrb[0].mxu0
      %v6516 = vadd.f32 0.0, %v6515
      %v6517 = vpop.f32.mrb[0].mxu0
      %v6518 = vadd.f32 0.0, %v6517
      %v6519 = vpop.f32.mrb[0].mxu0
      %v6520 = vadd.f32 0.0, %v6519
      %6521 = vmatprep.mubr.bf16.mxu0 0
      %6522 = vmatmul.mubr.bf16.gmra.mrb[0].mxu0 %v6428
      %v6523 = vpop.f32.mrb[0].mxu0
      %v6524 = vadd.f32 0.0, %v6523
      %v6525 = vpop.f32.mrb[0].mxu0
      %v6526 = vadd.f32 0.0, %v6525
      %v6527 = vpop.f32.mrb[0].mxu0
      %v6528 = vadd.f32 0.0, %v6527
      %v6529 = vpop.f32.mrb[0].mxu0
      %v6530 = vadd.f32 0.0, %v6529
      %6531 = vmatprep.mubr.bf16.mxu0 0
      %6532 = vmatmul.mubr.bf16.gmra.mrb[0].mxu0 %v6431
      %v6533 = vpop.f32.mrb[0].mxu0
      %v6534 = vadd.f32 0.0, %v6533
      %v6535 = vpop.f32.mrb[0].mxu0
      %v6536 = vadd.f32 0.0, %v6535
      %v6537 = vpop.f32.mrb[0].mxu0
      %v6538 = vadd.f32 0.0, %v6537
      %v6539 = vpop.f32.mrb[0].mxu0
      %v6540 = vadd.f32 0.0, %v6539
      %6541 = vmatprep.mubr.bf16.mxu0 0
      %6542 = vmatmul.mubr.bf16.gmra.mrb[0].mxu0 %v6434
      %v6543 = vpop.f32.mrb[0].mxu0
      %v6544 = vadd.f32 0.0, %v6543
      %v6545 = vpop.f32.mrb[0].mxu0
      %v6546 = vadd.f32 0.0, %v6545
      %v6547 = vpop.f32.mrb[0].mxu0
      %v6548 = vadd.f32 0.0, %v6547
      %v6549 = vpop.f32.mrb[0].mxu0
      %v6550 = vadd.f32 0.0, %v6549
      %6551 = vmatprep.mubr.bf16.mxu0 0
      %6552 = vmatmul.mubr.bf16.gmra.mrb[0].mxu0 %v6437
      %v6553 = vpop.f32.mrb[0].mxu0
      %v6554 = vadd.f32 0.0, %v6553
      %v6555 = vpop.f32.mrb[0].mxu0
      %v6556 = vadd.f32 0.0, %v6555
      %v6557 = vpop.f32.mrb[0].mxu0
      %v6558 = vadd.f32 0.0, %v6557
      %v6559 = vpop.f32.mrb[0].mxu0
      %v6560 = vadd.f32 0.0, %v6559
      %6561 = vdwg.mxu0
      %6564 = vrot.lane.b32.xlu0 %v6476, 17
      %v6565 = vpop.permute.xlu0 %6564
      %6566 = vrot.lane.b32.xlu0 %v6480, 17
      %v6567 = vpop.permute.xlu0 %6566
      %6572 = vrot.lane.b32.xlu0 %v6474, 17
      %v6573 = vpop.permute.xlu0 %6572
      %6574 = vrot.lane.b32.xlu0 %v6478, 17
      %v6575 = vpop.permute.xlu0 %6574
      %v6576 = vsel %vm661, %v6573, %v6565
      %v6577 = vsel %vm661, %v6575, %v6567
      %v6582 = vsel %vm661, %v6565, %v6573
      %v6583 = vsel %vm661, %v6567, %v6575
      %v6584 = vld [vmem:[%s11] sm:$0x3]
      %v6586 = vlaneseq
      %v6587 = vshrl.u32 %v6586, 7
      %v6588 = vsub.s32 0, %v6587
      %v6589 = vrot.slane %v6584, %v6588
      %v6590 = vlaneseq
      %v6591 = vshrl.u32 %v6590, 7
      %v6592 = vsub.s32 1, %v6591
      %v6593 = vrot.slane %v6584, %v6592
      %v6596 = vmul.f32 %v6582, %v6589
      %v6597 = vmul.f32 %v6576, %v6593
      %v6598 = vmul.f32 %v6583, %v6589
      %v6599 = vmul.f32 %v6577, %v6593
      %6602 = vrot.lane.b32.xlu0 %v6486, 16
      %v6603 = vpop.permute.xlu0 %6602
      %6604 = vrot.lane.b32.xlu0 %v6490, 16
      %v6605 = vpop.permute.xlu0 %6604
      %6610 = vrot.lane.b32.xlu0 %v6484, 16
      %v6611 = vpop.permute.xlu0 %6610
      %6612 = vrot.lane.b32.xlu0 %v6488, 16
      %v6613 = vpop.permute.xlu0 %6612
      %v6614 = vsel %vm496, %v6611, %v6603
      %v6615 = vsel %vm496, %v6613, %v6605
      %v6620 = vsel %vm496, %v6603, %v6611
      %v6621 = vsel %vm496, %v6605, %v6613
      %v6622 = vld [vmem:[%s708] sm:$0x3]
      %v6624 = vlaneseq
      %v6625 = vshrl.u32 %v6624, 7
      %v6626 = vsub.s32 0, %v6625
      %v6627 = vrot.slane %v6622, %v6626
      %v6628 = vlaneseq
      %v6629 = vshrl.u32 %v6628, 7
      %v6630 = vsub.s32 1, %v6629
      %v6631 = vrot.slane %v6622, %v6630
      %v6634 = vmul.f32 %v6620, %v6627
      %v6635 = vmul.f32 %v6614, %v6631
      %v6636 = vmul.f32 %v6621, %v6627
      %v6637 = vmul.f32 %v6615, %v6631
      %v6638 = vadd.f32 %v6596, %v6634
      %v6639 = vadd.f32 %v6597, %v6635
      %v6640 = vadd.f32 %v6598, %v6636
      %v6641 = vadd.f32 %v6599, %v6637
      %6644 = vrot.lane.b32.xlu0 %v6496, 15
      %v6645 = vpop.permute.xlu0 %6644
      %6646 = vrot.lane.b32.xlu0 %v6500, 15
      %v6647 = vpop.permute.xlu0 %6646
      %6652 = vrot.lane.b32.xlu0 %v6494, 15
      %v6653 = vpop.permute.xlu0 %6652
      %6654 = vrot.lane.b32.xlu0 %v6498, 15
      %v6655 = vpop.permute.xlu0 %6654
      %v6656 = vsel %vm743, %v6653, %v6645
      %v6657 = vsel %vm743, %v6655, %v6647
      %v6662 = vsel %vm743, %v6645, %v6653
      %v6663 = vsel %vm743, %v6647, %v6655
      %v6664 = vld [vmem:[%s752] sm:$0x3]
      %v6666 = vlaneseq
      %v6667 = vshrl.u32 %v6666, 7
      %v6668 = vsub.s32 0, %v6667
      %v6669 = vrot.slane %v6664, %v6668
      %v6670 = vlaneseq
      %v6671 = vshrl.u32 %v6670, 7
      %v6672 = vsub.s32 1, %v6671
      %v6673 = vrot.slane %v6664, %v6672
      %v6676 = vmul.f32 %v6662, %v6669
      %v6677 = vmul.f32 %v6656, %v6673
      %v6678 = vmul.f32 %v6663, %v6669
      %v6679 = vmul.f32 %v6657, %v6673
      %v6680 = vadd.f32 %v6638, %v6676
      %v6681 = vadd.f32 %v6639, %v6677
      %v6682 = vadd.f32 %v6640, %v6678
      %v6683 = vadd.f32 %v6641, %v6679
      %6686 = vrot.lane.b32.xlu0 %v6506, 1
      %v6687 = vpop.permute.xlu0 %6686
      %6688 = vrot.lane.b32.xlu0 %v6510, 1
      %v6689 = vpop.permute.xlu0 %6688
      %6694 = vrot.lane.b32.xlu0 %v6504, 1
      %v6695 = vpop.permute.xlu0 %6694
      %6696 = vrot.lane.b32.xlu0 %v6508, 1
      %v6697 = vpop.permute.xlu0 %6696
      %v6698 = vsel %vm787, %v6695, %v6687
      %v6699 = vsel %vm787, %v6697, %v6689
      %v6704 = vsel %vm787, %v6687, %v6695
      %v6705 = vsel %vm787, %v6689, %v6697
      %v6706 = vld [vmem:[%s796] sm:$0x3]
      %v6708 = vlaneseq
      %v6709 = vshrl.u32 %v6708, 7
      %v6710 = vsub.s32 0, %v6709
      %v6711 = vrot.slane %v6706, %v6710
      %v6712 = vlaneseq
      %v6713 = vshrl.u32 %v6712, 7
      %v6714 = vsub.s32 1, %v6713
      %v6715 = vrot.slane %v6706, %v6714
      %v6718 = vmul.f32 %v6704, %v6711
      %v6719 = vmul.f32 %v6698, %v6715
      %v6720 = vmul.f32 %v6705, %v6711
      %v6721 = vmul.f32 %v6699, %v6715
      %v6722 = vadd.f32 %v6680, %v6718
      %v6723 = vadd.f32 %v6681, %v6719
      %v6724 = vadd.f32 %v6682, %v6720
      %v6725 = vadd.f32 %v6683, %v6721
      %v6726 = vadd.f32 %v6722, %v6514
      %v6727 = vadd.f32 %v6723, %v6516
      %v6728 = vadd.f32 %v6724, %v6518
      %v6729 = vadd.f32 %v6725, %v6520
      %6734 = vrot.lane.b32.xlu0 %v6524, 127
      %v6735 = vpop.permute.xlu0 %6734
      %6736 = vrot.lane.b32.xlu0 %v6526, 127
      %v6737 = vpop.permute.xlu0 %6736
      %6738 = vrot.lane.b32.xlu0 %v6528, 127
      %v6739 = vpop.permute.xlu0 %6738
      %6740 = vrot.lane.b32.xlu0 %v6530, 127
      %v6741 = vpop.permute.xlu0 %6740
      %v6742 = vsel %vm833, %v6735, %v6737
      %v6743 = vsel %vm833, %v6739, %v6741
      %v6750 = vsel %vm833, %v6737, %v6735
      %v6751 = vsel %vm833, %v6741, %v6739
      %v6752 = vld [vmem:[%s844] sm:$0x3]
      %v6754 = vlaneseq
      %v6755 = vshrl.u32 %v6754, 7
      %v6756 = vsub.s32 0, %v6755
      %v6757 = vrot.slane %v6752, %v6756
      %v6758 = vlaneseq
      %v6759 = vshrl.u32 %v6758, 7
      %v6760 = vsub.s32 1, %v6759
      %v6761 = vrot.slane %v6752, %v6760
      %v6764 = vmul.f32 %v6742, %v6757
      %v6765 = vmul.f32 %v6750, %v6761
      %v6766 = vmul.f32 %v6743, %v6757
      %v6767 = vmul.f32 %v6751, %v6761
      %v6768 = vadd.f32 %v6726, %v6764
      %v6769 = vadd.f32 %v6727, %v6765
      %v6770 = vadd.f32 %v6728, %v6766
      %v6771 = vadd.f32 %v6729, %v6767
      %6776 = vrot.lane.b32.xlu0 %v6534, 113
      %v6777 = vpop.permute.xlu0 %6776
      %6778 = vrot.lane.b32.xlu0 %v6536, 113
      %v6779 = vpop.permute.xlu0 %6778
      %6780 = vrot.lane.b32.xlu0 %v6538, 113
      %v6781 = vpop.permute.xlu0 %6780
      %6782 = vrot.lane.b32.xlu0 %v6540, 113
      %v6783 = vpop.permute.xlu0 %6782
      %v6784 = vsel %vm877, %v6777, %v6779
      %v6785 = vsel %vm877, %v6781, %v6783
      %v6792 = vsel %vm877, %v6779, %v6777
      %v6793 = vsel %vm877, %v6783, %v6781
      %v6794 = vld [vmem:[%s888] sm:$0x3]
      %v6796 = vlaneseq
      %v6797 = vshrl.u32 %v6796, 7
      %v6798 = vsub.s32 0, %v6797
      %v6799 = vrot.slane %v6794, %v6798
      %v6800 = vlaneseq
      %v6801 = vshrl.u32 %v6800, 7
      %v6802 = vsub.s32 1, %v6801
      %v6803 = vrot.slane %v6794, %v6802
      %v6806 = vmul.f32 %v6784, %v6799
      %v6807 = vmul.f32 %v6792, %v6803
      %v6808 = vmul.f32 %v6785, %v6799
      %v6809 = vmul.f32 %v6793, %v6803
      %v6810 = vadd.f32 %v6768, %v6806
      %v6811 = vadd.f32 %v6769, %v6807
      %v6812 = vadd.f32 %v6770, %v6808
      %v6813 = vadd.f32 %v6771, %v6809
      %6818 = vrot.lane.b32.xlu0 %v6544, 112
      %v6819 = vpop.permute.xlu0 %6818
      %6820 = vrot.lane.b32.xlu0 %v6546, 112
      %v6821 = vpop.permute.xlu0 %6820
      %6822 = vrot.lane.b32.xlu0 %v6548, 112
      %v6823 = vpop.permute.xlu0 %6822
      %6824 = vrot.lane.b32.xlu0 %v6550, 112
      %v6825 = vpop.permute.xlu0 %6824
      %v6826 = vsel %vm921, %v6819, %v6821
      %v6827 = vsel %vm921, %v6823, %v6825
      %v6834 = vsel %vm921, %v6821, %v6819
      %v6835 = vsel %vm921, %v6825, %v6823
      %v6836 = vld [vmem:[%s932] sm:$0x3]
      %v6838 = vlaneseq
      %v6839 = vshrl.u32 %v6838, 7
      %v6840 = vsub.s32 0, %v6839
      %v6841 = vrot.slane %v6836, %v6840
      %v6842 = vlaneseq
      %v6843 = vshrl.u32 %v6842, 7
      %v6844 = vsub.s32 1, %v6843
      %v6845 = vrot.slane %v6836, %v6844
      %v6848 = vmul.f32 %v6826, %v6841
      %v6849 = vmul.f32 %v6834, %v6845
      %v6850 = vmul.f32 %v6827, %v6841
      %v6851 = vmul.f32 %v6835, %v6845
      %v6852 = vadd.f32 %v6810, %v6848
      %v6853 = vadd.f32 %v6811, %v6849
      %v6854 = vadd.f32 %v6812, %v6850
      %v6855 = vadd.f32 %v6813, %v6851
      %6860 = vrot.lane.b32.xlu0 %v6554, 111
      %v6861 = vpop.permute.xlu0 %6860
      %6862 = vrot.lane.b32.xlu0 %v6556, 111
      %v6863 = vpop.permute.xlu0 %6862
      %6864 = vrot.lane.b32.xlu0 %v6558, 111
      %v6865 = vpop.permute.xlu0 %6864
      %6866 = vrot.lane.b32.xlu0 %v6560, 111
      %v6867 = vpop.permute.xlu0 %6866
      %v6868 = vsel %vm965, %v6861, %v6863
      %v6869 = vsel %vm965, %v6865, %v6867
      %v6876 = vsel %vm965, %v6863, %v6861
      %v6877 = vsel %vm965, %v6867, %v6865
      %v6878 = vld [vmem:[%s976] sm:$0x3]
      %v6880 = vlaneseq
      %v6881 = vshrl.u32 %v6880, 7
      %v6882 = vsub.s32 0, %v6881
      %v6883 = vrot.slane %v6878, %v6882
      %v6884 = vlaneseq
      %v6885 = vshrl.u32 %v6884, 7
      %v6886 = vsub.s32 1, %v6885
      %v6887 = vrot.slane %v6878, %v6886
      %v6890 = vmul.f32 %v6868, %v6883
      %v6891 = vmul.f32 %v6876, %v6887
      %v6892 = vmul.f32 %v6869, %v6883
      %v6893 = vmul.f32 %v6877, %v6887
      %v6894 = vadd.f32 %v6852, %v6890
      %v6895 = vadd.f32 %v6853, %v6891
      %v6896 = vadd.f32 %v6854, %v6892
      %v6897 = vadd.f32 %v6855, %v6893
      %s6898 = scalar_lea.vmem %s6, 32
      %v6899 = vld [vmem:[%s6898] sm:$0xff]
      %v6900 = vld [vmem:[%s6898 + $0x8] sm:$0xff]
      %6902 = vset.pattern.permute.xlu0 0
      %6903 = vperm.xlu0 %6902, %v6899
      %v6904 = vpop.permute.xlu0 %6903
      %6907 = vset.pattern.permute.xlu0 0
      %6908 = vperm.xlu0 %6907, %v6900
      %v6909 = vpop.permute.xlu0 %6908
      %v6911 = vadd.f32 %v6894, %v6904
      %v6912 = vadd.f32 %v6895, %v6904
      %v6913 = vadd.f32 %v6896, %v6909
      %v6914 = vadd.f32 %v6897, %v6909
      %vm6915 = vcmp.gt.f32.partialorder %v6911, 0.0
      %vm6916 = vcmp.gt.f32.partialorder %v6912, 0.0
      %vm6917 = vcmp.gt.f32.partialorder %v6913, 0.0
      %vm6918 = vcmp.gt.f32.partialorder %v6914, 0.0
      %v6919 = vmul.f32 %v6911, 0.2
      %v6920 = vmul.f32 %v6912, 0.2
      %v6921 = vmul.f32 %v6913, 0.2
      %v6922 = vmul.f32 %v6914, 0.2
      %v6923 = vsel %vm6915, %v6911, %v6919
      %v6924 = vsel %vm6916, %v6912, %v6920
      %v6925 = vsel %vm6917, %v6913, %v6921
      %v6926 = vsel %vm6918, %v6914, %v6922
      %v6927 = vpack.c.bf16 %v6925, %v6923
      %v6928 = vpack.c.bf16 %v6926, %v6924
      %6929 = vst [vmem:[#allocation2 + $0x10] sm:$0xff] %v6927
      %6930 = vst [vmem:[#allocation2 + $0x18] sm:$0xff] %v6928
      %s6931 = scalar_lea.vmem %s2, 144
      %v6932 = vld [vmem:[%s6931] sm:$0xf]
      %v6933 = vld [vmem:[%s6931 + $0x4] sm:$0xf]
      %v6934 = vld [vmem:[%s6931 + $0x8] sm:$0xf]
      %v6935 = vld [vmem:[%s6931 + $0xc] sm:$0xf]
      %v6936 = vld [vmem:[%s6931 + $0x10] sm:$0xf]
      %v6937 = vld [vmem:[%s6931 + $0x14] sm:$0xf]
      %v6938 = vld [vmem:[%s6931 + $0x18] sm:$0xf]
      %v6939 = vld [vmem:[%s6931 + $0x1c] sm:$0xf]
      %v6940 = vld [vmem:[%s6931 + $0x20] sm:$0xf]
      %v6941 = vld [vmem:[%s6931 + $0x24] sm:$0xf]
      %v6942 = vld [vmem:[%s6931 + $0x28] sm:$0xf]
      %v6943 = vld [vmem:[%s6931 + $0x2c] sm:$0xf]
      %v6944 = vld [vmem:[%s6931 + $0x30] sm:$0xf]
      %v6945 = vld [vmem:[%s6931 + $0x34] sm:$0xf]
      %v6946 = vld [vmem:[%s6931 + $0x38] sm:$0xf]
      %v6947 = vld [vmem:[%s6931 + $0x3c] sm:$0xf]
      %v6948 = vld [vmem:[%s6931 + $0x40] sm:$0xf]
      %v6949 = vld [vmem:[%s6931 + $0x44] sm:$0xf]
      %v6950 = vld [vmem:[#allocation2] sm:$0xff]
      %v6951 = vld [vmem:[#allocation2 + $0x8] sm:$0xff]
      %v6952 = vld [vmem:[#allocation2 + $0x10] sm:$0xff]
      %v6953 = vld [vmem:[#allocation2 + $0x18] sm:$0xff]
      %v6972 = vunpack.c.l.b16 %v6932
      %v6973 = vunpack.c.l.b16 %v6933
      %v6974 = vunpack.c.l.b16 %v6934
      %v6975 = vunpack.c.l.b16 %v6935
      %v6976 = vunpack.c.l.b16 %v6936
      %v6977 = vunpack.c.l.b16 %v6937
      %v6978 = vunpack.c.l.b16 %v6938
      %v6979 = vunpack.c.l.b16 %v6939
      %v6980 = vunpack.c.l.b16 %v6940
      %v6981 = vunpack.c.l.b16 %v6941
      %v6982 = vunpack.c.l.b16 %v6942
      %v6983 = vunpack.c.l.b16 %v6943
      %v6984 = vunpack.c.l.b16 %v6944
      %v6985 = vunpack.c.l.b16 %v6945
      %v6986 = vunpack.c.l.b16 %v6946
      %v6987 = vunpack.c.l.b16 %v6947
      %v6988 = vunpack.c.l.b16 %v6948
      %v6989 = vunpack.c.l.b16 %v6949
      %v6990 = vpack.c.b16 %v6973, %v6972
      %v6991 = vpack.c.b16 %v6975, %v6974
      %v6992 = vpack.c.b16 %v6977, %v6976
      %v6993 = vpack.c.b16 %v6979, %v6978
      %v6994 = vpack.c.b16 %v6981, %v6980
      %v6995 = vpack.c.b16 %v6983, %v6982
      %v6996 = vpack.c.b16 %v6985, %v6984
      %v6997 = vpack.c.b16 %v6987, %v6986
      %v6998 = vpack.c.b16 %v6989, %v6988
      %v7000 = vsel %vm1096, %v6990, 0
      %v7003 = vsel %vm1096, %v6991, 0
      %v7006 = vsel %vm1096, %v6992, 0
      %v7009 = vsel %vm1096, %v6993, 0
      %v7012 = vsel %vm1096, %v6994, 0
      %v7015 = vsel %vm1096, %v6995, 0
      %v7018 = vsel %vm1096, %v6996, 0
      %v7021 = vsel %vm1096, %v6997, 0
      %v7024 = vsel %vm1096, %v6998, 0
      %7026 = vmatprep.subr.bf16.mxu0 %v6951
      %7027 = vmatpush1.bf16.msra.mxu0 %v6950
      %7028 = vmatprep.subr.bf16.mxu0 %v6953
      %7029 = vmatpush1.bf16.msra.mxu0 %v6952
      %7030 = vmatprep.subr.bf16.mxu0 0
      %7031 = vmatpush1.bf16.msra.mxu0 0
      %7032 = vmatprep.subr.bf16.mxu0 0
      %7033 = vmatpush1.bf16.msra.mxu0 0
      %7034 = vmatprep.subr.bf16.mxu0 0
      %7035 = vmatpush1.bf16.msra.mxu0 0
      %7036 = vmatprep.subr.bf16.mxu0 0
      %7037 = vmatpush1.bf16.msra.mxu0 0
      %7038 = vmatprep.subr.bf16.mxu0 0
      %7039 = vmatpush1.bf16.msra.mxu0 0
      %7040 = vmatprep.subr.bf16.mxu0 0
      %7041 = vmatpush1.bf16.msra.mxu0 0
      %7042 = vmatprep.subr.bf16.mxu0 0
      %7043 = vmatpush1.bf16.msra.mxu0 0
      %7044 = vmatprep.subr.bf16.mxu0 0
      %7045 = vmatpush1.bf16.msra.mxu0 0
      %7046 = vmatprep.subr.bf16.mxu0 0
      %7047 = vmatpush1.bf16.msra.mxu0 0
      %7048 = vmatprep.subr.bf16.mxu0 0
      %7049 = vmatpush1.bf16.msra.mxu0 0
      %7050 = vmatprep.subr.bf16.mxu0 0
      %7051 = vmatpush1.bf16.msra.mxu0 0
      %7052 = vmatprep.subr.bf16.mxu0 0
      %7053 = vmatpush1.bf16.msra.mxu0 0
      %7054 = vmatprep.subr.bf16.mxu0 0
      %7055 = vmatpush1.bf16.msra.mxu0 0
      %7056 = vmatprep.subr.bf16.mxu0 0
      %7057 = vmatpush1.bf16.msra.mxu0 0
      %7058 = vmatprep.mubr.bf16.mxu0 0
      %7059 = vmatmul.mubr.bf16.gmra.mrb[0].mxu0 %v7000
      %v7060 = vpop.f32.mrb[0].mxu0
      %v7061 = vadd.f32 0.0, %v7060
      %v7062 = vpop.f32.mrb[0].mxu0
      %v7063 = vadd.f32 0.0, %v7062
      %v7064 = vpop.f32.mrb[0].mxu0
      %v7065 = vadd.f32 0.0, %v7064
      %v7066 = vpop.f32.mrb[0].mxu0
      %v7067 = vadd.f32 0.0, %v7066
      %7068 = vmatprep.mubr.bf16.mxu0 0
      %7069 = vmatmul.mubr.bf16.gmra.mrb[0].mxu0 %v7003
      %v7070 = vpop.f32.mrb[0].mxu0
      %v7071 = vadd.f32 0.0, %v7070
      %v7072 = vpop.f32.mrb[0].mxu0
      %v7073 = vadd.f32 0.0, %v7072
      %v7074 = vpop.f32.mrb[0].mxu0
      %v7075 = vadd.f32 0.0, %v7074
      %v7076 = vpop.f32.mrb[0].mxu0
      %v7077 = vadd.f32 0.0, %v7076
      %7078 = vmatprep.mubr.bf16.mxu0 0
      %7079 = vmatmul.mubr.bf16.gmra.mrb[0].mxu0 %v7006
      %v7080 = vpop.f32.mrb[0].mxu0
      %v7081 = vadd.f32 0.0, %v7080
      %v7082 = vpop.f32.mrb[0].mxu0
      %v7083 = vadd.f32 0.0, %v7082
      %v7084 = vpop.f32.mrb[0].mxu0
      %v7085 = vadd.f32 0.0, %v7084
      %v7086 = vpop.f32.mrb[0].mxu0
      %v7087 = vadd.f32 0.0, %v7086
      %7088 = vmatprep.mubr.bf16.mxu0 0
      %7089 = vmatmul.mubr.bf16.gmra.mrb[0].mxu0 %v7009
      %v7090 = vpop.f32.mrb[0].mxu0
      %v7091 = vadd.f32 0.0, %v7090
      %v7092 = vpop.f32.mrb[0].mxu0
      %v7093 = vadd.f32 0.0, %v7092
      %v7094 = vpop.f32.mrb[0].mxu0
      %v7095 = vadd.f32 0.0, %v7094
      %v7096 = vpop.f32.mrb[0].mxu0
      %v7097 = vadd.f32 0.0, %v7096
      %7098 = vmatprep.mubr.bf16.mxu0 0
      %7099 = vmatmul.mubr.bf16.gmra.mrb[0].mxu0 %v7012
      %v7100 = vpop.f32.mrb[0].mxu0
      %v7101 = vadd.f32 0.0, %v7100
      %v7102 = vpop.f32.mrb[0].mxu0
      %v7103 = vadd.f32 0.0, %v7102
      %v7104 = vpop.f32.mrb[0].mxu0
      %v7105 = vadd.f32 0.0, %v7104
      %v7106 = vpop.f32.mrb[0].mxu0
      %v7107 = vadd.f32 0.0, %v7106
      %7108 = vmatprep.mubr.bf16.mxu0 0
      %7109 = vmatmul.mubr.bf16.gmra.mrb[0].mxu0 %v7015
      %v7110 = vpop.f32.mrb[0].mxu0
      %v7111 = vadd.f32 0.0, %v7110
      %v7112 = vpop.f32.mrb[0].mxu0
      %v7113 = vadd.f32 0.0, %v7112
      %v7114 = vpop.f32.mrb[0].mxu0
      %v7115 = vadd.f32 0.0, %v7114
      %v7116 = vpop.f32.mrb[0].mxu0
      %v7117 = vadd.f32 0.0, %v7116
      %7118 = vmatprep.mubr.bf16.mxu0 0
      %7119 = vmatmul.mubr.bf16.gmra.mrb[0].mxu0 %v7018
      %v7120 = vpop.f32.mrb[0].mxu0
      %v7121 = vadd.f32 0.0, %v7120
      %v7122 = vpop.f32.mrb[0].mxu0
      %v7123 = vadd.f32 0.0, %v7122
      %v7124 = vpop.f32.mrb[0].mxu0
      %v7125 = vadd.f32 0.0, %v7124
      %v7126 = vpop.f32.mrb[0].mxu0
      %v7127 = vadd.f32 0.0, %v7126
      %7128 = vmatprep.mubr.bf16.mxu0 0
      %7129 = vmatmul.mubr.bf16.gmra.mrb[0].mxu0 %v7021
      %v7130 = vpop.f32.mrb[0].mxu0
      %v7131 = vadd.f32 0.0, %v7130
      %v7132 = vpop.f32.mrb[0].mxu0
      %v7133 = vadd.f32 0.0, %v7132
      %v7134 = vpop.f32.mrb[0].mxu0
      %v7135 = vadd.f32 0.0, %v7134
      %v7136 = vpop.f32.mrb[0].mxu0
      %v7137 = vadd.f32 0.0, %v7136
      %7138 = vmatprep.mubr.bf16.mxu0 0
      %7139 = vmatmul.mubr.bf16.gmra.mrb[0].mxu0 %v7024
      %v7140 = vpop.f32.mrb[0].mxu0
      %v7141 = vadd.f32 0.0, %v7140
      %v7142 = vpop.f32.mrb[0].mxu0
      %v7143 = vadd.f32 0.0, %v7142
      %v7144 = vpop.f32.mrb[0].mxu0
      %v7145 = vadd.f32 0.0, %v7144
      %v7146 = vpop.f32.mrb[0].mxu0
      %v7147 = vadd.f32 0.0, %v7146
      %7148 = vdwg.mxu0
      %7151 = vrot.lane.b32.xlu0 %v7063, 17
      %v7152 = vpop.permute.xlu0 %7151
      %7153 = vrot.lane.b32.xlu0 %v7067, 17
      %v7154 = vpop.permute.xlu0 %7153
      %7159 = vrot.lane.b32.xlu0 %v7061, 17
      %v7160 = vpop.permute.xlu0 %7159
      %7161 = vrot.lane.b32.xlu0 %v7065, 17
      %v7162 = vpop.permute.xlu0 %7161
      %v7163 = vsel %vm661, %v7160, %v7152
      %v7164 = vsel %vm661, %v7162, %v7154
      %v7169 = vsel %vm661, %v7152, %v7160
      %v7170 = vsel %vm661, %v7154, %v7162
      %v7171 = vld [vmem:[%s11] sm:$0x3]
      %v7173 = vlaneseq
      %v7174 = vshrl.u32 %v7173, 7
      %v7175 = vsub.s32 0, %v7174
      %v7176 = vrot.slane %v7171, %v7175
      %v7177 = vlaneseq
      %v7178 = vshrl.u32 %v7177, 7
      %v7179 = vsub.s32 1, %v7178
      %v7180 = vrot.slane %v7171, %v7179
      %v7183 = vmul.f32 %v7169, %v7176
      %v7184 = vmul.f32 %v7163, %v7180
      %v7185 = vmul.f32 %v7170, %v7176
      %v7186 = vmul.f32 %v7164, %v7180
      %7189 = vrot.lane.b32.xlu0 %v7073, 16
      %v7190 = vpop.permute.xlu0 %7189
      %7191 = vrot.lane.b32.xlu0 %v7077, 16
      %v7192 = vpop.permute.xlu0 %7191
      %7197 = vrot.lane.b32.xlu0 %v7071, 16
      %v7198 = vpop.permute.xlu0 %7197
      %7199 = vrot.lane.b32.xlu0 %v7075, 16
      %v7200 = vpop.permute.xlu0 %7199
      %v7201 = vsel %vm496, %v7198, %v7190
      %v7202 = vsel %vm496, %v7200, %v7192
      %v7207 = vsel %vm496, %v7190, %v7198
      %v7208 = vsel %vm496, %v7192, %v7200
      %v7209 = vld [vmem:[%s708] sm:$0x3]
      %v7211 = vlaneseq
      %v7212 = vshrl.u32 %v7211, 7
      %v7213 = vsub.s32 0, %v7212
      %v7214 = vrot.slane %v7209, %v7213
      %v7215 = vlaneseq
      %v7216 = vshrl.u32 %v7215, 7
      %v7217 = vsub.s32 1, %v7216
      %v7218 = vrot.slane %v7209, %v7217
      %v7221 = vmul.f32 %v7207, %v7214
      %v7222 = vmul.f32 %v7201, %v7218
      %v7223 = vmul.f32 %v7208, %v7214
      %v7224 = vmul.f32 %v7202, %v7218
      %v7225 = vadd.f32 %v7183, %v7221
      %v7226 = vadd.f32 %v7184, %v7222
      %v7227 = vadd.f32 %v7185, %v7223
      %v7228 = vadd.f32 %v7186, %v7224
      %7231 = vrot.lane.b32.xlu0 %v7083, 15
      %v7232 = vpop.permute.xlu0 %7231
      %7233 = vrot.lane.b32.xlu0 %v7087, 15
      %v7234 = vpop.permute.xlu0 %7233
      %7239 = vrot.lane.b32.xlu0 %v7081, 15
      %v7240 = vpop.permute.xlu0 %7239
      %7241 = vrot.lane.b32.xlu0 %v7085, 15
      %v7242 = vpop.permute.xlu0 %7241
      %v7243 = vsel %vm743, %v7240, %v7232
      %v7244 = vsel %vm743, %v7242, %v7234
      %v7249 = vsel %vm743, %v7232, %v7240
      %v7250 = vsel %vm743, %v7234, %v7242
      %v7251 = vld [vmem:[%s752] sm:$0x3]
      %v7253 = vlaneseq
      %v7254 = vshrl.u32 %v7253, 7
      %v7255 = vsub.s32 0, %v7254
      %v7256 = vrot.slane %v7251, %v7255
      %v7257 = vlaneseq
      %v7258 = vshrl.u32 %v7257, 7
      %v7259 = vsub.s32 1, %v7258
      %v7260 = vrot.slane %v7251, %v7259
      %v7263 = vmul.f32 %v7249, %v7256
      %v7264 = vmul.f32 %v7243, %v7260
      %v7265 = vmul.f32 %v7250, %v7256
      %v7266 = vmul.f32 %v7244, %v7260
      %v7267 = vadd.f32 %v7225, %v7263
      %v7268 = vadd.f32 %v7226, %v7264
      %v7269 = vadd.f32 %v7227, %v7265
      %v7270 = vadd.f32 %v7228, %v7266
      %7273 = vrot.lane.b32.xlu0 %v7093, 1
      %v7274 = vpop.permute.xlu0 %7273
      %7275 = vrot.lane.b32.xlu0 %v7097, 1
      %v7276 = vpop.permute.xlu0 %7275
      %7281 = vrot.lane.b32.xlu0 %v7091, 1
      %v7282 = vpop.permute.xlu0 %7281
      %7283 = vrot.lane.b32.xlu0 %v7095, 1
      %v7284 = vpop.permute.xlu0 %7283
      %v7285 = vsel %vm787, %v7282, %v7274
      %v7286 = vsel %vm787, %v7284, %v7276
      %v7291 = vsel %vm787, %v7274, %v7282
      %v7292 = vsel %vm787, %v7276, %v7284
      %v7293 = vld [vmem:[%s796] sm:$0x3]
      %v7295 = vlaneseq
      %v7296 = vshrl.u32 %v7295, 7
      %v7297 = vsub.s32 0, %v7296
      %v7298 = vrot.slane %v7293, %v7297
      %v7299 = vlaneseq
      %v7300 = vshrl.u32 %v7299, 7
      %v7301 = vsub.s32 1, %v7300
      %v7302 = vrot.slane %v7293, %v7301
      %v7305 = vmul.f32 %v7291, %v7298
      %v7306 = vmul.f32 %v7285, %v7302
      %v7307 = vmul.f32 %v7292, %v7298
      %v7308 = vmul.f32 %v7286, %v7302
      %v7309 = vadd.f32 %v7267, %v7305
      %v7310 = vadd.f32 %v7268, %v7306
      %v7311 = vadd.f32 %v7269, %v7307
      %v7312 = vadd.f32 %v7270, %v7308
      %v7313 = vadd.f32 %v7309, %v7101
      %v7314 = vadd.f32 %v7310, %v7103
      %v7315 = vadd.f32 %v7311, %v7105
      %v7316 = vadd.f32 %v7312, %v7107
      %7321 = vrot.lane.b32.xlu0 %v7111, 127
      %v7322 = vpop.permute.xlu0 %7321
      %7323 = vrot.lane.b32.xlu0 %v7113, 127
      %v7324 = vpop.permute.xlu0 %7323
      %7325 = vrot.lane.b32.xlu0 %v7115, 127
      %v7326 = vpop.permute.xlu0 %7325
      %7327 = vrot.lane.b32.xlu0 %v7117, 127
      %v7328 = vpop.permute.xlu0 %7327
      %v7329 = vsel %vm833, %v7322, %v7324
      %v7330 = vsel %vm833, %v7326, %v7328
      %v7337 = vsel %vm833, %v7324, %v7322
      %v7338 = vsel %vm833, %v7328, %v7326
      %v7339 = vld [vmem:[%s844] sm:$0x3]
      %v7341 = vlaneseq
      %v7342 = vshrl.u32 %v7341, 7
      %v7343 = vsub.s32 0, %v7342
      %v7344 = vrot.slane %v7339, %v7343
      %v7345 = vlaneseq
      %v7346 = vshrl.u32 %v7345, 7
      %v7347 = vsub.s32 1, %v7346
      %v7348 = vrot.slane %v7339, %v7347
      %v7351 = vmul.f32 %v7329, %v7344
      %v7352 = vmul.f32 %v7337, %v7348
      %v7353 = vmul.f32 %v7330, %v7344
      %v7354 = vmul.f32 %v7338, %v7348
      %v7355 = vadd.f32 %v7313, %v7351
      %v7356 = vadd.f32 %v7314, %v7352
      %v7357 = vadd.f32 %v7315, %v7353
      %v7358 = vadd.f32 %v7316, %v7354
      %7363 = vrot.lane.b32.xlu0 %v7121, 113
      %v7364 = vpop.permute.xlu0 %7363
      %7365 = vrot.lane.b32.xlu0 %v7123, 113
      %v7366 = vpop.permute.xlu0 %7365
      %7367 = vrot.lane.b32.xlu0 %v7125, 113
      %v7368 = vpop.permute.xlu0 %7367
      %7369 = vrot.lane.b32.xlu0 %v7127, 113
      %v7370 = vpop.permute.xlu0 %7369
      %v7371 = vsel %vm877, %v7364, %v7366
      %v7372 = vsel %vm877, %v7368, %v7370
      %v7379 = vsel %vm877, %v7366, %v7364
      %v7380 = vsel %vm877, %v7370, %v7368
      %v7381 = vld [vmem:[%s888] sm:$0x3]
      %v7383 = vlaneseq
      %v7384 = vshrl.u32 %v7383, 7
      %v7385 = vsub.s32 0, %v7384
      %v7386 = vrot.slane %v7381, %v7385
      %v7387 = vlaneseq
      %v7388 = vshrl.u32 %v7387, 7
      %v7389 = vsub.s32 1, %v7388
      %v7390 = vrot.slane %v7381, %v7389
      %v7393 = vmul.f32 %v7371, %v7386
      %v7394 = vmul.f32 %v7379, %v7390
      %v7395 = vmul.f32 %v7372, %v7386
      %v7396 = vmul.f32 %v7380, %v7390
      %v7397 = vadd.f32 %v7355, %v7393
      %v7398 = vadd.f32 %v7356, %v7394
      %v7399 = vadd.f32 %v7357, %v7395
      %v7400 = vadd.f32 %v7358, %v7396
      %7405 = vrot.lane.b32.xlu0 %v7131, 112
      %v7406 = vpop.permute.xlu0 %7405
      %7407 = vrot.lane.b32.xlu0 %v7133, 112
      %v7408 = vpop.permute.xlu0 %7407
      %7409 = vrot.lane.b32.xlu0 %v7135, 112
      %v7410 = vpop.permute.xlu0 %7409
      %7411 = vrot.lane.b32.xlu0 %v7137, 112
      %v7412 = vpop.permute.xlu0 %7411
      %v7413 = vsel %vm921, %v7406, %v7408
      %v7414 = vsel %vm921, %v7410, %v7412
      %v7421 = vsel %vm921, %v7408, %v7406
      %v7422 = vsel %vm921, %v7412, %v7410
      %v7423 = vld [vmem:[%s932] sm:$0x3]
      %v7425 = vlaneseq
      %v7426 = vshrl.u32 %v7425, 7
      %v7427 = vsub.s32 0, %v7426
      %v7428 = vrot.slane %v7423, %v7427
      %v7429 = vlaneseq
      %v7430 = vshrl.u32 %v7429, 7
      %v7431 = vsub.s32 1, %v7430
      %v7432 = vrot.slane %v7423, %v7431
      %v7435 = vmul.f32 %v7413, %v7428
      %v7436 = vmul.f32 %v7421, %v7432
      %v7437 = vmul.f32 %v7414, %v7428
      %v7438 = vmul.f32 %v7422, %v7432
      %v7439 = vadd.f32 %v7397, %v7435
      %v7440 = vadd.f32 %v7398, %v7436
      %v7441 = vadd.f32 %v7399, %v7437
      %v7442 = vadd.f32 %v7400, %v7438
      %7447 = vrot.lane.b32.xlu0 %v7141, 111
      %v7448 = vpop.permute.xlu0 %7447
      %7449 = vrot.lane.b32.xlu0 %v7143, 111
      %v7450 = vpop.permute.xlu0 %7449
      %7451 = vrot.lane.b32.xlu0 %v7145, 111
      %v7452 = vpop.permute.xlu0 %7451
      %7453 = vrot.lane.b32.xlu0 %v7147, 111
      %v7454 = vpop.permute.xlu0 %7453
      %v7455 = vsel %vm965, %v7448, %v7450
      %v7456 = vsel %vm965, %v7452, %v7454
      %v7463 = vsel %vm965, %v7450, %v7448
      %v7464 = vsel %vm965, %v7454, %v7452
      %v7465 = vld [vmem:[%s976] sm:$0x3]
      %v7467 = vlaneseq
      %v7468 = vshrl.u32 %v7467, 7
      %v7469 = vsub.s32 0, %v7468
      %v7470 = vrot.slane %v7465, %v7469
      %v7471 = vlaneseq
      %v7472 = vshrl.u32 %v7471, 7
      %v7473 = vsub.s32 1, %v7472
      %v7474 = vrot.slane %v7465, %v7473
      %v7477 = vmul.f32 %v7455, %v7470
      %v7478 = vmul.f32 %v7463, %v7474
      %v7479 = vmul.f32 %v7456, %v7470
      %v7480 = vmul.f32 %v7464, %v7474
      %v7481 = vadd.f32 %v7439, %v7477
      %v7482 = vadd.f32 %v7440, %v7478
      %v7483 = vadd.f32 %v7441, %v7479
      %v7484 = vadd.f32 %v7442, %v7480
      %s7485 = scalar_lea.vmem %s7, 32
      %v7486 = vld [vmem:[%s7485] sm:$0xff]
      %v7487 = vld [vmem:[%s7485 + $0x8] sm:$0xff]
      %7489 = vset.pattern.permute.xlu0 0
      %7490 = vperm.xlu0 %7489, %v7486
      %v7491 = vpop.permute.xlu0 %7490
      %7494 = vset.pattern.permute.xlu0 0
      %7495 = vperm.xlu0 %7494, %v7487
      %v7496 = vpop.permute.xlu0 %7495
      %v7498 = vadd.f32 %v7481, %v7491
      %v7499 = vadd.f32 %v7482, %v7491
      %v7500 = vadd.f32 %v7483, %v7496
      %v7501 = vadd.f32 %v7484, %v7496
      %vm7502 = vcmp.gt.f32.partialorder %v7498, 0.0
      %vm7503 = vcmp.gt.f32.partialorder %v7499, 0.0
      %vm7504 = vcmp.gt.f32.partialorder %v7500, 0.0
      %vm7505 = vcmp.gt.f32.partialorder %v7501, 0.0
      %v7506 = vmul.f32 %v7498, 0.2
      %v7507 = vmul.f32 %v7499, 0.2
      %v7508 = vmul.f32 %v7500, 0.2
      %v7509 = vmul.f32 %v7501, 0.2
      %v7510 = vsel %vm7502, %v7498, %v7506
      %v7511 = vsel %vm7503, %v7499, %v7507
      %v7512 = vsel %vm7504, %v7500, %v7508
      %v7513 = vsel %vm7505, %v7501, %v7509
      %v7514 = vpack.c.bf16 %v7512, %v7510
      %v7515 = vpack.c.bf16 %v7513, %v7511
      %7516 = vst [vmem:[#allocation2 + $0x20] sm:$0xff] %v7514
      %7517 = vst [vmem:[#allocation2 + $0x28] sm:$0xff] %v7515
      %s7518 = scalar_lea.vmem %s3, 144
      %v7519 = vld [vmem:[%s7518] sm:$0xf]
      %v7520 = vld [vmem:[%s7518 + $0x4] sm:$0xf]
      %v7521 = vld [vmem:[%s7518 + $0x8] sm:$0xf]
      %v7522 = vld [vmem:[%s7518 + $0xc] sm:$0xf]
      %v7523 = vld [vmem:[%s7518 + $0x10] sm:$0xf]
      %v7524 = vld [vmem:[%s7518 + $0x14] sm:$0xf]
      %v7525 = vld [vmem:[%s7518 + $0x18] sm:$0xf]
      %v7526 = vld [vmem:[%s7518 + $0x1c] sm:$0xf]
      %v7527 = vld [vmem:[%s7518 + $0x20] sm:$0xf]
      %v7528 = vld [vmem:[%s7518 + $0x24] sm:$0xf]
      %v7529 = vld [vmem:[%s7518 + $0x28] sm:$0xf]
      %v7530 = vld [vmem:[%s7518 + $0x2c] sm:$0xf]
      %v7531 = vld [vmem:[%s7518 + $0x30] sm:$0xf]
      %v7532 = vld [vmem:[%s7518 + $0x34] sm:$0xf]
      %v7533 = vld [vmem:[%s7518 + $0x38] sm:$0xf]
      %v7534 = vld [vmem:[%s7518 + $0x3c] sm:$0xf]
      %v7535 = vld [vmem:[%s7518 + $0x40] sm:$0xf]
      %v7536 = vld [vmem:[%s7518 + $0x44] sm:$0xf]
      %v7537 = vld [vmem:[#allocation2] sm:$0xff]
      %v7538 = vld [vmem:[#allocation2 + $0x8] sm:$0xff]
      %v7539 = vld [vmem:[#allocation2 + $0x10] sm:$0xff]
      %v7540 = vld [vmem:[#allocation2 + $0x18] sm:$0xff]
      %v7541 = vld [vmem:[#allocation2 + $0x20] sm:$0xff]
      %v7542 = vld [vmem:[#allocation2 + $0x28] sm:$0xff]
      %v7561 = vunpack.c.l.b16 %v7519
      %v7562 = vunpack.c.l.b16 %v7520
      %v7563 = vunpack.c.l.b16 %v7521
      %v7564 = vunpack.c.l.b16 %v7522
      %v7565 = vunpack.c.l.b16 %v7523
      %v7566 = vunpack.c.l.b16 %v7524
      %v7567 = vunpack.c.l.b16 %v7525
      %v7568 = vunpack.c.l.b16 %v7526
      %v7569 = vunpack.c.l.b16 %v7527
      %v7570 = vunpack.c.l.b16 %v7528
      %v7571 = vunpack.c.l.b16 %v7529
      %v7572 = vunpack.c.l.b16 %v7530
      %v7573 = vunpack.c.l.b16 %v7531
      %v7574 = vunpack.c.l.b16 %v7532
      %v7575 = vunpack.c.l.b16 %v7533
      %v7576 = vunpack.c.l.b16 %v7534
      %v7577 = vunpack.c.l.b16 %v7535
      %v7578 = vunpack.c.l.b16 %v7536
      %v7579 = vpack.c.b16 %v7562, %v7561
      %v7580 = vpack.c.b16 %v7564, %v7563
      %v7581 = vpack.c.b16 %v7566, %v7565
      %v7582 = vpack.c.b16 %v7568, %v7567
      %v7583 = vpack.c.b16 %v7570, %v7569
      %v7584 = vpack.c.b16 %v7572, %v7571
      %v7585 = vpack.c.b16 %v7574, %v7573
      %v7586 = vpack.c.b16 %v7576, %v7575
      %v7587 = vpack.c.b16 %v7578, %v7577
      %v7589 = vsel %vm1684, %v7579, 0
      %v7592 = vsel %vm1684, %v7580, 0
      %v7595 = vsel %vm1684, %v7581, 0
      %v7598 = vsel %vm1684, %v7582, 0
      %v7601 = vsel %vm1684, %v7583, 0
      %v7604 = vsel %vm1684, %v7584, 0
      %v7607 = vsel %vm1684, %v7585, 0
      %v7610 = vsel %vm1684, %v7586, 0
      %v7613 = vsel %vm1684, %v7587, 0
      %7615 = vmatprep.subr.bf16.mxu0 %v7538
      %7616 = vmatpush1.bf16.msra.mxu0 %v7537
      %7617 = vmatprep.subr.bf16.mxu0 %v7540
      %7618 = vmatpush1.bf16.msra.mxu0 %v7539
      %7619 = vmatprep.subr.bf16.mxu0 %v7542
      %7620 = vmatpush1.bf16.msra.mxu0 %v7541
      %7621 = vmatprep.subr.bf16.mxu0 0
      %7622 = vmatpush1.bf16.msra.mxu0 0
      %7623 = vmatprep.subr.bf16.mxu0 0
      %7624 = vmatpush1.bf16.msra.mxu0 0
      %7625 = vmatprep.subr.bf16.mxu0 0
      %7626 = vmatpush1.bf16.msra.mxu0 0
      %7627 = vmatprep.subr.bf16.mxu0 0
      %7628 = vmatpush1.bf16.msra.mxu0 0
      %7629 = vmatprep.subr.bf16.mxu0 0
      %7630 = vmatpush1.bf16.msra.mxu0 0
      %7631 = vmatprep.subr.bf16.mxu0 0
      %7632 = vmatpush1.bf16.msra.mxu0 0
      %7633 = vmatprep.subr.bf16.mxu0 0
      %7634 = vmatpush1.bf16.msra.mxu0 0
      %7635 = vmatprep.subr.bf16.mxu0 0
      %7636 = vmatpush1.bf16.msra.mxu0 0
      %7637 = vmatprep.subr.bf16.mxu0 0
      %7638 = vmatpush1.bf16.msra.mxu0 0
      %7639 = vmatprep.subr.bf16.mxu0 0
      %7640 = vmatpush1.bf16.msra.mxu0 0
      %7641 = vmatprep.subr.bf16.mxu0 0
      %7642 = vmatpush1.bf16.msra.mxu0 0
      %7643 = vmatprep.subr.bf16.mxu0 0
      %7644 = vmatpush1.bf16.msra.mxu0 0
      %7645 = vmatprep.subr.bf16.mxu0 0
      %7646 = vmatpush1.bf16.msra.mxu0 0
      %7647 = vmatprep.mubr.bf16.mxu0 0
      %7648 = vmatmul.mubr.bf16.gmra.mrb[0].mxu0 %v7589
      %v7649 = vpop.f32.mrb[0].mxu0
      %v7650 = vadd.f32 0.0, %v7649
      %v7651 = vpop.f32.mrb[0].mxu0
      %v7652 = vadd.f32 0.0, %v7651
      %v7653 = vpop.f32.mrb[0].mxu0
      %v7654 = vadd.f32 0.0, %v7653
      %v7655 = vpop.f32.mrb[0].mxu0
      %v7656 = vadd.f32 0.0, %v7655
      %7657 = vmatprep.mubr.bf16.mxu0 0
      %7658 = vmatmul.mubr.bf16.gmra.mrb[0].mxu0 %v7592
      %v7659 = vpop.f32.mrb[0].mxu0
      %v7660 = vadd.f32 0.0, %v7659
      %v7661 = vpop.f32.mrb[0].mxu0
      %v7662 = vadd.f32 0.0, %v7661
      %v7663 = vpop.f32.mrb[0].mxu0
      %v7664 = vadd.f32 0.0, %v7663
      %v7665 = vpop.f32.mrb[0].mxu0
      %v7666 = vadd.f32 0.0, %v7665
      %7667 = vmatprep.mubr.bf16.mxu0 0
      %7668 = vmatmul.mubr.bf16.gmra.mrb[0].mxu0 %v7595
      %v7669 = vpop.f32.mrb[0].mxu0
      %v7670 = vadd.f32 0.0, %v7669
      %v7671 = vpop.f32.mrb[0].mxu0
      %v7672 = vadd.f32 0.0, %v7671
      %v7673 = vpop.f32.mrb[0].mxu0
      %v7674 = vadd.f32 0.0, %v7673
      %v7675 = vpop.f32.mrb[0].mxu0
      %v7676 = vadd.f32 0.0, %v7675
      %7677 = vmatprep.mubr.bf16.mxu0 0
      %7678 = vmatmul.mubr.bf16.gmra.mrb[0].mxu0 %v7598
      %v7679 = vpop.f32.mrb[0].mxu0
      %v7680 = vadd.f32 0.0, %v7679
      %v7681 = vpop.f32.mrb[0].mxu0
      %v7682 = vadd.f32 0.0, %v7681
      %v7683 = vpop.f32.mrb[0].mxu0
      %v7684 = vadd.f32 0.0, %v7683
      %v7685 = vpop.f32.mrb[0].mxu0
      %v7686 = vadd.f32 0.0, %v7685
      %7687 = vmatprep.mubr.bf16.mxu0 0
      %7688 = vmatmul.mubr.bf16.gmra.mrb[0].mxu0 %v7601
      %v7689 = vpop.f32.mrb[0].mxu0
      %v7690 = vadd.f32 0.0, %v7689
      %v7691 = vpop.f32.mrb[0].mxu0
      %v7692 = vadd.f32 0.0, %v7691
      %v7693 = vpop.f32.mrb[0].mxu0
      %v7694 = vadd.f32 0.0, %v7693
      %v7695 = vpop.f32.mrb[0].mxu0
      %v7696 = vadd.f32 0.0, %v7695
      %7697 = vmatprep.mubr.bf16.mxu0 0
      %7698 = vmatmul.mubr.bf16.gmra.mrb[0].mxu0 %v7604
      %v7699 = vpop.f32.mrb[0].mxu0
      %v7700 = vadd.f32 0.0, %v7699
      %v7701 = vpop.f32.mrb[0].mxu0
      %v7702 = vadd.f32 0.0, %v7701
      %v7703 = vpop.f32.mrb[0].mxu0
      %v7704 = vadd.f32 0.0, %v7703
      %v7705 = vpop.f32.mrb[0].mxu0
      %v7706 = vadd.f32 0.0, %v7705
      %7707 = vmatprep.mubr.bf16.mxu0 0
      %7708 = vmatmul.mubr.bf16.gmra.mrb[0].mxu0 %v7607
      %v7709 = vpop.f32.mrb[0].mxu0
      %v7710 = vadd.f32 0.0, %v7709
      %v7711 = vpop.f32.mrb[0].mxu0
      %v7712 = vadd.f32 0.0, %v7711
      %v7713 = vpop.f32.mrb[0].mxu0
      %v7714 = vadd.f32 0.0, %v7713
      %v7715 = vpop.f32.mrb[0].mxu0
      %v7716 = vadd.f32 0.0, %v7715
      %7717 = vmatprep.mubr.bf16.mxu0 0
      %7718 = vmatmul.mubr.bf16.gmra.mrb[0].mxu0 %v7610
      %v7719 = vpop.f32.mrb[0].mxu0
      %v7720 = vadd.f32 0.0, %v7719
      %v7721 = vpop.f32.mrb[0].mxu0
      %v7722 = vadd.f32 0.0, %v7721
      %v7723 = vpop.f32.mrb[0].mxu0
      %v7724 = vadd.f32 0.0, %v7723
      %v7725 = vpop.f32.mrb[0].mxu0
      %v7726 = vadd.f32 0.0, %v7725
      %7727 = vmatprep.mubr.bf16.mxu0 0
      %7728 = vmatmul.mubr.bf16.gmra.mrb[0].mxu0 %v7613
      %v7729 = vpop.f32.mrb[0].mxu0
      %v7730 = vadd.f32 0.0, %v7729
      %v7731 = vpop.f32.mrb[0].mxu0
      %v7732 = vadd.f32 0.0, %v7731
      %v7733 = vpop.f32.mrb[0].mxu0
      %v7734 = vadd.f32 0.0, %v7733
      %v7735 = vpop.f32.mrb[0].mxu0
      %v7736 = vadd.f32 0.0, %v7735
      %7737 = vdwg.mxu0
      %7740 = vrot.lane.b32.xlu0 %v7652, 17
      %v7741 = vpop.permute.xlu0 %7740
      %7742 = vrot.lane.b32.xlu0 %v7656, 17
      %v7743 = vpop.permute.xlu0 %7742
      %7748 = vrot.lane.b32.xlu0 %v7650, 17
      %v7749 = vpop.permute.xlu0 %7748
      %7750 = vrot.lane.b32.xlu0 %v7654, 17
      %v7751 = vpop.permute.xlu0 %7750
      %v7752 = vsel %vm661, %v7749, %v7741
      %v7753 = vsel %vm661, %v7751, %v7743
      %v7758 = vsel %vm661, %v7741, %v7749
      %v7759 = vsel %vm661, %v7743, %v7751
      %v7760 = vld [vmem:[%s11] sm:$0x3]
      %v7762 = vlaneseq
      %v7763 = vshrl.u32 %v7762, 7
      %v7764 = vsub.s32 0, %v7763
      %v7765 = vrot.slane %v7760, %v7764
      %v7766 = vlaneseq
      %v7767 = vshrl.u32 %v7766, 7
      %v7768 = vsub.s32 1, %v7767
      %v7769 = vrot.slane %v7760, %v7768
      %v7772 = vmul.f32 %v7758, %v7765
      %v7773 = vmul.f32 %v7752, %v7769
      %v7774 = vmul.f32 %v7759, %v7765
      %v7775 = vmul.f32 %v7753, %v7769
      %7778 = vrot.lane.b32.xlu0 %v7662, 16
      %v7779 = vpop.permute.xlu0 %7778
      %7780 = vrot.lane.b32.xlu0 %v7666, 16
      %v7781 = vpop.permute.xlu0 %7780
      %7786 = vrot.lane.b32.xlu0 %v7660, 16
      %v7787 = vpop.permute.xlu0 %7786
      %7788 = vrot.lane.b32.xlu0 %v7664, 16
      %v7789 = vpop.permute.xlu0 %7788
      %v7790 = vsel %vm496, %v7787, %v7779
      %v7791 = vsel %vm496, %v7789, %v7781
      %v7796 = vsel %vm496, %v7779, %v7787
      %v7797 = vsel %vm496, %v7781, %v7789
      %v7798 = vld [vmem:[%s708] sm:$0x3]
      %v7800 = vlaneseq
      %v7801 = vshrl.u32 %v7800, 7
      %v7802 = vsub.s32 0, %v7801
      %v7803 = vrot.slane %v7798, %v7802
      %v7804 = vlaneseq
      %v7805 = vshrl.u32 %v7804, 7
      %v7806 = vsub.s32 1, %v7805
      %v7807 = vrot.slane %v7798, %v7806
      %v7810 = vmul.f32 %v7796, %v7803
      %v7811 = vmul.f32 %v7790, %v7807
      %v7812 = vmul.f32 %v7797, %v7803
      %v7813 = vmul.f32 %v7791, %v7807
      %v7814 = vadd.f32 %v7772, %v7810
      %v7815 = vadd.f32 %v7773, %v7811
      %v7816 = vadd.f32 %v7774, %v7812
      %v7817 = vadd.f32 %v7775, %v7813
      %7820 = vrot.lane.b32.xlu0 %v7672, 15
      %v7821 = vpop.permute.xlu0 %7820
      %7822 = vrot.lane.b32.xlu0 %v7676, 15
      %v7823 = vpop.permute.xlu0 %7822
      %7828 = vrot.lane.b32.xlu0 %v7670, 15
      %v7829 = vpop.permute.xlu0 %7828
      %7830 = vrot.lane.b32.xlu0 %v7674, 15
      %v7831 = vpop.permute.xlu0 %7830
      %v7832 = vsel %vm743, %v7829, %v7821
      %v7833 = vsel %vm743, %v7831, %v7823
      %v7838 = vsel %vm743, %v7821, %v7829
      %v7839 = vsel %vm743, %v7823, %v7831
      %v7840 = vld [vmem:[%s752] sm:$0x3]
      %v7842 = vlaneseq
      %v7843 = vshrl.u32 %v7842, 7
      %v7844 = vsub.s32 0, %v7843
      %v7845 = vrot.slane %v7840, %v7844
      %v7846 = vlaneseq
      %v7847 = vshrl.u32 %v7846, 7
      %v7848 = vsub.s32 1, %v7847
      %v7849 = vrot.slane %v7840, %v7848
      %v7852 = vmul.f32 %v7838, %v7845
      %v7853 = vmul.f32 %v7832, %v7849
      %v7854 = vmul.f32 %v7839, %v7845
      %v7855 = vmul.f32 %v7833, %v7849
      %v7856 = vadd.f32 %v7814, %v7852
      %v7857 = vadd.f32 %v7815, %v7853
      %v7858 = vadd.f32 %v7816, %v7854
      %v7859 = vadd.f32 %v7817, %v7855
      %7862 = vrot.lane.b32.xlu0 %v7682, 1
      %v7863 = vpop.permute.xlu0 %7862
      %7864 = vrot.lane.b32.xlu0 %v7686, 1
      %v7865 = vpop.permute.xlu0 %7864
      %7870 = vrot.lane.b32.xlu0 %v7680, 1
      %v7871 = vpop.permute.xlu0 %7870
      %7872 = vrot.lane.b32.xlu0 %v7684, 1
      %v7873 = vpop.permute.xlu0 %7872
      %v7874 = vsel %vm787, %v7871, %v7863
      %v7875 = vsel %vm787, %v7873, %v7865
      %v7880 = vsel %vm787, %v7863, %v7871
      %v7881 = vsel %vm787, %v7865, %v7873
      %v7882 = vld [vmem:[%s796] sm:$0x3]
      %v7884 = vlaneseq
      %v7885 = vshrl.u32 %v7884, 7
      %v7886 = vsub.s32 0, %v7885
      %v7887 = vrot.slane %v7882, %v7886
      %v7888 = vlaneseq
      %v7889 = vshrl.u32 %v7888, 7
      %v7890 = vsub.s32 1, %v7889
      %v7891 = vrot.slane %v7882, %v7890
      %v7894 = vmul.f32 %v7880, %v7887
      %v7895 = vmul.f32 %v7874, %v7891
      %v7896 = vmul.f32 %v7881, %v7887
      %v7897 = vmul.f32 %v7875, %v7891
      %v7898 = vadd.f32 %v7856, %v7894
      %v7899 = vadd.f32 %v7857, %v7895
      %v7900 = vadd.f32 %v7858, %v7896
      %v7901 = vadd.f32 %v7859, %v7897
      %v7902 = vadd.f32 %v7898, %v7690
      %v7903 = vadd.f32 %v7899, %v7692
      %v7904 = vadd.f32 %v7900, %v7694
      %v7905 = vadd.f32 %v7901, %v7696
      %7910 = vrot.lane.b32.xlu0 %v7700, 127
      %v7911 = vpop.permute.xlu0 %7910
      %7912 = vrot.lane.b32.xlu0 %v7702, 127
      %v7913 = vpop.permute.xlu0 %7912
      %7914 = vrot.lane.b32.xlu0 %v7704, 127
      %v7915 = vpop.permute.xlu0 %7914
      %7916 = vrot.lane.b32.xlu0 %v7706, 127
      %v7917 = vpop.permute.xlu0 %7916
      %v7918 = vsel %vm833, %v7911, %v7913
      %v7919 = vsel %vm833, %v7915, %v7917
      %v7926 = vsel %vm833, %v7913, %v7911
      %v7927 = vsel %vm833, %v7917, %v7915
      %v7928 = vld [vmem:[%s844] sm:$0x3]
      %v7930 = vlaneseq
      %v7931 = vshrl.u32 %v7930, 7
      %v7932 = vsub.s32 0, %v7931
      %v7933 = vrot.slane %v7928, %v7932
      %v7934 = vlaneseq
      %v7935 = vshrl.u32 %v7934, 7
      %v7936 = vsub.s32 1, %v7935
      %v7937 = vrot.slane %v7928, %v7936
      %v7940 = vmul.f32 %v7918, %v7933
      %v7941 = vmul.f32 %v7926, %v7937
      %v7942 = vmul.f32 %v7919, %v7933
      %v7943 = vmul.f32 %v7927, %v7937
      %v7944 = vadd.f32 %v7902, %v7940
      %v7945 = vadd.f32 %v7903, %v7941
      %v7946 = vadd.f32 %v7904, %v7942
      %v7947 = vadd.f32 %v7905, %v7943
      %7952 = vrot.lane.b32.xlu0 %v7710, 113
      %v7953 = vpop.permute.xlu0 %7952
      %7954 = vrot.lane.b32.xlu0 %v7712, 113
      %v7955 = vpop.permute.xlu0 %7954
      %7956 = vrot.lane.b32.xlu0 %v7714, 113
      %v7957 = vpop.permute.xlu0 %7956
      %7958 = vrot.lane.b32.xlu0 %v7716, 113
      %v7959 = vpop.permute.xlu0 %7958
      %v7960 = vsel %vm877, %v7953, %v7955
      %v7961 = vsel %vm877, %v7957, %v7959
      %v7968 = vsel %vm877, %v7955, %v7953
      %v7969 = vsel %vm877, %v7959, %v7957
      %v7970 = vld [vmem:[%s888] sm:$0x3]
      %v7972 = vlaneseq
      %v7973 = vshrl.u32 %v7972, 7
      %v7974 = vsub.s32 0, %v7973
      %v7975 = vrot.slane %v7970, %v7974
      %v7976 = vlaneseq
      %v7977 = vshrl.u32 %v7976, 7
      %v7978 = vsub.s32 1, %v7977
      %v7979 = vrot.slane %v7970, %v7978
      %v7982 = vmul.f32 %v7960, %v7975
      %v7983 = vmul.f32 %v7968, %v7979
      %v7984 = vmul.f32 %v7961, %v7975
      %v7985 = vmul.f32 %v7969, %v7979
      %v7986 = vadd.f32 %v7944, %v7982
      %v7987 = vadd.f32 %v7945, %v7983
      %v7988 = vadd.f32 %v7946, %v7984
      %v7989 = vadd.f32 %v7947, %v7985
      %7994 = vrot.lane.b32.xlu0 %v7720, 112
      %v7995 = vpop.permute.xlu0 %7994
      %7996 = vrot.lane.b32.xlu0 %v7722, 112
      %v7997 = vpop.permute.xlu0 %7996
      %7998 = vrot.lane.b32.xlu0 %v7724, 112
      %v7999 = vpop.permute.xlu0 %7998
      %8000 = vrot.lane.b32.xlu0 %v7726, 112
      %v8001 = vpop.permute.xlu0 %8000
      %v8002 = vsel %vm921, %v7995, %v7997
      %v8003 = vsel %vm921, %v7999, %v8001
      %v8010 = vsel %vm921, %v7997, %v7995
      %v8011 = vsel %vm921, %v8001, %v7999
      %v8012 = vld [vmem:[%s932] sm:$0x3]
      %v8014 = vlaneseq
      %v8015 = vshrl.u32 %v8014, 7
      %v8016 = vsub.s32 0, %v8015
      %v8017 = vrot.slane %v8012, %v8016
      %v8018 = vlaneseq
      %v8019 = vshrl.u32 %v8018, 7
      %v8020 = vsub.s32 1, %v8019
      %v8021 = vrot.slane %v8012, %v8020
      %v8024 = vmul.f32 %v8002, %v8017
      %v8025 = vmul.f32 %v8010, %v8021
      %v8026 = vmul.f32 %v8003, %v8017
      %v8027 = vmul.f32 %v8011, %v8021
      %v8028 = vadd.f32 %v7986, %v8024
      %v8029 = vadd.f32 %v7987, %v8025
      %v8030 = vadd.f32 %v7988, %v8026
      %v8031 = vadd.f32 %v7989, %v8027
      %8036 = vrot.lane.b32.xlu0 %v7730, 111
      %v8037 = vpop.permute.xlu0 %8036
      %8038 = vrot.lane.b32.xlu0 %v7732, 111
      %v8039 = vpop.permute.xlu0 %8038
      %8040 = vrot.lane.b32.xlu0 %v7734, 111
      %v8041 = vpop.permute.xlu0 %8040
      %8042 = vrot.lane.b32.xlu0 %v7736, 111
      %v8043 = vpop.permute.xlu0 %8042
      %v8044 = vsel %vm965, %v8037, %v8039
      %v8045 = vsel %vm965, %v8041, %v8043
      %v8052 = vsel %vm965, %v8039, %v8037
      %v8053 = vsel %vm965, %v8043, %v8041
      %v8054 = vld [vmem:[%s976] sm:$0x3]
      %v8056 = vlaneseq
      %v8057 = vshrl.u32 %v8056, 7
      %v8058 = vsub.s32 0, %v8057
      %v8059 = vrot.slane %v8054, %v8058
      %v8060 = vlaneseq
      %v8061 = vshrl.u32 %v8060, 7
      %v8062 = vsub.s32 1, %v8061
      %v8063 = vrot.slane %v8054, %v8062
      %v8066 = vmul.f32 %v8044, %v8059
      %v8067 = vmul.f32 %v8052, %v8063
      %v8068 = vmul.f32 %v8045, %v8059
      %v8069 = vmul.f32 %v8053, %v8063
      %v8070 = vadd.f32 %v8028, %v8066
      %v8071 = vadd.f32 %v8029, %v8067
      %v8072 = vadd.f32 %v8030, %v8068
      %v8073 = vadd.f32 %v8031, %v8069
      %s8074 = scalar_lea.vmem %s8, 32
      %v8075 = vld [vmem:[%s8074] sm:$0xff]
      %v8076 = vld [vmem:[%s8074 + $0x8] sm:$0xff]
      %8078 = vset.pattern.permute.xlu0 0
      %8079 = vperm.xlu0 %8078, %v8075
      %v8080 = vpop.permute.xlu0 %8079
      %8083 = vset.pattern.permute.xlu0 0
      %8084 = vperm.xlu0 %8083, %v8076
      %v8085 = vpop.permute.xlu0 %8084
      %v8087 = vadd.f32 %v8070, %v8080
      %v8088 = vadd.f32 %v8071, %v8080
      %v8089 = vadd.f32 %v8072, %v8085
      %v8090 = vadd.f32 %v8073, %v8085
      %vm8091 = vcmp.gt.f32.partialorder %v8087, 0.0
      %vm8092 = vcmp.gt.f32.partialorder %v8088, 0.0
      %vm8093 = vcmp.gt.f32.partialorder %v8089, 0.0
      %vm8094 = vcmp.gt.f32.partialorder %v8090, 0.0
      %v8095 = vmul.f32 %v8087, 0.2
      %v8096 = vmul.f32 %v8088, 0.2
      %v8097 = vmul.f32 %v8089, 0.2
      %v8098 = vmul.f32 %v8090, 0.2
      %v8099 = vsel %vm8091, %v8087, %v8095
      %v8100 = vsel %vm8092, %v8088, %v8096
      %v8101 = vsel %vm8093, %v8089, %v8097
      %v8102 = vsel %vm8094, %v8090, %v8098
      %v8103 = vpack.c.bf16 %v8101, %v8099
      %v8104 = vpack.c.bf16 %v8102, %v8100
      %8105 = vst [vmem:[#allocation2 + $0x30] sm:$0xff] %v8103
      %8106 = vst [vmem:[#allocation2 + $0x38] sm:$0xff] %v8104
      %s8107 = scalar_lea.vmem %s4, 144
      %v8108 = vld [vmem:[%s8107] sm:$0xf]
      %v8109 = vld [vmem:[%s8107 + $0x4] sm:$0xf]
      %v8110 = vld [vmem:[%s8107 + $0x8] sm:$0xf]
      %v8111 = vld [vmem:[%s8107 + $0xc] sm:$0xf]
      %v8112 = vld [vmem:[%s8107 + $0x10] sm:$0xf]
      %v8113 = vld [vmem:[%s8107 + $0x14] sm:$0xf]
      %v8114 = vld [vmem:[%s8107 + $0x18] sm:$0xf]
      %v8115 = vld [vmem:[%s8107 + $0x1c] sm:$0xf]
      %v8116 = vld [vmem:[%s8107 + $0x20] sm:$0xf]
      %v8117 = vld [vmem:[%s8107 + $0x24] sm:$0xf]
      %v8118 = vld [vmem:[%s8107 + $0x28] sm:$0xf]
      %v8119 = vld [vmem:[%s8107 + $0x2c] sm:$0xf]
      %v8120 = vld [vmem:[%s8107 + $0x30] sm:$0xf]
      %v8121 = vld [vmem:[%s8107 + $0x34] sm:$0xf]
      %v8122 = vld [vmem:[%s8107 + $0x38] sm:$0xf]
      %v8123 = vld [vmem:[%s8107 + $0x3c] sm:$0xf]
      %v8124 = vld [vmem:[%s8107 + $0x40] sm:$0xf]
      %v8125 = vld [vmem:[%s8107 + $0x44] sm:$0xf]
      %v8126 = vld [vmem:[#allocation2] sm:$0xff]
      %v8127 = vld [vmem:[#allocation2 + $0x8] sm:$0xff]
      %v8128 = vld [vmem:[#allocation2 + $0x10] sm:$0xff]
      %v8129 = vld [vmem:[#allocation2 + $0x18] sm:$0xff]
      %v8130 = vld [vmem:[#allocation2 + $0x20] sm:$0xff]
      %v8131 = vld [vmem:[#allocation2 + $0x28] sm:$0xff]
      %v8132 = vld [vmem:[#allocation2 + $0x30] sm:$0xff]
      %v8133 = vld [vmem:[#allocation2 + $0x38] sm:$0xff]
      %v8152 = vunpack.c.l.b16 %v8108
      %v8153 = vunpack.c.l.b16 %v8109
      %v8154 = vunpack.c.l.b16 %v8110
      %v8155 = vunpack.c.l.b16 %v8111
      %v8156 = vunpack.c.l.b16 %v8112
      %v8157 = vunpack.c.l.b16 %v8113
      %v8158 = vunpack.c.l.b16 %v8114
      %v8159 = vunpack.c.l.b16 %v8115
      %v8160 = vunpack.c.l.b16 %v8116
      %v8161 = vunpack.c.l.b16 %v8117
      %v8162 = vunpack.c.l.b16 %v8118
      %v8163 = vunpack.c.l.b16 %v8119
      %v8164 = vunpack.c.l.b16 %v8120
      %v8165 = vunpack.c.l.b16 %v8121
      %v8166 = vunpack.c.l.b16 %v8122
      %v8167 = vunpack.c.l.b16 %v8123
      %v8168 = vunpack.c.l.b16 %v8124
      %v8169 = vunpack.c.l.b16 %v8125
      %v8170 = vpack.c.b16 %v8153, %v8152
      %v8171 = vpack.c.b16 %v8155, %v8154
      %v8172 = vpack.c.b16 %v8157, %v8156
      %v8173 = vpack.c.b16 %v8159, %v8158
      %v8174 = vpack.c.b16 %v8161, %v8160
      %v8175 = vpack.c.b16 %v8163, %v8162
      %v8176 = vpack.c.b16 %v8165, %v8164
      %v8177 = vpack.c.b16 %v8167, %v8166
      %v8178 = vpack.c.b16 %v8169, %v8168
      %v8180 = vsel %vm2274, %v8170, 0
      %v8183 = vsel %vm2274, %v8171, 0
      %v8186 = vsel %vm2274, %v8172, 0
      %v8189 = vsel %vm2274, %v8173, 0
      %v8192 = vsel %vm2274, %v8174, 0
      %v8195 = vsel %vm2274, %v8175, 0
      %v8198 = vsel %vm2274, %v8176, 0
      %v8201 = vsel %vm2274, %v8177, 0
      %v8204 = vsel %vm2274, %v8178, 0
      %8206 = vmatprep.subr.bf16.mxu0 %v8127
      %8207 = vmatpush1.bf16.msra.mxu0 %v8126
      %8208 = vmatprep.subr.bf16.mxu0 %v8129
      %8209 = vmatpush1.bf16.msra.mxu0 %v8128
      %8210 = vmatprep.subr.bf16.mxu0 %v8131
      %8211 = vmatpush1.bf16.msra.mxu0 %v8130
      %8212 = vmatprep.subr.bf16.mxu0 %v8133
      %8213 = vmatpush1.bf16.msra.mxu0 %v8132
      %8214 = vmatprep.subr.bf16.mxu0 0
      %8215 = vmatpush1.bf16.msra.mxu0 0
      %8216 = vmatprep.subr.bf16.mxu0 0
      %8217 = vmatpush1.bf16.msra.mxu0 0
      %8218 = vmatprep.subr.bf16.mxu0 0
      %8219 = vmatpush1.bf16.msra.mxu0 0
      %8220 = vmatprep.subr.bf16.mxu0 0
      %8221 = vmatpush1.bf16.msra.mxu0 0
      %8222 = vmatprep.subr.bf16.mxu0 0
      %8223 = vmatpush1.bf16.msra.mxu0 0
      %8224 = vmatprep.subr.bf16.mxu0 0
      %8225 = vmatpush1.bf16.msra.mxu0 0
      %8226 = vmatprep.subr.bf16.mxu0 0
      %8227 = vmatpush1.bf16.msra.mxu0 0
      %8228 = vmatprep.subr.bf16.mxu0 0
      %8229 = vmatpush1.bf16.msra.mxu0 0
      %8230 = vmatprep.subr.bf16.mxu0 0
      %8231 = vmatpush1.bf16.msra.mxu0 0
      %8232 = vmatprep.subr.bf16.mxu0 0
      %8233 = vmatpush1.bf16.msra.mxu0 0
      %8234 = vmatprep.subr.bf16.mxu0 0
      %8235 = vmatpush1.bf16.msra.mxu0 0
      %8236 = vmatprep.subr.bf16.mxu0 0
      %8237 = vmatpush1.bf16.msra.mxu0 0
      %8238 = vmatprep.mubr.bf16.mxu0 0
      %8239 = vmatmul.mubr.bf16.gmra.mrb[0].mxu0 %v8180
      %v8240 = vpop.f32.mrb[0].mxu0
      %v8241 = vadd.f32 0.0, %v8240
      %v8242 = vpop.f32.mrb[0].mxu0
      %v8243 = vadd.f32 0.0, %v8242
      %v8244 = vpop.f32.mrb[0].mxu0
      %v8245 = vadd.f32 0.0, %v8244
      %v8246 = vpop.f32.mrb[0].mxu0
      %v8247 = vadd.f32 0.0, %v8246
      %8248 = vmatprep.mubr.bf16.mxu0 0
      %8249 = vmatmul.mubr.bf16.gmra.mrb[0].mxu0 %v8183
      %v8250 = vpop.f32.mrb[0].mxu0
      %v8251 = vadd.f32 0.0, %v8250
      %v8252 = vpop.f32.mrb[0].mxu0
      %v8253 = vadd.f32 0.0, %v8252
      %v8254 = vpop.f32.mrb[0].mxu0
      %v8255 = vadd.f32 0.0, %v8254
      %v8256 = vpop.f32.mrb[0].mxu0
      %v8257 = vadd.f32 0.0, %v8256
      %8258 = vmatprep.mubr.bf16.mxu0 0
      %8259 = vmatmul.mubr.bf16.gmra.mrb[0].mxu0 %v8186
      %v8260 = vpop.f32.mrb[0].mxu0
      %v8261 = vadd.f32 0.0, %v8260
      %v8262 = vpop.f32.mrb[0].mxu0
      %v8263 = vadd.f32 0.0, %v8262
      %v8264 = vpop.f32.mrb[0].mxu0
      %v8265 = vadd.f32 0.0, %v8264
      %v8266 = vpop.f32.mrb[0].mxu0
      %v8267 = vadd.f32 0.0, %v8266
      %8268 = vmatprep.mubr.bf16.mxu0 0
      %8269 = vmatmul.mubr.bf16.gmra.mrb[0].mxu0 %v8189
      %v8270 = vpop.f32.mrb[0].mxu0
      %v8271 = vadd.f32 0.0, %v8270
      %v8272 = vpop.f32.mrb[0].mxu0
      %v8273 = vadd.f32 0.0, %v8272
      %v8274 = vpop.f32.mrb[0].mxu0
      %v8275 = vadd.f32 0.0, %v8274
      %v8276 = vpop.f32.mrb[0].mxu0
      %v8277 = vadd.f32 0.0, %v8276
      %8278 = vmatprep.mubr.bf16.mxu0 0
      %8279 = vmatmul.mubr.bf16.gmra.mrb[0].mxu0 %v8192
      %v8280 = vpop.f32.mrb[0].mxu0
      %v8281 = vadd.f32 0.0, %v8280
      %v8282 = vpop.f32.mrb[0].mxu0
      %v8283 = vadd.f32 0.0, %v8282
      %v8284 = vpop.f32.mrb[0].mxu0
      %v8285 = vadd.f32 0.0, %v8284
      %v8286 = vpop.f32.mrb[0].mxu0
      %v8287 = vadd.f32 0.0, %v8286
      %8288 = vmatprep.mubr.bf16.mxu0 0
      %8289 = vmatmul.mubr.bf16.gmra.mrb[0].mxu0 %v8195
      %v8290 = vpop.f32.mrb[0].mxu0
      %v8291 = vadd.f32 0.0, %v8290
      %v8292 = vpop.f32.mrb[0].mxu0
      %v8293 = vadd.f32 0.0, %v8292
      %v8294 = vpop.f32.mrb[0].mxu0
      %v8295 = vadd.f32 0.0, %v8294
      %v8296 = vpop.f32.mrb[0].mxu0
      %v8297 = vadd.f32 0.0, %v8296
      %8298 = vmatprep.mubr.bf16.mxu0 0
      %8299 = vmatmul.mubr.bf16.gmra.mrb[0].mxu0 %v8198
      %v8300 = vpop.f32.mrb[0].mxu0
      %v8301 = vadd.f32 0.0, %v8300
      %v8302 = vpop.f32.mrb[0].mxu0
      %v8303 = vadd.f32 0.0, %v8302
      %v8304 = vpop.f32.mrb[0].mxu0
      %v8305 = vadd.f32 0.0, %v8304
      %v8306 = vpop.f32.mrb[0].mxu0
      %v8307 = vadd.f32 0.0, %v8306
      %8308 = vmatprep.mubr.bf16.mxu0 0
      %8309 = vmatmul.mubr.bf16.gmra.mrb[0].mxu0 %v8201
      %v8310 = vpop.f32.mrb[0].mxu0
      %v8311 = vadd.f32 0.0, %v8310
      %v8312 = vpop.f32.mrb[0].mxu0
      %v8313 = vadd.f32 0.0, %v8312
      %v8314 = vpop.f32.mrb[0].mxu0
      %v8315 = vadd.f32 0.0, %v8314
      %v8316 = vpop.f32.mrb[0].mxu0
      %v8317 = vadd.f32 0.0, %v8316
      %8318 = vmatprep.mubr.bf16.mxu0 0
      %8319 = vmatmul.mubr.bf16.gmra.mrb[0].mxu0 %v8204
      %v8320 = vpop.f32.mrb[0].mxu0
      %v8321 = vadd.f32 0.0, %v8320
      %v8322 = vpop.f32.mrb[0].mxu0
      %v8323 = vadd.f32 0.0, %v8322
      %v8324 = vpop.f32.mrb[0].mxu0
      %v8325 = vadd.f32 0.0, %v8324
      %v8326 = vpop.f32.mrb[0].mxu0
      %v8327 = vadd.f32 0.0, %v8326
      %8328 = vdwg.mxu0
      %8331 = vrot.lane.b32.xlu0 %v8243, 17
      %v8332 = vpop.permute.xlu0 %8331
      %8333 = vrot.lane.b32.xlu0 %v8247, 17
      %v8334 = vpop.permute.xlu0 %8333
      %8339 = vrot.lane.b32.xlu0 %v8241, 17
      %v8340 = vpop.permute.xlu0 %8339
      %8341 = vrot.lane.b32.xlu0 %v8245, 17
      %v8342 = vpop.permute.xlu0 %8341
      %v8343 = vsel %vm661, %v8340, %v8332
      %v8344 = vsel %vm661, %v8342, %v8334
      %v8349 = vsel %vm661, %v8332, %v8340
      %v8350 = vsel %vm661, %v8334, %v8342
      %v8351 = vld [vmem:[%s11] sm:$0x3]
      %v8353 = vlaneseq
      %v8354 = vshrl.u32 %v8353, 7
      %v8355 = vsub.s32 0, %v8354
      %v8356 = vrot.slane %v8351, %v8355
      %v8357 = vlaneseq
      %v8358 = vshrl.u32 %v8357, 7
      %v8359 = vsub.s32 1, %v8358
      %v8360 = vrot.slane %v8351, %v8359
      %v8363 = vmul.f32 %v8349, %v8356
      %v8364 = vmul.f32 %v8343, %v8360
      %v8365 = vmul.f32 %v8350, %v8356
      %v8366 = vmul.f32 %v8344, %v8360
      %8369 = vrot.lane.b32.xlu0 %v8253, 16
      %v8370 = vpop.permute.xlu0 %8369
      %8371 = vrot.lane.b32.xlu0 %v8257, 16
      %v8372 = vpop.permute.xlu0 %8371
      %8377 = vrot.lane.b32.xlu0 %v8251, 16
      %v8378 = vpop.permute.xlu0 %8377
      %8379 = vrot.lane.b32.xlu0 %v8255, 16
      %v8380 = vpop.permute.xlu0 %8379
      %v8381 = vsel %vm496, %v8378, %v8370
      %v8382 = vsel %vm496, %v8380, %v8372
      %v8387 = vsel %vm496, %v8370, %v8378
      %v8388 = vsel %vm496, %v8372, %v8380
      %v8389 = vld [vmem:[%s708] sm:$0x3]
      %v8391 = vlaneseq
      %v8392 = vshrl.u32 %v8391, 7
      %v8393 = vsub.s32 0, %v8392
      %v8394 = vrot.slane %v8389, %v8393
      %v8395 = vlaneseq
      %v8396 = vshrl.u32 %v8395, 7
      %v8397 = vsub.s32 1, %v8396
      %v8398 = vrot.slane %v8389, %v8397
      %v8401 = vmul.f32 %v8387, %v8394
      %v8402 = vmul.f32 %v8381, %v8398
      %v8403 = vmul.f32 %v8388, %v8394
      %v8404 = vmul.f32 %v8382, %v8398
      %v8405 = vadd.f32 %v8363, %v8401
      %v8406 = vadd.f32 %v8364, %v8402
      %v8407 = vadd.f32 %v8365, %v8403
      %v8408 = vadd.f32 %v8366, %v8404
      %8411 = vrot.lane.b32.xlu0 %v8263, 15
      %v8412 = vpop.permute.xlu0 %8411
      %8413 = vrot.lane.b32.xlu0 %v8267, 15
      %v8414 = vpop.permute.xlu0 %8413
      %8419 = vrot.lane.b32.xlu0 %v8261, 15
      %v8420 = vpop.permute.xlu0 %8419
      %8421 = vrot.lane.b32.xlu0 %v8265, 15
      %v8422 = vpop.permute.xlu0 %8421
      %v8423 = vsel %vm743, %v8420, %v8412
      %v8424 = vsel %vm743, %v8422, %v8414
      %v8429 = vsel %vm743, %v8412, %v8420
      %v8430 = vsel %vm743, %v8414, %v8422
      %v8431 = vld [vmem:[%s752] sm:$0x3]
      %v8433 = vlaneseq
      %v8434 = vshrl.u32 %v8433, 7
      %v8435 = vsub.s32 0, %v8434
      %v8436 = vrot.slane %v8431, %v8435
      %v8437 = vlaneseq
      %v8438 = vshrl.u32 %v8437, 7
      %v8439 = vsub.s32 1, %v8438
      %v8440 = vrot.slane %v8431, %v8439
      %v8443 = vmul.f32 %v8429, %v8436
      %v8444 = vmul.f32 %v8423, %v8440
      %v8445 = vmul.f32 %v8430, %v8436
      %v8446 = vmul.f32 %v8424, %v8440
      %v8447 = vadd.f32 %v8405, %v8443
      %v8448 = vadd.f32 %v8406, %v8444
      %v8449 = vadd.f32 %v8407, %v8445
      %v8450 = vadd.f32 %v8408, %v8446
      %8453 = vrot.lane.b32.xlu0 %v8273, 1
      %v8454 = vpop.permute.xlu0 %8453
      %8455 = vrot.lane.b32.xlu0 %v8277, 1
      %v8456 = vpop.permute.xlu0 %8455
      %8461 = vrot.lane.b32.xlu0 %v8271, 1
      %v8462 = vpop.permute.xlu0 %8461
      %8463 = vrot.lane.b32.xlu0 %v8275, 1
      %v8464 = vpop.permute.xlu0 %8463
      %v8465 = vsel %vm787, %v8462, %v8454
      %v8466 = vsel %vm787, %v8464, %v8456
      %v8471 = vsel %vm787, %v8454, %v8462
      %v8472 = vsel %vm787, %v8456, %v8464
      %v8473 = vld [vmem:[%s796] sm:$0x3]
      %v8475 = vlaneseq
      %v8476 = vshrl.u32 %v8475, 7
      %v8477 = vsub.s32 0, %v8476
      %v8478 = vrot.slane %v8473, %v8477
      %v8479 = vlaneseq
      %v8480 = vshrl.u32 %v8479, 7
      %v8481 = vsub.s32 1, %v8480
      %v8482 = vrot.slane %v8473, %v8481
      %v8485 = vmul.f32 %v8471, %v8478
      %v8486 = vmul.f32 %v8465, %v8482
      %v8487 = vmul.f32 %v8472, %v8478
      %v8488 = vmul.f32 %v8466, %v8482
      %v8489 = vadd.f32 %v8447, %v8485
      %v8490 = vadd.f32 %v8448, %v8486
      %v8491 = vadd.f32 %v8449, %v8487
      %v8492 = vadd.f32 %v8450, %v8488
      %v8493 = vadd.f32 %v8489, %v8281
      %v8494 = vadd.f32 %v8490, %v8283
      %v8495 = vadd.f32 %v8491, %v8285
      %v8496 = vadd.f32 %v8492, %v8287
      %8501 = vrot.lane.b32.xlu0 %v8291, 127
      %v8502 = vpop.permute.xlu0 %8501
      %8503 = vrot.lane.b32.xlu0 %v8293, 127
      %v8504 = vpop.permute.xlu0 %8503
      %8505 = vrot.lane.b32.xlu0 %v8295, 127
      %v8506 = vpop.permute.xlu0 %8505
      %8507 = vrot.lane.b32.xlu0 %v8297, 127
      %v8508 = vpop.permute.xlu0 %8507
      %v8509 = vsel %vm833, %v8502, %v8504
      %v8510 = vsel %vm833, %v8506, %v8508
      %v8517 = vsel %vm833, %v8504, %v8502
      %v8518 = vsel %vm833, %v8508, %v8506
      %v8519 = vld [vmem:[%s844] sm:$0x3]
      %v8521 = vlaneseq
      %v8522 = vshrl.u32 %v8521, 7
      %v8523 = vsub.s32 0, %v8522
      %v8524 = vrot.slane %v8519, %v8523
      %v8525 = vlaneseq
      %v8526 = vshrl.u32 %v8525, 7
      %v8527 = vsub.s32 1, %v8526
      %v8528 = vrot.slane %v8519, %v8527
      %v8531 = vmul.f32 %v8509, %v8524
      %v8532 = vmul.f32 %v8517, %v8528
      %v8533 = vmul.f32 %v8510, %v8524
      %v8534 = vmul.f32 %v8518, %v8528
      %v8535 = vadd.f32 %v8493, %v8531
      %v8536 = vadd.f32 %v8494, %v8532
      %v8537 = vadd.f32 %v8495, %v8533
      %v8538 = vadd.f32 %v8496, %v8534
      %8543 = vrot.lane.b32.xlu0 %v8301, 113
      %v8544 = vpop.permute.xlu0 %8543
      %8545 = vrot.lane.b32.xlu0 %v8303, 113
      %v8546 = vpop.permute.xlu0 %8545
      %8547 = vrot.lane.b32.xlu0 %v8305, 113
      %v8548 = vpop.permute.xlu0 %8547
      %8549 = vrot.lane.b32.xlu0 %v8307, 113
      %v8550 = vpop.permute.xlu0 %8549
      %v8551 = vsel %vm877, %v8544, %v8546
      %v8552 = vsel %vm877, %v8548, %v8550
      %v8559 = vsel %vm877, %v8546, %v8544
      %v8560 = vsel %vm877, %v8550, %v8548
      %v8561 = vld [vmem:[%s888] sm:$0x3]
      %v8563 = vlaneseq
      %v8564 = vshrl.u32 %v8563, 7
      %v8565 = vsub.s32 0, %v8564
      %v8566 = vrot.slane %v8561, %v8565
      %v8567 = vlaneseq
      %v8568 = vshrl.u32 %v8567, 7
      %v8569 = vsub.s32 1, %v8568
      %v8570 = vrot.slane %v8561, %v8569
      %v8573 = vmul.f32 %v8551, %v8566
      %v8574 = vmul.f32 %v8559, %v8570
      %v8575 = vmul.f32 %v8552, %v8566
      %v8576 = vmul.f32 %v8560, %v8570
      %v8577 = vadd.f32 %v8535, %v8573
      %v8578 = vadd.f32 %v8536, %v8574
      %v8579 = vadd.f32 %v8537, %v8575
      %v8580 = vadd.f32 %v8538, %v8576
      %8585 = vrot.lane.b32.xlu0 %v8311, 112
      %v8586 = vpop.permute.xlu0 %8585
      %8587 = vrot.lane.b32.xlu0 %v8313, 112
      %v8588 = vpop.permute.xlu0 %8587
      %8589 = vrot.lane.b32.xlu0 %v8315, 112
      %v8590 = vpop.permute.xlu0 %8589
      %8591 = vrot.lane.b32.xlu0 %v8317, 112
      %v8592 = vpop.permute.xlu0 %8591
      %v8593 = vsel %vm921, %v8586, %v8588
      %v8594 = vsel %vm921, %v8590, %v8592
      %v8601 = vsel %vm921, %v8588, %v8586
      %v8602 = vsel %vm921, %v8592, %v8590
      %v8603 = vld [vmem:[%s932] sm:$0x3]
      %v8605 = vlaneseq
      %v8606 = vshrl.u32 %v8605, 7
      %v8607 = vsub.s32 0, %v8606
      %v8608 = vrot.slane %v8603, %v8607
      %v8609 = vlaneseq
      %v8610 = vshrl.u32 %v8609, 7
      %v8611 = vsub.s32 1, %v8610
      %v8612 = vrot.slane %v8603, %v8611
      %v8615 = vmul.f32 %v8593, %v8608
      %v8616 = vmul.f32 %v8601, %v8612
      %v8617 = vmul.f32 %v8594, %v8608
      %v8618 = vmul.f32 %v8602, %v8612
      %v8619 = vadd.f32 %v8577, %v8615
      %v8620 = vadd.f32 %v8578, %v8616
      %v8621 = vadd.f32 %v8579, %v8617
      %v8622 = vadd.f32 %v8580, %v8618
      %8627 = vrot.lane.b32.xlu0 %v8321, 111
      %v8628 = vpop.permute.xlu0 %8627
      %8629 = vrot.lane.b32.xlu0 %v8323, 111
      %v8630 = vpop.permute.xlu0 %8629
      %8631 = vrot.lane.b32.xlu0 %v8325, 111
      %v8632 = vpop.permute.xlu0 %8631
      %8633 = vrot.lane.b32.xlu0 %v8327, 111
      %v8634 = vpop.permute.xlu0 %8633
      %v8635 = vsel %vm965, %v8628, %v8630
      %v8636 = vsel %vm965, %v8632, %v8634
      %v8643 = vsel %vm965, %v8630, %v8628
      %v8644 = vsel %vm965, %v8634, %v8632
      %v8645 = vld [vmem:[%s976] sm:$0x3]
      %v8647 = vlaneseq
      %v8648 = vshrl.u32 %v8647, 7
      %v8649 = vsub.s32 0, %v8648
      %v8650 = vrot.slane %v8645, %v8649
      %v8651 = vlaneseq
      %v8652 = vshrl.u32 %v8651, 7
      %v8653 = vsub.s32 1, %v8652
      %v8654 = vrot.slane %v8645, %v8653
      %v8657 = vmul.f32 %v8635, %v8650
      %v8658 = vmul.f32 %v8643, %v8654
      %v8659 = vmul.f32 %v8636, %v8650
      %v8660 = vmul.f32 %v8644, %v8654
      %v8661 = vadd.f32 %v8619, %v8657
      %v8662 = vadd.f32 %v8620, %v8658
      %v8663 = vadd.f32 %v8621, %v8659
      %v8664 = vadd.f32 %v8622, %v8660
      %s8665 = scalar_lea.vmem %s9, 32
      %v8666 = vld [vmem:[%s8665] sm:$0xff]
      %v8667 = vld [vmem:[%s8665 + $0x8] sm:$0xff]
      %8669 = vset.pattern.permute.xlu0 0
      %8670 = vperm.xlu0 %8669, %v8666
      %v8671 = vpop.permute.xlu0 %8670
      %8674 = vset.pattern.permute.xlu0 0
      %8675 = vperm.xlu0 %8674, %v8667
      %v8676 = vpop.permute.xlu0 %8675
      %v8678 = vadd.f32 %v8661, %v8671
      %v8679 = vadd.f32 %v8662, %v8671
      %v8680 = vadd.f32 %v8663, %v8676
      %v8681 = vadd.f32 %v8664, %v8676
      %vm8682 = vcmp.gt.f32.partialorder %v8678, 0.0
      %vm8683 = vcmp.gt.f32.partialorder %v8679, 0.0
      %vm8684 = vcmp.gt.f32.partialorder %v8680, 0.0
      %vm8685 = vcmp.gt.f32.partialorder %v8681, 0.0
      %v8686 = vmul.f32 %v8678, 0.2
      %v8687 = vmul.f32 %v8679, 0.2
      %v8688 = vmul.f32 %v8680, 0.2
      %v8689 = vmul.f32 %v8681, 0.2
      %v8690 = vsel %vm8682, %v8678, %v8686
      %v8691 = vsel %vm8683, %v8679, %v8687
      %v8692 = vsel %vm8684, %v8680, %v8688
      %v8693 = vsel %vm8685, %v8681, %v8689
      %v8694 = vpack.c.bf16 %v8692, %v8690
      %v8695 = vpack.c.bf16 %v8693, %v8691
      %8696 = vst [vmem:[#allocation2 + $0x40] sm:$0xff] %v8694
      %8697 = vst [vmem:[#allocation2 + $0x48] sm:$0xff] %v8695
      %s8698 = scalar_lea.vmem %s5, 144
      %v8699 = vld [vmem:[%s8698] sm:$0xf]
      %v8700 = vld [vmem:[%s8698 + $0x4] sm:$0xf]
      %v8701 = vld [vmem:[%s8698 + $0x8] sm:$0xf]
      %v8702 = vld [vmem:[%s8698 + $0xc] sm:$0xf]
      %v8703 = vld [vmem:[%s8698 + $0x10] sm:$0xf]
      %v8704 = vld [vmem:[%s8698 + $0x14] sm:$0xf]
      %v8705 = vld [vmem:[%s8698 + $0x18] sm:$0xf]
      %v8706 = vld [vmem:[%s8698 + $0x1c] sm:$0xf]
      %v8707 = vld [vmem:[%s8698 + $0x20] sm:$0xf]
      %v8708 = vld [vmem:[%s8698 + $0x24] sm:$0xf]
      %v8709 = vld [vmem:[%s8698 + $0x28] sm:$0xf]
      %v8710 = vld [vmem:[%s8698 + $0x2c] sm:$0xf]
      %v8711 = vld [vmem:[%s8698 + $0x30] sm:$0xf]
      %v8712 = vld [vmem:[%s8698 + $0x34] sm:$0xf]
      %v8713 = vld [vmem:[%s8698 + $0x38] sm:$0xf]
      %v8714 = vld [vmem:[%s8698 + $0x3c] sm:$0xf]
      %v8715 = vld [vmem:[%s8698 + $0x40] sm:$0xf]
      %v8716 = vld [vmem:[%s8698 + $0x44] sm:$0xf]
      %v8717 = vld [vmem:[#allocation2] sm:$0xff]
      %v8718 = vld [vmem:[#allocation2 + $0x8] sm:$0xff]
      %v8719 = vld [vmem:[#allocation2 + $0x10] sm:$0xff]
      %v8720 = vld [vmem:[#allocation2 + $0x18] sm:$0xff]
      %v8721 = vld [vmem:[#allocation2 + $0x20] sm:$0xff]
      %v8722 = vld [vmem:[#allocation2 + $0x28] sm:$0xff]
      %v8723 = vld [vmem:[#allocation2 + $0x30] sm:$0xff]
      %v8724 = vld [vmem:[#allocation2 + $0x38] sm:$0xff]
      %v8725 = vld [vmem:[#allocation2 + $0x40] sm:$0xff]
      %v8726 = vld [vmem:[#allocation2 + $0x48] sm:$0xff]
      %v8745 = vunpack.c.l.b16 %v8699
      %v8746 = vunpack.c.l.b16 %v8700
      %v8747 = vunpack.c.l.b16 %v8701
      %v8748 = vunpack.c.l.b16 %v8702
      %v8749 = vunpack.c.l.b16 %v8703
      %v8750 = vunpack.c.l.b16 %v8704
      %v8751 = vunpack.c.l.b16 %v8705
      %v8752 = vunpack.c.l.b16 %v8706
      %v8753 = vunpack.c.l.b16 %v8707
      %v8754 = vunpack.c.l.b16 %v8708
      %v8755 = vunpack.c.l.b16 %v8709
      %v8756 = vunpack.c.l.b16 %v8710
      %v8757 = vunpack.c.l.b16 %v8711
      %v8758 = vunpack.c.l.b16 %v8712
      %v8759 = vunpack.c.l.b16 %v8713
      %v8760 = vunpack.c.l.b16 %v8714
      %v8761 = vunpack.c.l.b16 %v8715
      %v8762 = vunpack.c.l.b16 %v8716
      %v8763 = vpack.c.b16 %v8746, %v8745
      %v8764 = vpack.c.b16 %v8748, %v8747
      %v8765 = vpack.c.b16 %v8750, %v8749
      %v8766 = vpack.c.b16 %v8752, %v8751
      %v8767 = vpack.c.b16 %v8754, %v8753
      %v8768 = vpack.c.b16 %v8756, %v8755
      %v8769 = vpack.c.b16 %v8758, %v8757
      %v8770 = vpack.c.b16 %v8760, %v8759
      %v8771 = vpack.c.b16 %v8762, %v8761
      %v8773 = vsel %vm2866, %v8763, 0
      %v8776 = vsel %vm2866, %v8764, 0
      %v8779 = vsel %vm2866, %v8765, 0
      %v8782 = vsel %vm2866, %v8766, 0
      %v8785 = vsel %vm2866, %v8767, 0
      %v8788 = vsel %vm2866, %v8768, 0
      %v8791 = vsel %vm2866, %v8769, 0
      %v8794 = vsel %vm2866, %v8770, 0
      %v8797 = vsel %vm2866, %v8771, 0
      %8799 = vmatprep.subr.bf16.mxu0 %v8718
      %8800 = vmatpush1.bf16.msra.mxu0 %v8717
      %8801 = vmatprep.subr.bf16.mxu0 %v8720
      %8802 = vmatpush1.bf16.msra.mxu0 %v8719
      %8803 = vmatprep.subr.bf16.mxu0 %v8722
      %8804 = vmatpush1.bf16.msra.mxu0 %v8721
      %8805 = vmatprep.subr.bf16.mxu0 %v8724
      %8806 = vmatpush1.bf16.msra.mxu0 %v8723
      %8807 = vmatprep.subr.bf16.mxu0 %v8726
      %8808 = vmatpush1.bf16.msra.mxu0 %v8725
      %8809 = vmatprep.subr.bf16.mxu0 0
      %8810 = vmatpush1.bf16.msra.mxu0 0
      %8811 = vmatprep.subr.bf16.mxu0 0
      %8812 = vmatpush1.bf16.msra.mxu0 0
      %8813 = vmatprep.subr.bf16.mxu0 0
      %8814 = vmatpush1.bf16.msra.mxu0 0
      %8815 = vmatprep.subr.bf16.mxu0 0
      %8816 = vmatpush1.bf16.msra.mxu0 0
      %8817 = vmatprep.subr.bf16.mxu0 0
      %8818 = vmatpush1.bf16.msra.mxu0 0
      %8819 = vmatprep.subr.bf16.mxu0 0
      %8820 = vmatpush1.bf16.msra.mxu0 0
      %8821 = vmatprep.subr.bf16.mxu0 0
      %8822 = vmatpush1.bf16.msra.mxu0 0
      %8823 = vmatprep.subr.bf16.mxu0 0
      %8824 = vmatpush1.bf16.msra.mxu0 0
      %8825 = vmatprep.subr.bf16.mxu0 0
      %8826 = vmatpush1.bf16.msra.mxu0 0
      %8827 = vmatprep.subr.bf16.mxu0 0
      %8828 = vmatpush1.bf16.msra.mxu0 0
      %8829 = vmatprep.subr.bf16.mxu0 0
      %8830 = vmatpush1.bf16.msra.mxu0 0
      %8831 = vmatprep.mubr.bf16.mxu0 0
      %8832 = vmatmul.mubr.bf16.gmra.mrb[0].mxu0 %v8773
      %v8833 = vpop.f32.mrb[0].mxu0
      %v8834 = vadd.f32 0.0, %v8833
      %v8835 = vpop.f32.mrb[0].mxu0
      %v8836 = vadd.f32 0.0, %v8835
      %v8837 = vpop.f32.mrb[0].mxu0
      %v8838 = vadd.f32 0.0, %v8837
      %v8839 = vpop.f32.mrb[0].mxu0
      %v8840 = vadd.f32 0.0, %v8839
      %8841 = vmatprep.mubr.bf16.mxu0 0
      %8842 = vmatmul.mubr.bf16.gmra.mrb[0].mxu0 %v8776
      %v8843 = vpop.f32.mrb[0].mxu0
      %v8844 = vadd.f32 0.0, %v8843
      %v8845 = vpop.f32.mrb[0].mxu0
      %v8846 = vadd.f32 0.0, %v8845
      %v8847 = vpop.f32.mrb[0].mxu0
      %v8848 = vadd.f32 0.0, %v8847
      %v8849 = vpop.f32.mrb[0].mxu0
      %v8850 = vadd.f32 0.0, %v8849
      %8851 = vmatprep.mubr.bf16.mxu0 0
      %8852 = vmatmul.mubr.bf16.gmra.mrb[0].mxu0 %v8779
      %v8853 = vpop.f32.mrb[0].mxu0
      %v8854 = vadd.f32 0.0, %v8853
      %v8855 = vpop.f32.mrb[0].mxu0
      %v8856 = vadd.f32 0.0, %v8855
      %v8857 = vpop.f32.mrb[0].mxu0
      %v8858 = vadd.f32 0.0, %v8857
      %v8859 = vpop.f32.mrb[0].mxu0
      %v8860 = vadd.f32 0.0, %v8859
      %8861 = vmatprep.mubr.bf16.mxu0 0
      %8862 = vmatmul.mubr.bf16.gmra.mrb[0].mxu0 %v8782
      %v8863 = vpop.f32.mrb[0].mxu0
      %v8864 = vadd.f32 0.0, %v8863
      %v8865 = vpop.f32.mrb[0].mxu0
      %v8866 = vadd.f32 0.0, %v8865
      %v8867 = vpop.f32.mrb[0].mxu0
      %v8868 = vadd.f32 0.0, %v8867
      %v8869 = vpop.f32.mrb[0].mxu0
      %v8870 = vadd.f32 0.0, %v8869
      %8871 = vmatprep.mubr.bf16.mxu0 0
      %8872 = vmatmul.mubr.bf16.gmra.mrb[0].mxu0 %v8785
      %v8873 = vpop.f32.mrb[0].mxu0
      %v8874 = vadd.f32 0.0, %v8873
      %v8875 = vpop.f32.mrb[0].mxu0
      %v8876 = vadd.f32 0.0, %v8875
      %v8877 = vpop.f32.mrb[0].mxu0
      %v8878 = vadd.f32 0.0, %v8877
      %v8879 = vpop.f32.mrb[0].mxu0
      %v8880 = vadd.f32 0.0, %v8879
      %8881 = vmatprep.mubr.bf16.mxu0 0
      %8882 = vmatmul.mubr.bf16.gmra.mrb[0].mxu0 %v8788
      %v8883 = vpop.f32.mrb[0].mxu0
      %v8884 = vadd.f32 0.0, %v8883
      %v8885 = vpop.f32.mrb[0].mxu0
      %v8886 = vadd.f32 0.0, %v8885
      %v8887 = vpop.f32.mrb[0].mxu0
      %v8888 = vadd.f32 0.0, %v8887
      %v8889 = vpop.f32.mrb[0].mxu0
      %v8890 = vadd.f32 0.0, %v8889
      %8891 = vmatprep.mubr.bf16.mxu0 0
      %8892 = vmatmul.mubr.bf16.gmra.mrb[0].mxu0 %v8791
      %v8893 = vpop.f32.mrb[0].mxu0
      %v8894 = vadd.f32 0.0, %v8893
      %v8895 = vpop.f32.mrb[0].mxu0
      %v8896 = vadd.f32 0.0, %v8895
      %v8897 = vpop.f32.mrb[0].mxu0
      %v8898 = vadd.f32 0.0, %v8897
      %v8899 = vpop.f32.mrb[0].mxu0
      %v8900 = vadd.f32 0.0, %v8899
      %8901 = vmatprep.mubr.bf16.mxu0 0
      %8902 = vmatmul.mubr.bf16.gmra.mrb[0].mxu0 %v8794
      %v8903 = vpop.f32.mrb[0].mxu0
      %v8904 = vadd.f32 0.0, %v8903
      %v8905 = vpop.f32.mrb[0].mxu0
      %v8906 = vadd.f32 0.0, %v8905
      %v8907 = vpop.f32.mrb[0].mxu0
      %v8908 = vadd.f32 0.0, %v8907
      %v8909 = vpop.f32.mrb[0].mxu0
      %v8910 = vadd.f32 0.0, %v8909
      %8911 = vmatprep.mubr.bf16.mxu0 0
      %8912 = vmatmul.mubr.bf16.gmra.mrb[0].mxu0 %v8797
      %v8913 = vpop.f32.mrb[0].mxu0
      %v8914 = vadd.f32 0.0, %v8913
      %v8915 = vpop.f32.mrb[0].mxu0
      %v8916 = vadd.f32 0.0, %v8915
      %v8917 = vpop.f32.mrb[0].mxu0
      %v8918 = vadd.f32 0.0, %v8917
      %v8919 = vpop.f32.mrb[0].mxu0
      %v8920 = vadd.f32 0.0, %v8919
      %8921 = vdwg.mxu0
      %8924 = vrot.lane.b32.xlu0 %v8836, 17
      %v8925 = vpop.permute.xlu0 %8924
      %8926 = vrot.lane.b32.xlu0 %v8840, 17
      %v8927 = vpop.permute.xlu0 %8926
      %8932 = vrot.lane.b32.xlu0 %v8834, 17
      %v8933 = vpop.permute.xlu0 %8932
      %8934 = vrot.lane.b32.xlu0 %v8838, 17
      %v8935 = vpop.permute.xlu0 %8934
      %v8936 = vsel %vm661, %v8933, %v8925
      %v8937 = vsel %vm661, %v8935, %v8927
      %v8942 = vsel %vm661, %v8925, %v8933
      %v8943 = vsel %vm661, %v8927, %v8935
      %v8944 = vld [vmem:[%s11] sm:$0x3]
      %v8946 = vlaneseq
      %v8947 = vshrl.u32 %v8946, 7
      %v8948 = vsub.s32 0, %v8947
      %v8949 = vrot.slane %v8944, %v8948
      %v8950 = vlaneseq
      %v8951 = vshrl.u32 %v8950, 7
      %v8952 = vsub.s32 1, %v8951
      %v8953 = vrot.slane %v8944, %v8952
      %v8956 = vmul.f32 %v8942, %v8949
      %v8957 = vmul.f32 %v8936, %v8953
      %v8958 = vmul.f32 %v8943, %v8949
      %v8959 = vmul.f32 %v8937, %v8953
      %8962 = vrot.lane.b32.xlu0 %v8846, 16
      %v8963 = vpop.permute.xlu0 %8962
      %8964 = vrot.lane.b32.xlu0 %v8850, 16
      %v8965 = vpop.permute.xlu0 %8964
      %8970 = vrot.lane.b32.xlu0 %v8844, 16
      %v8971 = vpop.permute.xlu0 %8970
      %8972 = vrot.lane.b32.xlu0 %v8848, 16
      %v8973 = vpop.permute.xlu0 %8972
      %v8974 = vsel %vm496, %v8971, %v8963
      %v8975 = vsel %vm496, %v8973, %v8965
      %v8980 = vsel %vm496, %v8963, %v8971
      %v8981 = vsel %vm496, %v8965, %v8973
      %v8982 = vld [vmem:[%s708] sm:$0x3]
      %v8984 = vlaneseq
      %v8985 = vshrl.u32 %v8984, 7
      %v8986 = vsub.s32 0, %v8985
      %v8987 = vrot.slane %v8982, %v8986
      %v8988 = vlaneseq
      %v8989 = vshrl.u32 %v8988, 7
      %v8990 = vsub.s32 1, %v8989
      %v8991 = vrot.slane %v8982, %v8990
      %v8994 = vmul.f32 %v8980, %v8987
      %v8995 = vmul.f32 %v8974, %v8991
      %v8996 = vmul.f32 %v8981, %v8987
      %v8997 = vmul.f32 %v8975, %v8991
      %v8998 = vadd.f32 %v8956, %v8994
      %v8999 = vadd.f32 %v8957, %v8995
      %v9000 = vadd.f32 %v8958, %v8996
      %v9001 = vadd.f32 %v8959, %v8997
      %9004 = vrot.lane.b32.xlu0 %v8856, 15
      %v9005 = vpop.permute.xlu0 %9004
      %9006 = vrot.lane.b32.xlu0 %v8860, 15
      %v9007 = vpop.permute.xlu0 %9006
      %9012 = vrot.lane.b32.xlu0 %v8854, 15
      %v9013 = vpop.permute.xlu0 %9012
      %9014 = vrot.lane.b32.xlu0 %v8858, 15
      %v9015 = vpop.permute.xlu0 %9014
      %v9016 = vsel %vm743, %v9013, %v9005
      %v9017 = vsel %vm743, %v9015, %v9007
      %v9022 = vsel %vm743, %v9005, %v9013
      %v9023 = vsel %vm743, %v9007, %v9015
      %v9024 = vld [vmem:[%s752] sm:$0x3]
      %v9026 = vlaneseq
      %v9027 = vshrl.u32 %v9026, 7
      %v9028 = vsub.s32 0, %v9027
      %v9029 = vrot.slane %v9024, %v9028
      %v9030 = vlaneseq
      %v9031 = vshrl.u32 %v9030, 7
      %v9032 = vsub.s32 1, %v9031
      %v9033 = vrot.slane %v9024, %v9032
      %v9036 = vmul.f32 %v9022, %v9029
      %v9037 = vmul.f32 %v9016, %v9033
      %v9038 = vmul.f32 %v9023, %v9029
      %v9039 = vmul.f32 %v9017, %v9033
      %v9040 = vadd.f32 %v8998, %v9036
      %v9041 = vadd.f32 %v8999, %v9037
      %v9042 = vadd.f32 %v9000, %v9038
      %v9043 = vadd.f32 %v9001, %v9039
      %9046 = vrot.lane.b32.xlu0 %v8866, 1
      %v9047 = vpop.permute.xlu0 %9046
      %9048 = vrot.lane.b32.xlu0 %v8870, 1
      %v9049 = vpop.permute.xlu0 %9048
      %9054 = vrot.lane.b32.xlu0 %v8864, 1
      %v9055 = vpop.permute.xlu0 %9054
      %9056 = vrot.lane.b32.xlu0 %v8868, 1
      %v9057 = vpop.permute.xlu0 %9056
      %v9058 = vsel %vm787, %v9055, %v9047
      %v9059 = vsel %vm787, %v9057, %v9049
      %v9064 = vsel %vm787, %v9047, %v9055
      %v9065 = vsel %vm787, %v9049, %v9057
      %v9066 = vld [vmem:[%s796] sm:$0x3]
      %v9068 = vlaneseq
      %v9069 = vshrl.u32 %v9068, 7
      %v9070 = vsub.s32 0, %v9069
      %v9071 = vrot.slane %v9066, %v9070
      %v9072 = vlaneseq
      %v9073 = vshrl.u32 %v9072, 7
      %v9074 = vsub.s32 1, %v9073
      %v9075 = vrot.slane %v9066, %v9074
      %v9078 = vmul.f32 %v9064, %v9071
      %v9079 = vmul.f32 %v9058, %v9075
      %v9080 = vmul.f32 %v9065, %v9071
      %v9081 = vmul.f32 %v9059, %v9075
      %v9082 = vadd.f32 %v9040, %v9078
      %v9083 = vadd.f32 %v9041, %v9079
      %v9084 = vadd.f32 %v9042, %v9080
      %v9085 = vadd.f32 %v9043, %v9081
      %v9086 = vadd.f32 %v9082, %v8874
      %v9087 = vadd.f32 %v9083, %v8876
      %v9088 = vadd.f32 %v9084, %v8878
      %v9089 = vadd.f32 %v9085, %v8880
      %9094 = vrot.lane.b32.xlu0 %v8884, 127
      %v9095 = vpop.permute.xlu0 %9094
      %9096 = vrot.lane.b32.xlu0 %v8886, 127
      %v9097 = vpop.permute.xlu0 %9096
      %9098 = vrot.lane.b32.xlu0 %v8888, 127
      %v9099 = vpop.permute.xlu0 %9098
      %9100 = vrot.lane.b32.xlu0 %v8890, 127
      %v9101 = vpop.permute.xlu0 %9100
      %v9102 = vsel %vm833, %v9095, %v9097
      %v9103 = vsel %vm833, %v9099, %v9101
      %v9110 = vsel %vm833, %v9097, %v9095
      %v9111 = vsel %vm833, %v9101, %v9099
      %v9112 = vld [vmem:[%s844] sm:$0x3]
      %v9114 = vlaneseq
      %v9115 = vshrl.u32 %v9114, 7
      %v9116 = vsub.s32 0, %v9115
      %v9117 = vrot.slane %v9112, %v9116
      %v9118 = vlaneseq
      %v9119 = vshrl.u32 %v9118, 7
      %v9120 = vsub.s32 1, %v9119
      %v9121 = vrot.slane %v9112, %v9120
      %v9124 = vmul.f32 %v9102, %v9117
      %v9125 = vmul.f32 %v9110, %v9121
      %v9126 = vmul.f32 %v9103, %v9117
      %v9127 = vmul.f32 %v9111, %v9121
      %v9128 = vadd.f32 %v9086, %v9124
      %v9129 = vadd.f32 %v9087, %v9125
      %v9130 = vadd.f32 %v9088, %v9126
      %v9131 = vadd.f32 %v9089, %v9127
      %9136 = vrot.lane.b32.xlu0 %v8894, 113
      %v9137 = vpop.permute.xlu0 %9136
      %9138 = vrot.lane.b32.xlu0 %v8896, 113
      %v9139 = vpop.permute.xlu0 %9138
      %9140 = vrot.lane.b32.xlu0 %v8898, 113
      %v9141 = vpop.permute.xlu0 %9140
      %9142 = vrot.lane.b32.xlu0 %v8900, 113
      %v9143 = vpop.permute.xlu0 %9142
      %v9144 = vsel %vm877, %v9137, %v9139
      %v9145 = vsel %vm877, %v9141, %v9143
      %v9152 = vsel %vm877, %v9139, %v9137
      %v9153 = vsel %vm877, %v9143, %v9141
      %v9154 = vld [vmem:[%s888] sm:$0x3]
      %v9156 = vlaneseq
      %v9157 = vshrl.u32 %v9156, 7
      %v9158 = vsub.s32 0, %v9157
      %v9159 = vrot.slane %v9154, %v9158
      %v9160 = vlaneseq
      %v9161 = vshrl.u32 %v9160, 7
      %v9162 = vsub.s32 1, %v9161
      %v9163 = vrot.slane %v9154, %v9162
      %v9166 = vmul.f32 %v9144, %v9159
      %v9167 = vmul.f32 %v9152, %v9163
      %v9168 = vmul.f32 %v9145, %v9159
      %v9169 = vmul.f32 %v9153, %v9163
      %v9170 = vadd.f32 %v9128, %v9166
      %v9171 = vadd.f32 %v9129, %v9167
      %v9172 = vadd.f32 %v9130, %v9168
      %v9173 = vadd.f32 %v9131, %v9169
      %9178 = vrot.lane.b32.xlu0 %v8904, 112
      %v9179 = vpop.permute.xlu0 %9178
      %9180 = vrot.lane.b32.xlu0 %v8906, 112
      %v9181 = vpop.permute.xlu0 %9180
      %9182 = vrot.lane.b32.xlu0 %v8908, 112
      %v9183 = vpop.permute.xlu0 %9182
      %9184 = vrot.lane.b32.xlu0 %v8910, 112
      %v9185 = vpop.permute.xlu0 %9184
      %v9186 = vsel %vm921, %v9179, %v9181
      %v9187 = vsel %vm921, %v9183, %v9185
      %v9194 = vsel %vm921, %v9181, %v9179
      %v9195 = vsel %vm921, %v9185, %v9183
      %v9196 = vld [vmem:[%s932] sm:$0x3]
      %v9198 = vlaneseq
      %v9199 = vshrl.u32 %v9198, 7
      %v9200 = vsub.s32 0, %v9199
      %v9201 = vrot.slane %v9196, %v9200
      %v9202 = vlaneseq
      %v9203 = vshrl.u32 %v9202, 7
      %v9204 = vsub.s32 1, %v9203
      %v9205 = vrot.slane %v9196, %v9204
      %v9208 = vmul.f32 %v9186, %v9201
      %v9209 = vmul.f32 %v9194, %v9205
      %v9210 = vmul.f32 %v9187, %v9201
      %v9211 = vmul.f32 %v9195, %v9205
      %v9212 = vadd.f32 %v9170, %v9208
      %v9213 = vadd.f32 %v9171, %v9209
      %v9214 = vadd.f32 %v9172, %v9210
      %v9215 = vadd.f32 %v9173, %v9211
      %9220 = vrot.lane.b32.xlu0 %v8914, 111
      %v9221 = vpop.permute.xlu0 %9220
      %9222 = vrot.lane.b32.xlu0 %v8916, 111
      %v9223 = vpop.permute.xlu0 %9222
      %9224 = vrot.lane.b32.xlu0 %v8918, 111
      %v9225 = vpop.permute.xlu0 %9224
      %9226 = vrot.lane.b32.xlu0 %v8920, 111
      %v9227 = vpop.permute.xlu0 %9226
      %v9228 = vsel %vm965, %v9221, %v9223
      %v9229 = vsel %vm965, %v9225, %v9227
      %v9236 = vsel %vm965, %v9223, %v9221
      %v9237 = vsel %vm965, %v9227, %v9225
      %v9238 = vld [vmem:[%s976] sm:$0x3]
      %v9240 = vlaneseq
      %v9241 = vshrl.u32 %v9240, 7
      %v9242 = vsub.s32 0, %v9241
      %v9243 = vrot.slane %v9238, %v9242
      %v9244 = vlaneseq
      %v9245 = vshrl.u32 %v9244, 7
      %v9246 = vsub.s32 1, %v9245
      %v9247 = vrot.slane %v9238, %v9246
      %v9250 = vmul.f32 %v9228, %v9243
      %v9251 = vmul.f32 %v9236, %v9247
      %v9252 = vmul.f32 %v9229, %v9243
      %v9253 = vmul.f32 %v9237, %v9247
      %v9254 = vadd.f32 %v9212, %v9250
      %v9255 = vadd.f32 %v9213, %v9251
      %v9256 = vadd.f32 %v9214, %v9252
      %v9257 = vadd.f32 %v9215, %v9253
      %s9258 = scalar_lea.vmem %s10, 32
      %v9259 = vld [vmem:[%s9258] sm:$0xff]
      %v9260 = vld [vmem:[%s9258 + $0x8] sm:$0xff]
      %9262 = vset.pattern.permute.xlu0 0
      %9263 = vperm.xlu0 %9262, %v9259
      %v9264 = vpop.permute.xlu0 %9263
      %9267 = vset.pattern.permute.xlu0 0
      %9268 = vperm.xlu0 %9267, %v9260
      %v9269 = vpop.permute.xlu0 %9268
      %v9271 = vadd.f32 %v9254, %v9264
      %v9272 = vadd.f32 %v9255, %v9264
      %v9273 = vadd.f32 %v9256, %v9269
      %v9274 = vadd.f32 %v9257, %v9269
      %v9275 = vmul.f32 %v9271, 0.2
      %v9276 = vmul.f32 %v9272, 0.2
      %v9277 = vmul.f32 %v9273, 0.2
      %v9278 = vmul.f32 %v9274, 0.2
      %v9279 = vld [vmem:[#allocation3] sm:$0xff]
      %v9280 = vld [vmem:[#allocation3 + $0x8] sm:$0xff]
      %v9281 = vld [vmem:[#allocation3 + $0x10] sm:$0xff]
      %v9282 = vld [vmem:[#allocation3 + $0x18] sm:$0xff]
      %v9283 = vadd.f32 %v9275, %v9279
      %v9284 = vadd.f32 %v9276, %v9280
      %v9285 = vadd.f32 %v9277, %v9281
      %v9286 = vadd.f32 %v9278, %v9282
      %9287 = vst [vmem:[#allocation3] sm:$0xff] %v9283
      %9288 = vst [vmem:[#allocation3 + $0x8] sm:$0xff] %v9284
      %9289 = vst [vmem:[#allocation3 + $0x10] sm:$0xff] %v9285
      %9290 = vst [vmem:[#allocation3 + $0x18] sm:$0xff] %v9286
      %v9291 = vld [vmem:[#allocation3] sm:$0xff]
      %v9292 = vld [vmem:[#allocation3 + $0x8] sm:$0xff]
      %v9293 = vld [vmem:[#allocation3 + $0x10] sm:$0xff]
      %v9294 = vld [vmem:[#allocation3 + $0x18] sm:$0xff]
      %v9295 = vmul.f32 %v9291, 0.2
      %v9296 = vmul.f32 %v9292, 0.2
      %v9297 = vmul.f32 %v9293, 0.2
      %v9298 = vmul.f32 %v9294, 0.2
      %v9299 = vld [vmem:[%s408] sm:$0xff]
      %v9300 = vld [vmem:[%s408 + $0x8] sm:$0xff]
      %v9301 = vld [vmem:[%s408 + $0x10] sm:$0xff]
      %v9302 = vld [vmem:[%s408 + $0x18] sm:$0xff]
      %v9303 = vadd.f32 %v9295, %v9299
      %v9304 = vadd.f32 %v9296, %v9300
      %v9305 = vadd.f32 %v9297, %v9301
      %v9306 = vadd.f32 %v9298, %v9302
      %9307 = vst [vmem:[%s413] sm:$0xff] %v9303
      %9308 = vst [vmem:[%s413 + $0x8] sm:$0xff] %v9304
      %9309 = vst [vmem:[%s413 + $0x10] sm:$0xff] %v9305
      %9310 = vst [vmem:[%s413 + $0x18] sm:$0xff] %v9306
      %p9311 = scmp.lt.s32.totalorder %s23, 1
      %s9312 = scalar_select %p9311, %s23, 1
      %s9313 = smul.addr %s9312, 4
      %s9314 = smul.addr %s9313, 8
      %s9315 = scalar_lea.vmem %s12, %s9314
      // Predicated region
      $region69: #{rrdb_forward.1} parent=67 // pred_check
        %p9316 = pneg %p298
      $region70: #{rrdb_forward.1} parent=67 // pred_check_branch
        %9318 = sbr.rel (%p9316) target = $region72
      $region71: #{rrdb_forward.1} parent=67 // pred_region
        _
      $region72: #{rrdb_forward.1} parent=67 // pred_fallthru
        _
    $region68: #{rrdb_forward.1} parent=5 // pred_fallthru
      _
    %p9319 = scmp.le.s32.totalorder 2, %s18
    // Predicated region
    $region73: #{rrdb_forward.1} parent=5 // pred_check
      %p9320 = pneg %p9319
    $region74: #{rrdb_forward.1} parent=5 // pred_check_branch
      %9322 = sbr.rel (%p9320) target = $region76
    $region75: #{rrdb_forward.1} parent=5 // pred_region
      %s9323 = ssub.s32 %s18, 2
      // Predicated region
      $region77: #{rrdb_forward.1} parent=75 // pred_check
        %p9324 = pneg %p304
      $region78: #{rrdb_forward.1} parent=75 // pred_check_branch
        %9326 = sbr.rel (%p9324) target = $region80
      $region79: #{rrdb_forward.1} parent=75 // pred_region
        %p9327 = scmp.lt.s32.totalorder %s24, 1
        %s9328 = scalar_select %p9327, %s24, 1
        %s9329 = smul.addr %s9328, 4
        %s9330 = smul.addr %s9329, 8
        %s9331 = scalar_lea.vmem %s12, %s9330
      $region80: #{rrdb_forward.1} parent=75 // pred_fallthru
        _
    $region76: #{rrdb_forward.1} parent=5 // pred_fallthru
      _
  $region6: #{rrdb_forward.1} parent=0 // loop_footer
    %s22 = sadd.s32 1, %s18
  $region7: #{rrdb_forward.1} parent=0 // loop_footer_branch
    %17 = sbr.rel target = $region3
  $region8: #{rrdb_forward.1} parent=0 // loop_exit
    _

</llo_original>
